<compile_context>
chip_gen: v7x
topology: tpu7x:2x2x1
jax: 0.10.0
libtpu: 0.0.40
codegen_flags: <defaults>
</compile_context>

<pallas_src>
import functools

import jax
import jax.numpy as jnp
from jax import lax
from jax.experimental import pallas as pl
from jax.experimental.pallas import tpu as pltpu

LANE = 128  # pad hidden size to full lane width


# ----------------------------------------------------------------------------
# Fused Pallas kernel
# ----------------------------------------------------------------------------
def _lstm_recurrence(xproj, whh, hp):
    """Unrolled LSTM recurrence. xproj: [T, 4*hp], whh: [hp, 4*hp] -> hseq [T, hp].

    PyTorch gate order (i, f, g, o); zero initial h/c; biases already folded into xproj.
    """
    T = xproj.shape[0]
    h = jnp.zeros((1, hp), jnp.float32)
    c = jnp.zeros((1, hp), jnp.float32)
    rows = []
    for t in range(T):  # static unroll: T is small and fixed
        gates = xproj[t:t + 1, :] + jnp.dot(h, whh, preferred_element_type=jnp.float32)
        i = jax.nn.sigmoid(gates[:, 0 * hp:1 * hp])
        f = jax.nn.sigmoid(gates[:, 1 * hp:2 * hp])
        g = jnp.tanh(gates[:, 2 * hp:3 * hp])
        o = jax.nn.sigmoid(gates[:, 3 * hp:4 * hp])
        c = f * c + i * g
        h = o * jnp.tanh(c)
        rows.append(h)
    return jnp.concatenate(rows, axis=0)  # [T, hp]


def _fused_graph_kernel(edges_ref, inputs_ref, w_in_ref, b_in_ref,
                        we_src_ref, we_dst_ref, be_ref,
                        w_ih_a_ref, w_ih_b_ref, w_ih_r_ref, w_hh_ref, b_lstm_ref,
                        w_out_ref, b_out_ref, out_ref,
                        *, num_relations, num_layers, hp):
    n = inputs_ref.shape[0]
    inputs = inputs_ref[...]                                                 # [N, in]

    # ---- input Linear -------------------------------------------------------
    nodes = jnp.dot(inputs, w_in_ref[...],
                    preferred_element_type=jnp.float32) + b_in_ref[...]      # [N, hp]

    # ---- one-hot gather matrices (edges shared by every relation) ----------
    col = lax.broadcasted_iota(jnp.int32, (n, n), 1)                         # [E, N]
    src_sel = (edges_ref[:, 0:1] == col).astype(jnp.float32)                 # [E, N]
    dst_sel = (edges_ref[:, 1:2] == col).astype(jnp.float32)                 # [E, N]

    for r in range(num_relations):
        # gather endpoints on the MXU (nodes stays in VMEM/vregs)
        src = jnp.dot(src_sel, nodes, preferred_element_type=jnp.float32)    # [E, hp]
        dst = jnp.dot(dst_sel, nodes, preferred_element_type=jnp.float32)    # [E, hp]

        # edge Linear; cat([src, dst]) folded into a split matmul
        edge_h = (jnp.dot(src, we_src_ref[r], preferred_element_type=jnp.float32)
                  + jnp.dot(dst, we_dst_ref[r], preferred_element_type=jnp.float32)
                  + be_ref[r])                                               # [E, hp]

        # LSTM layer 0: cat([inputs, edge_h]) folded into a split matmul
        xproj = (jnp.dot(inputs, w_ih_a_ref[r], preferred_element_type=jnp.float32)
                 + jnp.dot(edge_h, w_ih_b_ref[r], preferred_element_type=jnp.float32)
                 + b_lstm_ref[r * num_layers + 0])                           # [T, 4*hp]
        hseq = _lstm_recurrence(xproj, w_hh_ref[r * num_layers + 0], hp)

        for l in range(1, num_layers):
            xproj = (jnp.dot(hseq, w_ih_r_ref[r * (num_layers - 1) + (l - 1)],
                             preferred_element_type=jnp.float32)
                     + b_lstm_ref[r * num_layers + l])
            hseq = _lstm_recurrence(xproj, w_hh_ref[r * num_layers + l], hp)

        nodes = hseq                                                         # [N, hp]

    # ---- output Linear ------------------------------------------------------
    out_ref[...] = (jnp.dot(nodes, w_out_ref[...], preferred_element_type=jnp.float32)
                    + b_out_ref[...])


def graph_network_forward(packed, inputs, edges):
    """inputs: [N, input_size] f32, edges: [E, 2] int32 (E == N). Single fused pallas_call."""
    n = inputs.shape[0]
    out_size = packed["b_out"].shape[-1]
    hp = packed["w_in"].shape[-1]
    num_relations = packed["we_src"].shape[0]
    num_layers = packed["b_lstm"].shape[0] // num_relations

    kernel = functools.partial(_fused_graph_kernel,
                               num_relations=num_relations,
                               num_layers=num_layers,
                               hp=hp)
    vmem = pl.BlockSpec(memory_space=pltpu.MemorySpace.VMEM)
    operands = (edges, inputs,
                packed["w_in"], packed["b_in"],
                packed["we_src"], packed["we_dst"], packed["be"],
                packed["w_ih_a"], packed["w_ih_b"], packed["w_ih_r"],
                packed["w_hh"], packed["b_lstm"],
                packed["w_out"], packed["b_out"])
    return pl.pallas_call(
        kernel,
        out_shape=jax.ShapeDtypeStruct((n, out_size), jnp.float32),
        in_specs=[vmem] * len(operands),
        out_specs=vmem,
    )(*operands)


# ----------------------------------------------------------------------------
# Parameter construction (deterministic, synthetic) + packing/padding
# ----------------------------------------------------------------------------
def init_params(key, input_size, output_size, hidden_size, num_layers, num_relations):
    def uni(k, shape, fan_in):
        bound = 1.0 / jnp.sqrt(jnp.float32(fan_in))
        return jax.random.uniform(k, shape, jnp.float32, -bound, bound)

    keys = iter(jax.random.split(key, 4 + num_relations * (2 + 4 * num_layers)))
    p = {}
    # input / output linear layers (weights stored pre-transposed as [in, out])
    p["w_in"] = uni(next(keys), (input_size, hidden_size), input_size)
    p["b_in"] = uni(next(keys), (hidden_size,), input_size)
    p["w_out"] = uni(next(keys), (hidden_size, output_size), hidden_size)
    p["b_out"] = uni(next(keys), (output_size,), hidden_size)

    p["edge"] = []
    p["lstm"] = []
    for _ in range(num_relations):
        p["edge"].append(
            dict(
                w=uni(next(keys), (2 * hidden_size, hidden_size), 2 * hidden_size),
                b=uni(next(keys), (hidden_size,), 2 * hidden_size),
            )
        )
        layers = []
        for layer in range(num_layers):
            in_dim = (input_size + hidden_size) if layer == 0 else hidden_size
            layers.append(
                dict(
                    # stored pre-transposed: w_ih_t [in_dim, 4H], w_hh_t [H, 4H]
                    w_ih_t=uni(next(keys), (in_dim, 4 * hidden_size), hidden_size),
                    w_hh_t=uni(next(keys), (hidden_size, 4 * hidden_size), hidden_size),
                    b_ih=uni(next(keys), (4 * hidden_size,), hidden_size),
                    b_hh=uni(next(keys), (4 * hidden_size,), hidden_size),
                )
            )
        p["lstm"].append(layers)
    return p


def pack_params(p, input_size, hidden_size, output_size, num_layers, num_relations, hp=LANE):
    """Zero-pad hidden dim H -> hp (=128 lanes) and stack per-relation/per-layer weights.

    Padded lanes of every activation stay exactly 0 (zero weight columns / biases), so the
    first H lanes reproduce the unpadded math exactly.
    """
    H = hidden_size

    def pad_last(w, target):
        return jnp.pad(w, [(0, 0)] * (w.ndim - 1) + [(0, target - w.shape[-1])])

    def pad_axis(w, axis, target):
        pads = [(0, 0)] * w.ndim
        pads[axis] = (0, target - w.shape[axis])
        return jnp.pad(w, pads)

    def pad_gate_cols(w):  # [..., 4H] -> [..., 4*hp], per-gate zero pad (i, f, g, o blocks)
        lead = w.shape[:-1]
        w4 = w.reshape(lead + (4, H))
        w4 = jnp.pad(w4, [(0, 0)] * len(lead) + [(0, 0), (0, hp - H)])
        return w4.reshape(lead + (4 * hp,))

    packed = {}
    packed["w_in"] = pad_last(p["w_in"], hp)                          # [in, hp]
    packed["b_in"] = pad_last(p["b_in"], hp).reshape(1, hp)           # [1, hp]
    packed["w_out"] = pad_axis(p["w_out"], 0, hp)                     # [hp, O]
    packed["b_out"] = p["b_out"].reshape(1, output_size)              # [1, O]

    we_src, we_dst, be = [], [], []
    w_ih_a, w_ih_b = [], []
    w_ih_r, w_hh, b_lstm = [], [], []
    for r in range(num_relations):
        ew = p["edge"][r]["w"]                                        # [2H, H]
        we_src.append(pad_last(pad_axis(ew[:H], 0, hp), hp))          # [hp, hp]
        we_dst.append(pad_last(pad_axis(ew[H:], 0, hp), hp))          # [hp, hp]
        be.append(pad_last(p["edge"][r]["b"], hp).reshape(1, hp))     # [1, hp]

        layers = p["lstm"][r]
        wih0 = pad_gate_cols(layers[0]["w_ih_t"])                     # [in+H, 4hp]
        w_ih_a.append(wih0[:input_size])                              # [in, 4hp]
        w_ih_b.append(pad_axis(wih0[input_size:], 0, hp))             # [hp, 4hp]
        for l in range(num_layers):
            lp = layers[l]
            w_hh.append(pad_axis(pad_gate_cols(lp["w_hh_t"]), 0, hp))                 # [hp, 4hp]
            b_lstm.append(pad_gate_cols(lp["b_ih"] + lp["b_hh"]).reshape(1, 4 * hp))  # [1, 4hp]
            if l >= 1:
                w_ih_r.append(pad_axis(pad_gate_cols(lp["w_ih_t"]), 0, hp))           # [hp, 4hp]
    if not w_ih_r:  # num_layers == 1: keep a dummy slab so the stacked array is non-empty
        w_ih_r.append(jnp.zeros((hp, 4 * hp), jnp.float32))

    packed["we_src"] = jnp.stack(we_src)      # [R, hp, hp]
    packed["we_dst"] = jnp.stack(we_dst)      # [R, hp, hp]
    packed["be"] = jnp.stack(be)              # [R, 1, hp]
    packed["w_ih_a"] = jnp.stack(w_ih_a)      # [R, in, 4hp]
    packed["w_ih_b"] = jnp.stack(w_ih_b)      # [R, hp, 4hp]
    packed["w_ih_r"] = jnp.stack(w_ih_r)      # [R*(L-1) or 1, hp, 4hp]
    packed["w_hh"] = jnp.stack(w_hh)          # [R*L, hp, 4hp]
    packed["b_lstm"] = jnp.stack(b_lstm)      # [R*L, 1, 4hp]
    return packed


# ----------------------------------------------------------------------------
# Pure-JAX reference (for correctness check)
# ----------------------------------------------------------------------------
def graph_network_reference(params, inputs, edges):
    nodes = inputs @ params["w_in"] + params["b_in"]
    for edge_p, lstm_layers in zip(params["edge"], params["lstm"]):
        edge_in = jnp.concatenate([nodes[edges[:, 0]], nodes[edges[:, 1]]], axis=1)
        edge_hiddens = edge_in @ edge_p["w"] + edge_p["b"]
        x = jnp.concatenate([inputs, edge_hiddens], axis=1)
        for layer_p in lstm_layers:
            H = layer_p["w_hh_t"].shape[0]
            xproj = x @ layer_p["w_ih_t"] + layer_p["b_ih"] + layer_p["b_hh"]

            def step(carry, xp_t):
                h, c = carry
                gates = xp_t + h @ layer_p["w_hh_t"]
                i = jax.nn.sigmoid(gates[0 * H:1 * H])
                f = jax.nn.sigmoid(gates[1 * H:2 * H])
                g = jnp.tanh(gates[2 * H:3 * H])
                o = jax.nn.sigmoid(gates[3 * H:4 * H])
                c = f * c + i * g
                h = o * jnp.tanh(c)
                return (h, c), h

            (_, _), hseq = lax.scan(
                step, (jnp.zeros((H,), jnp.float32), jnp.zeros((H,), jnp.float32)), xproj
            )
            x = hseq
        nodes = x
    return nodes @ params["w_out"] + params["b_out"]


# ----------------------------------------------------------------------------
if __name__ == "__main__":
    input_size = 8
    hidden_size = 32
    output_size = 4
    num_layers = 2
    num_relations = 2
    num_nodes = 8          # E must equal N (forced by cat([inputs, edge_hiddens], dim=1))
    num_edges = num_nodes

    key = jax.random.PRNGKey(0)
    k_param, k_in, k_edge = jax.random.split(key, 3)

    params = init_params(
        k_param, input_size, output_size, hidden_size, num_layers, num_relations
    )
    inputs = jax.random.normal(k_in, (num_nodes, input_size), jnp.float32)
    edges = jax.random.randint(k_edge, (num_edges, 2), 0, num_nodes, dtype=jnp.int32)

    # One-time packing/padding of the weights (setup, outside the hot path).
    packed = pack_params(params, input_size, hidden_size, output_size,
                         num_layers, num_relations, hp=LANE)

    fwd = jax.jit(graph_network_forward)
    out = fwd(packed, inputs, edges)
    out = jax.block_until_ready(out)

    ref = graph_network_reference(params, inputs, edges)
    assert out.shape == (num_nodes, output_size)
    assert jnp.all(jnp.isfinite(out))
    assert jnp.allclose(out, ref, atol=1e-3, rtol=1e-3), (
        f"max abs err {jnp.max(jnp.abs(out - ref))}"
    )
    print("KERNEL_OK")
</pallas_src>

<mosaic_0001>
module attributes {stable_mosaic.version = 11 : i64} {
  func.func @_fused_graph_kernel(%arg0: memref<8x2xi32, #tpu.memory_space<vmem>>, %arg1: memref<8x8xf32, #tpu.memory_space<vmem>>, %arg2: memref<8x128xf32, #tpu.memory_space<vmem>>, %arg3: memref<1x128xf32, #tpu.memory_space<vmem>>, %arg4: memref<2x128x128xf32, #tpu.memory_space<vmem>>, %arg5: memref<2x128x128xf32, #tpu.memory_space<vmem>>, %arg6: memref<2x1x128xf32, #tpu.memory_space<vmem>>, %arg7: memref<2x8x512xf32, #tpu.memory_space<vmem>>, %arg8: memref<2x128x512xf32, #tpu.memory_space<vmem>>, %arg9: memref<2x128x512xf32, #tpu.memory_space<vmem>>, %arg10: memref<4x128x512xf32, #tpu.memory_space<vmem>>, %arg11: memref<4x1x512xf32, #tpu.memory_space<vmem>>, %arg12: memref<128x4xf32, #tpu.memory_space<vmem>>, %arg13: memref<1x4xf32, #tpu.memory_space<vmem>>, %arg14: memref<8x4xf32, #tpu.memory_space<vmem>>) attributes {dimension_semantics = [], scalar_prefetch = 0 : i64, scratch_operands = 0 : i64, tpu.core_type = #tpu.core_type<tc>} {
    %c0 = arith.constant 0 : index
    %c0_0 = arith.constant 0 : index
    %0 = vector.load %arg1[%c0, %c0_0] : memref<8x8xf32, #tpu.memory_space<vmem>>, vector<8x8xf32>
    %c0_1 = arith.constant 0 : index
    %c0_2 = arith.constant 0 : index
    %1 = vector.load %arg2[%c0_1, %c0_2] : memref<8x128xf32, #tpu.memory_space<vmem>>, vector<8x128xf32>
    %cst = arith.constant dense<0.000000e+00> : vector<8x128xf32>
    %2 = tpu.matmul %0, %1, %cst {dimension_numbers = #tpu.dot_dimension_numbers<[1], [0], [0], [1], [0, 0, 1, 1], [], []>} : vector<8x8xf32>, vector<8x128xf32>, vector<8x128xf32> -> vector<8x128xf32>
    %c0_3 = arith.constant 0 : index
    %c0_4 = arith.constant 0 : index
    %3 = vector.load %arg3[%c0_3, %c0_4] : memref<1x128xf32, #tpu.memory_space<vmem>>, vector<1x128xf32>
    %4 = vector.broadcast %3 : vector<1x128xf32> to vector<8x128xf32>
    %5 = arith.addf %2, %4 : vector<8x128xf32>
    %6 = tpu.iota {dimensions = array<i32: 1>} : vector<8x8xi32>
    %c0_5 = arith.constant 0 : index
    %c0_6 = arith.constant 0 : index
    %7 = vector.load %arg0[%c0_5, %c0_6] : memref<8x2xi32, #tpu.memory_space<vmem>>, vector<8x1xi32>
    %8 = vector.broadcast %7 : vector<8x1xi32> to vector<8x8xi32>
    %9 = arith.cmpi eq, %8, %6 : vector<8x8xi32>
    %10 = arith.extui %9 : vector<8x8xi1> to vector<8x8xi32>
    %11 = arith.sitofp %10 : vector<8x8xi32> to vector<8x8xf32>
    %c0_7 = arith.constant 0 : index
    %c1 = arith.constant 1 : index
    %12 = vector.load %arg0[%c0_7, %c1] : memref<8x2xi32, #tpu.memory_space<vmem>>, vector<8x1xi32>
    %13 = vector.broadcast %12 : vector<8x1xi32> to vector<8x8xi32>
    %14 = arith.cmpi eq, %13, %6 : vector<8x8xi32>
    %15 = arith.extui %14 : vector<8x8xi1> to vector<8x8xi32>
    %16 = arith.sitofp %15 : vector<8x8xi32> to vector<8x8xf32>
    %cst_8 = arith.constant dense<0.000000e+00> : vector<8x128xf32>
    %17 = tpu.matmul %11, %5, %cst_8 {dimension_numbers = #tpu.dot_dimension_numbers<[1], [0], [0], [1], [0, 0, 1, 1], [], []>} : vector<8x8xf32>, vector<8x128xf32>, vector<8x128xf32> -> vector<8x128xf32>
    %cst_9 = arith.constant dense<0.000000e+00> : vector<8x128xf32>
    %18 = tpu.matmul %16, %5, %cst_9 {dimension_numbers = #tpu.dot_dimension_numbers<[1], [0], [0], [1], [0, 0, 1, 1], [], []>} : vector<8x8xf32>, vector<8x128xf32>, vector<8x128xf32> -> vector<8x128xf32>
    %c0_10 = arith.constant 0 : index
    %c0_11 = arith.constant 0 : index
    %c0_12 = arith.constant 0 : index
    %19 = vector.load %arg4[%c0_10, %c0_11, %c0_12] : memref<2x128x128xf32, #tpu.memory_space<vmem>>, vector<1x128x128xf32>
    %20 = vector.shape_cast %19 : vector<1x128x128xf32> to vector<128x128xf32>
    %cst_13 = arith.constant dense<0.000000e+00> : vector<8x128xf32>
    %21 = tpu.matmul %17, %20, %cst_13 {dimension_numbers = #tpu.dot_dimension_numbers<[1], [0], [0], [1], [0, 0, 1, 1], [], []>} : vector<8x128xf32>, vector<128x128xf32>, vector<8x128xf32> -> vector<8x128xf32>
    %c0_14 = arith.constant 0 : index
    %c0_15 = arith.constant 0 : index
    %c0_16 = arith.constant 0 : index
    %22 = vector.load %arg5[%c0_14, %c0_15, %c0_16] : memref<2x128x128xf32, #tpu.memory_space<vmem>>, vector<1x128x128xf32>
    %23 = vector.shape_cast %22 : vector<1x128x128xf32> to vector<128x128xf32>
    %cst_17 = arith.constant dense<0.000000e+00> : vector<8x128xf32>
    %24 = tpu.matmul %18, %23, %cst_17 {dimension_numbers = #tpu.dot_dimension_numbers<[1], [0], [0], [1], [0, 0, 1, 1], [], []>} : vector<8x128xf32>, vector<128x128xf32>, vector<8x128xf32> -> vector<8x128xf32>
    %25 = arith.addf %21, %24 : vector<8x128xf32>
    %c0_18 = arith.constant 0 : index
    %c0_19 = arith.constant 0 : index
    %c0_20 = arith.constant 0 : index
    %26 = vector.load %arg6[%c0_18, %c0_19, %c0_20] : memref<2x1x128xf32, #tpu.memory_space<vmem>>, vector<1x1x128xf32>
    %27 = vector.shape_cast %26 : vector<1x1x128xf32> to vector<1x128xf32>
    %28 = vector.broadcast %27 : vector<1x128xf32> to vector<8x128xf32>
    %29 = arith.addf %25, %28 : vector<8x128xf32>
    %c0_21 = arith.constant 0 : index
    %c0_22 = arith.constant 0 : index
    %c0_23 = arith.constant 0 : index
    %30 = vector.load %arg7[%c0_21, %c0_22, %c0_23] : memref<2x8x512xf32, #tpu.memory_space<vmem>>, vector<1x8x512xf32>
    %31 = vector.shape_cast %30 : vector<1x8x512xf32> to vector<8x512xf32>
    %cst_24 = arith.constant dense<0.000000e+00> : vector<8x512xf32>
    %32 = tpu.matmul %0, %31, %cst_24 {dimension_numbers = #tpu.dot_dimension_numbers<[1], [0], [0], [1], [0, 0, 1, 1], [], []>} : vector<8x8xf32>, vector<8x512xf32>, vector<8x512xf32> -> vector<8x512xf32>
    %c0_25 = arith.constant 0 : index
    %c0_26 = arith.constant 0 : index
    %c0_27 = arith.constant 0 : index
    %33 = vector.load %arg8[%c0_25, %c0_26, %c0_27] : memref<2x128x512xf32, #tpu.memory_space<vmem>>, vector<1x128x512xf32>
    %34 = vector.shape_cast %33 : vector<1x128x512xf32> to vector<128x512xf32>
    %cst_28 = arith.constant dense<0.000000e+00> : vector<8x512xf32>
    %35 = tpu.matmul %29, %34, %cst_28 {dimension_numbers = #tpu.dot_dimension_numbers<[1], [0], [0], [1], [0, 0, 1, 1], [], []>} : vector<8x128xf32>, vector<128x512xf32>, vector<8x512xf32> -> vector<8x512xf32>
    %36 = arith.addf %32, %35 : vector<8x512xf32>
    %c0_29 = arith.constant 0 : index
    %c0_30 = arith.constant 0 : index
    %c0_31 = arith.constant 0 : index
    %37 = vector.load %arg11[%c0_29, %c0_30, %c0_31] : memref<4x1x512xf32, #tpu.memory_space<vmem>>, vector<1x1x512xf32>
    %38 = vector.shape_cast %37 : vector<1x1x512xf32> to vector<1x512xf32>
    %39 = vector.broadcast %38 : vector<1x512xf32> to vector<8x512xf32>
    %40 = arith.addf %36, %39 : vector<8x512xf32>
    %c0_32 = arith.constant 0 : index
    %c0_33 = arith.constant 0 : index
    %c0_34 = arith.constant 0 : index
    %41 = vector.load %arg10[%c0_32, %c0_33, %c0_34] : memref<4x128x512xf32, #tpu.memory_space<vmem>>, vector<1x128x512xf32>
    %42 = vector.shape_cast %41 : vector<1x128x512xf32> to vector<128x512xf32>
    %cst_35 = arith.constant 0.000000e+00 : f32
    %43 = vector.broadcast %cst_35 : f32 to vector<1x128xf32>
    %cst_36 = arith.constant 0.000000e+00 : f32
    %44 = vector.broadcast %cst_36 : f32 to vector<1x128xf32>
    %45 = vector.extract_strided_slice %40 {offsets = [0, 0], sizes = [1, 512], strides = [1, 1]} : vector<8x512xf32> to vector<1x512xf32>
    %cst_37 = arith.constant dense<0.000000e+00> : vector<1x512xf32>
    %46 = tpu.matmul %43, %42, %cst_37 {dimension_numbers = #tpu.dot_dimension_numbers<[1], [0], [0], [1], [0, 0, 1, 1], [], []>} : vector<1x128xf32>, vector<128x512xf32>, vector<1x512xf32> -> vector<1x512xf32>
    %47 = arith.addf %45, %46 : vector<1x512xf32>
    %48 = vector.extract_strided_slice %47 {offsets = [0, 0], sizes = [1, 128], strides = [1, 1]} : vector<1x512xf32> to vector<1x128xf32>
    %49 = arith.negf %48 : vector<1x128xf32>
    %50 = math.exp %49 : vector<1x128xf32>
    %cst_38 = arith.constant 1.000000e+00 : f32
    %51 = vector.broadcast %cst_38 : f32 to vector<1x128xf32>
    %52 = arith.addf %51, %50 : vector<1x128xf32>
    %53 = arith.divf %51, %52 : vector<1x128xf32>
    %54 = vector.extract_strided_slice %47 {offsets = [0, 128], sizes = [1, 128], strides = [1, 1]} : vector<1x512xf32> to vector<1x128xf32>
    %55 = arith.negf %54 : vector<1x128xf32>
    %56 = math.exp %55 : vector<1x128xf32>
    %cst_39 = arith.constant 1.000000e+00 : f32
    %57 = vector.broadcast %cst_39 : f32 to vector<1x128xf32>
    %58 = arith.addf %57, %56 : vector<1x128xf32>
    %59 = arith.divf %57, %58 : vector<1x128xf32>
    %60 = vector.extract_strided_slice %47 {offsets = [0, 256], sizes = [1, 128], strides = [1, 1]} : vector<1x512xf32> to vector<1x128xf32>
    %61 = math.tanh %60 : vector<1x128xf32>
    %62 = vector.extract_strided_slice %47 {offsets = [0, 384], sizes = [1, 128], strides = [1, 1]} : vector<1x512xf32> to vector<1x128xf32>
    %63 = arith.negf %62 : vector<1x128xf32>
    %64 = math.exp %63 : vector<1x128xf32>
    %cst_40 = arith.constant 1.000000e+00 : f32
    %65 = vector.broadcast %cst_40 : f32 to vector<1x128xf32>
    %66 = arith.addf %65, %64 : vector<1x128xf32>
    %67 = arith.divf %65, %66 : vector<1x128xf32>
    %68 = arith.mulf %59, %44 : vector<1x128xf32>
    %69 = arith.mulf %53, %61 : vector<1x128xf32>
    %70 = arith.addf %68, %69 : vector<1x128xf32>
    %71 = math.tanh %70 : vector<1x128xf32>
    %72 = arith.mulf %67, %71 : vector<1x128xf32>
    %73 = vector.extract_strided_slice %40 {offsets = [1, 0], sizes = [1, 512], strides = [1, 1]} : vector<8x512xf32> to vector<1x512xf32>
    %cst_41 = arith.constant dense<0.000000e+00> : vector<1x512xf32>
    %74 = tpu.matmul %72, %42, %cst_41 {dimension_numbers = #tpu.dot_dimension_numbers<[1], [0], [0], [1], [0, 0, 1, 1], [], []>} : vector<1x128xf32>, vector<128x512xf32>, vector<1x512xf32> -> vector<1x512xf32>
    %75 = arith.addf %73, %74 : vector<1x512xf32>
    %76 = vector.extract_strided_slice %75 {offsets = [0, 0], sizes = [1, 128], strides = [1, 1]} : vector<1x512xf32> to vector<1x128xf32>
    %77 = arith.negf %76 : vector<1x128xf32>
    %78 = math.exp %77 : vector<1x128xf32>
    %cst_42 = arith.constant 1.000000e+00 : f32
    %79 = vector.broadcast %cst_42 : f32 to vector<1x128xf32>
    %80 = arith.addf %79, %78 : vector<1x128xf32>
    %81 = arith.divf %79, %80 : vector<1x128xf32>
    %82 = vector.extract_strided_slice %75 {offsets = [0, 128], sizes = [1, 128], strides = [1, 1]} : vector<1x512xf32> to vector<1x128xf32>
    %83 = arith.negf %82 : vector<1x128xf32>
    %84 = math.exp %83 : vector<1x128xf32>
    %cst_43 = arith.constant 1.000000e+00 : f32
    %85 = vector.broadcast %cst_43 : f32 to vector<1x128xf32>
    %86 = arith.addf %85, %84 : vector<1x128xf32>
    %87 = arith.divf %85, %86 : vector<1x128xf32>
    %88 = vector.extract_strided_slice %75 {offsets = [0, 256], sizes = [1, 128], strides = [1, 1]} : vector<1x512xf32> to vector<1x128xf32>
    %89 = math.tanh %88 : vector<1x128xf32>
    %90 = vector.extract_strided_slice %75 {offsets = [0, 384], sizes = [1, 128], strides = [1, 1]} : vector<1x512xf32> to vector<1x128xf32>
    %91 = arith.negf %90 : vector<1x128xf32>
    %92 = math.exp %91 : vector<1x128xf32>
    %cst_44 = arith.constant 1.000000e+00 : f32
    %93 = vector.broadcast %cst_44 : f32 to vector<1x128xf32>
    %94 = arith.addf %93, %92 : vector<1x128xf32>
    %95 = arith.divf %93, %94 : vector<1x128xf32>
    %96 = arith.mulf %87, %70 : vector<1x128xf32>
    %97 = arith.mulf %81, %89 : vector<1x128xf32>
    %98 = arith.addf %96, %97 : vector<1x128xf32>
    %99 = math.tanh %98 : vector<1x128xf32>
    %100 = arith.mulf %95, %99 : vector<1x128xf32>
    %101 = vector.extract_strided_slice %40 {offsets = [2, 0], sizes = [1, 512], strides = [1, 1]} : vector<8x512xf32> to vector<1x512xf32>
    %cst_45 = arith.constant dense<0.000000e+00> : vector<1x512xf32>
    %102 = tpu.matmul %100, %42, %cst_45 {dimension_numbers = #tpu.dot_dimension_numbers<[1], [0], [0], [1], [0, 0, 1, 1], [], []>} : vector<1x128xf32>, vector<128x512xf32>, vector<1x512xf32> -> vector<1x512xf32>
    %103 = arith.addf %101, %102 : vector<1x512xf32>
    %104 = vector.extract_strided_slice %103 {offsets = [0, 0], sizes = [1, 128], strides = [1, 1]} : vector<1x512xf32> to vector<1x128xf32>
    %105 = arith.negf %104 : vector<1x128xf32>
    %106 = math.exp %105 : vector<1x128xf32>
    %cst_46 = arith.constant 1.000000e+00 : f32
    %107 = vector.broadcast %cst_46 : f32 to vector<1x128xf32>
    %108 = arith.addf %107, %106 : vector<1x128xf32>
    %109 = arith.divf %107, %108 : vector<1x128xf32>
    %110 = vector.extract_strided_slice %103 {offsets = [0, 128], sizes = [1, 128], strides = [1, 1]} : vector<1x512xf32> to vector<1x128xf32>
    %111 = arith.negf %110 : vector<1x128xf32>
    %112 = math.exp %111 : vector<1x128xf32>
    %cst_47 = arith.constant 1.000000e+00 : f32
    %113 = vector.broadcast %cst_47 : f32 to vector<1x128xf32>
    %114 = arith.addf %113, %112 : vector<1x128xf32>
    %115 = arith.divf %113, %114 : vector<1x128xf32>
    %116 = vector.extract_strided_slice %103 {offsets = [0, 256], sizes = [1, 128], strides = [1, 1]} : vector<1x512xf32> to vector<1x128xf32>
    %117 = math.tanh %116 : vector<1x128xf32>
    %118 = vector.extract_strided_slice %103 {offsets = [0, 384], sizes = [1, 128], strides = [1, 1]} : vector<1x512xf32> to vector<1x128xf32>
    %119 = arith.negf %118 : vector<1x128xf32>
    %120 = math.exp %119 : vector<1x128xf32>
    %cst_48 = arith.constant 1.000000e+00 : f32
    %121 = vector.broadcast %cst_48 : f32 to vector<1x128xf32>
    %122 = arith.addf %121, %120 : vector<1x128xf32>
    %123 = arith.divf %121, %122 : vector<1x128xf32>
    %124 = arith.mulf %115, %98 : vector<1x128xf32>
    %125 = arith.mulf %109, %117 : vector<1x128xf32>
    %126 = arith.addf %124, %125 : vector<1x128xf32>
    %127 = math.tanh %126 : vector<1x128xf32>
    %128 = arith.mulf %123, %127 : vector<1x128xf32>
    %129 = vector.extract_strided_slice %40 {offsets = [3, 0], sizes = [1, 512], strides = [1, 1]} : vector<8x512xf32> to vector<1x512xf32>
    %cst_49 = arith.constant dense<0.000000e+00> : vector<1x512xf32>
    %130 = tpu.matmul %128, %42, %cst_49 {dimension_numbers = #tpu.dot_dimension_numbers<[1], [0], [0], [1], [0, 0, 1, 1], [], []>} : vector<1x128xf32>, vector<128x512xf32>, vector<1x512xf32> -> vector<1x512xf32>
    %131 = arith.addf %129, %130 : vector<1x512xf32>
    %132 = vector.extract_strided_slice %131 {offsets = [0, 0], sizes = [1, 128], strides = [1, 1]} : vector<1x512xf32> to vector<1x128xf32>
    %133 = arith.negf %132 : vector<1x128xf32>
    %134 = math.exp %133 : vector<1x128xf32>
    %cst_50 = arith.constant 1.000000e+00 : f32
    %135 = vector.broadcast %cst_50 : f32 to vector<1x128xf32>
    %136 = arith.addf %135, %134 : vector<1x128xf32>
    %137 = arith.divf %135, %136 : vector<1x128xf32>
    %138 = vector.extract_strided_slice %131 {offsets = [0, 128], sizes = [1, 128], strides = [1, 1]} : vector<1x512xf32> to vector<1x128xf32>
    %139 = arith.negf %138 : vector<1x128xf32>
    %140 = math.exp %139 : vector<1x128xf32>
    %cst_51 = arith.constant 1.000000e+00 : f32
    %141 = vector.broadcast %cst_51 : f32 to vector<1x128xf32>
    %142 = arith.addf %141, %140 : vector<1x128xf32>
    %143 = arith.divf %141, %142 : vector<1x128xf32>
    %144 = vector.extract_strided_slice %131 {offsets = [0, 256], sizes = [1, 128], strides = [1, 1]} : vector<1x512xf32> to vector<1x128xf32>
    %145 = math.tanh %144 : vector<1x128xf32>
    %146 = vector.extract_strided_slice %131 {offsets = [0, 384], sizes = [1, 128], strides = [1, 1]} : vector<1x512xf32> to vector<1x128xf32>
    %147 = arith.negf %146 : vector<1x128xf32>
    %148 = math.exp %147 : vector<1x128xf32>
    %cst_52 = arith.constant 1.000000e+00 : f32
    %149 = vector.broadcast %cst_52 : f32 to vector<1x128xf32>
    %150 = arith.addf %149, %148 : vector<1x128xf32>
    %151 = arith.divf %149, %150 : vector<1x128xf32>
    %152 = arith.mulf %143, %126 : vector<1x128xf32>
    %153 = arith.mulf %137, %145 : vector<1x128xf32>
    %154 = arith.addf %152, %153 : vector<1x128xf32>
    %155 = math.tanh %154 : vector<1x128xf32>
    %156 = arith.mulf %151, %155 : vector<1x128xf32>
    %157 = vector.extract_strided_slice %40 {offsets = [4, 0], sizes = [1, 512], strides = [1, 1]} : vector<8x512xf32> to vector<1x512xf32>
    %cst_53 = arith.constant dense<0.000000e+00> : vector<1x512xf32>
    %158 = tpu.matmul %156, %42, %cst_53 {dimension_numbers = #tpu.dot_dimension_numbers<[1], [0], [0], [1], [0, 0, 1, 1], [], []>} : vector<1x128xf32>, vector<128x512xf32>, vector<1x512xf32> -> vector<1x512xf32>
    %159 = arith.addf %157, %158 : vector<1x512xf32>
    %160 = vector.extract_strided_slice %159 {offsets = [0, 0], sizes = [1, 128], strides = [1, 1]} : vector<1x512xf32> to vector<1x128xf32>
    %161 = arith.negf %160 : vector<1x128xf32>
    %162 = math.exp %161 : vector<1x128xf32>
    %cst_54 = arith.constant 1.000000e+00 : f32
    %163 = vector.broadcast %cst_54 : f32 to vector<1x128xf32>
    %164 = arith.addf %163, %162 : vector<1x128xf32>
    %165 = arith.divf %163, %164 : vector<1x128xf32>
    %166 = vector.extract_strided_slice %159 {offsets = [0, 128], sizes = [1, 128], strides = [1, 1]} : vector<1x512xf32> to vector<1x128xf32>
    %167 = arith.negf %166 : vector<1x128xf32>
    %168 = math.exp %167 : vector<1x128xf32>
    %cst_55 = arith.constant 1.000000e+00 : f32
    %169 = vector.broadcast %cst_55 : f32 to vector<1x128xf32>
    %170 = arith.addf %169, %168 : vector<1x128xf32>
    %171 = arith.divf %169, %170 : vector<1x128xf32>
    %172 = vector.extract_strided_slice %159 {offsets = [0, 256], sizes = [1, 128], strides = [1, 1]} : vector<1x512xf32> to vector<1x128xf32>
    %173 = math.tanh %172 : vector<1x128xf32>
    %174 = vector.extract_strided_slice %159 {offsets = [0, 384], sizes = [1, 128], strides = [1, 1]} : vector<1x512xf32> to vector<1x128xf32>
    %175 = arith.negf %174 : vector<1x128xf32>
    %176 = math.exp %175 : vector<1x128xf32>
    %cst_56 = arith.constant 1.000000e+00 : f32
    %177 = vector.broadcast %cst_56 : f32 to vector<1x128xf32>
    %178 = arith.addf %177, %176 : vector<1x128xf32>
    %179 = arith.divf %177, %178 : vector<1x128xf32>
    %180 = arith.mulf %171, %154 : vector<1x128xf32>
    %181 = arith.mulf %165, %173 : vector<1x128xf32>
    %182 = arith.addf %180, %181 : vector<1x128xf32>
    %183 = math.tanh %182 : vector<1x128xf32>
    %184 = arith.mulf %179, %183 : vector<1x128xf32>
    %185 = vector.extract_strided_slice %40 {offsets = [5, 0], sizes = [1, 512], strides = [1, 1]} : vector<8x512xf32> to vector<1x512xf32>
    %cst_57 = arith.constant dense<0.000000e+00> : vector<1x512xf32>
    %186 = tpu.matmul %184, %42, %cst_57 {dimension_numbers = #tpu.dot_dimension_numbers<[1], [0], [0], [1], [0, 0, 1, 1], [], []>} : vector<1x128xf32>, vector<128x512xf32>, vector<1x512xf32> -> vector<1x512xf32>
    %187 = arith.addf %185, %186 : vector<1x512xf32>
    %188 = vector.extract_strided_slice %187 {offsets = [0, 0], sizes = [1, 128], strides = [1, 1]} : vector<1x512xf32> to vector<1x128xf32>
    %189 = arith.negf %188 : vector<1x128xf32>
    %190 = math.exp %189 : vector<1x128xf32>
    %cst_58 = arith.constant 1.000000e+00 : f32
    %191 = vector.broadcast %cst_58 : f32 to vector<1x128xf32>
    %192 = arith.addf %191, %190 : vector<1x128xf32>
    %193 = arith.divf %191, %192 : vector<1x128xf32>
    %194 = vector.extract_strided_slice %187 {offsets = [0, 128], sizes = [1, 128], strides = [1, 1]} : vector<1x512xf32> to vector<1x128xf32>
    %195 = arith.negf %194 : vector<1x128xf32>
    %196 = math.exp %195 : vector<1x128xf32>
    %cst_59 = arith.constant 1.000000e+00 : f32
    %197 = vector.broadcast %cst_59 : f32 to vector<1x128xf32>
    %198 = arith.addf %197, %196 : vector<1x128xf32>
    %199 = arith.divf %197, %198 : vector<1x128xf32>
    %200 = vector.extract_strided_slice %187 {offsets = [0, 256], sizes = [1, 128], strides = [1, 1]} : vector<1x512xf32> to vector<1x128xf32>
    %201 = math.tanh %200 : vector<1x128xf32>
    %202 = vector.extract_strided_slice %187 {offsets = [0, 384], sizes = [1, 128], strides = [1, 1]} : vector<1x512xf32> to vector<1x128xf32>
    %203 = arith.negf %202 : vector<1x128xf32>
    %204 = math.exp %203 : vector<1x128xf32>
    %cst_60 = arith.constant 1.000000e+00 : f32
    %205 = vector.broadcast %cst_60 : f32 to vector<1x128xf32>
    %206 = arith.addf %205, %204 : vector<1x128xf32>
    %207 = arith.divf %205, %206 : vector<1x128xf32>
    %208 = arith.mulf %199, %182 : vector<1x128xf32>
    %209 = arith.mulf %193, %201 : vector<1x128xf32>
    %210 = arith.addf %208, %209 : vector<1x128xf32>
    %211 = math.tanh %210 : vector<1x128xf32>
    %212 = arith.mulf %207, %211 : vector<1x128xf32>
    %213 = vector.extract_strided_slice %40 {offsets = [6, 0], sizes = [1, 512], strides = [1, 1]} : vector<8x512xf32> to vector<1x512xf32>
    %cst_61 = arith.constant dense<0.000000e+00> : vector<1x512xf32>
    %214 = tpu.matmul %212, %42, %cst_61 {dimension_numbers = #tpu.dot_dimension_numbers<[1], [0], [0], [1], [0, 0, 1, 1], [], []>} : vector<1x128xf32>, vector<128x512xf32>, vector<1x512xf32> -> vector<1x512xf32>
    %215 = arith.addf %213, %214 : vector<1x512xf32>
    %216 = vector.extract_strided_slice %215 {offsets = [0, 0], sizes = [1, 128], strides = [1, 1]} : vector<1x512xf32> to vector<1x128xf32>
    %217 = arith.negf %216 : vector<1x128xf32>
    %218 = math.exp %217 : vector<1x128xf32>
    %cst_62 = arith.constant 1.000000e+00 : f32
    %219 = vector.broadcast %cst_62 : f32 to vector<1x128xf32>
    %220 = arith.addf %219, %218 : vector<1x128xf32>
    %221 = arith.divf %219, %220 : vector<1x128xf32>
    %222 = vector.extract_strided_slice %215 {offsets = [0, 128], sizes = [1, 128], strides = [1, 1]} : vector<1x512xf32> to vector<1x128xf32>
    %223 = arith.negf %222 : vector<1x128xf32>
    %224 = math.exp %223 : vector<1x128xf32>
    %cst_63 = arith.constant 1.000000e+00 : f32
    %225 = vector.broadcast %cst_63 : f32 to vector<1x128xf32>
    %226 = arith.addf %225, %224 : vector<1x128xf32>
    %227 = arith.divf %225, %226 : vector<1x128xf32>
    %228 = vector.extract_strided_slice %215 {offsets = [0, 256], sizes = [1, 128], strides = [1, 1]} : vector<1x512xf32> to vector<1x128xf32>
    %229 = math.tanh %228 : vector<1x128xf32>
    %230 = vector.extract_strided_slice %215 {offsets = [0, 384], sizes = [1, 128], strides = [1, 1]} : vector<1x512xf32> to vector<1x128xf32>
    %231 = arith.negf %230 : vector<1x128xf32>
    %232 = math.exp %231 : vector<1x128xf32>
    %cst_64 = arith.constant 1.000000e+00 : f32
    %233 = vector.broadcast %cst_64 : f32 to vector<1x128xf32>
    %234 = arith.addf %233, %232 : vector<1x128xf32>
    %235 = arith.divf %233, %234 : vector<1x128xf32>
    %236 = arith.mulf %227, %210 : vector<1x128xf32>
    %237 = arith.mulf %221, %229 : vector<1x128xf32>
    %238 = arith.addf %236, %237 : vector<1x128xf32>
    %239 = math.tanh %238 : vector<1x128xf32>
    %240 = arith.mulf %235, %239 : vector<1x128xf32>
    %241 = vector.extract_strided_slice %40 {offsets = [7, 0], sizes = [1, 512], strides = [1, 1]} : vector<8x512xf32> to vector<1x512xf32>
    %cst_65 = arith.constant dense<0.000000e+00> : vector<1x512xf32>
    %242 = tpu.matmul %240, %42, %cst_65 {dimension_numbers = #tpu.dot_dimension_numbers<[1], [0], [0], [1], [0, 0, 1, 1], [], []>} : vector<1x128xf32>, vector<128x512xf32>, vector<1x512xf32> -> vector<1x512xf32>
    %243 = arith.addf %241, %242 : vector<1x512xf32>
    %244 = vector.extract_strided_slice %243 {offsets = [0, 0], sizes = [1, 128], strides = [1, 1]} : vector<1x512xf32> to vector<1x128xf32>
    %245 = arith.negf %244 : vector<1x128xf32>
    %246 = math.exp %245 : vector<1x128xf32>
    %cst_66 = arith.constant 1.000000e+00 : f32
    %247 = vector.broadcast %cst_66 : f32 to vector<1x128xf32>
    %248 = arith.addf %247, %246 : vector<1x128xf32>
    %249 = arith.divf %247, %248 : vector<1x128xf32>
    %250 = vector.extract_strided_slice %243 {offsets = [0, 128], sizes = [1, 128], strides = [1, 1]} : vector<1x512xf32> to vector<1x128xf32>
    %251 = arith.negf %250 : vector<1x128xf32>
    %252 = math.exp %251 : vector<1x128xf32>
    %cst_67 = arith.constant 1.000000e+00 : f32
    %253 = vector.broadcast %cst_67 : f32 to vector<1x128xf32>
    %254 = arith.addf %253, %252 : vector<1x128xf32>
    %255 = arith.divf %253, %254 : vector<1x128xf32>
    %256 = vector.extract_strided_slice %243 {offsets = [0, 256], sizes = [1, 128], strides = [1, 1]} : vector<1x512xf32> to vector<1x128xf32>
    %257 = math.tanh %256 : vector<1x128xf32>
    %258 = vector.extract_strided_slice %243 {offsets = [0, 384], sizes = [1, 128], strides = [1, 1]} : vector<1x512xf32> to vector<1x128xf32>
    %259 = arith.negf %258 : vector<1x128xf32>
    %260 = math.exp %259 : vector<1x128xf32>
    %cst_68 = arith.constant 1.000000e+00 : f32
    %261 = vector.broadcast %cst_68 : f32 to vector<1x128xf32>
    %262 = arith.addf %261, %260 : vector<1x128xf32>
    %263 = arith.divf %261, %262 : vector<1x128xf32>
    %264 = arith.mulf %255, %238 : vector<1x128xf32>
    %265 = arith.mulf %249, %257 : vector<1x128xf32>
    %266 = arith.addf %264, %265 : vector<1x128xf32>
    %267 = math.tanh %266 : vector<1x128xf32>
    %268 = arith.mulf %263, %267 : vector<1x128xf32>
    %269 = tpu.concatenate %72, %100, %128, %156, %184, %212, %240, %268 in 0 : vector<1x128xf32>, vector<1x128xf32>, vector<1x128xf32>, vector<1x128xf32>, vector<1x128xf32>, vector<1x128xf32>, vector<1x128xf32>, vector<1x128xf32> -> vector<8x128xf32>
    %c0_69 = arith.constant 0 : index
    %c0_70 = arith.constant 0 : index
    %c0_71 = arith.constant 0 : index
    %270 = vector.load %arg9[%c0_69, %c0_70, %c0_71] : memref<2x128x512xf32, #tpu.memory_space<vmem>>, vector<1x128x512xf32>
    %271 = vector.shape_cast %270 : vector<1x128x512xf32> to vector<128x512xf32>
    %cst_72 = arith.constant dense<0.000000e+00> : vector<8x512xf32>
    %272 = tpu.matmul %269, %271, %cst_72 {dimension_numbers = #tpu.dot_dimension_numbers<[1], [0], [0], [1], [0, 0, 1, 1], [], []>} : vector<8x128xf32>, vector<128x512xf32>, vector<8x512xf32> -> vector<8x512xf32>
    %c1_73 = arith.constant 1 : index
    %c0_74 = arith.constant 0 : index
    %c0_75 = arith.constant 0 : index
    %273 = vector.load %arg11[%c1_73, %c0_74, %c0_75] : memref<4x1x512xf32, #tpu.memory_space<vmem>>, vector<1x1x512xf32>
    %274 = vector.shape_cast %273 : vector<1x1x512xf32> to vector<1x512xf32>
    %275 = vector.broadcast %274 : vector<1x512xf32> to vector<8x512xf32>
    %276 = arith.addf %272, %275 : vector<8x512xf32>
    %c1_76 = arith.constant 1 : index
    %c0_77 = arith.constant 0 : index
    %c0_78 = arith.constant 0 : index
    %277 = vector.load %arg10[%c1_76, %c0_77, %c0_78] : memref<4x128x512xf32, #tpu.memory_space<vmem>>, vector<1x128x512xf32>
    %278 = vector.shape_cast %277 : vector<1x128x512xf32> to vector<128x512xf32>
    %cst_79 = arith.constant 0.000000e+00 : f32
    %279 = vector.broadcast %cst_79 : f32 to vector<1x128xf32>
    %cst_80 = arith.constant 0.000000e+00 : f32
    %280 = vector.broadcast %cst_80 : f32 to vector<1x128xf32>
    %281 = vector.extract_strided_slice %276 {offsets = [0, 0], sizes = [1, 512], strides = [1, 1]} : vector<8x512xf32> to vector<1x512xf32>
    %cst_81 = arith.constant dense<0.000000e+00> : vector<1x512xf32>
    %282 = tpu.matmul %279, %278, %cst_81 {dimension_numbers = #tpu.dot_dimension_numbers<[1], [0], [0], [1], [0, 0, 1, 1], [], []>} : vector<1x128xf32>, vector<128x512xf32>, vector<1x512xf32> -> vector<1x512xf32>
    %283 = arith.addf %281, %282 : vector<1x512xf32>
    %284 = vector.extract_strided_slice %283 {offsets = [0, 0], sizes = [1, 128], strides = [1, 1]} : vector<1x512xf32> to vector<1x128xf32>
    %285 = arith.negf %284 : vector<1x128xf32>
    %286 = math.exp %285 : vector<1x128xf32>
    %cst_82 = arith.constant 1.000000e+00 : f32
    %287 = vector.broadcast %cst_82 : f32 to vector<1x128xf32>
    %288 = arith.addf %287, %286 : vector<1x128xf32>
    %289 = arith.divf %287, %288 : vector<1x128xf32>
    %290 = vector.extract_strided_slice %283 {offsets = [0, 128], sizes = [1, 128], strides = [1, 1]} : vector<1x512xf32> to vector<1x128xf32>
    %291 = arith.negf %290 : vector<1x128xf32>
    %292 = math.exp %291 : vector<1x128xf32>
    %cst_83 = arith.constant 1.000000e+00 : f32
    %293 = vector.broadcast %cst_83 : f32 to vector<1x128xf32>
    %294 = arith.addf %293, %292 : vector<1x128xf32>
    %295 = arith.divf %293, %294 : vector<1x128xf32>
    %296 = vector.extract_strided_slice %283 {offsets = [0, 256], sizes = [1, 128], strides = [1, 1]} : vector<1x512xf32> to vector<1x128xf32>
    %297 = math.tanh %296 : vector<1x128xf32>
    %298 = vector.extract_strided_slice %283 {offsets = [0, 384], sizes = [1, 128], strides = [1, 1]} : vector<1x512xf32> to vector<1x128xf32>
    %299 = arith.negf %298 : vector<1x128xf32>
    %300 = math.exp %299 : vector<1x128xf32>
    %cst_84 = arith.constant 1.000000e+00 : f32
    %301 = vector.broadcast %cst_84 : f32 to vector<1x128xf32>
    %302 = arith.addf %301, %300 : vector<1x128xf32>
    %303 = arith.divf %301, %302 : vector<1x128xf32>
    %304 = arith.mulf %295, %280 : vector<1x128xf32>
    %305 = arith.mulf %289, %297 : vector<1x128xf32>
    %306 = arith.addf %304, %305 : vector<1x128xf32>
    %307 = math.tanh %306 : vector<1x128xf32>
    %308 = arith.mulf %303, %307 : vector<1x128xf32>
    %309 = vector.extract_strided_slice %276 {offsets = [1, 0], sizes = [1, 512], strides = [1, 1]} : vector<8x512xf32> to vector<1x512xf32>
    %cst_85 = arith.constant dense<0.000000e+00> : vector<1x512xf32>
    %310 = tpu.matmul %308, %278, %cst_85 {dimension_numbers = #tpu.dot_dimension_numbers<[1], [0], [0], [1], [0, 0, 1, 1], [], []>} : vector<1x128xf32>, vector<128x512xf32>, vector<1x512xf32> -> vector<1x512xf32>
    %311 = arith.addf %309, %310 : vector<1x512xf32>
    %312 = vector.extract_strided_slice %311 {offsets = [0, 0], sizes = [1, 128], strides = [1, 1]} : vector<1x512xf32> to vector<1x128xf32>
    %313 = arith.negf %312 : vector<1x128xf32>
    %314 = math.exp %313 : vector<1x128xf32>
    %cst_86 = arith.constant 1.000000e+00 : f32
    %315 = vector.broadcast %cst_86 : f32 to vector<1x128xf32>
    %316 = arith.addf %315, %314 : vector<1x128xf32>
    %317 = arith.divf %315, %316 : vector<1x128xf32>
    %318 = vector.extract_strided_slice %311 {offsets = [0, 128], sizes = [1, 128], strides = [1, 1]} : vector<1x512xf32> to vector<1x128xf32>
    %319 = arith.negf %318 : vector<1x128xf32>
    %320 = math.exp %319 : vector<1x128xf32>
    %cst_87 = arith.constant 1.000000e+00 : f32
    %321 = vector.broadcast %cst_87 : f32 to vector<1x128xf32>
    %322 = arith.addf %321, %320 : vector<1x128xf32>
    %323 = arith.divf %321, %322 : vector<1x128xf32>
    %324 = vector.extract_strided_slice %311 {offsets = [0, 256], sizes = [1, 128], strides = [1, 1]} : vector<1x512xf32> to vector<1x128xf32>
    %325 = math.tanh %324 : vector<1x128xf32>
    %326 = vector.extract_strided_slice %311 {offsets = [0, 384], sizes = [1, 128], strides = [1, 1]} : vector<1x512xf32> to vector<1x128xf32>
    %327 = arith.negf %326 : vector<1x128xf32>
    %328 = math.exp %327 : vector<1x128xf32>
    %cst_88 = arith.constant 1.000000e+00 : f32
    %329 = vector.broadcast %cst_88 : f32 to vector<1x128xf32>
    %330 = arith.addf %329, %328 : vector<1x128xf32>
    %331 = arith.divf %329, %330 : vector<1x128xf32>
    %332 = arith.mulf %323, %306 : vector<1x128xf32>
    %333 = arith.mulf %317, %325 : vector<1x128xf32>
    %334 = arith.addf %332, %333 : vector<1x128xf32>
    %335 = math.tanh %334 : vector<1x128xf32>
    %336 = arith.mulf %331, %335 : vector<1x128xf32>
    %337 = vector.extract_strided_slice %276 {offsets = [2, 0], sizes = [1, 512], strides = [1, 1]} : vector<8x512xf32> to vector<1x512xf32>
    %cst_89 = arith.constant dense<0.000000e+00> : vector<1x512xf32>
    %338 = tpu.matmul %336, %278, %cst_89 {dimension_numbers = #tpu.dot_dimension_numbers<[1], [0], [0], [1], [0, 0, 1, 1], [], []>} : vector<1x128xf32>, vector<128x512xf32>, vector<1x512xf32> -> vector<1x512xf32>
    %339 = arith.addf %337, %338 : vector<1x512xf32>
    %340 = vector.extract_strided_slice %339 {offsets = [0, 0], sizes = [1, 128], strides = [1, 1]} : vector<1x512xf32> to vector<1x128xf32>
    %341 = arith.negf %340 : vector<1x128xf32>
    %342 = math.exp %341 : vector<1x128xf32>
    %cst_90 = arith.constant 1.000000e+00 : f32
    %343 = vector.broadcast %cst_90 : f32 to vector<1x128xf32>
    %344 = arith.addf %343, %342 : vector<1x128xf32>
    %345 = arith.divf %343, %344 : vector<1x128xf32>
    %346 = vector.extract_strided_slice %339 {offsets = [0, 128], sizes = [1, 128], strides = [1, 1]} : vector<1x512xf32> to vector<1x128xf32>
    %347 = arith.negf %346 : vector<1x128xf32>
    %348 = math.exp %347 : vector<1x128xf32>
    %cst_91 = arith.constant 1.000000e+00 : f32
    %349 = vector.broadcast %cst_91 : f32 to vector<1x128xf32>
    %350 = arith.addf %349, %348 : vector<1x128xf32>
    %351 = arith.divf %349, %350 : vector<1x128xf32>
    %352 = vector.extract_strided_slice %339 {offsets = [0, 256], sizes = [1, 128], strides = [1, 1]} : vector<1x512xf32> to vector<1x128xf32>
    %353 = math.tanh %352 : vector<1x128xf32>
    %354 = vector.extract_strided_slice %339 {offsets = [0, 384], sizes = [1, 128], strides = [1, 1]} : vector<1x512xf32> to vector<1x128xf32>
    %355 = arith.negf %354 : vector<1x128xf32>
    %356 = math.exp %355 : vector<1x128xf32>
    %cst_92 = arith.constant 1.000000e+00 : f32
    %357 = vector.broadcast %cst_92 : f32 to vector<1x128xf32>
    %358 = arith.addf %357, %356 : vector<1x128xf32>
    %359 = arith.divf %357, %358 : vector<1x128xf32>
    %360 = arith.mulf %351, %334 : vector<1x128xf32>
    %361 = arith.mulf %345, %353 : vector<1x128xf32>
    %362 = arith.addf %360, %361 : vector<1x128xf32>
    %363 = math.tanh %362 : vector<1x128xf32>
    %364 = arith.mulf %359, %363 : vector<1x128xf32>
    %365 = vector.extract_strided_slice %276 {offsets = [3, 0], sizes = [1, 512], strides = [1, 1]} : vector<8x512xf32> to vector<1x512xf32>
    %cst_93 = arith.constant dense<0.000000e+00> : vector<1x512xf32>
    %366 = tpu.matmul %364, %278, %cst_93 {dimension_numbers = #tpu.dot_dimension_numbers<[1], [0], [0], [1], [0, 0, 1, 1], [], []>} : vector<1x128xf32>, vector<128x512xf32>, vector<1x512xf32> -> vector<1x512xf32>
    %367 = arith.addf %365, %366 : vector<1x512xf32>
    %368 = vector.extract_strided_slice %367 {offsets = [0, 0], sizes = [1, 128], strides = [1, 1]} : vector<1x512xf32> to vector<1x128xf32>
    %369 = arith.negf %368 : vector<1x128xf32>
    %370 = math.exp %369 : vector<1x128xf32>
    %cst_94 = arith.constant 1.000000e+00 : f32
    %371 = vector.broadcast %cst_94 : f32 to vector<1x128xf32>
    %372 = arith.addf %371, %370 : vector<1x128xf32>
    %373 = arith.divf %371, %372 : vector<1x128xf32>
    %374 = vector.extract_strided_slice %367 {offsets = [0, 128], sizes = [1, 128], strides = [1, 1]} : vector<1x512xf32> to vector<1x128xf32>
    %375 = arith.negf %374 : vector<1x128xf32>
    %376 = math.exp %375 : vector<1x128xf32>
    %cst_95 = arith.constant 1.000000e+00 : f32
    %377 = vector.broadcast %cst_95 : f32 to vector<1x128xf32>
    %378 = arith.addf %377, %376 : vector<1x128xf32>
    %379 = arith.divf %377, %378 : vector<1x128xf32>
    %380 = vector.extract_strided_slice %367 {offsets = [0, 256], sizes = [1, 128], strides = [1, 1]} : vector<1x512xf32> to vector<1x128xf32>
    %381 = math.tanh %380 : vector<1x128xf32>
    %382 = vector.extract_strided_slice %367 {offsets = [0, 384], sizes = [1, 128], strides = [1, 1]} : vector<1x512xf32> to vector<1x128xf32>
    %383 = arith.negf %382 : vector<1x128xf32>
    %384 = math.exp %383 : vector<1x128xf32>
    %cst_96 = arith.constant 1.000000e+00 : f32
    %385 = vector.broadcast %cst_96 : f32 to vector<1x128xf32>
    %386 = arith.addf %385, %384 : vector<1x128xf32>
    %387 = arith.divf %385, %386 : vector<1x128xf32>
    %388 = arith.mulf %379, %362 : vector<1x128xf32>
    %389 = arith.mulf %373, %381 : vector<1x128xf32>
    %390 = arith.addf %388, %389 : vector<1x128xf32>
    %391 = math.tanh %390 : vector<1x128xf32>
    %392 = arith.mulf %387, %391 : vector<1x128xf32>
    %393 = vector.extract_strided_slice %276 {offsets = [4, 0], sizes = [1, 512], strides = [1, 1]} : vector<8x512xf32> to vector<1x512xf32>
    %cst_97 = arith.constant dense<0.000000e+00> : vector<1x512xf32>
    %394 = tpu.matmul %392, %278, %cst_97 {dimension_numbers = #tpu.dot_dimension_numbers<[1], [0], [0], [1], [0, 0, 1, 1], [], []>} : vector<1x128xf32>, vector<128x512xf32>, vector<1x512xf32> -> vector<1x512xf32>
    %395 = arith.addf %393, %394 : vector<1x512xf32>
    %396 = vector.extract_strided_slice %395 {offsets = [0, 0], sizes = [1, 128], strides = [1, 1]} : vector<1x512xf32> to vector<1x128xf32>
    %397 = arith.negf %396 : vector<1x128xf32>
    %398 = math.exp %397 : vector<1x128xf32>
    %cst_98 = arith.constant 1.000000e+00 : f32
    %399 = vector.broadcast %cst_98 : f32 to vector<1x128xf32>
    %400 = arith.addf %399, %398 : vector<1x128xf32>
    %401 = arith.divf %399, %400 : vector<1x128xf32>
    %402 = vector.extract_strided_slice %395 {offsets = [0, 128], sizes = [1, 128], strides = [1, 1]} : vector<1x512xf32> to vector<1x128xf32>
    %403 = arith.negf %402 : vector<1x128xf32>
    %404 = math.exp %403 : vector<1x128xf32>
    %cst_99 = arith.constant 1.000000e+00 : f32
    %405 = vector.broadcast %cst_99 : f32 to vector<1x128xf32>
    %406 = arith.addf %405, %404 : vector<1x128xf32>
    %407 = arith.divf %405, %406 : vector<1x128xf32>
    %408 = vector.extract_strided_slice %395 {offsets = [0, 256], sizes = [1, 128], strides = [1, 1]} : vector<1x512xf32> to vector<1x128xf32>
    %409 = math.tanh %408 : vector<1x128xf32>
    %410 = vector.extract_strided_slice %395 {offsets = [0, 384], sizes = [1, 128], strides = [1, 1]} : vector<1x512xf32> to vector<1x128xf32>
    %411 = arith.negf %410 : vector<1x128xf32>
    %412 = math.exp %411 : vector<1x128xf32>
    %cst_100 = arith.constant 1.000000e+00 : f32
    %413 = vector.broadcast %cst_100 : f32 to vector<1x128xf32>
    %414 = arith.addf %413, %412 : vector<1x128xf32>
    %415 = arith.divf %413, %414 : vector<1x128xf32>
    %416 = arith.mulf %407, %390 : vector<1x128xf32>
    %417 = arith.mulf %401, %409 : vector<1x128xf32>
    %418 = arith.addf %416, %417 : vector<1x128xf32>
    %419 = math.tanh %418 : vector<1x128xf32>
    %420 = arith.mulf %415, %419 : vector<1x128xf32>
    %421 = vector.extract_strided_slice %276 {offsets = [5, 0], sizes = [1, 512], strides = [1, 1]} : vector<8x512xf32> to vector<1x512xf32>
    %cst_101 = arith.constant dense<0.000000e+00> : vector<1x512xf32>
    %422 = tpu.matmul %420, %278, %cst_101 {dimension_numbers = #tpu.dot_dimension_numbers<[1], [0], [0], [1], [0, 0, 1, 1], [], []>} : vector<1x128xf32>, vector<128x512xf32>, vector<1x512xf32> -> vector<1x512xf32>
    %423 = arith.addf %421, %422 : vector<1x512xf32>
    %424 = vector.extract_strided_slice %423 {offsets = [0, 0], sizes = [1, 128], strides = [1, 1]} : vector<1x512xf32> to vector<1x128xf32>
    %425 = arith.negf %424 : vector<1x128xf32>
    %426 = math.exp %425 : vector<1x128xf32>
    %cst_102 = arith.constant 1.000000e+00 : f32
    %427 = vector.broadcast %cst_102 : f32 to vector<1x128xf32>
    %428 = arith.addf %427, %426 : vector<1x128xf32>
    %429 = arith.divf %427, %428 : vector<1x128xf32>
    %430 = vector.extract_strided_slice %423 {offsets = [0, 128], sizes = [1, 128], strides = [1, 1]} : vector<1x512xf32> to vector<1x128xf32>
    %431 = arith.negf %430 : vector<1x128xf32>
    %432 = math.exp %431 : vector<1x128xf32>
    %cst_103 = arith.constant 1.000000e+00 : f32
    %433 = vector.broadcast %cst_103 : f32 to vector<1x128xf32>
    %434 = arith.addf %433, %432 : vector<1x128xf32>
    %435 = arith.divf %433, %434 : vector<1x128xf32>
    %436 = vector.extract_strided_slice %423 {offsets = [0, 256], sizes = [1, 128], strides = [1, 1]} : vector<1x512xf32> to vector<1x128xf32>
    %437 = math.tanh %436 : vector<1x128xf32>
    %438 = vector.extract_strided_slice %423 {offsets = [0, 384], sizes = [1, 128], strides = [1, 1]} : vector<1x512xf32> to vector<1x128xf32>
    %439 = arith.negf %438 : vector<1x128xf32>
    %440 = math.exp %439 : vector<1x128xf32>
    %cst_104 = arith.constant 1.000000e+00 : f32
    %441 = vector.broadcast %cst_104 : f32 to vector<1x128xf32>
    %442 = arith.addf %441, %440 : vector<1x128xf32>
    %443 = arith.divf %441, %442 : vector<1x128xf32>
    %444 = arith.mulf %435, %418 : vector<1x128xf32>
    %445 = arith.mulf %429, %437 : vector<1x128xf32>
    %446 = arith.addf %444, %445 : vector<1x128xf32>
    %447 = math.tanh %446 : vector<1x128xf32>
    %448 = arith.mulf %443, %447 : vector<1x128xf32>
    %449 = vector.extract_strided_slice %276 {offsets = [6, 0], sizes = [1, 512], strides = [1, 1]} : vector<8x512xf32> to vector<1x512xf32>
    %cst_105 = arith.constant dense<0.000000e+00> : vector<1x512xf32>
    %450 = tpu.matmul %448, %278, %cst_105 {dimension_numbers = #tpu.dot_dimension_numbers<[1], [0], [0], [1], [0, 0, 1, 1], [], []>} : vector<1x128xf32>, vector<128x512xf32>, vector<1x512xf32> -> vector<1x512xf32>
    %451 = arith.addf %449, %450 : vector<1x512xf32>
    %452 = vector.extract_strided_slice %451 {offsets = [0, 0], sizes = [1, 128], strides = [1, 1]} : vector<1x512xf32> to vector<1x128xf32>
    %453 = arith.negf %452 : vector<1x128xf32>
    %454 = math.exp %453 : vector<1x128xf32>
    %cst_106 = arith.constant 1.000000e+00 : f32
    %455 = vector.broadcast %cst_106 : f32 to vector<1x128xf32>
    %456 = arith.addf %455, %454 : vector<1x128xf32>
    %457 = arith.divf %455, %456 : vector<1x128xf32>
    %458 = vector.extract_strided_slice %451 {offsets = [0, 128], sizes = [1, 128], strides = [1, 1]} : vector<1x512xf32> to vector<1x128xf32>
    %459 = arith.negf %458 : vector<1x128xf32>
    %460 = math.exp %459 : vector<1x128xf32>
    %cst_107 = arith.constant 1.000000e+00 : f32
    %461 = vector.broadcast %cst_107 : f32 to vector<1x128xf32>
    %462 = arith.addf %461, %460 : vector<1x128xf32>
    %463 = arith.divf %461, %462 : vector<1x128xf32>
    %464 = vector.extract_strided_slice %451 {offsets = [0, 256], sizes = [1, 128], strides = [1, 1]} : vector<1x512xf32> to vector<1x128xf32>
    %465 = math.tanh %464 : vector<1x128xf32>
    %466 = vector.extract_strided_slice %451 {offsets = [0, 384], sizes = [1, 128], strides = [1, 1]} : vector<1x512xf32> to vector<1x128xf32>
    %467 = arith.negf %466 : vector<1x128xf32>
    %468 = math.exp %467 : vector<1x128xf32>
    %cst_108 = arith.constant 1.000000e+00 : f32
    %469 = vector.broadcast %cst_108 : f32 to vector<1x128xf32>
    %470 = arith.addf %469, %468 : vector<1x128xf32>
    %471 = arith.divf %469, %470 : vector<1x128xf32>
    %472 = arith.mulf %463, %446 : vector<1x128xf32>
    %473 = arith.mulf %457, %465 : vector<1x128xf32>
    %474 = arith.addf %472, %473 : vector<1x128xf32>
    %475 = math.tanh %474 : vector<1x128xf32>
    %476 = arith.mulf %471, %475 : vector<1x128xf32>
    %477 = vector.extract_strided_slice %276 {offsets = [7, 0], sizes = [1, 512], strides = [1, 1]} : vector<8x512xf32> to vector<1x512xf32>
    %cst_109 = arith.constant dense<0.000000e+00> : vector<1x512xf32>
    %478 = tpu.matmul %476, %278, %cst_109 {dimension_numbers = #tpu.dot_dimension_numbers<[1], [0], [0], [1], [0, 0, 1, 1], [], []>} : vector<1x128xf32>, vector<128x512xf32>, vector<1x512xf32> -> vector<1x512xf32>
    %479 = arith.addf %477, %478 : vector<1x512xf32>
    %480 = vector.extract_strided_slice %479 {offsets = [0, 0], sizes = [1, 128], strides = [1, 1]} : vector<1x512xf32> to vector<1x128xf32>
    %481 = arith.negf %480 : vector<1x128xf32>
    %482 = math.exp %481 : vector<1x128xf32>
    %cst_110 = arith.constant 1.000000e+00 : f32
    %483 = vector.broadcast %cst_110 : f32 to vector<1x128xf32>
    %484 = arith.addf %483, %482 : vector<1x128xf32>
    %485 = arith.divf %483, %484 : vector<1x128xf32>
    %486 = vector.extract_strided_slice %479 {offsets = [0, 128], sizes = [1, 128], strides = [1, 1]} : vector<1x512xf32> to vector<1x128xf32>
    %487 = arith.negf %486 : vector<1x128xf32>
    %488 = math.exp %487 : vector<1x128xf32>
    %cst_111 = arith.constant 1.000000e+00 : f32
    %489 = vector.broadcast %cst_111 : f32 to vector<1x128xf32>
    %490 = arith.addf %489, %488 : vector<1x128xf32>
    %491 = arith.divf %489, %490 : vector<1x128xf32>
    %492 = vector.extract_strided_slice %479 {offsets = [0, 256], sizes = [1, 128], strides = [1, 1]} : vector<1x512xf32> to vector<1x128xf32>
    %493 = math.tanh %492 : vector<1x128xf32>
    %494 = vector.extract_strided_slice %479 {offsets = [0, 384], sizes = [1, 128], strides = [1, 1]} : vector<1x512xf32> to vector<1x128xf32>
    %495 = arith.negf %494 : vector<1x128xf32>
    %496 = math.exp %495 : vector<1x128xf32>
    %cst_112 = arith.constant 1.000000e+00 : f32
    %497 = vector.broadcast %cst_112 : f32 to vector<1x128xf32>
    %498 = arith.addf %497, %496 : vector<1x128xf32>
    %499 = arith.divf %497, %498 : vector<1x128xf32>
    %500 = arith.mulf %491, %474 : vector<1x128xf32>
    %501 = arith.mulf %485, %493 : vector<1x128xf32>
    %502 = arith.addf %500, %501 : vector<1x128xf32>
    %503 = math.tanh %502 : vector<1x128xf32>
    %504 = arith.mulf %499, %503 : vector<1x128xf32>
    %505 = tpu.concatenate %308, %336, %364, %392, %420, %448, %476, %504 in 0 : vector<1x128xf32>, vector<1x128xf32>, vector<1x128xf32>, vector<1x128xf32>, vector<1x128xf32>, vector<1x128xf32>, vector<1x128xf32>, vector<1x128xf32> -> vector<8x128xf32>
    %cst_113 = arith.constant dense<0.000000e+00> : vector<8x128xf32>
    %506 = tpu.matmul %11, %505, %cst_113 {dimension_numbers = #tpu.dot_dimension_numbers<[1], [0], [0], [1], [0, 0, 1, 1], [], []>} : vector<8x8xf32>, vector<8x128xf32>, vector<8x128xf32> -> vector<8x128xf32>
    %cst_114 = arith.constant dense<0.000000e+00> : vector<8x128xf32>
    %507 = tpu.matmul %16, %505, %cst_114 {dimension_numbers = #tpu.dot_dimension_numbers<[1], [0], [0], [1], [0, 0, 1, 1], [], []>} : vector<8x8xf32>, vector<8x128xf32>, vector<8x128xf32> -> vector<8x128xf32>
    %c1_115 = arith.constant 1 : index
    %c0_116 = arith.constant 0 : index
    %c0_117 = arith.constant 0 : index
    %508 = vector.load %arg4[%c1_115, %c0_116, %c0_117] : memref<2x128x128xf32, #tpu.memory_space<vmem>>, vector<1x128x128xf32>
    %509 = vector.shape_cast %508 : vector<1x128x128xf32> to vector<128x128xf32>
    %cst_118 = arith.constant dense<0.000000e+00> : vector<8x128xf32>
    %510 = tpu.matmul %506, %509, %cst_118 {dimension_numbers = #tpu.dot_dimension_numbers<[1], [0], [0], [1], [0, 0, 1, 1], [], []>} : vector<8x128xf32>, vector<128x128xf32>, vector<8x128xf32> -> vector<8x128xf32>
    %c1_119 = arith.constant 1 : index
    %c0_120 = arith.constant 0 : index
    %c0_121 = arith.constant 0 : index
    %511 = vector.load %arg5[%c1_119, %c0_120, %c0_121] : memref<2x128x128xf32, #tpu.memory_space<vmem>>, vector<1x128x128xf32>
    %512 = vector.shape_cast %511 : vector<1x128x128xf32> to vector<128x128xf32>
    %cst_122 = arith.constant dense<0.000000e+00> : vector<8x128xf32>
    %513 = tpu.matmul %507, %512, %cst_122 {dimension_numbers = #tpu.dot_dimension_numbers<[1], [0], [0], [1], [0, 0, 1, 1], [], []>} : vector<8x128xf32>, vector<128x128xf32>, vector<8x128xf32> -> vector<8x128xf32>
    %514 = arith.addf %510, %513 : vector<8x128xf32>
    %c1_123 = arith.constant 1 : index
    %c0_124 = arith.constant 0 : index
    %c0_125 = arith.constant 0 : index
    %515 = vector.load %arg6[%c1_123, %c0_124, %c0_125] : memref<2x1x128xf32, #tpu.memory_space<vmem>>, vector<1x1x128xf32>
    %516 = vector.shape_cast %515 : vector<1x1x128xf32> to vector<1x128xf32>
    %517 = vector.broadcast %516 : vector<1x128xf32> to vector<8x128xf32>
    %518 = arith.addf %514, %517 : vector<8x128xf32>
    %c1_126 = arith.constant 1 : index
    %c0_127 = arith.constant 0 : index
    %c0_128 = arith.constant 0 : index
    %519 = vector.load %arg7[%c1_126, %c0_127, %c0_128] : memref<2x8x512xf32, #tpu.memory_space<vmem>>, vector<1x8x512xf32>
    %520 = vector.shape_cast %519 : vector<1x8x512xf32> to vector<8x512xf32>
    %cst_129 = arith.constant dense<0.000000e+00> : vector<8x512xf32>
    %521 = tpu.matmul %0, %520, %cst_129 {dimension_numbers = #tpu.dot_dimension_numbers<[1], [0], [0], [1], [0, 0, 1, 1], [], []>} : vector<8x8xf32>, vector<8x512xf32>, vector<8x512xf32> -> vector<8x512xf32>
    %c1_130 = arith.constant 1 : index
    %c0_131 = arith.constant 0 : index
    %c0_132 = arith.constant 0 : index
    %522 = vector.load %arg8[%c1_130, %c0_131, %c0_132] : memref<2x128x512xf32, #tpu.memory_space<vmem>>, vector<1x128x512xf32>
    %523 = vector.shape_cast %522 : vector<1x128x512xf32> to vector<128x512xf32>
    %cst_133 = arith.constant dense<0.000000e+00> : vector<8x512xf32>
    %524 = tpu.matmul %518, %523, %cst_133 {dimension_numbers = #tpu.dot_dimension_numbers<[1], [0], [0], [1], [0, 0, 1, 1], [], []>} : vector<8x128xf32>, vector<128x512xf32>, vector<8x512xf32> -> vector<8x512xf32>
    %525 = arith.addf %521, %524 : vector<8x512xf32>
    %c2 = arith.constant 2 : index
    %c0_134 = arith.constant 0 : index
    %c0_135 = arith.constant 0 : index
    %526 = vector.load %arg11[%c2, %c0_134, %c0_135] : memref<4x1x512xf32, #tpu.memory_space<vmem>>, vector<1x1x512xf32>
    %527 = vector.shape_cast %526 : vector<1x1x512xf32> to vector<1x512xf32>
    %528 = vector.broadcast %527 : vector<1x512xf32> to vector<8x512xf32>
    %529 = arith.addf %525, %528 : vector<8x512xf32>
    %c2_136 = arith.constant 2 : index
    %c0_137 = arith.constant 0 : index
    %c0_138 = arith.constant 0 : index
    %530 = vector.load %arg10[%c2_136, %c0_137, %c0_138] : memref<4x128x512xf32, #tpu.memory_space<vmem>>, vector<1x128x512xf32>
    %531 = vector.shape_cast %530 : vector<1x128x512xf32> to vector<128x512xf32>
    %cst_139 = arith.constant 0.000000e+00 : f32
    %532 = vector.broadcast %cst_139 : f32 to vector<1x128xf32>
    %cst_140 = arith.constant 0.000000e+00 : f32
    %533 = vector.broadcast %cst_140 : f32 to vector<1x128xf32>
    %534 = vector.extract_strided_slice %529 {offsets = [0, 0], sizes = [1, 512], strides = [1, 1]} : vector<8x512xf32> to vector<1x512xf32>
    %cst_141 = arith.constant dense<0.000000e+00> : vector<1x512xf32>
    %535 = tpu.matmul %532, %531, %cst_141 {dimension_numbers = #tpu.dot_dimension_numbers<[1], [0], [0], [1], [0, 0, 1, 1], [], []>} : vector<1x128xf32>, vector<128x512xf32>, vector<1x512xf32> -> vector<1x512xf32>
    %536 = arith.addf %534, %535 : vector<1x512xf32>
    %537 = vector.extract_strided_slice %536 {offsets = [0, 0], sizes = [1, 128], strides = [1, 1]} : vector<1x512xf32> to vector<1x128xf32>
    %538 = arith.negf %537 : vector<1x128xf32>
    %539 = math.exp %538 : vector<1x128xf32>
    %cst_142 = arith.constant 1.000000e+00 : f32
    %540 = vector.broadcast %cst_142 : f32 to vector<1x128xf32>
    %541 = arith.addf %540, %539 : vector<1x128xf32>
    %542 = arith.divf %540, %541 : vector<1x128xf32>
    %543 = vector.extract_strided_slice %536 {offsets = [0, 128], sizes = [1, 128], strides = [1, 1]} : vector<1x512xf32> to vector<1x128xf32>
    %544 = arith.negf %543 : vector<1x128xf32>
    %545 = math.exp %544 : vector<1x128xf32>
    %cst_143 = arith.constant 1.000000e+00 : f32
    %546 = vector.broadcast %cst_143 : f32 to vector<1x128xf32>
    %547 = arith.addf %546, %545 : vector<1x128xf32>
    %548 = arith.divf %546, %547 : vector<1x128xf32>
    %549 = vector.extract_strided_slice %536 {offsets = [0, 256], sizes = [1, 128], strides = [1, 1]} : vector<1x512xf32> to vector<1x128xf32>
    %550 = math.tanh %549 : vector<1x128xf32>
    %551 = vector.extract_strided_slice %536 {offsets = [0, 384], sizes = [1, 128], strides = [1, 1]} : vector<1x512xf32> to vector<1x128xf32>
    %552 = arith.negf %551 : vector<1x128xf32>
    %553 = math.exp %552 : vector<1x128xf32>
    %cst_144 = arith.constant 1.000000e+00 : f32
    %554 = vector.broadcast %cst_144 : f32 to vector<1x128xf32>
    %555 = arith.addf %554, %553 : vector<1x128xf32>
    %556 = arith.divf %554, %555 : vector<1x128xf32>
    %557 = arith.mulf %548, %533 : vector<1x128xf32>
    %558 = arith.mulf %542, %550 : vector<1x128xf32>
    %559 = arith.addf %557, %558 : vector<1x128xf32>
    %560 = math.tanh %559 : vector<1x128xf32>
    %561 = arith.mulf %556, %560 : vector<1x128xf32>
    %562 = vector.extract_strided_slice %529 {offsets = [1, 0], sizes = [1, 512], strides = [1, 1]} : vector<8x512xf32> to vector<1x512xf32>
    %cst_145 = arith.constant dense<0.000000e+00> : vector<1x512xf32>
    %563 = tpu.matmul %561, %531, %cst_145 {dimension_numbers = #tpu.dot_dimension_numbers<[1], [0], [0], [1], [0, 0, 1, 1], [], []>} : vector<1x128xf32>, vector<128x512xf32>, vector<1x512xf32> -> vector<1x512xf32>
    %564 = arith.addf %562, %563 : vector<1x512xf32>
    %565 = vector.extract_strided_slice %564 {offsets = [0, 0], sizes = [1, 128], strides = [1, 1]} : vector<1x512xf32> to vector<1x128xf32>
    %566 = arith.negf %565 : vector<1x128xf32>
    %567 = math.exp %566 : vector<1x128xf32>
    %cst_146 = arith.constant 1.000000e+00 : f32
    %568 = vector.broadcast %cst_146 : f32 to vector<1x128xf32>
    %569 = arith.addf %568, %567 : vector<1x128xf32>
    %570 = arith.divf %568, %569 : vector<1x128xf32>
    %571 = vector.extract_strided_slice %564 {offsets = [0, 128], sizes = [1, 128], strides = [1, 1]} : vector<1x512xf32> to vector<1x128xf32>
    %572 = arith.negf %571 : vector<1x128xf32>
    %573 = math.exp %572 : vector<1x128xf32>
    %cst_147 = arith.constant 1.000000e+00 : f32
    %574 = vector.broadcast %cst_147 : f32 to vector<1x128xf32>
    %575 = arith.addf %574, %573 : vector<1x128xf32>
    %576 = arith.divf %574, %575 : vector<1x128xf32>
    %577 = vector.extract_strided_slice %564 {offsets = [0, 256], sizes = [1, 128], strides = [1, 1]} : vector<1x512xf32> to vector<1x128xf32>
    %578 = math.tanh %577 : vector<1x128xf32>
    %579 = vector.extract_strided_slice %564 {offsets = [0, 384], sizes = [1, 128], strides = [1, 1]} : vector<1x512xf32> to vector<1x128xf32>
    %580 = arith.negf %579 : vector<1x128xf32>
    %581 = math.exp %580 : vector<1x128xf32>
    %cst_148 = arith.constant 1.000000e+00 : f32
    %582 = vector.broadcast %cst_148 : f32 to vector<1x128xf32>
    %583 = arith.addf %582, %581 : vector<1x128xf32>
    %584 = arith.divf %582, %583 : vector<1x128xf32>
    %585 = arith.mulf %576, %559 : vector<1x128xf32>
    %586 = arith.mulf %570, %578 : vector<1x128xf32>
    %587 = arith.addf %585, %586 : vector<1x128xf32>
    %588 = math.tanh %587 : vector<1x128xf32>
    %589 = arith.mulf %584, %588 : vector<1x128xf32>
    %590 = vector.extract_strided_slice %529 {offsets = [2, 0], sizes = [1, 512], strides = [1, 1]} : vector<8x512xf32> to vector<1x512xf32>
    %cst_149 = arith.constant dense<0.000000e+00> : vector<1x512xf32>
    %591 = tpu.matmul %589, %531, %cst_149 {dimension_numbers = #tpu.dot_dimension_numbers<[1], [0], [0], [1], [0, 0, 1, 1], [], []>} : vector<1x128xf32>, vector<128x512xf32>, vector<1x512xf32> -> vector<1x512xf32>
    %592 = arith.addf %590, %591 : vector<1x512xf32>
    %593 = vector.extract_strided_slice %592 {offsets = [0, 0], sizes = [1, 128], strides = [1, 1]} : vector<1x512xf32> to vector<1x128xf32>
    %594 = arith.negf %593 : vector<1x128xf32>
    %595 = math.exp %594 : vector<1x128xf32>
    %cst_150 = arith.constant 1.000000e+00 : f32
    %596 = vector.broadcast %cst_150 : f32 to vector<1x128xf32>
    %597 = arith.addf %596, %595 : vector<1x128xf32>
    %598 = arith.divf %596, %597 : vector<1x128xf32>
    %599 = vector.extract_strided_slice %592 {offsets = [0, 128], sizes = [1, 128], strides = [1, 1]} : vector<1x512xf32> to vector<1x128xf32>
    %600 = arith.negf %599 : vector<1x128xf32>
    %601 = math.exp %600 : vector<1x128xf32>
    %cst_151 = arith.constant 1.000000e+00 : f32
    %602 = vector.broadcast %cst_151 : f32 to vector<1x128xf32>
    %603 = arith.addf %602, %601 : vector<1x128xf32>
    %604 = arith.divf %602, %603 : vector<1x128xf32>
    %605 = vector.extract_strided_slice %592 {offsets = [0, 256], sizes = [1, 128], strides = [1, 1]} : vector<1x512xf32> to vector<1x128xf32>
    %606 = math.tanh %605 : vector<1x128xf32>
    %607 = vector.extract_strided_slice %592 {offsets = [0, 384], sizes = [1, 128], strides = [1, 1]} : vector<1x512xf32> to vector<1x128xf32>
    %608 = arith.negf %607 : vector<1x128xf32>
    %609 = math.exp %608 : vector<1x128xf32>
    %cst_152 = arith.constant 1.000000e+00 : f32
    %610 = vector.broadcast %cst_152 : f32 to vector<1x128xf32>
    %611 = arith.addf %610, %609 : vector<1x128xf32>
    %612 = arith.divf %610, %611 : vector<1x128xf32>
    %613 = arith.mulf %604, %587 : vector<1x128xf32>
    %614 = arith.mulf %598, %606 : vector<1x128xf32>
    %615 = arith.addf %613, %614 : vector<1x128xf32>
    %616 = math.tanh %615 : vector<1x128xf32>
    %617 = arith.mulf %612, %616 : vector<1x128xf32>
    %618 = vector.extract_strided_slice %529 {offsets = [3, 0], sizes = [1, 512], strides = [1, 1]} : vector<8x512xf32> to vector<1x512xf32>
    %cst_153 = arith.constant dense<0.000000e+00> : vector<1x512xf32>
    %619 = tpu.matmul %617, %531, %cst_153 {dimension_numbers = #tpu.dot_dimension_numbers<[1], [0], [0], [1], [0, 0, 1, 1], [], []>} : vector<1x128xf32>, vector<128x512xf32>, vector<1x512xf32> -> vector<1x512xf32>
    %620 = arith.addf %618, %619 : vector<1x512xf32>
    %621 = vector.extract_strided_slice %620 {offsets = [0, 0], sizes = [1, 128], strides = [1, 1]} : vector<1x512xf32> to vector<1x128xf32>
    %622 = arith.negf %621 : vector<1x128xf32>
    %623 = math.exp %622 : vector<1x128xf32>
    %cst_154 = arith.constant 1.000000e+00 : f32
    %624 = vector.broadcast %cst_154 : f32 to vector<1x128xf32>
    %625 = arith.addf %624, %623 : vector<1x128xf32>
    %626 = arith.divf %624, %625 : vector<1x128xf32>
    %627 = vector.extract_strided_slice %620 {offsets = [0, 128], sizes = [1, 128], strides = [1, 1]} : vector<1x512xf32> to vector<1x128xf32>
    %628 = arith.negf %627 : vector<1x128xf32>
    %629 = math.exp %628 : vector<1x128xf32>
    %cst_155 = arith.constant 1.000000e+00 : f32
    %630 = vector.broadcast %cst_155 : f32 to vector<1x128xf32>
    %631 = arith.addf %630, %629 : vector<1x128xf32>
    %632 = arith.divf %630, %631 : vector<1x128xf32>
    %633 = vector.extract_strided_slice %620 {offsets = [0, 256], sizes = [1, 128], strides = [1, 1]} : vector<1x512xf32> to vector<1x128xf32>
    %634 = math.tanh %633 : vector<1x128xf32>
    %635 = vector.extract_strided_slice %620 {offsets = [0, 384], sizes = [1, 128], strides = [1, 1]} : vector<1x512xf32> to vector<1x128xf32>
    %636 = arith.negf %635 : vector<1x128xf32>
    %637 = math.exp %636 : vector<1x128xf32>
    %cst_156 = arith.constant 1.000000e+00 : f32
    %638 = vector.broadcast %cst_156 : f32 to vector<1x128xf32>
    %639 = arith.addf %638, %637 : vector<1x128xf32>
    %640 = arith.divf %638, %639 : vector<1x128xf32>
    %641 = arith.mulf %632, %615 : vector<1x128xf32>
    %642 = arith.mulf %626, %634 : vector<1x128xf32>
    %643 = arith.addf %641, %642 : vector<1x128xf32>
    %644 = math.tanh %643 : vector<1x128xf32>
    %645 = arith.mulf %640, %644 : vector<1x128xf32>
    %646 = vector.extract_strided_slice %529 {offsets = [4, 0], sizes = [1, 512], strides = [1, 1]} : vector<8x512xf32> to vector<1x512xf32>
    %cst_157 = arith.constant dense<0.000000e+00> : vector<1x512xf32>
    %647 = tpu.matmul %645, %531, %cst_157 {dimension_numbers = #tpu.dot_dimension_numbers<[1], [0], [0], [1], [0, 0, 1, 1], [], []>} : vector<1x128xf32>, vector<128x512xf32>, vector<1x512xf32> -> vector<1x512xf32>
    %648 = arith.addf %646, %647 : vector<1x512xf32>
    %649 = vector.extract_strided_slice %648 {offsets = [0, 0], sizes = [1, 128], strides = [1, 1]} : vector<1x512xf32> to vector<1x128xf32>
    %650 = arith.negf %649 : vector<1x128xf32>
    %651 = math.exp %650 : vector<1x128xf32>
    %cst_158 = arith.constant 1.000000e+00 : f32
    %652 = vector.broadcast %cst_158 : f32 to vector<1x128xf32>
    %653 = arith.addf %652, %651 : vector<1x128xf32>
    %654 = arith.divf %652, %653 : vector<1x128xf32>
    %655 = vector.extract_strided_slice %648 {offsets = [0, 128], sizes = [1, 128], strides = [1, 1]} : vector<1x512xf32> to vector<1x128xf32>
    %656 = arith.negf %655 : vector<1x128xf32>
    %657 = math.exp %656 : vector<1x128xf32>
    %cst_159 = arith.constant 1.000000e+00 : f32
    %658 = vector.broadcast %cst_159 : f32 to vector<1x128xf32>
    %659 = arith.addf %658, %657 : vector<1x128xf32>
    %660 = arith.divf %658, %659 : vector<1x128xf32>
    %661 = vector.extract_strided_slice %648 {offsets = [0, 256], sizes = [1, 128], strides = [1, 1]} : vector<1x512xf32> to vector<1x128xf32>
    %662 = math.tanh %661 : vector<1x128xf32>
    %663 = vector.extract_strided_slice %648 {offsets = [0, 384], sizes = [1, 128], strides = [1, 1]} : vector<1x512xf32> to vector<1x128xf32>
    %664 = arith.negf %663 : vector<1x128xf32>
    %665 = math.exp %664 : vector<1x128xf32>
    %cst_160 = arith.constant 1.000000e+00 : f32
    %666 = vector.broadcast %cst_160 : f32 to vector<1x128xf32>
    %667 = arith.addf %666, %665 : vector<1x128xf32>
    %668 = arith.divf %666, %667 : vector<1x128xf32>
    %669 = arith.mulf %660, %643 : vector<1x128xf32>
    %670 = arith.mulf %654, %662 : vector<1x128xf32>
    %671 = arith.addf %669, %670 : vector<1x128xf32>
    %672 = math.tanh %671 : vector<1x128xf32>
    %673 = arith.mulf %668, %672 : vector<1x128xf32>
    %674 = vector.extract_strided_slice %529 {offsets = [5, 0], sizes = [1, 512], strides = [1, 1]} : vector<8x512xf32> to vector<1x512xf32>
    %cst_161 = arith.constant dense<0.000000e+00> : vector<1x512xf32>
    %675 = tpu.matmul %673, %531, %cst_161 {dimension_numbers = #tpu.dot_dimension_numbers<[1], [0], [0], [1], [0, 0, 1, 1], [], []>} : vector<1x128xf32>, vector<128x512xf32>, vector<1x512xf32> -> vector<1x512xf32>
    %676 = arith.addf %674, %675 : vector<1x512xf32>
    %677 = vector.extract_strided_slice %676 {offsets = [0, 0], sizes = [1, 128], strides = [1, 1]} : vector<1x512xf32> to vector<1x128xf32>
    %678 = arith.negf %677 : vector<1x128xf32>
    %679 = math.exp %678 : vector<1x128xf32>
    %cst_162 = arith.constant 1.000000e+00 : f32
    %680 = vector.broadcast %cst_162 : f32 to vector<1x128xf32>
    %681 = arith.addf %680, %679 : vector<1x128xf32>
    %682 = arith.divf %680, %681 : vector<1x128xf32>
    %683 = vector.extract_strided_slice %676 {offsets = [0, 128], sizes = [1, 128], strides = [1, 1]} : vector<1x512xf32> to vector<1x128xf32>
    %684 = arith.negf %683 : vector<1x128xf32>
    %685 = math.exp %684 : vector<1x128xf32>
    %cst_163 = arith.constant 1.000000e+00 : f32
    %686 = vector.broadcast %cst_163 : f32 to vector<1x128xf32>
    %687 = arith.addf %686, %685 : vector<1x128xf32>
    %688 = arith.divf %686, %687 : vector<1x128xf32>
    %689 = vector.extract_strided_slice %676 {offsets = [0, 256], sizes = [1, 128], strides = [1, 1]} : vector<1x512xf32> to vector<1x128xf32>
    %690 = math.tanh %689 : vector<1x128xf32>
    %691 = vector.extract_strided_slice %676 {offsets = [0, 384], sizes = [1, 128], strides = [1, 1]} : vector<1x512xf32> to vector<1x128xf32>
    %692 = arith.negf %691 : vector<1x128xf32>
    %693 = math.exp %692 : vector<1x128xf32>
    %cst_164 = arith.constant 1.000000e+00 : f32
    %694 = vector.broadcast %cst_164 : f32 to vector<1x128xf32>
    %695 = arith.addf %694, %693 : vector<1x128xf32>
    %696 = arith.divf %694, %695 : vector<1x128xf32>
    %697 = arith.mulf %688, %671 : vector<1x128xf32>
    %698 = arith.mulf %682, %690 : vector<1x128xf32>
    %699 = arith.addf %697, %698 : vector<1x128xf32>
    %700 = math.tanh %699 : vector<1x128xf32>
    %701 = arith.mulf %696, %700 : vector<1x128xf32>
    %702 = vector.extract_strided_slice %529 {offsets = [6, 0], sizes = [1, 512], strides = [1, 1]} : vector<8x512xf32> to vector<1x512xf32>
    %cst_165 = arith.constant dense<0.000000e+00> : vector<1x512xf32>
    %703 = tpu.matmul %701, %531, %cst_165 {dimension_numbers = #tpu.dot_dimension_numbers<[1], [0], [0], [1], [0, 0, 1, 1], [], []>} : vector<1x128xf32>, vector<128x512xf32>, vector<1x512xf32> -> vector<1x512xf32>
    %704 = arith.addf %702, %703 : vector<1x512xf32>
    %705 = vector.extract_strided_slice %704 {offsets = [0, 0], sizes = [1, 128], strides = [1, 1]} : vector<1x512xf32> to vector<1x128xf32>
    %706 = arith.negf %705 : vector<1x128xf32>
    %707 = math.exp %706 : vector<1x128xf32>
    %cst_166 = arith.constant 1.000000e+00 : f32
    %708 = vector.broadcast %cst_166 : f32 to vector<1x128xf32>
    %709 = arith.addf %708, %707 : vector<1x128xf32>
    %710 = arith.divf %708, %709 : vector<1x128xf32>
    %711 = vector.extract_strided_slice %704 {offsets = [0, 128], sizes = [1, 128], strides = [1, 1]} : vector<1x512xf32> to vector<1x128xf32>
    %712 = arith.negf %711 : vector<1x128xf32>
    %713 = math.exp %712 : vector<1x128xf32>
    %cst_167 = arith.constant 1.000000e+00 : f32
    %714 = vector.broadcast %cst_167 : f32 to vector<1x128xf32>
    %715 = arith.addf %714, %713 : vector<1x128xf32>
    %716 = arith.divf %714, %715 : vector<1x128xf32>
    %717 = vector.extract_strided_slice %704 {offsets = [0, 256], sizes = [1, 128], strides = [1, 1]} : vector<1x512xf32> to vector<1x128xf32>
    %718 = math.tanh %717 : vector<1x128xf32>
    %719 = vector.extract_strided_slice %704 {offsets = [0, 384], sizes = [1, 128], strides = [1, 1]} : vector<1x512xf32> to vector<1x128xf32>
    %720 = arith.negf %719 : vector<1x128xf32>
    %721 = math.exp %720 : vector<1x128xf32>
    %cst_168 = arith.constant 1.000000e+00 : f32
    %722 = vector.broadcast %cst_168 : f32 to vector<1x128xf32>
    %723 = arith.addf %722, %721 : vector<1x128xf32>
    %724 = arith.divf %722, %723 : vector<1x128xf32>
    %725 = arith.mulf %716, %699 : vector<1x128xf32>
    %726 = arith.mulf %710, %718 : vector<1x128xf32>
    %727 = arith.addf %725, %726 : vector<1x128xf32>
    %728 = math.tanh %727 : vector<1x128xf32>
    %729 = arith.mulf %724, %728 : vector<1x128xf32>
    %730 = vector.extract_strided_slice %529 {offsets = [7, 0], sizes = [1, 512], strides = [1, 1]} : vector<8x512xf32> to vector<1x512xf32>
    %cst_169 = arith.constant dense<0.000000e+00> : vector<1x512xf32>
    %731 = tpu.matmul %729, %531, %cst_169 {dimension_numbers = #tpu.dot_dimension_numbers<[1], [0], [0], [1], [0, 0, 1, 1], [], []>} : vector<1x128xf32>, vector<128x512xf32>, vector<1x512xf32> -> vector<1x512xf32>
    %732 = arith.addf %730, %731 : vector<1x512xf32>
    %733 = vector.extract_strided_slice %732 {offsets = [0, 0], sizes = [1, 128], strides = [1, 1]} : vector<1x512xf32> to vector<1x128xf32>
    %734 = arith.negf %733 : vector<1x128xf32>
    %735 = math.exp %734 : vector<1x128xf32>
    %cst_170 = arith.constant 1.000000e+00 : f32
    %736 = vector.broadcast %cst_170 : f32 to vector<1x128xf32>
    %737 = arith.addf %736, %735 : vector<1x128xf32>
    %738 = arith.divf %736, %737 : vector<1x128xf32>
    %739 = vector.extract_strided_slice %732 {offsets = [0, 128], sizes = [1, 128], strides = [1, 1]} : vector<1x512xf32> to vector<1x128xf32>
    %740 = arith.negf %739 : vector<1x128xf32>
    %741 = math.exp %740 : vector<1x128xf32>
    %cst_171 = arith.constant 1.000000e+00 : f32
    %742 = vector.broadcast %cst_171 : f32 to vector<1x128xf32>
    %743 = arith.addf %742, %741 : vector<1x128xf32>
    %744 = arith.divf %742, %743 : vector<1x128xf32>
    %745 = vector.extract_strided_slice %732 {offsets = [0, 256], sizes = [1, 128], strides = [1, 1]} : vector<1x512xf32> to vector<1x128xf32>
    %746 = math.tanh %745 : vector<1x128xf32>
    %747 = vector.extract_strided_slice %732 {offsets = [0, 384], sizes = [1, 128], strides = [1, 1]} : vector<1x512xf32> to vector<1x128xf32>
    %748 = arith.negf %747 : vector<1x128xf32>
    %749 = math.exp %748 : vector<1x128xf32>
    %cst_172 = arith.constant 1.000000e+00 : f32
    %750 = vector.broadcast %cst_172 : f32 to vector<1x128xf32>
    %751 = arith.addf %750, %749 : vector<1x128xf32>
    %752 = arith.divf %750, %751 : vector<1x128xf32>
    %753 = arith.mulf %744, %727 : vector<1x128xf32>
    %754 = arith.mulf %738, %746 : vector<1x128xf32>
    %755 = arith.addf %753, %754 : vector<1x128xf32>
    %756 = math.tanh %755 : vector<1x128xf32>
    %757 = arith.mulf %752, %756 : vector<1x128xf32>
    %758 = tpu.concatenate %561, %589, %617, %645, %673, %701, %729, %757 in 0 : vector<1x128xf32>, vector<1x128xf32>, vector<1x128xf32>, vector<1x128xf32>, vector<1x128xf32>, vector<1x128xf32>, vector<1x128xf32>, vector<1x128xf32> -> vector<8x128xf32>
    %c1_173 = arith.constant 1 : index
    %c0_174 = arith.constant 0 : index
    %c0_175 = arith.constant 0 : index
    %759 = vector.load %arg9[%c1_173, %c0_174, %c0_175] : memref<2x128x512xf32, #tpu.memory_space<vmem>>, vector<1x128x512xf32>
    %760 = vector.shape_cast %759 : vector<1x128x512xf32> to vector<128x512xf32>
    %cst_176 = arith.constant dense<0.000000e+00> : vector<8x512xf32>
    %761 = tpu.matmul %758, %760, %cst_176 {dimension_numbers = #tpu.dot_dimension_numbers<[1], [0], [0], [1], [0, 0, 1, 1], [], []>} : vector<8x128xf32>, vector<128x512xf32>, vector<8x512xf32> -> vector<8x512xf32>
    %c3 = arith.constant 3 : index
    %c0_177 = arith.constant 0 : index
    %c0_178 = arith.constant 0 : index
    %762 = vector.load %arg11[%c3, %c0_177, %c0_178] : memref<4x1x512xf32, #tpu.memory_space<vmem>>, vector<1x1x512xf32>
    %763 = vector.shape_cast %762 : vector<1x1x512xf32> to vector<1x512xf32>
    %764 = vector.broadcast %763 : vector<1x512xf32> to vector<8x512xf32>
    %765 = arith.addf %761, %764 : vector<8x512xf32>
    %c3_179 = arith.constant 3 : index
    %c0_180 = arith.constant 0 : index
    %c0_181 = arith.constant 0 : index
    %766 = vector.load %arg10[%c3_179, %c0_180, %c0_181] : memref<4x128x512xf32, #tpu.memory_space<vmem>>, vector<1x128x512xf32>
    %767 = vector.shape_cast %766 : vector<1x128x512xf32> to vector<128x512xf32>
    %cst_182 = arith.constant 0.000000e+00 : f32
    %768 = vector.broadcast %cst_182 : f32 to vector<1x128xf32>
    %cst_183 = arith.constant 0.000000e+00 : f32
    %769 = vector.broadcast %cst_183 : f32 to vector<1x128xf32>
    %770 = vector.extract_strided_slice %765 {offsets = [0, 0], sizes = [1, 512], strides = [1, 1]} : vector<8x512xf32> to vector<1x512xf32>
    %cst_184 = arith.constant dense<0.000000e+00> : vector<1x512xf32>
    %771 = tpu.matmul %768, %767, %cst_184 {dimension_numbers = #tpu.dot_dimension_numbers<[1], [0], [0], [1], [0, 0, 1, 1], [], []>} : vector<1x128xf32>, vector<128x512xf32>, vector<1x512xf32> -> vector<1x512xf32>
    %772 = arith.addf %770, %771 : vector<1x512xf32>
    %773 = vector.extract_strided_slice %772 {offsets = [0, 0], sizes = [1, 128], strides = [1, 1]} : vector<1x512xf32> to vector<1x128xf32>
    %774 = arith.negf %773 : vector<1x128xf32>
    %775 = math.exp %774 : vector<1x128xf32>
    %cst_185 = arith.constant 1.000000e+00 : f32
    %776 = vector.broadcast %cst_185 : f32 to vector<1x128xf32>
    %777 = arith.addf %776, %775 : vector<1x128xf32>
    %778 = arith.divf %776, %777 : vector<1x128xf32>
    %779 = vector.extract_strided_slice %772 {offsets = [0, 128], sizes = [1, 128], strides = [1, 1]} : vector<1x512xf32> to vector<1x128xf32>
    %780 = arith.negf %779 : vector<1x128xf32>
    %781 = math.exp %780 : vector<1x128xf32>
    %cst_186 = arith.constant 1.000000e+00 : f32
    %782 = vector.broadcast %cst_186 : f32 to vector<1x128xf32>
    %783 = arith.addf %782, %781 : vector<1x128xf32>
    %784 = arith.divf %782, %783 : vector<1x128xf32>
    %785 = vector.extract_strided_slice %772 {offsets = [0, 256], sizes = [1, 128], strides = [1, 1]} : vector<1x512xf32> to vector<1x128xf32>
    %786 = math.tanh %785 : vector<1x128xf32>
    %787 = vector.extract_strided_slice %772 {offsets = [0, 384], sizes = [1, 128], strides = [1, 1]} : vector<1x512xf32> to vector<1x128xf32>
    %788 = arith.negf %787 : vector<1x128xf32>
    %789 = math.exp %788 : vector<1x128xf32>
    %cst_187 = arith.constant 1.000000e+00 : f32
    %790 = vector.broadcast %cst_187 : f32 to vector<1x128xf32>
    %791 = arith.addf %790, %789 : vector<1x128xf32>
    %792 = arith.divf %790, %791 : vector<1x128xf32>
    %793 = arith.mulf %784, %769 : vector<1x128xf32>
    %794 = arith.mulf %778, %786 : vector<1x128xf32>
    %795 = arith.addf %793, %794 : vector<1x128xf32>
    %796 = math.tanh %795 : vector<1x128xf32>
    %797 = arith.mulf %792, %796 : vector<1x128xf32>
    %798 = vector.extract_strided_slice %765 {offsets = [1, 0], sizes = [1, 512], strides = [1, 1]} : vector<8x512xf32> to vector<1x512xf32>
    %cst_188 = arith.constant dense<0.000000e+00> : vector<1x512xf32>
    %799 = tpu.matmul %797, %767, %cst_188 {dimension_numbers = #tpu.dot_dimension_numbers<[1], [0], [0], [1], [0, 0, 1, 1], [], []>} : vector<1x128xf32>, vector<128x512xf32>, vector<1x512xf32> -> vector<1x512xf32>
    %800 = arith.addf %798, %799 : vector<1x512xf32>
    %801 = vector.extract_strided_slice %800 {offsets = [0, 0], sizes = [1, 128], strides = [1, 1]} : vector<1x512xf32> to vector<1x128xf32>
    %802 = arith.negf %801 : vector<1x128xf32>
    %803 = math.exp %802 : vector<1x128xf32>
    %cst_189 = arith.constant 1.000000e+00 : f32
    %804 = vector.broadcast %cst_189 : f32 to vector<1x128xf32>
    %805 = arith.addf %804, %803 : vector<1x128xf32>
    %806 = arith.divf %804, %805 : vector<1x128xf32>
    %807 = vector.extract_strided_slice %800 {offsets = [0, 128], sizes = [1, 128], strides = [1, 1]} : vector<1x512xf32> to vector<1x128xf32>
    %808 = arith.negf %807 : vector<1x128xf32>
    %809 = math.exp %808 : vector<1x128xf32>
    %cst_190 = arith.constant 1.000000e+00 : f32
    %810 = vector.broadcast %cst_190 : f32 to vector<1x128xf32>
    %811 = arith.addf %810, %809 : vector<1x128xf32>
    %812 = arith.divf %810, %811 : vector<1x128xf32>
    %813 = vector.extract_strided_slice %800 {offsets = [0, 256], sizes = [1, 128], strides = [1, 1]} : vector<1x512xf32> to vector<1x128xf32>
    %814 = math.tanh %813 : vector<1x128xf32>
    %815 = vector.extract_strided_slice %800 {offsets = [0, 384], sizes = [1, 128], strides = [1, 1]} : vector<1x512xf32> to vector<1x128xf32>
    %816 = arith.negf %815 : vector<1x128xf32>
    %817 = math.exp %816 : vector<1x128xf32>
    %cst_191 = arith.constant 1.000000e+00 : f32
    %818 = vector.broadcast %cst_191 : f32 to vector<1x128xf32>
    %819 = arith.addf %818, %817 : vector<1x128xf32>
    %820 = arith.divf %818, %819 : vector<1x128xf32>
    %821 = arith.mulf %812, %795 : vector<1x128xf32>
    %822 = arith.mulf %806, %814 : vector<1x128xf32>
    %823 = arith.addf %821, %822 : vector<1x128xf32>
    %824 = math.tanh %823 : vector<1x128xf32>
    %825 = arith.mulf %820, %824 : vector<1x128xf32>
    %826 = vector.extract_strided_slice %765 {offsets = [2, 0], sizes = [1, 512], strides = [1, 1]} : vector<8x512xf32> to vector<1x512xf32>
    %cst_192 = arith.constant dense<0.000000e+00> : vector<1x512xf32>
    %827 = tpu.matmul %825, %767, %cst_192 {dimension_numbers = #tpu.dot_dimension_numbers<[1], [0], [0], [1], [0, 0, 1, 1], [], []>} : vector<1x128xf32>, vector<128x512xf32>, vector<1x512xf32> -> vector<1x512xf32>
    %828 = arith.addf %826, %827 : vector<1x512xf32>
    %829 = vector.extract_strided_slice %828 {offsets = [0, 0], sizes = [1, 128], strides = [1, 1]} : vector<1x512xf32> to vector<1x128xf32>
    %830 = arith.negf %829 : vector<1x128xf32>
    %831 = math.exp %830 : vector<1x128xf32>
    %cst_193 = arith.constant 1.000000e+00 : f32
    %832 = vector.broadcast %cst_193 : f32 to vector<1x128xf32>
    %833 = arith.addf %832, %831 : vector<1x128xf32>
    %834 = arith.divf %832, %833 : vector<1x128xf32>
    %835 = vector.extract_strided_slice %828 {offsets = [0, 128], sizes = [1, 128], strides = [1, 1]} : vector<1x512xf32> to vector<1x128xf32>
    %836 = arith.negf %835 : vector<1x128xf32>
    %837 = math.exp %836 : vector<1x128xf32>
    %cst_194 = arith.constant 1.000000e+00 : f32
    %838 = vector.broadcast %cst_194 : f32 to vector<1x128xf32>
    %839 = arith.addf %838, %837 : vector<1x128xf32>
    %840 = arith.divf %838, %839 : vector<1x128xf32>
    %841 = vector.extract_strided_slice %828 {offsets = [0, 256], sizes = [1, 128], strides = [1, 1]} : vector<1x512xf32> to vector<1x128xf32>
    %842 = math.tanh %841 : vector<1x128xf32>
    %843 = vector.extract_strided_slice %828 {offsets = [0, 384], sizes = [1, 128], strides = [1, 1]} : vector<1x512xf32> to vector<1x128xf32>
    %844 = arith.negf %843 : vector<1x128xf32>
    %845 = math.exp %844 : vector<1x128xf32>
    %cst_195 = arith.constant 1.000000e+00 : f32
    %846 = vector.broadcast %cst_195 : f32 to vector<1x128xf32>
    %847 = arith.addf %846, %845 : vector<1x128xf32>
    %848 = arith.divf %846, %847 : vector<1x128xf32>
    %849 = arith.mulf %840, %823 : vector<1x128xf32>
    %850 = arith.mulf %834, %842 : vector<1x128xf32>
    %851 = arith.addf %849, %850 : vector<1x128xf32>
    %852 = math.tanh %851 : vector<1x128xf32>
    %853 = arith.mulf %848, %852 : vector<1x128xf32>
    %854 = vector.extract_strided_slice %765 {offsets = [3, 0], sizes = [1, 512], strides = [1, 1]} : vector<8x512xf32> to vector<1x512xf32>
    %cst_196 = arith.constant dense<0.000000e+00> : vector<1x512xf32>
    %855 = tpu.matmul %853, %767, %cst_196 {dimension_numbers = #tpu.dot_dimension_numbers<[1], [0], [0], [1], [0, 0, 1, 1], [], []>} : vector<1x128xf32>, vector<128x512xf32>, vector<1x512xf32> -> vector<1x512xf32>
    %856 = arith.addf %854, %855 : vector<1x512xf32>
    %857 = vector.extract_strided_slice %856 {offsets = [0, 0], sizes = [1, 128], strides = [1, 1]} : vector<1x512xf32> to vector<1x128xf32>
    %858 = arith.negf %857 : vector<1x128xf32>
    %859 = math.exp %858 : vector<1x128xf32>
    %cst_197 = arith.constant 1.000000e+00 : f32
    %860 = vector.broadcast %cst_197 : f32 to vector<1x128xf32>
    %861 = arith.addf %860, %859 : vector<1x128xf32>
    %862 = arith.divf %860, %861 : vector<1x128xf32>
    %863 = vector.extract_strided_slice %856 {offsets = [0, 128], sizes = [1, 128], strides = [1, 1]} : vector<1x512xf32> to vector<1x128xf32>
    %864 = arith.negf %863 : vector<1x128xf32>
    %865 = math.exp %864 : vector<1x128xf32>
    %cst_198 = arith.constant 1.000000e+00 : f32
    %866 = vector.broadcast %cst_198 : f32 to vector<1x128xf32>
    %867 = arith.addf %866, %865 : vector<1x128xf32>
    %868 = arith.divf %866, %867 : vector<1x128xf32>
    %869 = vector.extract_strided_slice %856 {offsets = [0, 256], sizes = [1, 128], strides = [1, 1]} : vector<1x512xf32> to vector<1x128xf32>
    %870 = math.tanh %869 : vector<1x128xf32>
    %871 = vector.extract_strided_slice %856 {offsets = [0, 384], sizes = [1, 128], strides = [1, 1]} : vector<1x512xf32> to vector<1x128xf32>
    %872 = arith.negf %871 : vector<1x128xf32>
    %873 = math.exp %872 : vector<1x128xf32>
    %cst_199 = arith.constant 1.000000e+00 : f32
    %874 = vector.broadcast %cst_199 : f32 to vector<1x128xf32>
    %875 = arith.addf %874, %873 : vector<1x128xf32>
    %876 = arith.divf %874, %875 : vector<1x128xf32>
    %877 = arith.mulf %868, %851 : vector<1x128xf32>
    %878 = arith.mulf %862, %870 : vector<1x128xf32>
    %879 = arith.addf %877, %878 : vector<1x128xf32>
    %880 = math.tanh %879 : vector<1x128xf32>
    %881 = arith.mulf %876, %880 : vector<1x128xf32>
    %882 = vector.extract_strided_slice %765 {offsets = [4, 0], sizes = [1, 512], strides = [1, 1]} : vector<8x512xf32> to vector<1x512xf32>
    %cst_200 = arith.constant dense<0.000000e+00> : vector<1x512xf32>
    %883 = tpu.matmul %881, %767, %cst_200 {dimension_numbers = #tpu.dot_dimension_numbers<[1], [0], [0], [1], [0, 0, 1, 1], [], []>} : vector<1x128xf32>, vector<128x512xf32>, vector<1x512xf32> -> vector<1x512xf32>
    %884 = arith.addf %882, %883 : vector<1x512xf32>
    %885 = vector.extract_strided_slice %884 {offsets = [0, 0], sizes = [1, 128], strides = [1, 1]} : vector<1x512xf32> to vector<1x128xf32>
    %886 = arith.negf %885 : vector<1x128xf32>
    %887 = math.exp %886 : vector<1x128xf32>
    %cst_201 = arith.constant 1.000000e+00 : f32
    %888 = vector.broadcast %cst_201 : f32 to vector<1x128xf32>
    %889 = arith.addf %888, %887 : vector<1x128xf32>
    %890 = arith.divf %888, %889 : vector<1x128xf32>
    %891 = vector.extract_strided_slice %884 {offsets = [0, 128], sizes = [1, 128], strides = [1, 1]} : vector<1x512xf32> to vector<1x128xf32>
    %892 = arith.negf %891 : vector<1x128xf32>
    %893 = math.exp %892 : vector<1x128xf32>
    %cst_202 = arith.constant 1.000000e+00 : f32
    %894 = vector.broadcast %cst_202 : f32 to vector<1x128xf32>
    %895 = arith.addf %894, %893 : vector<1x128xf32>
    %896 = arith.divf %894, %895 : vector<1x128xf32>
    %897 = vector.extract_strided_slice %884 {offsets = [0, 256], sizes = [1, 128], strides = [1, 1]} : vector<1x512xf32> to vector<1x128xf32>
    %898 = math.tanh %897 : vector<1x128xf32>
    %899 = vector.extract_strided_slice %884 {offsets = [0, 384], sizes = [1, 128], strides = [1, 1]} : vector<1x512xf32> to vector<1x128xf32>
    %900 = arith.negf %899 : vector<1x128xf32>
    %901 = math.exp %900 : vector<1x128xf32>
    %cst_203 = arith.constant 1.000000e+00 : f32
    %902 = vector.broadcast %cst_203 : f32 to vector<1x128xf32>
    %903 = arith.addf %902, %901 : vector<1x128xf32>
    %904 = arith.divf %902, %903 : vector<1x128xf32>
    %905 = arith.mulf %896, %879 : vector<1x128xf32>
    %906 = arith.mulf %890, %898 : vector<1x128xf32>
    %907 = arith.addf %905, %906 : vector<1x128xf32>
    %908 = math.tanh %907 : vector<1x128xf32>
    %909 = arith.mulf %904, %908 : vector<1x128xf32>
    %910 = vector.extract_strided_slice %765 {offsets = [5, 0], sizes = [1, 512], strides = [1, 1]} : vector<8x512xf32> to vector<1x512xf32>
    %cst_204 = arith.constant dense<0.000000e+00> : vector<1x512xf32>
    %911 = tpu.matmul %909, %767, %cst_204 {dimension_numbers = #tpu.dot_dimension_numbers<[1], [0], [0], [1], [0, 0, 1, 1], [], []>} : vector<1x128xf32>, vector<128x512xf32>, vector<1x512xf32> -> vector<1x512xf32>
    %912 = arith.addf %910, %911 : vector<1x512xf32>
    %913 = vector.extract_strided_slice %912 {offsets = [0, 0], sizes = [1, 128], strides = [1, 1]} : vector<1x512xf32> to vector<1x128xf32>
    %914 = arith.negf %913 : vector<1x128xf32>
    %915 = math.exp %914 : vector<1x128xf32>
    %cst_205 = arith.constant 1.000000e+00 : f32
    %916 = vector.broadcast %cst_205 : f32 to vector<1x128xf32>
    %917 = arith.addf %916, %915 : vector<1x128xf32>
    %918 = arith.divf %916, %917 : vector<1x128xf32>
    %919 = vector.extract_strided_slice %912 {offsets = [0, 128], sizes = [1, 128], strides = [1, 1]} : vector<1x512xf32> to vector<1x128xf32>
    %920 = arith.negf %919 : vector<1x128xf32>
    %921 = math.exp %920 : vector<1x128xf32>
    %cst_206 = arith.constant 1.000000e+00 : f32
    %922 = vector.broadcast %cst_206 : f32 to vector<1x128xf32>
    %923 = arith.addf %922, %921 : vector<1x128xf32>
    %924 = arith.divf %922, %923 : vector<1x128xf32>
    %925 = vector.extract_strided_slice %912 {offsets = [0, 256], sizes = [1, 128], strides = [1, 1]} : vector<1x512xf32> to vector<1x128xf32>
    %926 = math.tanh %925 : vector<1x128xf32>
    %927 = vector.extract_strided_slice %912 {offsets = [0, 384], sizes = [1, 128], strides = [1, 1]} : vector<1x512xf32> to vector<1x128xf32>
    %928 = arith.negf %927 : vector<1x128xf32>
    %929 = math.exp %928 : vector<1x128xf32>
    %cst_207 = arith.constant 1.000000e+00 : f32
    %930 = vector.broadcast %cst_207 : f32 to vector<1x128xf32>
    %931 = arith.addf %930, %929 : vector<1x128xf32>
    %932 = arith.divf %930, %931 : vector<1x128xf32>
    %933 = arith.mulf %924, %907 : vector<1x128xf32>
    %934 = arith.mulf %918, %926 : vector<1x128xf32>
    %935 = arith.addf %933, %934 : vector<1x128xf32>
    %936 = math.tanh %935 : vector<1x128xf32>
    %937 = arith.mulf %932, %936 : vector<1x128xf32>
    %938 = vector.extract_strided_slice %765 {offsets = [6, 0], sizes = [1, 512], strides = [1, 1]} : vector<8x512xf32> to vector<1x512xf32>
    %cst_208 = arith.constant dense<0.000000e+00> : vector<1x512xf32>
    %939 = tpu.matmul %937, %767, %cst_208 {dimension_numbers = #tpu.dot_dimension_numbers<[1], [0], [0], [1], [0, 0, 1, 1], [], []>} : vector<1x128xf32>, vector<128x512xf32>, vector<1x512xf32> -> vector<1x512xf32>
    %940 = arith.addf %938, %939 : vector<1x512xf32>
    %941 = vector.extract_strided_slice %940 {offsets = [0, 0], sizes = [1, 128], strides = [1, 1]} : vector<1x512xf32> to vector<1x128xf32>
    %942 = arith.negf %941 : vector<1x128xf32>
    %943 = math.exp %942 : vector<1x128xf32>
    %cst_209 = arith.constant 1.000000e+00 : f32
    %944 = vector.broadcast %cst_209 : f32 to vector<1x128xf32>
    %945 = arith.addf %944, %943 : vector<1x128xf32>
    %946 = arith.divf %944, %945 : vector<1x128xf32>
    %947 = vector.extract_strided_slice %940 {offsets = [0, 128], sizes = [1, 128], strides = [1, 1]} : vector<1x512xf32> to vector<1x128xf32>
    %948 = arith.negf %947 : vector<1x128xf32>
    %949 = math.exp %948 : vector<1x128xf32>
    %cst_210 = arith.constant 1.000000e+00 : f32
    %950 = vector.broadcast %cst_210 : f32 to vector<1x128xf32>
    %951 = arith.addf %950, %949 : vector<1x128xf32>
    %952 = arith.divf %950, %951 : vector<1x128xf32>
    %953 = vector.extract_strided_slice %940 {offsets = [0, 256], sizes = [1, 128], strides = [1, 1]} : vector<1x512xf32> to vector<1x128xf32>
    %954 = math.tanh %953 : vector<1x128xf32>
    %955 = vector.extract_strided_slice %940 {offsets = [0, 384], sizes = [1, 128], strides = [1, 1]} : vector<1x512xf32> to vector<1x128xf32>
    %956 = arith.negf %955 : vector<1x128xf32>
    %957 = math.exp %956 : vector<1x128xf32>
    %cst_211 = arith.constant 1.000000e+00 : f32
    %958 = vector.broadcast %cst_211 : f32 to vector<1x128xf32>
    %959 = arith.addf %958, %957 : vector<1x128xf32>
    %960 = arith.divf %958, %959 : vector<1x128xf32>
    %961 = arith.mulf %952, %935 : vector<1x128xf32>
    %962 = arith.mulf %946, %954 : vector<1x128xf32>
    %963 = arith.addf %961, %962 : vector<1x128xf32>
    %964 = math.tanh %963 : vector<1x128xf32>
    %965 = arith.mulf %960, %964 : vector<1x128xf32>
    %966 = vector.extract_strided_slice %765 {offsets = [7, 0], sizes = [1, 512], strides = [1, 1]} : vector<8x512xf32> to vector<1x512xf32>
    %cst_212 = arith.constant dense<0.000000e+00> : vector<1x512xf32>
    %967 = tpu.matmul %965, %767, %cst_212 {dimension_numbers = #tpu.dot_dimension_numbers<[1], [0], [0], [1], [0, 0, 1, 1], [], []>} : vector<1x128xf32>, vector<128x512xf32>, vector<1x512xf32> -> vector<1x512xf32>
    %968 = arith.addf %966, %967 : vector<1x512xf32>
    %969 = vector.extract_strided_slice %968 {offsets = [0, 0], sizes = [1, 128], strides = [1, 1]} : vector<1x512xf32> to vector<1x128xf32>
    %970 = arith.negf %969 : vector<1x128xf32>
    %971 = math.exp %970 : vector<1x128xf32>
    %cst_213 = arith.constant 1.000000e+00 : f32
    %972 = vector.broadcast %cst_213 : f32 to vector<1x128xf32>
    %973 = arith.addf %972, %971 : vector<1x128xf32>
    %974 = arith.divf %972, %973 : vector<1x128xf32>
    %975 = vector.extract_strided_slice %968 {offsets = [0, 128], sizes = [1, 128], strides = [1, 1]} : vector<1x512xf32> to vector<1x128xf32>
    %976 = arith.negf %975 : vector<1x128xf32>
    %977 = math.exp %976 : vector<1x128xf32>
    %cst_214 = arith.constant 1.000000e+00 : f32
    %978 = vector.broadcast %cst_214 : f32 to vector<1x128xf32>
    %979 = arith.addf %978, %977 : vector<1x128xf32>
    %980 = arith.divf %978, %979 : vector<1x128xf32>
    %981 = vector.extract_strided_slice %968 {offsets = [0, 256], sizes = [1, 128], strides = [1, 1]} : vector<1x512xf32> to vector<1x128xf32>
    %982 = math.tanh %981 : vector<1x128xf32>
    %983 = vector.extract_strided_slice %968 {offsets = [0, 384], sizes = [1, 128], strides = [1, 1]} : vector<1x512xf32> to vector<1x128xf32>
    %984 = arith.negf %983 : vector<1x128xf32>
    %985 = math.exp %984 : vector<1x128xf32>
    %cst_215 = arith.constant 1.000000e+00 : f32
    %986 = vector.broadcast %cst_215 : f32 to vector<1x128xf32>
    %987 = arith.addf %986, %985 : vector<1x128xf32>
    %988 = arith.divf %986, %987 : vector<1x128xf32>
    %989 = arith.mulf %980, %963 : vector<1x128xf32>
    %990 = arith.mulf %974, %982 : vector<1x128xf32>
    %991 = arith.addf %989, %990 : vector<1x128xf32>
    %992 = math.tanh %991 : vector<1x128xf32>
    %993 = arith.mulf %988, %992 : vector<1x128xf32>
    %994 = tpu.concatenate %797, %825, %853, %881, %909, %937, %965, %993 in 0 : vector<1x128xf32>, vector<1x128xf32>, vector<1x128xf32>, vector<1x128xf32>, vector<1x128xf32>, vector<1x128xf32>, vector<1x128xf32>, vector<1x128xf32> -> vector<8x128xf32>
    %c0_216 = arith.constant 0 : index
    %c0_217 = arith.constant 0 : index
    %995 = vector.load %arg12[%c0_216, %c0_217] : memref<128x4xf32, #tpu.memory_space<vmem>>, vector<128x4xf32>
    %cst_218 = arith.constant dense<0.000000e+00> : vector<8x4xf32>
    %996 = tpu.matmul %994, %995, %cst_218 {dimension_numbers = #tpu.dot_dimension_numbers<[1], [0], [0], [1], [0, 0, 1, 1], [], []>} : vector<8x128xf32>, vector<128x4xf32>, vector<8x4xf32> -> vector<8x4xf32>
    %c0_219 = arith.constant 0 : index
    %c0_220 = arith.constant 0 : index
    %997 = vector.load %arg13[%c0_219, %c0_220] : memref<1x4xf32, #tpu.memory_space<vmem>>, vector<1x4xf32>
    %998 = vector.broadcast %997 : vector<1x4xf32> to vector<8x4xf32>
    %999 = arith.addf %996, %998 : vector<8x4xf32>
    %c0_221 = arith.constant 0 : index
    %c0_222 = arith.constant 0 : index
    %1000 = vector.load %arg14[%c0_221, %c0_222] : memref<8x4xf32, #tpu.memory_space<vmem>>, vector<8x4xf32>
    tpu.vector_store %arg14[%c0_221, %c0_222], %999 {strides = array<i32>} : memref<8x4xf32, #tpu.memory_space<vmem>>, vector<8x4xf32>,
    return
  }
}

</mosaic_0001>

<llo_original>
// kernel: graph_network_forward.1
$region0: #{graph_network_forward.1}
  #allocation0 [shape = 'u32[]', space=smem, size = 0x4, offset = 0x4, fixed_abs, tag = 'smem constant byte address 0x4 - core index']
  #allocation1 [shape = 'u32[144,128]{1,0:T(1,128)}', space=vmem, size = 0x12000, scoped, tag = 'internal scratch']
  %s0 = inlined_call_operand.vmem [shape: s32[8,2], index: 0, kind: input, shape index: {}]
  %s1 = inlined_call_operand.vmem [shape: f32[8,8], index: 1, kind: input, shape index: {}]
  %s2 = inlined_call_operand.vmem [shape: f32[8,128], index: 2, kind: input, shape index: {}]
  %s3 = inlined_call_operand.vmem [shape: f32[1,128], index: 3, kind: input, shape index: {}]
  %s4 = inlined_call_operand.hbm [shape: f32[2,128,128], index: 4, kind: input, shape index: {}]
  %s5 = inlined_call_operand.hbm [shape: f32[2,128,128], index: 5, kind: input, shape index: {}]
  %s6 = inlined_call_operand.vmem [shape: f32[2,1,128], index: 6, kind: input, shape index: {}]
  %s7 = inlined_call_operand.vmem [shape: f32[2,8,512], index: 7, kind: input, shape index: {}]
  %s8 = inlined_call_operand.hbm [shape: f32[2,128,512], index: 8, kind: input, shape index: {}]
  %s9 = inlined_call_operand.hbm [shape: f32[2,128,512], index: 9, kind: input, shape index: {}]
  %s10 = inlined_call_operand.hbm [shape: f32[4,128,512], index: 10, kind: input, shape index: {}]
  %s11 = inlined_call_operand.vmem [shape: f32[4,1,512], index: 11, kind: input, shape index: {}]
  %s12 = inlined_call_operand.vmem [shape: f32[128,4], index: 12, kind: input, shape index: {}]
  %s13 = inlined_call_operand.vmem [shape: f32[1,4], index: 13, kind: input, shape index: {}]
  %s14 = inlined_call_operand.vmem [shape: f32[8,4], index: 14, kind: output, shape index: {}]
  %s15 = sld [smem:[#allocation0]]
  $region86: #{graph_network_forward.1} parent=0
    _
  %s17 = ssub.s32 1, %s15
  %s18 = scalar_select 0, %s17, %s15
  $region1: #{graph_network_forward.1} parent=0
    #allocation2 [shape = 'u8[131072]{0}', space=vmem, size = 0x20000, scoped, tag = 'input window, operand 4, single buffered']
    #allocation3 [shape = 's32[1]{0}', space=sflag, size = 0x4, scoped, tag = 'scoped memory for graph_network_forward.1']
    #allocation4 [shape = 'u8[131072]{0}', space=vmem, size = 0x20000, scoped, tag = 'input window, operand 5, single buffered']
    #allocation5 [shape = 's32[1]{0}', space=sflag, size = 0x4, scoped, tag = 'scoped memory for graph_network_forward.1']
    #allocation6 [shape = 'u8[524288]{0}', space=vmem, size = 0x80000, scoped, tag = 'input window, operand 8, single buffered']
    #allocation7 [shape = 'u8[524288]{0}', space=vmem, size = 0x80000, scoped, tag = 'input window, operand 9, single buffered']
    #allocation8 [shape = 's32[1]{0}', space=sflag, size = 0x4, scoped, tag = 'scoped memory for graph_network_forward.1']
    #allocation9 [shape = 'u8[1048576]{0}', space=vmem, size = 0x100000, scoped, tag = 'input window, operand 10, single buffered']
    %19 = vsyncpa [#allocation3], 0
    %20 = vsyncpa [#allocation5], 0
    %21 = vsyncpa [#allocation8], 0
    // Predicated region
    $region2: #{graph_network_forward.1} parent=1 // pred_check
      _
    $region3: #{graph_network_forward.1} parent=1 // pred_check_branch
      %23 = sbr.rel (0) target = $region5
    $region4: #{graph_network_forward.1} parent=1 // pred_region
      _
    $region5: #{graph_network_forward.1} parent=1 // pred_fallthru
      _
    // Predicated region
    $region6: #{graph_network_forward.1} parent=1 // pred_check
      _
    $region7: #{graph_network_forward.1} parent=1 // pred_check_branch
      %25 = sbr.rel (0) target = $region9
    $region8: #{graph_network_forward.1} parent=1 // pred_region
      _
    $region9: #{graph_network_forward.1} parent=1 // pred_fallthru
      _
    // Predicated region
    $region10: #{graph_network_forward.1} parent=1 // pred_check
      _
    $region11: #{graph_network_forward.1} parent=1 // pred_check_branch
      %27 = sbr.rel (0) target = $region13
    $region12: #{graph_network_forward.1} parent=1 // pred_region
      _
    $region13: #{graph_network_forward.1} parent=1 // pred_fallthru
      _
    // Predicated region
    $region14: #{graph_network_forward.1} parent=1 // pred_check
      _
    $region15: #{graph_network_forward.1} parent=1 // pred_check_branch
      %29 = sbr.rel (0) target = $region17
    $region16: #{graph_network_forward.1} parent=1 // pred_region
      _
    $region17: #{graph_network_forward.1} parent=1 // pred_fallthru
      _
    // Predicated region
    $region18: #{graph_network_forward.1} parent=1 // pred_check
      _
    $region19: #{graph_network_forward.1} parent=1 // pred_check_branch
      %31 = sbr.rel (0) target = $region21
    $region20: #{graph_network_forward.1} parent=1 // pred_region
      %s33 = ssub.s32 4096, 4096
      %34 = vsyncadd [#allocation3], %s33
      %s35 = sshll.u32 [#allocation2], 4
      %s36 = int_to_ptr.vmem [resolvable:$true] %s35
      %41 = dma.hbm_to_vmem [thread:$0]  %s4, 4096, %s36, [#allocation3], 128, 128, 8
    $region21: #{graph_network_forward.1} parent=1 // pred_fallthru
      _
    // Predicated region
    $region22: #{graph_network_forward.1} parent=1 // pred_check
      _
    $region23: #{graph_network_forward.1} parent=1 // pred_check_branch
      %43 = sbr.rel (0) target = $region25
    $region24: #{graph_network_forward.1} parent=1 // pred_region
      %s45 = ssub.s32 4096, 4096
      %46 = vsyncadd [#allocation5], %s45
      %s47 = sshll.u32 [#allocation4], 4
      %s48 = int_to_ptr.vmem [resolvable:$true] %s47
      %53 = dma.hbm_to_vmem [thread:$0]  %s5, 4096, %s48, [#allocation5], 128, 128, 8
    $region25: #{graph_network_forward.1} parent=1 // pred_fallthru
      _
    // Predicated region
    $region26: #{graph_network_forward.1} parent=1 // pred_check
      _
    $region27: #{graph_network_forward.1} parent=1 // pred_check_branch
      %55 = sbr.rel (0) target = $region29
    $region28: #{graph_network_forward.1} parent=1 // pred_region
      _
    $region29: #{graph_network_forward.1} parent=1 // pred_fallthru
      _
    // Predicated region
    $region30: #{graph_network_forward.1} parent=1 // pred_check
      _
    $region31: #{graph_network_forward.1} parent=1 // pred_check_branch
      %57 = sbr.rel (0) target = $region33
    $region32: #{graph_network_forward.1} parent=1 // pred_region
      _
    $region33: #{graph_network_forward.1} parent=1 // pred_fallthru
      _
    // Predicated region
    $region34: #{graph_network_forward.1} parent=1 // pred_check
      _
    $region35: #{graph_network_forward.1} parent=1 // pred_check_branch
      %59 = sbr.rel (0) target = $region37
    $region36: #{graph_network_forward.1} parent=1 // pred_region
      %s61 = ssub.s32 16384, 16384
      %62 = vsyncadd [#allocation5], %s61
      %s63 = sshll.u32 [#allocation6], 4
      %s64 = int_to_ptr.vmem [resolvable:$true] %s63
      %69 = dma.hbm_to_vmem [thread:$0]  %s8, 16384, %s64, [#allocation5], 512, 512, 32
    $region37: #{graph_network_forward.1} parent=1 // pred_fallthru
      _
    // Predicated region
    $region38: #{graph_network_forward.1} parent=1 // pred_check
      _
    $region39: #{graph_network_forward.1} parent=1 // pred_check_branch
      %71 = sbr.rel (0) target = $region41
    $region40: #{graph_network_forward.1} parent=1 // pred_region
      %s73 = ssub.s32 16384, 16384
      %74 = vsyncadd [#allocation8], %s73
      %s75 = sshll.u32 [#allocation7], 4
      %s76 = int_to_ptr.vmem [resolvable:$true] %s75
      %81 = dma.hbm_to_vmem [thread:$0]  %s9, 16384, %s76, [#allocation8], 512, 512, 32
    $region41: #{graph_network_forward.1} parent=1 // pred_fallthru
      _
    // Predicated region
    $region42: #{graph_network_forward.1} parent=1 // pred_check
      _
    $region43: #{graph_network_forward.1} parent=1 // pred_check_branch
      %83 = sbr.rel (0) target = $region45
    $region44: #{graph_network_forward.1} parent=1 // pred_region
      %s85 = ssub.s32 32768, 32768
      %86 = vsyncadd [#allocation8], %s85
      %s87 = sshll.u32 [#allocation9], 4
      %s88 = int_to_ptr.vmem [resolvable:$true] %s87
      %93 = dma.hbm_to_vmem [thread:$0]  %s10, 32768, %s88, [#allocation8], 512, 512, 32
    $region45: #{graph_network_forward.1} parent=1 // pred_fallthru
      _
    // Predicated region
    $region46: #{graph_network_forward.1} parent=1 // pred_check
      _
    $region47: #{graph_network_forward.1} parent=1 // pred_check_branch
      %95 = sbr.rel (0) target = $region49
    $region48: #{graph_network_forward.1} parent=1 // pred_region
      _
    $region49: #{graph_network_forward.1} parent=1 // pred_fallthru
      _
    // Predicated region
    $region50: #{graph_network_forward.1} parent=1 // pred_check
      _
    $region51: #{graph_network_forward.1} parent=1 // pred_check_branch
      %97 = sbr.rel (0) target = $region53
    $region52: #{graph_network_forward.1} parent=1 // pred_region
      _
    $region53: #{graph_network_forward.1} parent=1 // pred_fallthru
      _
    // Predicated region
    $region54: #{graph_network_forward.1} parent=1 // pred_check
      _
    $region55: #{graph_network_forward.1} parent=1 // pred_check_branch
      %99 = sbr.rel (0) target = $region57
    $region56: #{graph_network_forward.1} parent=1 // pred_region
      _
    $region57: #{graph_network_forward.1} parent=1 // pred_fallthru
      _
    // Predicated region
    $region58: #{graph_network_forward.1} parent=1 // pred_check
      _
    $region59: #{graph_network_forward.1} parent=1 // pred_check_branch
      %101 = sbr.rel (0) target = $region61
    $region60: #{graph_network_forward.1} parent=1 // pred_region
      %102 = dma.done [#allocation3], 4096
    $region61: #{graph_network_forward.1} parent=1 // pred_fallthru
      _
    // Predicated region
    $region62: #{graph_network_forward.1} parent=1 // pred_check
      _
    $region63: #{graph_network_forward.1} parent=1 // pred_check_branch
      %104 = sbr.rel (0) target = $region65
    $region64: #{graph_network_forward.1} parent=1 // pred_region
      %105 = dma.done [#allocation5], 4096
    $region65: #{graph_network_forward.1} parent=1 // pred_fallthru
      _
    // Predicated region
    $region66: #{graph_network_forward.1} parent=1 // pred_check
      _
    $region67: #{graph_network_forward.1} parent=1 // pred_check_branch
      %107 = sbr.rel (0) target = $region69
    $region68: #{graph_network_forward.1} parent=1 // pred_region
      %108 = dma.done [#allocation5], 16384
    $region69: #{graph_network_forward.1} parent=1 // pred_fallthru
      _
    // Predicated region
    $region70: #{graph_network_forward.1} parent=1 // pred_check
      _
    $region71: #{graph_network_forward.1} parent=1 // pred_check_branch
      %110 = sbr.rel (0) target = $region73
    $region72: #{graph_network_forward.1} parent=1 // pred_region
      %111 = dma.done [#allocation8], 16384
    $region73: #{graph_network_forward.1} parent=1 // pred_fallthru
      _
    // Predicated region
    $region74: #{graph_network_forward.1} parent=1 // pred_check
      _
    $region75: #{graph_network_forward.1} parent=1 // pred_check_branch
      %113 = sbr.rel (0) target = $region77
    $region76: #{graph_network_forward.1} parent=1 // pred_region
      %114 = dma.done [#allocation8], 32768
    $region77: #{graph_network_forward.1} parent=1 // pred_fallthru
      _
    %v115 = vld [vmem:[%s1] sm:$0xff]
    %v116 = vld [vmem:[%s2] sm:$0xff]
    %v117 = vld [vmem:[%s3] sm:$0x1]
    %v119 = vlaneseq
    %v120 = vshrl.u32 %v119, 7
    %v121 = vsub.s32 0, %v120
    %v122 = vrot.slane %v117, %v121
    %vm124 = vcmask 64512
    %v126 = vsel %vm124, %v115, 0
    %128 = vmatprep.subr.mxu0 0.0
    %129 = vmatpush1.msra.mxu0 %v116
    %130 = vmatprep.subr.mxu0 0.0
    %131 = vmatpush1.msra.mxu0 0.0
    %132 = vmatprep.subr.mxu0 0.0
    %133 = vmatpush1.msra.mxu0 0.0
    %134 = vmatprep.subr.mxu0 0.0
    %135 = vmatpush1.msra.mxu0 0.0
    %136 = vmatprep.subr.mxu0 0.0
    %137 = vmatpush1.msra.mxu0 0.0
    %138 = vmatprep.subr.mxu0 0.0
    %139 = vmatpush1.msra.mxu0 0.0
    %140 = vmatprep.subr.mxu0 0.0
    %141 = vmatpush1.msra.mxu0 0.0
    %142 = vmatprep.subr.mxu0 0.0
    %143 = vmatpush1.msra.mxu0 0.0
    %144 = vmatprep.subr.mxu0 0.0
    %145 = vmatpush1.msra.mxu0 0.0
    %146 = vmatprep.subr.mxu0 0.0
    %147 = vmatpush1.msra.mxu0 0.0
    %148 = vmatprep.subr.mxu0 0.0
    %149 = vmatpush1.msra.mxu0 0.0
    %150 = vmatprep.subr.mxu0 0.0
    %151 = vmatpush1.msra.mxu0 0.0
    %152 = vmatprep.subr.mxu0 0.0
    %153 = vmatpush1.msra.mxu0 0.0
    %154 = vmatprep.subr.mxu0 0.0
    %155 = vmatpush1.msra.mxu0 0.0
    %156 = vmatprep.subr.mxu0 0.0
    %157 = vmatpush1.msra.mxu0 0.0
    %158 = vmatprep.subr.mxu0 0.0
    %159 = vmatpush1.msra.mxu0 0.0
    %160 = vmatprep.subr.mxu0 0.0
    %161 = vmatpush1.msra.mxu0 0.0
    %162 = vmatprep.subr.mxu0 0.0
    %163 = vmatpush1.msra.mxu0 0.0
    %164 = vmatprep.subr.mxu0 0.0
    %165 = vmatpush1.msra.mxu0 0.0
    %166 = vmatprep.subr.mxu0 0.0
    %167 = vmatpush1.msra.mxu0 0.0
    %168 = vmatprep.subr.mxu0 0.0
    %169 = vmatpush1.msra.mxu0 0.0
    %170 = vmatprep.subr.mxu0 0.0
    %171 = vmatpush1.msra.mxu0 0.0
    %172 = vmatprep.subr.mxu0 0.0
    %173 = vmatpush1.msra.mxu0 0.0
    %174 = vmatprep.subr.mxu0 0.0
    %175 = vmatpush1.msra.mxu0 0.0
    %176 = vmatprep.subr.mxu0 0.0
    %177 = vmatpush1.msra.mxu0 0.0
    %178 = vmatprep.subr.mxu0 0.0
    %179 = vmatpush1.msra.mxu0 0.0
    %180 = vmatprep.subr.mxu0 0.0
    %181 = vmatpush1.msra.mxu0 0.0
    %182 = vmatprep.subr.mxu0 0.0
    %183 = vmatpush1.msra.mxu0 0.0
    %184 = vmatprep.subr.mxu0 0.0
    %185 = vmatpush1.msra.mxu0 0.0
    %186 = vmatprep.subr.mxu0 0.0
    %187 = vmatpush1.msra.mxu0 0.0
    %188 = vmatprep.subr.mxu0 0.0
    %189 = vmatpush1.msra.mxu0 0.0
    %190 = vmatprep.subr.mxu0 0.0
    %191 = vmatpush1.msra.mxu0 0.0
    %192 = vmatprep.mubr.f32.mxu0 0.0
    %193 = vmatmul.mubr.f32.gmra.mrb[0].mxu0 %v126
    %v194 = vpop.f32.mrb[0].mxu0
    %v195 = vadd.f32 %v122, %v194
    %v196 = vpop.f32.mrb[0].mxu0
    %197 = vdwg.mxu0
    %v198 = vlaneseq
    %v199 = vand.u32 %v198, 127
    %v200 = vld [vmem:[%s0] sm:$0xff]
    %201 = vset.pattern.permute.xlu0 0
    %202 = vperm.xlu0 %201, %v200
    %v203 = vpop.permute.xlu0 %202
    %vm204 = vcmp.eq.s32.totalorder %v203, %v199
    %v205 = vsel %vm204, 1, 0
    %v206 = vcvt.s32.f32 %v205
    %207 = vset.pattern.permute.xlu0 1
    %208 = vperm.xlu0 %207, %v200
    %v209 = vpop.permute.xlu0 %208
    %vm210 = vcmp.eq.s32.totalorder %v209, %v199
    %v211 = vsel %vm210, 1, 0
    %v212 = vcvt.s32.f32 %v211
    %v214 = vsel %vm124, %v206, 0
    %216 = vmatprep.subr.mxu0 0.0
    %217 = vmatpush1.msra.mxu0 %v195
    %218 = vmatprep.subr.mxu0 0.0
    %219 = vmatpush1.msra.mxu0 0.0
    %220 = vmatprep.subr.mxu0 0.0
    %221 = vmatpush1.msra.mxu0 0.0
    %222 = vmatprep.subr.mxu0 0.0
    %223 = vmatpush1.msra.mxu0 0.0
    %224 = vmatprep.subr.mxu0 0.0
    %225 = vmatpush1.msra.mxu0 0.0
    %226 = vmatprep.subr.mxu0 0.0
    %227 = vmatpush1.msra.mxu0 0.0
    %228 = vmatprep.subr.mxu0 0.0
    %229 = vmatpush1.msra.mxu0 0.0
    %230 = vmatprep.subr.mxu0 0.0
    %231 = vmatpush1.msra.mxu0 0.0
    %232 = vmatprep.subr.mxu0 0.0
    %233 = vmatpush1.msra.mxu0 0.0
    %234 = vmatprep.subr.mxu0 0.0
    %235 = vmatpush1.msra.mxu0 0.0
    %236 = vmatprep.subr.mxu0 0.0
    %237 = vmatpush1.msra.mxu0 0.0
    %238 = vmatprep.subr.mxu0 0.0
    %239 = vmatpush1.msra.mxu0 0.0
    %240 = vmatprep.subr.mxu0 0.0
    %241 = vmatpush1.msra.mxu0 0.0
    %242 = vmatprep.subr.mxu0 0.0
    %243 = vmatpush1.msra.mxu0 0.0
    %244 = vmatprep.subr.mxu0 0.0
    %245 = vmatpush1.msra.mxu0 0.0
    %246 = vmatprep.subr.mxu0 0.0
    %247 = vmatpush1.msra.mxu0 0.0
    %248 = vmatprep.subr.mxu0 0.0
    %249 = vmatpush1.msra.mxu0 0.0
    %250 = vmatprep.subr.mxu0 0.0
    %251 = vmatpush1.msra.mxu0 0.0
    %252 = vmatprep.subr.mxu0 0.0
    %253 = vmatpush1.msra.mxu0 0.0
    %254 = vmatprep.subr.mxu0 0.0
    %255 = vmatpush1.msra.mxu0 0.0
    %256 = vmatprep.subr.mxu0 0.0
    %257 = vmatpush1.msra.mxu0 0.0
    %258 = vmatprep.subr.mxu0 0.0
    %259 = vmatpush1.msra.mxu0 0.0
    %260 = vmatprep.subr.mxu0 0.0
    %261 = vmatpush1.msra.mxu0 0.0
    %262 = vmatprep.subr.mxu0 0.0
    %263 = vmatpush1.msra.mxu0 0.0
    %264 = vmatprep.subr.mxu0 0.0
    %265 = vmatpush1.msra.mxu0 0.0
    %266 = vmatprep.subr.mxu0 0.0
    %267 = vmatpush1.msra.mxu0 0.0
    %268 = vmatprep.subr.mxu0 0.0
    %269 = vmatpush1.msra.mxu0 0.0
    %270 = vmatprep.subr.mxu0 0.0
    %271 = vmatpush1.msra.mxu0 0.0
    %272 = vmatprep.subr.mxu0 0.0
    %273 = vmatpush1.msra.mxu0 0.0
    %274 = vmatprep.subr.mxu0 0.0
    %275 = vmatpush1.msra.mxu0 0.0
    %276 = vmatprep.subr.mxu0 0.0
    %277 = vmatpush1.msra.mxu0 0.0
    %278 = vmatprep.subr.mxu0 0.0
    %279 = vmatpush1.msra.mxu0 0.0
    %280 = vmatprep.mubr.f32.mxu0 0.0
    %281 = vmatmul.mubr.f32.gmra.mrb[0].mxu0 %v214
    %v282 = vpop.f32.mrb[0].mxu0
    %v283 = vadd.f32 0.0, %v282
    %v284 = vpop.f32.mrb[0].mxu0
    %285 = vdwg.mxu0
    %v287 = vsel %vm124, %v212, 0
    %289 = vmatprep.subr.mxu0 0.0
    %290 = vmatpush1.msra.mxu0 %v195
    %291 = vmatprep.subr.mxu0 0.0
    %292 = vmatpush1.msra.mxu0 0.0
    %293 = vmatprep.subr.mxu0 0.0
    %294 = vmatpush1.msra.mxu0 0.0
    %295 = vmatprep.subr.mxu0 0.0
    %296 = vmatpush1.msra.mxu0 0.0
    %297 = vmatprep.subr.mxu0 0.0
    %298 = vmatpush1.msra.mxu0 0.0
    %299 = vmatprep.subr.mxu0 0.0
    %300 = vmatpush1.msra.mxu0 0.0
    %301 = vmatprep.subr.mxu0 0.0
    %302 = vmatpush1.msra.mxu0 0.0
    %303 = vmatprep.subr.mxu0 0.0
    %304 = vmatpush1.msra.mxu0 0.0
    %305 = vmatprep.subr.mxu0 0.0
    %306 = vmatpush1.msra.mxu0 0.0
    %307 = vmatprep.subr.mxu0 0.0
    %308 = vmatpush1.msra.mxu0 0.0
    %309 = vmatprep.subr.mxu0 0.0
    %310 = vmatpush1.msra.mxu0 0.0
    %311 = vmatprep.subr.mxu0 0.0
    %312 = vmatpush1.msra.mxu0 0.0
    %313 = vmatprep.subr.mxu0 0.0
    %314 = vmatpush1.msra.mxu0 0.0
    %315 = vmatprep.subr.mxu0 0.0
    %316 = vmatpush1.msra.mxu0 0.0
    %317 = vmatprep.subr.mxu0 0.0
    %318 = vmatpush1.msra.mxu0 0.0
    %319 = vmatprep.subr.mxu0 0.0
    %320 = vmatpush1.msra.mxu0 0.0
    %321 = vmatprep.subr.mxu0 0.0
    %322 = vmatpush1.msra.mxu0 0.0
    %323 = vmatprep.subr.mxu0 0.0
    %324 = vmatpush1.msra.mxu0 0.0
    %325 = vmatprep.subr.mxu0 0.0
    %326 = vmatpush1.msra.mxu0 0.0
    %327 = vmatprep.subr.mxu0 0.0
    %328 = vmatpush1.msra.mxu0 0.0
    %329 = vmatprep.subr.mxu0 0.0
    %330 = vmatpush1.msra.mxu0 0.0
    %331 = vmatprep.subr.mxu0 0.0
    %332 = vmatpush1.msra.mxu0 0.0
    %333 = vmatprep.subr.mxu0 0.0
    %334 = vmatpush1.msra.mxu0 0.0
    %335 = vmatprep.subr.mxu0 0.0
    %336 = vmatpush1.msra.mxu0 0.0
    %337 = vmatprep.subr.mxu0 0.0
    %338 = vmatpush1.msra.mxu0 0.0
    %339 = vmatprep.subr.mxu0 0.0
    %340 = vmatpush1.msra.mxu0 0.0
    %341 = vmatprep.subr.mxu0 0.0
    %342 = vmatpush1.msra.mxu0 0.0
    %343 = vmatprep.subr.mxu0 0.0
    %344 = vmatpush1.msra.mxu0 0.0
    %345 = vmatprep.subr.mxu0 0.0
    %346 = vmatpush1.msra.mxu0 0.0
    %347 = vmatprep.subr.mxu0 0.0
    %348 = vmatpush1.msra.mxu0 0.0
    %349 = vmatprep.subr.mxu0 0.0
    %350 = vmatpush1.msra.mxu0 0.0
    %351 = vmatprep.subr.mxu0 0.0
    %352 = vmatpush1.msra.mxu0 0.0
    %353 = vmatprep.mubr.f32.mxu0 0.0
    %354 = vmatmul.mubr.f32.gmra.mrb[0].mxu0 %v287
    %v355 = vpop.f32.mrb[0].mxu0
    %v356 = vadd.f32 0.0, %v355
    %v357 = vpop.f32.mrb[0].mxu0
    %358 = vdwg.mxu0
    %v359 = vld [vmem:[#allocation2] sm:$0xff]
    %v360 = vld [vmem:[#allocation2 + $0x8] sm:$0xff]
    %v361 = vld [vmem:[#allocation2 + $0x10] sm:$0xff]
    %v362 = vld [vmem:[#allocation2 + $0x18] sm:$0xff]
    %v363 = vld [vmem:[#allocation2 + $0x20] sm:$0xff]
    %v364 = vld [vmem:[#allocation2 + $0x28] sm:$0xff]
    %v365 = vld [vmem:[#allocation2 + $0x30] sm:$0xff]
    %v366 = vld [vmem:[#allocation2 + $0x38] sm:$0xff]
    %v367 = vld [vmem:[#allocation2 + $0x40] sm:$0xff]
    %v368 = vld [vmem:[#allocation2 + $0x48] sm:$0xff]
    %v369 = vld [vmem:[#allocation2 + $0x50] sm:$0xff]
    %v370 = vld [vmem:[#allocation2 + $0x58] sm:$0xff]
    %v371 = vld [vmem:[#allocation2 + $0x60] sm:$0xff]
    %v372 = vld [vmem:[#allocation2 + $0x68] sm:$0xff]
    %v373 = vld [vmem:[#allocation2 + $0x70] sm:$0xff]
    %v374 = vld [vmem:[#allocation2 + $0x78] sm:$0xff]
    %v375 = vld [vmem:[#allocation4] sm:$0xff]
    %v376 = vld [vmem:[#allocation4 + $0x8] sm:$0xff]
    %v377 = vld [vmem:[#allocation4 + $0x10] sm:$0xff]
    %v378 = vld [vmem:[#allocation4 + $0x18] sm:$0xff]
    %v379 = vld [vmem:[#allocation4 + $0x20] sm:$0xff]
    %v380 = vld [vmem:[#allocation4 + $0x28] sm:$0xff]
    %v381 = vld [vmem:[#allocation4 + $0x30] sm:$0xff]
    %v382 = vld [vmem:[#allocation4 + $0x38] sm:$0xff]
    %v383 = vld [vmem:[#allocation4 + $0x40] sm:$0xff]
    %v384 = vld [vmem:[#allocation4 + $0x48] sm:$0xff]
    %v385 = vld [vmem:[#allocation4 + $0x50] sm:$0xff]
    %v386 = vld [vmem:[#allocation4 + $0x58] sm:$0xff]
    %v387 = vld [vmem:[#allocation4 + $0x60] sm:$0xff]
    %v388 = vld [vmem:[#allocation4 + $0x68] sm:$0xff]
    %v389 = vld [vmem:[#allocation4 + $0x70] sm:$0xff]
    %v390 = vld [vmem:[#allocation4 + $0x78] sm:$0xff]
    %391 = vmatprep.subr.mxu0 0.0
    %392 = vmatpush1.msra.mxu0 %v375
    %393 = vmatprep.subr.mxu0 0.0
    %394 = vmatpush1.msra.mxu0 %v376
    %395 = vmatprep.subr.mxu0 0.0
    %396 = vmatpush1.msra.mxu0 %v377
    %397 = vmatprep.subr.mxu0 0.0
    %398 = vmatpush1.msra.mxu0 %v378
    %399 = vmatprep.subr.mxu0 0.0
    %400 = vmatpush1.msra.mxu0 %v379
    %401 = vmatprep.subr.mxu0 0.0
    %402 = vmatpush1.msra.mxu0 %v380
    %403 = vmatprep.subr.mxu0 0.0
    %404 = vmatpush1.msra.mxu0 %v381
    %405 = vmatprep.subr.mxu0 0.0
    %406 = vmatpush1.msra.mxu0 %v382
    %407 = vmatprep.subr.mxu0 0.0
    %408 = vmatpush1.msra.mxu0 %v383
    %409 = vmatprep.subr.mxu0 0.0
    %410 = vmatpush1.msra.mxu0 %v384
    %411 = vmatprep.subr.mxu0 0.0
    %412 = vmatpush1.msra.mxu0 %v385
    %413 = vmatprep.subr.mxu0 0.0
    %414 = vmatpush1.msra.mxu0 %v386
    %415 = vmatprep.subr.mxu0 0.0
    %416 = vmatpush1.msra.mxu0 %v387
    %417 = vmatprep.subr.mxu0 0.0
    %418 = vmatpush1.msra.mxu0 %v388
    %419 = vmatprep.subr.mxu0 0.0
    %420 = vmatpush1.msra.mxu0 %v389
    %421 = vmatprep.subr.mxu0 0.0
    %422 = vmatpush1.msra.mxu0 %v390
    %423 = vmatprep.subr.mxu0 0.0
    %424 = vmatpush1.msra.mxu0 0.0
    %425 = vmatprep.subr.mxu0 0.0
    %426 = vmatpush1.msra.mxu0 0.0
    %427 = vmatprep.subr.mxu0 0.0
    %428 = vmatpush1.msra.mxu0 0.0
    %429 = vmatprep.subr.mxu0 0.0
    %430 = vmatpush1.msra.mxu0 0.0
    %431 = vmatprep.subr.mxu0 0.0
    %432 = vmatpush1.msra.mxu0 0.0
    %433 = vmatprep.subr.mxu0 0.0
    %434 = vmatpush1.msra.mxu0 0.0
    %435 = vmatprep.subr.mxu0 0.0
    %436 = vmatpush1.msra.mxu0 0.0
    %437 = vmatprep.subr.mxu0 0.0
    %438 = vmatpush1.msra.mxu0 0.0
    %439 = vmatprep.subr.mxu0 0.0
    %440 = vmatpush1.msra.mxu0 0.0
    %441 = vmatprep.subr.mxu0 0.0
    %442 = vmatpush1.msra.mxu0 0.0
    %443 = vmatprep.subr.mxu0 0.0
    %444 = vmatpush1.msra.mxu0 0.0
    %445 = vmatprep.subr.mxu0 0.0
    %446 = vmatpush1.msra.mxu0 0.0
    %447 = vmatprep.subr.mxu0 0.0
    %448 = vmatpush1.msra.mxu0 0.0
    %449 = vmatprep.subr.mxu0 0.0
    %450 = vmatpush1.msra.mxu0 0.0
    %451 = vmatprep.subr.mxu0 0.0
    %452 = vmatpush1.msra.mxu0 0.0
    %453 = vmatprep.subr.mxu0 0.0
    %454 = vmatpush1.msra.mxu0 0.0
    %455 = vmatprep.mubr.f32.mxu0 0.0
    %456 = vmatmul.mubr.f32.gmra.mrb[0].mxu0 %v356
    %v457 = vpop.f32.mrb[0].mxu0
    %v458 = vadd.f32 0.0, %v457
    %v459 = vpop.f32.mrb[0].mxu0
    %460 = vdwg.mxu0
    %461 = vmatprep.subr.mxu0 0.0
    %462 = vmatpush1.msra.mxu0 %v359
    %463 = vmatprep.subr.mxu0 0.0
    %464 = vmatpush1.msra.mxu0 %v360
    %465 = vmatprep.subr.mxu0 0.0
    %466 = vmatpush1.msra.mxu0 %v361
    %467 = vmatprep.subr.mxu0 0.0
    %468 = vmatpush1.msra.mxu0 %v362
    %469 = vmatprep.subr.mxu0 0.0
    %470 = vmatpush1.msra.mxu0 %v363
    %471 = vmatprep.subr.mxu0 0.0
    %472 = vmatpush1.msra.mxu0 %v364
    %473 = vmatprep.subr.mxu0 0.0
    %474 = vmatpush1.msra.mxu0 %v365
    %475 = vmatprep.subr.mxu0 0.0
    %476 = vmatpush1.msra.mxu0 %v366
    %477 = vmatprep.subr.mxu0 0.0
    %478 = vmatpush1.msra.mxu0 %v367
    %479 = vmatprep.subr.mxu0 0.0
    %480 = vmatpush1.msra.mxu0 %v368
    %481 = vmatprep.subr.mxu0 0.0
    %482 = vmatpush1.msra.mxu0 %v369
    %483 = vmatprep.subr.mxu0 0.0
    %484 = vmatpush1.msra.mxu0 %v370
    %485 = vmatprep.subr.mxu0 0.0
    %486 = vmatpush1.msra.mxu0 %v371
    %487 = vmatprep.subr.mxu0 0.0
    %488 = vmatpush1.msra.mxu0 %v372
    %489 = vmatprep.subr.mxu0 0.0
    %490 = vmatpush1.msra.mxu0 %v373
    %491 = vmatprep.subr.mxu0 0.0
    %492 = vmatpush1.msra.mxu0 %v374
    %493 = vmatprep.subr.mxu0 0.0
    %494 = vmatpush1.msra.mxu0 0.0
    %495 = vmatprep.subr.mxu0 0.0
    %496 = vmatpush1.msra.mxu0 0.0
    %497 = vmatprep.subr.mxu0 0.0
    %498 = vmatpush1.msra.mxu0 0.0
    %499 = vmatprep.subr.mxu0 0.0
    %500 = vmatpush1.msra.mxu0 0.0
    %501 = vmatprep.subr.mxu0 0.0
    %502 = vmatpush1.msra.mxu0 0.0
    %503 = vmatprep.subr.mxu0 0.0
    %504 = vmatpush1.msra.mxu0 0.0
    %505 = vmatprep.subr.mxu0 0.0
    %506 = vmatpush1.msra.mxu0 0.0
    %507 = vmatprep.subr.mxu0 0.0
    %508 = vmatpush1.msra.mxu0 0.0
    %509 = vmatprep.subr.mxu0 0.0
    %510 = vmatpush1.msra.mxu0 0.0
    %511 = vmatprep.subr.mxu0 0.0
    %512 = vmatpush1.msra.mxu0 0.0
    %513 = vmatprep.subr.mxu0 0.0
    %514 = vmatpush1.msra.mxu0 0.0
    %515 = vmatprep.subr.mxu0 0.0
    %516 = vmatpush1.msra.mxu0 0.0
    %517 = vmatprep.subr.mxu0 0.0
    %518 = vmatpush1.msra.mxu0 0.0
    %519 = vmatprep.subr.mxu0 0.0
    %520 = vmatpush1.msra.mxu0 0.0
    %521 = vmatprep.subr.mxu0 0.0
    %522 = vmatpush1.msra.mxu0 0.0
    %523 = vmatprep.subr.mxu0 0.0
    %524 = vmatpush1.msra.mxu0 0.0
    %525 = vmatprep.mubr.f32.mxu0 0.0
    %526 = vmatmul.mubr.f32.gmra.mrb[0].mxu0 %v283
    %v527 = vpop.f32.mrb[0].mxu0
    %v528 = vadd.f32 %v458, %v527
    %v529 = vpop.f32.mrb[0].mxu0
    %530 = vdwg.mxu0
    %v531 = vld [vmem:[%s6] sm:$0x1]
    %v533 = vlaneseq
    %v534 = vshrl.u32 %v533, 7
    %v535 = vsub.s32 0, %v534
    %v536 = vrot.slane %v531, %v535
    %v538 = vadd.f32 %v528, %v536
    %v539 = vld [vmem:[%s7] sm:$0xff]
    %v540 = vld [vmem:[%s7 + $0x8] sm:$0xff]
    %v541 = vld [vmem:[%s7 + $0x10] sm:$0xff]
    %v542 = vld [vmem:[%s7 + $0x18] sm:$0xff]
    %v543 = vld [vmem:[#allocation6] sm:$0xff]
    %v544 = vld [vmem:[#allocation6 + $0x8] sm:$0xff]
    %v545 = vld [vmem:[#allocation6 + $0x10] sm:$0xff]
    %v546 = vld [vmem:[#allocation6 + $0x18] sm:$0xff]
    %v547 = vld [vmem:[#allocation6 + $0x20] sm:$0xff]
    %v548 = vld [vmem:[#allocation6 + $0x28] sm:$0xff]
    %v549 = vld [vmem:[#allocation6 + $0x30] sm:$0xff]
    %v550 = vld [vmem:[#allocation6 + $0x38] sm:$0xff]
    %v551 = vld [vmem:[#allocation6 + $0x40] sm:$0xff]
    %v552 = vld [vmem:[#allocation6 + $0x48] sm:$0xff]
    %v553 = vld [vmem:[#allocation6 + $0x50] sm:$0xff]
    %v554 = vld [vmem:[#allocation6 + $0x58] sm:$0xff]
    %v555 = vld [vmem:[#allocation6 + $0x60] sm:$0xff]
    %v556 = vld [vmem:[#allocation6 + $0x68] sm:$0xff]
    %v557 = vld [vmem:[#allocation6 + $0x70] sm:$0xff]
    %v558 = vld [vmem:[#allocation6 + $0x78] sm:$0xff]
    %v559 = vld [vmem:[#allocation6 + $0x80] sm:$0xff]
    %v560 = vld [vmem:[#allocation6 + $0x88] sm:$0xff]
    %v561 = vld [vmem:[#allocation6 + $0x90] sm:$0xff]
    %v562 = vld [vmem:[#allocation6 + $0x98] sm:$0xff]
    %v563 = vld [vmem:[#allocation6 + $0xa0] sm:$0xff]
    %v564 = vld [vmem:[#allocation6 + $0xa8] sm:$0xff]
    %v565 = vld [vmem:[#allocation6 + $0xb0] sm:$0xff]
    %v566 = vld [vmem:[#allocation6 + $0xb8] sm:$0xff]
    %v567 = vld [vmem:[#allocation6 + $0xc0] sm:$0xff]
    %v568 = vld [vmem:[#allocation6 + $0xc8] sm:$0xff]
    %v569 = vld [vmem:[#allocation6 + $0xd0] sm:$0xff]
    %v570 = vld [vmem:[#allocation6 + $0xd8] sm:$0xff]
    %v571 = vld [vmem:[#allocation6 + $0xe0] sm:$0xff]
    %v572 = vld [vmem:[#allocation6 + $0xe8] sm:$0xff]
    %v573 = vld [vmem:[#allocation6 + $0xf0] sm:$0xff]
    %v574 = vld [vmem:[#allocation6 + $0xf8] sm:$0xff]
    %v575 = vld [vmem:[#allocation6 + $0x100] sm:$0xff]
    %v576 = vld [vmem:[#allocation6 + $0x108] sm:$0xff]
    %v577 = vld [vmem:[#allocation6 + $0x110] sm:$0xff]
    %v578 = vld [vmem:[#allocation6 + $0x118] sm:$0xff]
    %v579 = vld [vmem:[#allocation6 + $0x120] sm:$0xff]
    %v580 = vld [vmem:[#allocation6 + $0x128] sm:$0xff]
    %v581 = vld [vmem:[#allocation6 + $0x130] sm:$0xff]
    %v582 = vld [vmem:[#allocation6 + $0x138] sm:$0xff]
    %v583 = vld [vmem:[#allocation6 + $0x140] sm:$0xff]
    %v584 = vld [vmem:[#allocation6 + $0x148] sm:$0xff]
    %v585 = vld [vmem:[#allocation6 + $0x150] sm:$0xff]
    %v586 = vld [vmem:[#allocation6 + $0x158] sm:$0xff]
    %v587 = vld [vmem:[#allocation6 + $0x160] sm:$0xff]
    %v588 = vld [vmem:[#allocation6 + $0x168] sm:$0xff]
    %v589 = vld [vmem:[#allocation6 + $0x170] sm:$0xff]
    %v590 = vld [vmem:[#allocation6 + $0x178] sm:$0xff]
    %v591 = vld [vmem:[#allocation6 + $0x180] sm:$0xff]
    %v592 = vld [vmem:[#allocation6 + $0x188] sm:$0xff]
    %v593 = vld [vmem:[#allocation6 + $0x190] sm:$0xff]
    %v594 = vld [vmem:[#allocation6 + $0x198] sm:$0xff]
    %v595 = vld [vmem:[#allocation6 + $0x1a0] sm:$0xff]
    %v596 = vld [vmem:[#allocation6 + $0x1a8] sm:$0xff]
    %v597 = vld [vmem:[#allocation6 + $0x1b0] sm:$0xff]
    %v598 = vld [vmem:[#allocation6 + $0x1b8] sm:$0xff]
    %v599 = vld [vmem:[#allocation6 + $0x1c0] sm:$0xff]
    %v600 = vld [vmem:[#allocation6 + $0x1c8] sm:$0xff]
    %v601 = vld [vmem:[#allocation6 + $0x1d0] sm:$0xff]
    %v602 = vld [vmem:[#allocation6 + $0x1d8] sm:$0xff]
    %v603 = vld [vmem:[#allocation6 + $0x1e0] sm:$0xff]
    %v604 = vld [vmem:[#allocation6 + $0x1e8] sm:$0xff]
    %v605 = vld [vmem:[#allocation6 + $0x1f0] sm:$0xff]
    %v606 = vld [vmem:[#allocation6 + $0x1f8] sm:$0xff]
    %607 = vmatprep.subr.mxu0 %v544
    %608 = vmatpush1.msra.mxu0 %v543
    %609 = vmatprep.subr.mxu0 %v548
    %610 = vmatpush1.msra.mxu0 %v547
    %611 = vmatprep.subr.mxu0 %v552
    %612 = vmatpush1.msra.mxu0 %v551
    %613 = vmatprep.subr.mxu0 %v556
    %614 = vmatpush1.msra.mxu0 %v555
    %615 = vmatprep.subr.mxu0 %v560
    %616 = vmatpush1.msra.mxu0 %v559
    %617 = vmatprep.subr.mxu0 %v564
    %618 = vmatpush1.msra.mxu0 %v563
    %619 = vmatprep.subr.mxu0 %v568
    %620 = vmatpush1.msra.mxu0 %v567
    %621 = vmatprep.subr.mxu0 %v572
    %622 = vmatpush1.msra.mxu0 %v571
    %623 = vmatprep.subr.mxu0 %v576
    %624 = vmatpush1.msra.mxu0 %v575
    %625 = vmatprep.subr.mxu0 %v580
    %626 = vmatpush1.msra.mxu0 %v579
    %627 = vmatprep.subr.mxu0 %v584
    %628 = vmatpush1.msra.mxu0 %v583
    %629 = vmatprep.subr.mxu0 %v588
    %630 = vmatpush1.msra.mxu0 %v587
    %631 = vmatprep.subr.mxu0 %v592
    %632 = vmatpush1.msra.mxu0 %v591
    %633 = vmatprep.subr.mxu0 %v596
    %634 = vmatpush1.msra.mxu0 %v595
    %635 = vmatprep.subr.mxu0 %v600
    %636 = vmatpush1.msra.mxu0 %v599
    %637 = vmatprep.subr.mxu0 %v604
    %638 = vmatpush1.msra.mxu0 %v603
    %639 = vmatprep.subr.mxu0 0.0
    %640 = vmatpush1.msra.mxu0 0.0
    %641 = vmatprep.subr.mxu0 0.0
    %642 = vmatpush1.msra.mxu0 0.0
    %643 = vmatprep.subr.mxu0 0.0
    %644 = vmatpush1.msra.mxu0 0.0
    %645 = vmatprep.subr.mxu0 0.0
    %646 = vmatpush1.msra.mxu0 0.0
    %647 = vmatprep.subr.mxu0 0.0
    %648 = vmatpush1.msra.mxu0 0.0
    %649 = vmatprep.subr.mxu0 0.0
    %650 = vmatpush1.msra.mxu0 0.0
    %651 = vmatprep.subr.mxu0 0.0
    %652 = vmatpush1.msra.mxu0 0.0
    %653 = vmatprep.subr.mxu0 0.0
    %654 = vmatpush1.msra.mxu0 0.0
    %655 = vmatprep.subr.mxu0 0.0
    %656 = vmatpush1.msra.mxu0 0.0
    %657 = vmatprep.subr.mxu0 0.0
    %658 = vmatpush1.msra.mxu0 0.0
    %659 = vmatprep.subr.mxu0 0.0
    %660 = vmatpush1.msra.mxu0 0.0
    %661 = vmatprep.subr.mxu0 0.0
    %662 = vmatpush1.msra.mxu0 0.0
    %663 = vmatprep.subr.mxu0 0.0
    %664 = vmatpush1.msra.mxu0 0.0
    %665 = vmatprep.subr.mxu0 0.0
    %666 = vmatpush1.msra.mxu0 0.0
    %667 = vmatprep.subr.mxu0 0.0
    %668 = vmatpush1.msra.mxu0 0.0
    %669 = vmatprep.subr.mxu0 0.0
    %670 = vmatpush1.msra.mxu0 0.0
    %671 = vmatprep.mubr.f32.mxu0 0.0
    %672 = vmatmul.mubr.f32.gmra.mrb[0].mxu0 %v538
    %v673 = vpop.f32.mrb[0].mxu0
    %v674 = vadd.f32 0.0, %v673
    %v675 = vpop.f32.mrb[0].mxu0
    %v676 = vadd.f32 0.0, %v675
    %677 = vdwg.mxu0
    %678 = vmatprep.subr.mxu0 %v546
    %679 = vmatpush1.msra.mxu0 %v545
    %680 = vmatprep.subr.mxu0 %v550
    %681 = vmatpush1.msra.mxu0 %v549
    %682 = vmatprep.subr.mxu0 %v554
    %683 = vmatpush1.msra.mxu0 %v553
    %684 = vmatprep.subr.mxu0 %v558
    %685 = vmatpush1.msra.mxu0 %v557
    %686 = vmatprep.subr.mxu0 %v562
    %687 = vmatpush1.msra.mxu0 %v561
    %688 = vmatprep.subr.mxu0 %v566
    %689 = vmatpush1.msra.mxu0 %v565
    %690 = vmatprep.subr.mxu0 %v570
    %691 = vmatpush1.msra.mxu0 %v569
    %692 = vmatprep.subr.mxu0 %v574
    %693 = vmatpush1.msra.mxu0 %v573
    %694 = vmatprep.subr.mxu0 %v578
    %695 = vmatpush1.msra.mxu0 %v577
    %696 = vmatprep.subr.mxu0 %v582
    %697 = vmatpush1.msra.mxu0 %v581
    %698 = vmatprep.subr.mxu0 %v586
    %699 = vmatpush1.msra.mxu0 %v585
    %700 = vmatprep.subr.mxu0 %v590
    %701 = vmatpush1.msra.mxu0 %v589
    %702 = vmatprep.subr.mxu0 %v594
    %703 = vmatpush1.msra.mxu0 %v593
    %704 = vmatprep.subr.mxu0 %v598
    %705 = vmatpush1.msra.mxu0 %v597
    %706 = vmatprep.subr.mxu0 %v602
    %707 = vmatpush1.msra.mxu0 %v601
    %708 = vmatprep.subr.mxu0 %v606
    %709 = vmatpush1.msra.mxu0 %v605
    %710 = vmatprep.subr.mxu0 0.0
    %711 = vmatpush1.msra.mxu0 0.0
    %712 = vmatprep.subr.mxu0 0.0
    %713 = vmatpush1.msra.mxu0 0.0
    %714 = vmatprep.subr.mxu0 0.0
    %715 = vmatpush1.msra.mxu0 0.0
    %716 = vmatprep.subr.mxu0 0.0
    %717 = vmatpush1.msra.mxu0 0.0
    %718 = vmatprep.subr.mxu0 0.0
    %719 = vmatpush1.msra.mxu0 0.0
    %720 = vmatprep.subr.mxu0 0.0
    %721 = vmatpush1.msra.mxu0 0.0
    %722 = vmatprep.subr.mxu0 0.0
    %723 = vmatpush1.msra.mxu0 0.0
    %724 = vmatprep.subr.mxu0 0.0
    %725 = vmatpush1.msra.mxu0 0.0
    %726 = vmatprep.subr.mxu0 0.0
    %727 = vmatpush1.msra.mxu0 0.0
    %728 = vmatprep.subr.mxu0 0.0
    %729 = vmatpush1.msra.mxu0 0.0
    %730 = vmatprep.subr.mxu0 0.0
    %731 = vmatpush1.msra.mxu0 0.0
    %732 = vmatprep.subr.mxu0 0.0
    %733 = vmatpush1.msra.mxu0 0.0
    %734 = vmatprep.subr.mxu0 0.0
    %735 = vmatpush1.msra.mxu0 0.0
    %736 = vmatprep.subr.mxu0 0.0
    %737 = vmatpush1.msra.mxu0 0.0
    %738 = vmatprep.subr.mxu0 0.0
    %739 = vmatpush1.msra.mxu0 0.0
    %740 = vmatprep.subr.mxu0 0.0
    %741 = vmatpush1.msra.mxu0 0.0
    %742 = vmatprep.mubr.f32.mxu0 0.0
    %743 = vmatmul.mubr.f32.gmra.mrb[0].mxu0 %v538
    %v744 = vpop.f32.mrb[0].mxu0
    %v745 = vadd.f32 0.0, %v744
    %v746 = vpop.f32.mrb[0].mxu0
    %v747 = vadd.f32 0.0, %v746
    %748 = vdwg.mxu0
    %749 = vmatprep.subr.mxu0 %v540
    %750 = vmatpush1.msra.mxu0 %v539
    %751 = vmatprep.subr.mxu0 0.0
    %752 = vmatpush1.msra.mxu0 0.0
    %753 = vmatprep.subr.mxu0 0.0
    %754 = vmatpush1.msra.mxu0 0.0
    %755 = vmatprep.subr.mxu0 0.0
    %756 = vmatpush1.msra.mxu0 0.0
    %757 = vmatprep.subr.mxu0 0.0
    %758 = vmatpush1.msra.mxu0 0.0
    %759 = vmatprep.subr.mxu0 0.0
    %760 = vmatpush1.msra.mxu0 0.0
    %761 = vmatprep.subr.mxu0 0.0
    %762 = vmatpush1.msra.mxu0 0.0
    %763 = vmatprep.subr.mxu0 0.0
    %764 = vmatpush1.msra.mxu0 0.0
    %765 = vmatprep.subr.mxu0 0.0
    %766 = vmatpush1.msra.mxu0 0.0
    %767 = vmatprep.subr.mxu0 0.0
    %768 = vmatpush1.msra.mxu0 0.0
    %769 = vmatprep.subr.mxu0 0.0
    %770 = vmatpush1.msra.mxu0 0.0
    %771 = vmatprep.subr.mxu0 0.0
    %772 = vmatpush1.msra.mxu0 0.0
    %773 = vmatprep.subr.mxu0 0.0
    %774 = vmatpush1.msra.mxu0 0.0
    %775 = vmatprep.subr.mxu0 0.0
    %776 = vmatpush1.msra.mxu0 0.0
    %777 = vmatprep.subr.mxu0 0.0
    %778 = vmatpush1.msra.mxu0 0.0
    %779 = vmatprep.subr.mxu0 0.0
    %780 = vmatpush1.msra.mxu0 0.0
    %781 = vmatprep.subr.mxu0 0.0
    %782 = vmatpush1.msra.mxu0 0.0
    %783 = vmatprep.subr.mxu0 0.0
    %784 = vmatpush1.msra.mxu0 0.0
    %785 = vmatprep.subr.mxu0 0.0
    %786 = vmatpush1.msra.mxu0 0.0
    %787 = vmatprep.subr.mxu0 0.0
    %788 = vmatpush1.msra.mxu0 0.0
    %789 = vmatprep.subr.mxu0 0.0
    %790 = vmatpush1.msra.mxu0 0.0
    %791 = vmatprep.subr.mxu0 0.0
    %792 = vmatpush1.msra.mxu0 0.0
    %793 = vmatprep.subr.mxu0 0.0
    %794 = vmatpush1.msra.mxu0 0.0
    %795 = vmatprep.subr.mxu0 0.0
    %796 = vmatpush1.msra.mxu0 0.0
    %797 = vmatprep.subr.mxu0 0.0
    %798 = vmatpush1.msra.mxu0 0.0
    %799 = vmatprep.subr.mxu0 0.0
    %800 = vmatpush1.msra.mxu0 0.0
    %801 = vmatprep.subr.mxu0 0.0
    %802 = vmatpush1.msra.mxu0 0.0
    %803 = vmatprep.subr.mxu0 0.0
    %804 = vmatpush1.msra.mxu0 0.0
    %805 = vmatprep.subr.mxu0 0.0
    %806 = vmatpush1.msra.mxu0 0.0
    %807 = vmatprep.subr.mxu0 0.0
    %808 = vmatpush1.msra.mxu0 0.0
    %809 = vmatprep.subr.mxu0 0.0
    %810 = vmatpush1.msra.mxu0 0.0
    %811 = vmatprep.subr.mxu0 0.0
    %812 = vmatpush1.msra.mxu0 0.0
    %813 = vmatprep.mubr.f32.mxu0 0.0
    %814 = vmatmul.mubr.f32.gmra.mrb[0].mxu0 %v126
    %v815 = vpop.f32.mrb[0].mxu0
    %v816 = vadd.f32 %v674, %v815
    %v817 = vpop.f32.mrb[0].mxu0
    %v818 = vadd.f32 %v676, %v817
    %819 = vdwg.mxu0
    %820 = vmatprep.subr.mxu0 %v542
    %821 = vmatpush1.msra.mxu0 %v541
    %822 = vmatprep.subr.mxu0 0.0
    %823 = vmatpush1.msra.mxu0 0.0
    %824 = vmatprep.subr.mxu0 0.0
    %825 = vmatpush1.msra.mxu0 0.0
    %826 = vmatprep.subr.mxu0 0.0
    %827 = vmatpush1.msra.mxu0 0.0
    %828 = vmatprep.subr.mxu0 0.0
    %829 = vmatpush1.msra.mxu0 0.0
    %830 = vmatprep.subr.mxu0 0.0
    %831 = vmatpush1.msra.mxu0 0.0
    %832 = vmatprep.subr.mxu0 0.0
    %833 = vmatpush1.msra.mxu0 0.0
    %834 = vmatprep.subr.mxu0 0.0
    %835 = vmatpush1.msra.mxu0 0.0
    %836 = vmatprep.subr.mxu0 0.0
    %837 = vmatpush1.msra.mxu0 0.0
    %838 = vmatprep.subr.mxu0 0.0
    %839 = vmatpush1.msra.mxu0 0.0
    %840 = vmatprep.subr.mxu0 0.0
    %841 = vmatpush1.msra.mxu0 0.0
    %842 = vmatprep.subr.mxu0 0.0
    %843 = vmatpush1.msra.mxu0 0.0
    %844 = vmatprep.subr.mxu0 0.0
    %845 = vmatpush1.msra.mxu0 0.0
    %846 = vmatprep.subr.mxu0 0.0
    %847 = vmatpush1.msra.mxu0 0.0
    %848 = vmatprep.subr.mxu0 0.0
    %849 = vmatpush1.msra.mxu0 0.0
    %850 = vmatprep.subr.mxu0 0.0
    %851 = vmatpush1.msra.mxu0 0.0
    %852 = vmatprep.subr.mxu0 0.0
    %853 = vmatpush1.msra.mxu0 0.0
    %854 = vmatprep.subr.mxu0 0.0
    %855 = vmatpush1.msra.mxu0 0.0
    %856 = vmatprep.subr.mxu0 0.0
    %857 = vmatpush1.msra.mxu0 0.0
    %858 = vmatprep.subr.mxu0 0.0
    %859 = vmatpush1.msra.mxu0 0.0
    %860 = vmatprep.subr.mxu0 0.0
    %861 = vmatpush1.msra.mxu0 0.0
    %862 = vmatprep.subr.mxu0 0.0
    %863 = vmatpush1.msra.mxu0 0.0
    %864 = vmatprep.subr.mxu0 0.0
    %865 = vmatpush1.msra.mxu0 0.0
    %866 = vmatprep.subr.mxu0 0.0
    %867 = vmatpush1.msra.mxu0 0.0
    %868 = vmatprep.subr.mxu0 0.0
    %869 = vmatpush1.msra.mxu0 0.0
    %870 = vmatprep.subr.mxu0 0.0
    %871 = vmatpush1.msra.mxu0 0.0
    %872 = vmatprep.subr.mxu0 0.0
    %873 = vmatpush1.msra.mxu0 0.0
    %874 = vmatprep.subr.mxu0 0.0
    %875 = vmatpush1.msra.mxu0 0.0
    %876 = vmatprep.subr.mxu0 0.0
    %877 = vmatpush1.msra.mxu0 0.0
    %878 = vmatprep.subr.mxu0 0.0
    %879 = vmatpush1.msra.mxu0 0.0
    %880 = vmatprep.subr.mxu0 0.0
    %881 = vmatpush1.msra.mxu0 0.0
    %882 = vmatprep.subr.mxu0 0.0
    %883 = vmatpush1.msra.mxu0 0.0
    %884 = vmatprep.mubr.f32.mxu0 0.0
    %885 = vmatmul.mubr.f32.gmra.mrb[0].mxu0 %v126
    %v886 = vpop.f32.mrb[0].mxu0
    %v887 = vadd.f32 %v745, %v886
    %v888 = vpop.f32.mrb[0].mxu0
    %v889 = vadd.f32 %v747, %v888
    %890 = vdwg.mxu0
    %v891 = vld [vmem:[%s11] sm:$0xf]
    %v893 = vlaneseq
    %v894 = vshrl.u32 %v893, 7
    %v895 = vsub.s32 0, %v894
    %v896 = vrot.slane %v891, %v895
    %v897 = vlaneseq
    %v898 = vshrl.u32 %v897, 7
    %v899 = vsub.s32 1, %v898
    %v900 = vrot.slane %v891, %v899
    %v901 = vlaneseq
    %v902 = vshrl.u32 %v901, 7
    %v903 = vsub.s32 2, %v902
    %v904 = vrot.slane %v891, %v903
    %v905 = vlaneseq
    %v906 = vshrl.u32 %v905, 7
    %v907 = vsub.s32 3, %v906
    %v908 = vrot.slane %v891, %v907
    %v913 = vadd.f32 %v816, %v896
    %v914 = vadd.f32 %v818, %v900
    %v915 = vadd.f32 %v887, %v904
    %v916 = vadd.f32 %v889, %v908
    %v917 = vld [vmem:[#allocation9] sm:$0xff]
    %v918 = vld [vmem:[#allocation9 + $0x8] sm:$0xff]
    %v919 = vld [vmem:[#allocation9 + $0x10] sm:$0xff]
    %v920 = vld [vmem:[#allocation9 + $0x18] sm:$0xff]
    %v921 = vld [vmem:[#allocation9 + $0x20] sm:$0xff]
    %v922 = vld [vmem:[#allocation9 + $0x28] sm:$0xff]
    %v923 = vld [vmem:[#allocation9 + $0x30] sm:$0xff]
    %v924 = vld [vmem:[#allocation9 + $0x38] sm:$0xff]
    %v925 = vld [vmem:[#allocation9 + $0x40] sm:$0xff]
    %v926 = vld [vmem:[#allocation9 + $0x48] sm:$0xff]
    %v927 = vld [vmem:[#allocation9 + $0x50] sm:$0xff]
    %v928 = vld [vmem:[#allocation9 + $0x58] sm:$0xff]
    %v929 = vld [vmem:[#allocation9 + $0x60] sm:$0xff]
    %v930 = vld [vmem:[#allocation9 + $0x68] sm:$0xff]
    %v931 = vld [vmem:[#allocation9 + $0x70] sm:$0xff]
    %v932 = vld [vmem:[#allocation9 + $0x78] sm:$0xff]
    %v933 = vld [vmem:[#allocation9 + $0x80] sm:$0xff]
    %v934 = vld [vmem:[#allocation9 + $0x88] sm:$0xff]
    %v935 = vld [vmem:[#allocation9 + $0x90] sm:$0xff]
    %v936 = vld [vmem:[#allocation9 + $0x98] sm:$0xff]
    %v937 = vld [vmem:[#allocation9 + $0xa0] sm:$0xff]
    %v938 = vld [vmem:[#allocation9 + $0xa8] sm:$0xff]
    %v939 = vld [vmem:[#allocation9 + $0xb0] sm:$0xff]
    %v940 = vld [vmem:[#allocation9 + $0xb8] sm:$0xff]
    %v941 = vld [vmem:[#allocation9 + $0xc0] sm:$0xff]
    %v942 = vld [vmem:[#allocation9 + $0xc8] sm:$0xff]
    %v943 = vld [vmem:[#allocation9 + $0xd0] sm:$0xff]
    %v944 = vld [vmem:[#allocation9 + $0xd8] sm:$0xff]
    %v945 = vld [vmem:[#allocation9 + $0xe0] sm:$0xff]
    %v946 = vld [vmem:[#allocation9 + $0xe8] sm:$0xff]
    %v947 = vld [vmem:[#allocation9 + $0xf0] sm:$0xff]
    %v948 = vld [vmem:[#allocation9 + $0xf8] sm:$0xff]
    %v949 = vld [vmem:[#allocation9 + $0x100] sm:$0xff]
    %v950 = vld [vmem:[#allocation9 + $0x108] sm:$0xff]
    %v951 = vld [vmem:[#allocation9 + $0x110] sm:$0xff]
    %v952 = vld [vmem:[#allocation9 + $0x118] sm:$0xff]
    %v953 = vld [vmem:[#allocation9 + $0x120] sm:$0xff]
    %v954 = vld [vmem:[#allocation9 + $0x128] sm:$0xff]
    %v955 = vld [vmem:[#allocation9 + $0x130] sm:$0xff]
    %v956 = vld [vmem:[#allocation9 + $0x138] sm:$0xff]
    %v957 = vld [vmem:[#allocation9 + $0x140] sm:$0xff]
    %v958 = vld [vmem:[#allocation9 + $0x148] sm:$0xff]
    %v959 = vld [vmem:[#allocation9 + $0x150] sm:$0xff]
    %v960 = vld [vmem:[#allocation9 + $0x158] sm:$0xff]
    %v961 = vld [vmem:[#allocation9 + $0x160] sm:$0xff]
    %v962 = vld [vmem:[#allocation9 + $0x168] sm:$0xff]
    %v963 = vld [vmem:[#allocation9 + $0x170] sm:$0xff]
    %v964 = vld [vmem:[#allocation9 + $0x178] sm:$0xff]
    %v965 = vld [vmem:[#allocation9 + $0x180] sm:$0xff]
    %v966 = vld [vmem:[#allocation9 + $0x188] sm:$0xff]
    %v967 = vld [vmem:[#allocation9 + $0x190] sm:$0xff]
    %v968 = vld [vmem:[#allocation9 + $0x198] sm:$0xff]
    %v969 = vld [vmem:[#allocation9 + $0x1a0] sm:$0xff]
    %v970 = vld [vmem:[#allocation9 + $0x1a8] sm:$0xff]
    %v971 = vld [vmem:[#allocation9 + $0x1b0] sm:$0xff]
    %v972 = vld [vmem:[#allocation9 + $0x1b8] sm:$0xff]
    %v973 = vld [vmem:[#allocation9 + $0x1c0] sm:$0xff]
    %v974 = vld [vmem:[#allocation9 + $0x1c8] sm:$0xff]
    %v975 = vld [vmem:[#allocation9 + $0x1d0] sm:$0xff]
    %v976 = vld [vmem:[#allocation9 + $0x1d8] sm:$0xff]
    %v977 = vld [vmem:[#allocation9 + $0x1e0] sm:$0xff]
    %v978 = vld [vmem:[#allocation9 + $0x1e8] sm:$0xff]
    %v979 = vld [vmem:[#allocation9 + $0x1f0] sm:$0xff]
    %v980 = vld [vmem:[#allocation9 + $0x1f8] sm:$0xff]
    %981 = vmatprep.subr.mxu0 %v918
    %982 = vmatpush1.msra.mxu0 %v917
    %983 = vmatprep.subr.mxu0 %v922
    %984 = vmatpush1.msra.mxu0 %v921
    %985 = vmatprep.subr.mxu0 %v926
    %986 = vmatpush1.msra.mxu0 %v925
    %987 = vmatprep.subr.mxu0 %v930
    %988 = vmatpush1.msra.mxu0 %v929
    %989 = vmatprep.subr.mxu0 %v934
    %990 = vmatpush1.msra.mxu0 %v933
    %991 = vmatprep.subr.mxu0 %v938
    %992 = vmatpush1.msra.mxu0 %v937
    %993 = vmatprep.subr.mxu0 %v942
    %994 = vmatpush1.msra.mxu0 %v941
    %995 = vmatprep.subr.mxu0 %v946
    %996 = vmatpush1.msra.mxu0 %v945
    %997 = vmatprep.subr.mxu0 %v950
    %998 = vmatpush1.msra.mxu0 %v949
    %999 = vmatprep.subr.mxu0 %v954
    %1000 = vmatpush1.msra.mxu0 %v953
    %1001 = vmatprep.subr.mxu0 %v958
    %1002 = vmatpush1.msra.mxu0 %v957
    %1003 = vmatprep.subr.mxu0 %v962
    %1004 = vmatpush1.msra.mxu0 %v961
    %1005 = vmatprep.subr.mxu0 %v966
    %1006 = vmatpush1.msra.mxu0 %v965
    %1007 = vmatprep.subr.mxu0 %v970
    %1008 = vmatpush1.msra.mxu0 %v969
    %1009 = vmatprep.subr.mxu0 %v974
    %1010 = vmatpush1.msra.mxu0 %v973
    %1011 = vmatprep.subr.mxu0 %v978
    %1012 = vmatpush1.msra.mxu0 %v977
    %1013 = vmatprep.subr.mxu0 0.0
    %1014 = vmatpush1.msra.mxu0 0.0
    %1015 = vmatprep.subr.mxu0 0.0
    %1016 = vmatpush1.msra.mxu0 0.0
    %1017 = vmatprep.subr.mxu0 0.0
    %1018 = vmatpush1.msra.mxu0 0.0
    %1019 = vmatprep.subr.mxu0 0.0
    %1020 = vmatpush1.msra.mxu0 0.0
    %1021 = vmatprep.subr.mxu0 0.0
    %1022 = vmatpush1.msra.mxu0 0.0
    %1023 = vmatprep.subr.mxu0 0.0
    %1024 = vmatpush1.msra.mxu0 0.0
    %1025 = vmatprep.subr.mxu0 0.0
    %1026 = vmatpush1.msra.mxu0 0.0
    %1027 = vmatprep.subr.mxu0 0.0
    %1028 = vmatpush1.msra.mxu0 0.0
    %1029 = vmatprep.subr.mxu0 0.0
    %1030 = vmatpush1.msra.mxu0 0.0
    %1031 = vmatprep.subr.mxu0 0.0
    %1032 = vmatpush1.msra.mxu0 0.0
    %1033 = vmatprep.subr.mxu0 0.0
    %1034 = vmatpush1.msra.mxu0 0.0
    %1035 = vmatprep.subr.mxu0 0.0
    %1036 = vmatpush1.msra.mxu0 0.0
    %1037 = vmatprep.subr.mxu0 0.0
    %1038 = vmatpush1.msra.mxu0 0.0
    %1039 = vmatprep.subr.mxu0 0.0
    %1040 = vmatpush1.msra.mxu0 0.0
    %1041 = vmatprep.subr.mxu0 0.0
    %1042 = vmatpush1.msra.mxu0 0.0
    %1043 = vmatprep.subr.mxu0 0.0
    %1044 = vmatpush1.msra.mxu0 0.0
    %1045 = vmatprep.mubr.f32.mxu0 0.0
    %1046 = vmatmul.mubr.f32.gmra.mrb[0].mxu0 0.0
    %v1047 = vpop.f32.mrb[0].mxu0
    %v1048 = vadd.f32 0.0, %v1047
    %v1049 = vpop.f32.mrb[0].mxu0
    %v1050 = vadd.f32 0.0, %v1049
    %1051 = vdwg.mxu0
    %1052 = vmatprep.subr.mxu0 %v920
    %1053 = vmatpush1.msra.mxu0 %v919
    %1054 = vmatprep.subr.mxu0 %v924
    %1055 = vmatpush1.msra.mxu0 %v923
    %1056 = vmatprep.subr.mxu0 %v928
    %1057 = vmatpush1.msra.mxu0 %v927
    %1058 = vmatprep.subr.mxu0 %v932
    %1059 = vmatpush1.msra.mxu0 %v931
    %1060 = vmatprep.subr.mxu0 %v936
    %1061 = vmatpush1.msra.mxu0 %v935
    %1062 = vmatprep.subr.mxu0 %v940
    %1063 = vmatpush1.msra.mxu0 %v939
    %1064 = vmatprep.subr.mxu0 %v944
    %1065 = vmatpush1.msra.mxu0 %v943
    %1066 = vmatprep.subr.mxu0 %v948
    %1067 = vmatpush1.msra.mxu0 %v947
    %1068 = vmatprep.subr.mxu0 %v952
    %1069 = vmatpush1.msra.mxu0 %v951
    %1070 = vmatprep.subr.mxu0 %v956
    %1071 = vmatpush1.msra.mxu0 %v955
    %1072 = vmatprep.subr.mxu0 %v960
    %1073 = vmatpush1.msra.mxu0 %v959
    %1074 = vmatprep.subr.mxu0 %v964
    %1075 = vmatpush1.msra.mxu0 %v963
    %1076 = vmatprep.subr.mxu0 %v968
    %1077 = vmatpush1.msra.mxu0 %v967
    %1078 = vmatprep.subr.mxu0 %v972
    %1079 = vmatpush1.msra.mxu0 %v971
    %1080 = vmatprep.subr.mxu0 %v976
    %1081 = vmatpush1.msra.mxu0 %v975
    %1082 = vmatprep.subr.mxu0 %v980
    %1083 = vmatpush1.msra.mxu0 %v979
    %1084 = vmatprep.subr.mxu0 0.0
    %1085 = vmatpush1.msra.mxu0 0.0
    %1086 = vmatprep.subr.mxu0 0.0
    %1087 = vmatpush1.msra.mxu0 0.0
    %1088 = vmatprep.subr.mxu0 0.0
    %1089 = vmatpush1.msra.mxu0 0.0
    %1090 = vmatprep.subr.mxu0 0.0
    %1091 = vmatpush1.msra.mxu0 0.0
    %1092 = vmatprep.subr.mxu0 0.0
    %1093 = vmatpush1.msra.mxu0 0.0
    %1094 = vmatprep.subr.mxu0 0.0
    %1095 = vmatpush1.msra.mxu0 0.0
    %1096 = vmatprep.subr.mxu0 0.0
    %1097 = vmatpush1.msra.mxu0 0.0
    %1098 = vmatprep.subr.mxu0 0.0
    %1099 = vmatpush1.msra.mxu0 0.0
    %1100 = vmatprep.subr.mxu0 0.0
    %1101 = vmatpush1.msra.mxu0 0.0
    %1102 = vmatprep.subr.mxu0 0.0
    %1103 = vmatpush1.msra.mxu0 0.0
    %1104 = vmatprep.subr.mxu0 0.0
    %1105 = vmatpush1.msra.mxu0 0.0
    %1106 = vmatprep.subr.mxu0 0.0
    %1107 = vmatpush1.msra.mxu0 0.0
    %1108 = vmatprep.subr.mxu0 0.0
    %1109 = vmatpush1.msra.mxu0 0.0
    %1110 = vmatprep.subr.mxu0 0.0
    %1111 = vmatpush1.msra.mxu0 0.0
    %1112 = vmatprep.subr.mxu0 0.0
    %1113 = vmatpush1.msra.mxu0 0.0
    %1114 = vmatprep.subr.mxu0 0.0
    %1115 = vmatpush1.msra.mxu0 0.0
    %1116 = vmatprep.mubr.f32.mxu0 0.0
    %1117 = vmatmul.mubr.f32.gmra.mrb[0].mxu0 0.0
    %v1118 = vpop.f32.mrb[0].mxu0
    %v1119 = vadd.f32 0.0, %v1118
    %v1120 = vpop.f32.mrb[0].mxu0
    %v1121 = vadd.f32 0.0, %v1120
    %1122 = vdwg.mxu0
    %v1123 = vadd.f32 %v913, %v1048
    %v1124 = vadd.f32 %v914, %v1050
    %v1125 = vadd.f32 %v915, %v1119
    %v1126 = vadd.f32 %v916, %v1121
    %v1127 = vxor.u32 %v1123, 2147483648
    %v1128 = vmul.f32 %v1127, 1.442695
    %v1129 = vpow.pop %v1128
    %v1130 = vadd.f32 %v1129, 1.0
    %v1131 = vrcp.pop %v1130
    %v1132 = vmul.f32 1.0, %v1131
    %v1133 = vxor.u32 %v1124, 2147483648
    %v1134 = vmul.f32 %v1133, 1.442695
    %v1135 = vpow.pop %v1134
    %v1136 = vadd.f32 %v1135, 1.0
    %v1137 = vrcp.pop %v1136
    %v1138 = vmul.f32 1.0, %v1137
    %v1139 = vtanh.pop %v1125
    %v1140 = vxor.u32 %v1126, 2147483648
    %v1141 = vmul.f32 %v1140, 1.442695
    %v1142 = vpow.pop %v1141
    %v1143 = vadd.f32 %v1142, 1.0
    %v1144 = vrcp.pop %v1143
    %v1145 = vmul.f32 1.0, %v1144
    %v1146 = vmul.f32 %v1138, 0.0
    %v1147 = vmul.f32 %v1132, %v1139
    %v1148 = vadd.f32 %v1146, %v1147
    %v1149 = vtanh.pop %v1148
    %v1150 = vmul.f32 %v1145, %v1149
    %1151 = vmatprep.subr.mxu0 %v918
    %1152 = vmatpush1.msra.mxu0 %v917
    %1153 = vmatprep.subr.mxu0 %v922
    %1154 = vmatpush1.msra.mxu0 %v921
    %1155 = vmatprep.subr.mxu0 %v926
    %1156 = vmatpush1.msra.mxu0 %v925
    %1157 = vmatprep.subr.mxu0 %v930
    %1158 = vmatpush1.msra.mxu0 %v929
    %1159 = vmatprep.subr.mxu0 %v934
    %1160 = vmatpush1.msra.mxu0 %v933
    %1161 = vmatprep.subr.mxu0 %v938
    %1162 = vmatpush1.msra.mxu0 %v937
    %1163 = vmatprep.subr.mxu0 %v942
    %1164 = vmatpush1.msra.mxu0 %v941
    %1165 = vmatprep.subr.mxu0 %v946
    %1166 = vmatpush1.msra.mxu0 %v945
    %1167 = vmatprep.subr.mxu0 %v950
    %1168 = vmatpush1.msra.mxu0 %v949
    %1169 = vmatprep.subr.mxu0 %v954
    %1170 = vmatpush1.msra.mxu0 %v953
    %1171 = vmatprep.subr.mxu0 %v958
    %1172 = vmatpush1.msra.mxu0 %v957
    %1173 = vmatprep.subr.mxu0 %v962
    %1174 = vmatpush1.msra.mxu0 %v961
    %1175 = vmatprep.subr.mxu0 %v966
    %1176 = vmatpush1.msra.mxu0 %v965
    %1177 = vmatprep.subr.mxu0 %v970
    %1178 = vmatpush1.msra.mxu0 %v969
    %1179 = vmatprep.subr.mxu0 %v974
    %1180 = vmatpush1.msra.mxu0 %v973
    %1181 = vmatprep.subr.mxu0 %v978
    %1182 = vmatpush1.msra.mxu0 %v977
    %1183 = vmatprep.subr.mxu0 0.0
    %1184 = vmatpush1.msra.mxu0 0.0
    %1185 = vmatprep.subr.mxu0 0.0
    %1186 = vmatpush1.msra.mxu0 0.0
    %1187 = vmatprep.subr.mxu0 0.0
    %1188 = vmatpush1.msra.mxu0 0.0
    %1189 = vmatprep.subr.mxu0 0.0
    %1190 = vmatpush1.msra.mxu0 0.0
    %1191 = vmatprep.subr.mxu0 0.0
    %1192 = vmatpush1.msra.mxu0 0.0
    %1193 = vmatprep.subr.mxu0 0.0
    %1194 = vmatpush1.msra.mxu0 0.0
    %1195 = vmatprep.subr.mxu0 0.0
    %1196 = vmatpush1.msra.mxu0 0.0
    %1197 = vmatprep.subr.mxu0 0.0
    %1198 = vmatpush1.msra.mxu0 0.0
    %1199 = vmatprep.subr.mxu0 0.0
    %1200 = vmatpush1.msra.mxu0 0.0
    %1201 = vmatprep.subr.mxu0 0.0
    %1202 = vmatpush1.msra.mxu0 0.0
    %1203 = vmatprep.subr.mxu0 0.0
    %1204 = vmatpush1.msra.mxu0 0.0
    %1205 = vmatprep.subr.mxu0 0.0
    %1206 = vmatpush1.msra.mxu0 0.0
    %1207 = vmatprep.subr.mxu0 0.0
    %1208 = vmatpush1.msra.mxu0 0.0
    %1209 = vmatprep.subr.mxu0 0.0
    %1210 = vmatpush1.msra.mxu0 0.0
    %1211 = vmatprep.subr.mxu0 0.0
    %1212 = vmatpush1.msra.mxu0 0.0
    %1213 = vmatprep.subr.mxu0 0.0
    %1214 = vmatpush1.msra.mxu0 0.0
    %1215 = vmatprep.mubr.f32.mxu0 0.0
    %1216 = vmatmul.mubr.f32.gmra.mrb[0].mxu0 %v1150
    %v1217 = vpop.f32.mrb[0].mxu0
    %v1218 = vadd.f32 0.0, %v1217
    %v1219 = vpop.f32.mrb[0].mxu0
    %v1220 = vadd.f32 0.0, %v1219
    %1221 = vdwg.mxu0
    %1222 = vmatprep.subr.mxu0 %v920
    %1223 = vmatpush1.msra.mxu0 %v919
    %1224 = vmatprep.subr.mxu0 %v924
    %1225 = vmatpush1.msra.mxu0 %v923
    %1226 = vmatprep.subr.mxu0 %v928
    %1227 = vmatpush1.msra.mxu0 %v927
    %1228 = vmatprep.subr.mxu0 %v932
    %1229 = vmatpush1.msra.mxu0 %v931
    %1230 = vmatprep.subr.mxu0 %v936
    %1231 = vmatpush1.msra.mxu0 %v935
    %1232 = vmatprep.subr.mxu0 %v940
    %1233 = vmatpush1.msra.mxu0 %v939
    %1234 = vmatprep.subr.mxu0 %v944
    %1235 = vmatpush1.msra.mxu0 %v943
    %1236 = vmatprep.subr.mxu0 %v948
    %1237 = vmatpush1.msra.mxu0 %v947
    %1238 = vmatprep.subr.mxu0 %v952
    %1239 = vmatpush1.msra.mxu0 %v951
    %1240 = vmatprep.subr.mxu0 %v956
    %1241 = vmatpush1.msra.mxu0 %v955
    %1242 = vmatprep.subr.mxu0 %v960
    %1243 = vmatpush1.msra.mxu0 %v959
    %1244 = vmatprep.subr.mxu0 %v964
    %1245 = vmatpush1.msra.mxu0 %v963
    %1246 = vmatprep.subr.mxu0 %v968
    %1247 = vmatpush1.msra.mxu0 %v967
    %1248 = vmatprep.subr.mxu0 %v972
    %1249 = vmatpush1.msra.mxu0 %v971
    %1250 = vmatprep.subr.mxu0 %v976
    %1251 = vmatpush1.msra.mxu0 %v975
    %1252 = vmatprep.subr.mxu0 %v980
    %1253 = vmatpush1.msra.mxu0 %v979
    %1254 = vmatprep.subr.mxu0 0.0
    %1255 = vmatpush1.msra.mxu0 0.0
    %1256 = vmatprep.subr.mxu0 0.0
    %1257 = vmatpush1.msra.mxu0 0.0
    %1258 = vmatprep.subr.mxu0 0.0
    %1259 = vmatpush1.msra.mxu0 0.0
    %1260 = vmatprep.subr.mxu0 0.0
    %1261 = vmatpush1.msra.mxu0 0.0
    %1262 = vmatprep.subr.mxu0 0.0
    %1263 = vmatpush1.msra.mxu0 0.0
    %1264 = vmatprep.subr.mxu0 0.0
    %1265 = vmatpush1.msra.mxu0 0.0
    %1266 = vmatprep.subr.mxu0 0.0
    %1267 = vmatpush1.msra.mxu0 0.0
    %1268 = vmatprep.subr.mxu0 0.0
    %1269 = vmatpush1.msra.mxu0 0.0
    %1270 = vmatprep.subr.mxu0 0.0
    %1271 = vmatpush1.msra.mxu0 0.0
    %1272 = vmatprep.subr.mxu0 0.0
    %1273 = vmatpush1.msra.mxu0 0.0
    %1274 = vmatprep.subr.mxu0 0.0
    %1275 = vmatpush1.msra.mxu0 0.0
    %1276 = vmatprep.subr.mxu0 0.0
    %1277 = vmatpush1.msra.mxu0 0.0
    %1278 = vmatprep.subr.mxu0 0.0
    %1279 = vmatpush1.msra.mxu0 0.0
    %1280 = vmatprep.subr.mxu0 0.0
    %1281 = vmatpush1.msra.mxu0 0.0
    %1282 = vmatprep.subr.mxu0 0.0
    %1283 = vmatpush1.msra.mxu0 0.0
    %1284 = vmatprep.subr.mxu0 0.0
    %1285 = vmatpush1.msra.mxu0 0.0
    %1286 = vmatprep.mubr.f32.mxu0 0.0
    %1287 = vmatmul.mubr.f32.gmra.mrb[0].mxu0 %v1150
    %v1288 = vpop.f32.mrb[0].mxu0
    %v1289 = vadd.f32 0.0, %v1288
    %v1290 = vpop.f32.mrb[0].mxu0
    %v1291 = vadd.f32 0.0, %v1290
    %1292 = vdwg.mxu0
    %v1297 = vrot.slane %v1218, 7
    %v1298 = vrot.slane %v1220, 7
    %v1299 = vrot.slane %v1289, 7
    %v1300 = vrot.slane %v1291, 7
    %v1305 = vadd.f32 %v913, %v1297
    %v1306 = vadd.f32 %v914, %v1298
    %v1307 = vadd.f32 %v915, %v1299
    %v1308 = vadd.f32 %v916, %v1300
    %v1309 = vxor.u32 %v1305, 2147483648
    %v1310 = vmul.f32 %v1309, 1.442695
    %v1311 = vpow.pop %v1310
    %v1312 = vadd.f32 %v1311, 1.0
    %v1313 = vrcp.pop %v1312
    %v1314 = vmul.f32 1.0, %v1313
    %v1315 = vxor.u32 %v1306, 2147483648
    %v1316 = vmul.f32 %v1315, 1.442695
    %v1317 = vpow.pop %v1316
    %v1318 = vadd.f32 %v1317, 1.0
    %v1319 = vrcp.pop %v1318
    %v1320 = vmul.f32 1.0, %v1319
    %v1321 = vtanh.pop %v1307
    %v1322 = vxor.u32 %v1308, 2147483648
    %v1323 = vmul.f32 %v1322, 1.442695
    %v1324 = vpow.pop %v1323
    %v1325 = vadd.f32 %v1324, 1.0
    %v1326 = vrcp.pop %v1325
    %v1327 = vmul.f32 1.0, %v1326
    %v1329 = vrot.slane %v1148, 7
    %v1331 = vmul.f32 %v1320, %v1329
    %v1332 = vmul.f32 %v1314, %v1321
    %v1333 = vadd.f32 %v1331, %v1332
    %v1334 = vtanh.pop %v1333
    %v1335 = vmul.f32 %v1327, %v1334
    %v1337 = vrot.slane %v1335, 1
    %1339 = vmatprep.subr.mxu0 %v918
    %1340 = vmatpush1.msra.mxu0 %v917
    %1341 = vmatprep.subr.mxu0 %v922
    %1342 = vmatpush1.msra.mxu0 %v921
    %1343 = vmatprep.subr.mxu0 %v926
    %1344 = vmatpush1.msra.mxu0 %v925
    %1345 = vmatprep.subr.mxu0 %v930
    %1346 = vmatpush1.msra.mxu0 %v929
    %1347 = vmatprep.subr.mxu0 %v934
    %1348 = vmatpush1.msra.mxu0 %v933
    %1349 = vmatprep.subr.mxu0 %v938
    %1350 = vmatpush1.msra.mxu0 %v937
    %1351 = vmatprep.subr.mxu0 %v942
    %1352 = vmatpush1.msra.mxu0 %v941
    %1353 = vmatprep.subr.mxu0 %v946
    %1354 = vmatpush1.msra.mxu0 %v945
    %1355 = vmatprep.subr.mxu0 %v950
    %1356 = vmatpush1.msra.mxu0 %v949
    %1357 = vmatprep.subr.mxu0 %v954
    %1358 = vmatpush1.msra.mxu0 %v953
    %1359 = vmatprep.subr.mxu0 %v958
    %1360 = vmatpush1.msra.mxu0 %v957
    %1361 = vmatprep.subr.mxu0 %v962
    %1362 = vmatpush1.msra.mxu0 %v961
    %1363 = vmatprep.subr.mxu0 %v966
    %1364 = vmatpush1.msra.mxu0 %v965
    %1365 = vmatprep.subr.mxu0 %v970
    %1366 = vmatpush1.msra.mxu0 %v969
    %1367 = vmatprep.subr.mxu0 %v974
    %1368 = vmatpush1.msra.mxu0 %v973
    %1369 = vmatprep.subr.mxu0 %v978
    %1370 = vmatpush1.msra.mxu0 %v977
    %1371 = vmatprep.subr.mxu0 0.0
    %1372 = vmatpush1.msra.mxu0 0.0
    %1373 = vmatprep.subr.mxu0 0.0
    %1374 = vmatpush1.msra.mxu0 0.0
    %1375 = vmatprep.subr.mxu0 0.0
    %1376 = vmatpush1.msra.mxu0 0.0
    %1377 = vmatprep.subr.mxu0 0.0
    %1378 = vmatpush1.msra.mxu0 0.0
    %1379 = vmatprep.subr.mxu0 0.0
    %1380 = vmatpush1.msra.mxu0 0.0
    %1381 = vmatprep.subr.mxu0 0.0
    %1382 = vmatpush1.msra.mxu0 0.0
    %1383 = vmatprep.subr.mxu0 0.0
    %1384 = vmatpush1.msra.mxu0 0.0
    %1385 = vmatprep.subr.mxu0 0.0
    %1386 = vmatpush1.msra.mxu0 0.0
    %1387 = vmatprep.subr.mxu0 0.0
    %1388 = vmatpush1.msra.mxu0 0.0
    %1389 = vmatprep.subr.mxu0 0.0
    %1390 = vmatpush1.msra.mxu0 0.0
    %1391 = vmatprep.subr.mxu0 0.0
    %1392 = vmatpush1.msra.mxu0 0.0
    %1393 = vmatprep.subr.mxu0 0.0
    %1394 = vmatpush1.msra.mxu0 0.0
    %1395 = vmatprep.subr.mxu0 0.0
    %1396 = vmatpush1.msra.mxu0 0.0
    %1397 = vmatprep.subr.mxu0 0.0
    %1398 = vmatpush1.msra.mxu0 0.0
    %1399 = vmatprep.subr.mxu0 0.0
    %1400 = vmatpush1.msra.mxu0 0.0
    %1401 = vmatprep.subr.mxu0 0.0
    %1402 = vmatpush1.msra.mxu0 0.0
    %1403 = vmatprep.mubr.f32.mxu0 0.0
    %1404 = vmatmul.mubr.f32.gmra.mrb[0].mxu0 %v1337
    %v1405 = vpop.f32.mrb[0].mxu0
    %v1406 = vadd.f32 0.0, %v1405
    %v1407 = vpop.f32.mrb[0].mxu0
    %v1408 = vadd.f32 0.0, %v1407
    %1409 = vdwg.mxu0
    %1410 = vmatprep.subr.mxu0 %v920
    %1411 = vmatpush1.msra.mxu0 %v919
    %1412 = vmatprep.subr.mxu0 %v924
    %1413 = vmatpush1.msra.mxu0 %v923
    %1414 = vmatprep.subr.mxu0 %v928
    %1415 = vmatpush1.msra.mxu0 %v927
    %1416 = vmatprep.subr.mxu0 %v932
    %1417 = vmatpush1.msra.mxu0 %v931
    %1418 = vmatprep.subr.mxu0 %v936
    %1419 = vmatpush1.msra.mxu0 %v935
    %1420 = vmatprep.subr.mxu0 %v940
    %1421 = vmatpush1.msra.mxu0 %v939
    %1422 = vmatprep.subr.mxu0 %v944
    %1423 = vmatpush1.msra.mxu0 %v943
    %1424 = vmatprep.subr.mxu0 %v948
    %1425 = vmatpush1.msra.mxu0 %v947
    %1426 = vmatprep.subr.mxu0 %v952
    %1427 = vmatpush1.msra.mxu0 %v951
    %1428 = vmatprep.subr.mxu0 %v956
    %1429 = vmatpush1.msra.mxu0 %v955
    %1430 = vmatprep.subr.mxu0 %v960
    %1431 = vmatpush1.msra.mxu0 %v959
    %1432 = vmatprep.subr.mxu0 %v964
    %1433 = vmatpush1.msra.mxu0 %v963
    %1434 = vmatprep.subr.mxu0 %v968
    %1435 = vmatpush1.msra.mxu0 %v967
    %1436 = vmatprep.subr.mxu0 %v972
    %1437 = vmatpush1.msra.mxu0 %v971
    %1438 = vmatprep.subr.mxu0 %v976
    %1439 = vmatpush1.msra.mxu0 %v975
    %1440 = vmatprep.subr.mxu0 %v980
    %1441 = vmatpush1.msra.mxu0 %v979
    %1442 = vmatprep.subr.mxu0 0.0
    %1443 = vmatpush1.msra.mxu0 0.0
    %1444 = vmatprep.subr.mxu0 0.0
    %1445 = vmatpush1.msra.mxu0 0.0
    %1446 = vmatprep.subr.mxu0 0.0
    %1447 = vmatpush1.msra.mxu0 0.0
    %1448 = vmatprep.subr.mxu0 0.0
    %1449 = vmatpush1.msra.mxu0 0.0
    %1450 = vmatprep.subr.mxu0 0.0
    %1451 = vmatpush1.msra.mxu0 0.0
    %1452 = vmatprep.subr.mxu0 0.0
    %1453 = vmatpush1.msra.mxu0 0.0
    %1454 = vmatprep.subr.mxu0 0.0
    %1455 = vmatpush1.msra.mxu0 0.0
    %1456 = vmatprep.subr.mxu0 0.0
    %1457 = vmatpush1.msra.mxu0 0.0
    %1458 = vmatprep.subr.mxu0 0.0
    %1459 = vmatpush1.msra.mxu0 0.0
    %1460 = vmatprep.subr.mxu0 0.0
    %1461 = vmatpush1.msra.mxu0 0.0
    %1462 = vmatprep.subr.mxu0 0.0
    %1463 = vmatpush1.msra.mxu0 0.0
    %1464 = vmatprep.subr.mxu0 0.0
    %1465 = vmatpush1.msra.mxu0 0.0
    %1466 = vmatprep.subr.mxu0 0.0
    %1467 = vmatpush1.msra.mxu0 0.0
    %1468 = vmatprep.subr.mxu0 0.0
    %1469 = vmatpush1.msra.mxu0 0.0
    %1470 = vmatprep.subr.mxu0 0.0
    %1471 = vmatpush1.msra.mxu0 0.0
    %1472 = vmatprep.subr.mxu0 0.0
    %1473 = vmatpush1.msra.mxu0 0.0
    %1474 = vmatprep.mubr.f32.mxu0 0.0
    %1475 = vmatmul.mubr.f32.gmra.mrb[0].mxu0 %v1337
    %v1476 = vpop.f32.mrb[0].mxu0
    %v1477 = vadd.f32 0.0, %v1476
    %v1478 = vpop.f32.mrb[0].mxu0
    %v1479 = vadd.f32 0.0, %v1478
    %1480 = vdwg.mxu0
    %v1485 = vrot.slane %v1406, 6
    %v1486 = vrot.slane %v1408, 6
    %v1487 = vrot.slane %v1477, 6
    %v1488 = vrot.slane %v1479, 6
    %v1493 = vadd.f32 %v913, %v1485
    %v1494 = vadd.f32 %v914, %v1486
    %v1495 = vadd.f32 %v915, %v1487
    %v1496 = vadd.f32 %v916, %v1488
    %v1497 = vxor.u32 %v1493, 2147483648
    %v1498 = vmul.f32 %v1497, 1.442695
    %v1499 = vpow.pop %v1498
    %v1500 = vadd.f32 %v1499, 1.0
    %v1501 = vrcp.pop %v1500
    %v1502 = vmul.f32 1.0, %v1501
    %v1503 = vxor.u32 %v1494, 2147483648
    %v1504 = vmul.f32 %v1503, 1.442695
    %v1505 = vpow.pop %v1504
    %v1506 = vadd.f32 %v1505, 1.0
    %v1507 = vrcp.pop %v1506
    %v1508 = vmul.f32 1.0, %v1507
    %v1509 = vtanh.pop %v1495
    %v1510 = vxor.u32 %v1496, 2147483648
    %v1511 = vmul.f32 %v1510, 1.442695
    %v1512 = vpow.pop %v1511
    %v1513 = vadd.f32 %v1512, 1.0
    %v1514 = vrcp.pop %v1513
    %v1515 = vmul.f32 1.0, %v1514
    %v1517 = vrot.slane %v1333, 7
    %v1519 = vmul.f32 %v1508, %v1517
    %v1520 = vmul.f32 %v1502, %v1509
    %v1521 = vadd.f32 %v1519, %v1520
    %v1522 = vtanh.pop %v1521
    %v1523 = vmul.f32 %v1515, %v1522
    %v1525 = vrot.slane %v1523, 2
    %1527 = vmatprep.subr.mxu0 %v918
    %1528 = vmatpush1.msra.mxu0 %v917
    %1529 = vmatprep.subr.mxu0 %v922
    %1530 = vmatpush1.msra.mxu0 %v921
    %1531 = vmatprep.subr.mxu0 %v926
    %1532 = vmatpush1.msra.mxu0 %v925
    %1533 = vmatprep.subr.mxu0 %v930
    %1534 = vmatpush1.msra.mxu0 %v929
    %1535 = vmatprep.subr.mxu0 %v934
    %1536 = vmatpush1.msra.mxu0 %v933
    %1537 = vmatprep.subr.mxu0 %v938
    %1538 = vmatpush1.msra.mxu0 %v937
    %1539 = vmatprep.subr.mxu0 %v942
    %1540 = vmatpush1.msra.mxu0 %v941
    %1541 = vmatprep.subr.mxu0 %v946
    %1542 = vmatpush1.msra.mxu0 %v945
    %1543 = vmatprep.subr.mxu0 %v950
    %1544 = vmatpush1.msra.mxu0 %v949
    %1545 = vmatprep.subr.mxu0 %v954
    %1546 = vmatpush1.msra.mxu0 %v953
    %1547 = vmatprep.subr.mxu0 %v958
    %1548 = vmatpush1.msra.mxu0 %v957
    %1549 = vmatprep.subr.mxu0 %v962
    %1550 = vmatpush1.msra.mxu0 %v961
    %1551 = vmatprep.subr.mxu0 %v966
    %1552 = vmatpush1.msra.mxu0 %v965
    %1553 = vmatprep.subr.mxu0 %v970
    %1554 = vmatpush1.msra.mxu0 %v969
    %1555 = vmatprep.subr.mxu0 %v974
    %1556 = vmatpush1.msra.mxu0 %v973
    %1557 = vmatprep.subr.mxu0 %v978
    %1558 = vmatpush1.msra.mxu0 %v977
    %1559 = vmatprep.subr.mxu0 0.0
    %1560 = vmatpush1.msra.mxu0 0.0
    %1561 = vmatprep.subr.mxu0 0.0
    %1562 = vmatpush1.msra.mxu0 0.0
    %1563 = vmatprep.subr.mxu0 0.0
    %1564 = vmatpush1.msra.mxu0 0.0
    %1565 = vmatprep.subr.mxu0 0.0
    %1566 = vmatpush1.msra.mxu0 0.0
    %1567 = vmatprep.subr.mxu0 0.0
    %1568 = vmatpush1.msra.mxu0 0.0
    %1569 = vmatprep.subr.mxu0 0.0
    %1570 = vmatpush1.msra.mxu0 0.0
    %1571 = vmatprep.subr.mxu0 0.0
    %1572 = vmatpush1.msra.mxu0 0.0
    %1573 = vmatprep.subr.mxu0 0.0
    %1574 = vmatpush1.msra.mxu0 0.0
    %1575 = vmatprep.subr.mxu0 0.0
    %1576 = vmatpush1.msra.mxu0 0.0
    %1577 = vmatprep.subr.mxu0 0.0
    %1578 = vmatpush1.msra.mxu0 0.0
    %1579 = vmatprep.subr.mxu0 0.0
    %1580 = vmatpush1.msra.mxu0 0.0
    %1581 = vmatprep.subr.mxu0 0.0
    %1582 = vmatpush1.msra.mxu0 0.0
    %1583 = vmatprep.subr.mxu0 0.0
    %1584 = vmatpush1.msra.mxu0 0.0
    %1585 = vmatprep.subr.mxu0 0.0
    %1586 = vmatpush1.msra.mxu0 0.0
    %1587 = vmatprep.subr.mxu0 0.0
    %1588 = vmatpush1.msra.mxu0 0.0
    %1589 = vmatprep.subr.mxu0 0.0
    %1590 = vmatpush1.msra.mxu0 0.0
    %1591 = vmatprep.mubr.f32.mxu0 0.0
    %1592 = vmatmul.mubr.f32.gmra.mrb[0].mxu0 %v1525
    %v1593 = vpop.f32.mrb[0].mxu0
    %v1594 = vadd.f32 0.0, %v1593
    %v1595 = vpop.f32.mrb[0].mxu0
    %v1596 = vadd.f32 0.0, %v1595
    %1597 = vdwg.mxu0
    %1598 = vmatprep.subr.mxu0 %v920
    %1599 = vmatpush1.msra.mxu0 %v919
    %1600 = vmatprep.subr.mxu0 %v924
    %1601 = vmatpush1.msra.mxu0 %v923
    %1602 = vmatprep.subr.mxu0 %v928
    %1603 = vmatpush1.msra.mxu0 %v927
    %1604 = vmatprep.subr.mxu0 %v932
    %1605 = vmatpush1.msra.mxu0 %v931
    %1606 = vmatprep.subr.mxu0 %v936
    %1607 = vmatpush1.msra.mxu0 %v935
    %1608 = vmatprep.subr.mxu0 %v940
    %1609 = vmatpush1.msra.mxu0 %v939
    %1610 = vmatprep.subr.mxu0 %v944
    %1611 = vmatpush1.msra.mxu0 %v943
    %1612 = vmatprep.subr.mxu0 %v948
    %1613 = vmatpush1.msra.mxu0 %v947
    %1614 = vmatprep.subr.mxu0 %v952
    %1615 = vmatpush1.msra.mxu0 %v951
    %1616 = vmatprep.subr.mxu0 %v956
    %1617 = vmatpush1.msra.mxu0 %v955
    %1618 = vmatprep.subr.mxu0 %v960
    %1619 = vmatpush1.msra.mxu0 %v959
    %1620 = vmatprep.subr.mxu0 %v964
    %1621 = vmatpush1.msra.mxu0 %v963
    %1622 = vmatprep.subr.mxu0 %v968
    %1623 = vmatpush1.msra.mxu0 %v967
    %1624 = vmatprep.subr.mxu0 %v972
    %1625 = vmatpush1.msra.mxu0 %v971
    %1626 = vmatprep.subr.mxu0 %v976
    %1627 = vmatpush1.msra.mxu0 %v975
    %1628 = vmatprep.subr.mxu0 %v980
    %1629 = vmatpush1.msra.mxu0 %v979
    %1630 = vmatprep.subr.mxu0 0.0
    %1631 = vmatpush1.msra.mxu0 0.0
    %1632 = vmatprep.subr.mxu0 0.0
    %1633 = vmatpush1.msra.mxu0 0.0
    %1634 = vmatprep.subr.mxu0 0.0
    %1635 = vmatpush1.msra.mxu0 0.0
    %1636 = vmatprep.subr.mxu0 0.0
    %1637 = vmatpush1.msra.mxu0 0.0
    %1638 = vmatprep.subr.mxu0 0.0
    %1639 = vmatpush1.msra.mxu0 0.0
    %1640 = vmatprep.subr.mxu0 0.0
    %1641 = vmatpush1.msra.mxu0 0.0
    %1642 = vmatprep.subr.mxu0 0.0
    %1643 = vmatpush1.msra.mxu0 0.0
    %1644 = vmatprep.subr.mxu0 0.0
    %1645 = vmatpush1.msra.mxu0 0.0
    %1646 = vmatprep.subr.mxu0 0.0
    %1647 = vmatpush1.msra.mxu0 0.0
    %1648 = vmatprep.subr.mxu0 0.0
    %1649 = vmatpush1.msra.mxu0 0.0
    %1650 = vmatprep.subr.mxu0 0.0
    %1651 = vmatpush1.msra.mxu0 0.0
    %1652 = vmatprep.subr.mxu0 0.0
    %1653 = vmatpush1.msra.mxu0 0.0
    %1654 = vmatprep.subr.mxu0 0.0
    %1655 = vmatpush1.msra.mxu0 0.0
    %1656 = vmatprep.subr.mxu0 0.0
    %1657 = vmatpush1.msra.mxu0 0.0
    %1658 = vmatprep.subr.mxu0 0.0
    %1659 = vmatpush1.msra.mxu0 0.0
    %1660 = vmatprep.subr.mxu0 0.0
    %1661 = vmatpush1.msra.mxu0 0.0
    %1662 = vmatprep.mubr.f32.mxu0 0.0
    %1663 = vmatmul.mubr.f32.gmra.mrb[0].mxu0 %v1525
    %v1664 = vpop.f32.mrb[0].mxu0
    %v1665 = vadd.f32 0.0, %v1664
    %v1666 = vpop.f32.mrb[0].mxu0
    %v1667 = vadd.f32 0.0, %v1666
    %1668 = vdwg.mxu0
    %v1673 = vrot.slane %v1594, 5
    %v1674 = vrot.slane %v1596, 5
    %v1675 = vrot.slane %v1665, 5
    %v1676 = vrot.slane %v1667, 5
    %v1681 = vadd.f32 %v913, %v1673
    %v1682 = vadd.f32 %v914, %v1674
    %v1683 = vadd.f32 %v915, %v1675
    %v1684 = vadd.f32 %v916, %v1676
    %v1685 = vxor.u32 %v1681, 2147483648
    %v1686 = vmul.f32 %v1685, 1.442695
    %v1687 = vpow.pop %v1686
    %v1688 = vadd.f32 %v1687, 1.0
    %v1689 = vrcp.pop %v1688
    %v1690 = vmul.f32 1.0, %v1689
    %v1691 = vxor.u32 %v1682, 2147483648
    %v1692 = vmul.f32 %v1691, 1.442695
    %v1693 = vpow.pop %v1692
    %v1694 = vadd.f32 %v1693, 1.0
    %v1695 = vrcp.pop %v1694
    %v1696 = vmul.f32 1.0, %v1695
    %v1697 = vtanh.pop %v1683
    %v1698 = vxor.u32 %v1684, 2147483648
    %v1699 = vmul.f32 %v1698, 1.442695
    %v1700 = vpow.pop %v1699
    %v1701 = vadd.f32 %v1700, 1.0
    %v1702 = vrcp.pop %v1701
    %v1703 = vmul.f32 1.0, %v1702
    %v1705 = vrot.slane %v1521, 7
    %v1707 = vmul.f32 %v1696, %v1705
    %v1708 = vmul.f32 %v1690, %v1697
    %v1709 = vadd.f32 %v1707, %v1708
    %v1710 = vtanh.pop %v1709
    %v1711 = vmul.f32 %v1703, %v1710
    %v1713 = vrot.slane %v1711, 3
    %1715 = vmatprep.subr.mxu0 %v918
    %1716 = vmatpush1.msra.mxu0 %v917
    %1717 = vmatprep.subr.mxu0 %v922
    %1718 = vmatpush1.msra.mxu0 %v921
    %1719 = vmatprep.subr.mxu0 %v926
    %1720 = vmatpush1.msra.mxu0 %v925
    %1721 = vmatprep.subr.mxu0 %v930
    %1722 = vmatpush1.msra.mxu0 %v929
    %1723 = vmatprep.subr.mxu0 %v934
    %1724 = vmatpush1.msra.mxu0 %v933
    %1725 = vmatprep.subr.mxu0 %v938
    %1726 = vmatpush1.msra.mxu0 %v937
    %1727 = vmatprep.subr.mxu0 %v942
    %1728 = vmatpush1.msra.mxu0 %v941
    %1729 = vmatprep.subr.mxu0 %v946
    %1730 = vmatpush1.msra.mxu0 %v945
    %1731 = vmatprep.subr.mxu0 %v950
    %1732 = vmatpush1.msra.mxu0 %v949
    %1733 = vmatprep.subr.mxu0 %v954
    %1734 = vmatpush1.msra.mxu0 %v953
    %1735 = vmatprep.subr.mxu0 %v958
    %1736 = vmatpush1.msra.mxu0 %v957
    %1737 = vmatprep.subr.mxu0 %v962
    %1738 = vmatpush1.msra.mxu0 %v961
    %1739 = vmatprep.subr.mxu0 %v966
    %1740 = vmatpush1.msra.mxu0 %v965
    %1741 = vmatprep.subr.mxu0 %v970
    %1742 = vmatpush1.msra.mxu0 %v969
    %1743 = vmatprep.subr.mxu0 %v974
    %1744 = vmatpush1.msra.mxu0 %v973
    %1745 = vmatprep.subr.mxu0 %v978
    %1746 = vmatpush1.msra.mxu0 %v977
    %1747 = vmatprep.subr.mxu0 0.0
    %1748 = vmatpush1.msra.mxu0 0.0
    %1749 = vmatprep.subr.mxu0 0.0
    %1750 = vmatpush1.msra.mxu0 0.0
    %1751 = vmatprep.subr.mxu0 0.0
    %1752 = vmatpush1.msra.mxu0 0.0
    %1753 = vmatprep.subr.mxu0 0.0
    %1754 = vmatpush1.msra.mxu0 0.0
    %1755 = vmatprep.subr.mxu0 0.0
    %1756 = vmatpush1.msra.mxu0 0.0
    %1757 = vmatprep.subr.mxu0 0.0
    %1758 = vmatpush1.msra.mxu0 0.0
    %1759 = vmatprep.subr.mxu0 0.0
    %1760 = vmatpush1.msra.mxu0 0.0
    %1761 = vmatprep.subr.mxu0 0.0
    %1762 = vmatpush1.msra.mxu0 0.0
    %1763 = vmatprep.subr.mxu0 0.0
    %1764 = vmatpush1.msra.mxu0 0.0
    %1765 = vmatprep.subr.mxu0 0.0
    %1766 = vmatpush1.msra.mxu0 0.0
    %1767 = vmatprep.subr.mxu0 0.0
    %1768 = vmatpush1.msra.mxu0 0.0
    %1769 = vmatprep.subr.mxu0 0.0
    %1770 = vmatpush1.msra.mxu0 0.0
    %1771 = vmatprep.subr.mxu0 0.0
    %1772 = vmatpush1.msra.mxu0 0.0
    %1773 = vmatprep.subr.mxu0 0.0
    %1774 = vmatpush1.msra.mxu0 0.0
    %1775 = vmatprep.subr.mxu0 0.0
    %1776 = vmatpush1.msra.mxu0 0.0
    %1777 = vmatprep.subr.mxu0 0.0
    %1778 = vmatpush1.msra.mxu0 0.0
    %1779 = vmatprep.mubr.f32.mxu0 0.0
    %1780 = vmatmul.mubr.f32.gmra.mrb[0].mxu0 %v1713
    %v1781 = vpop.f32.mrb[0].mxu0
    %v1782 = vadd.f32 0.0, %v1781
    %v1783 = vpop.f32.mrb[0].mxu0
    %v1784 = vadd.f32 0.0, %v1783
    %1785 = vdwg.mxu0
    %1786 = vmatprep.subr.mxu0 %v920
    %1787 = vmatpush1.msra.mxu0 %v919
    %1788 = vmatprep.subr.mxu0 %v924
    %1789 = vmatpush1.msra.mxu0 %v923
    %1790 = vmatprep.subr.mxu0 %v928
    %1791 = vmatpush1.msra.mxu0 %v927
    %1792 = vmatprep.subr.mxu0 %v932
    %1793 = vmatpush1.msra.mxu0 %v931
    %1794 = vmatprep.subr.mxu0 %v936
    %1795 = vmatpush1.msra.mxu0 %v935
    %1796 = vmatprep.subr.mxu0 %v940
    %1797 = vmatpush1.msra.mxu0 %v939
    %1798 = vmatprep.subr.mxu0 %v944
    %1799 = vmatpush1.msra.mxu0 %v943
    %1800 = vmatprep.subr.mxu0 %v948
    %1801 = vmatpush1.msra.mxu0 %v947
    %1802 = vmatprep.subr.mxu0 %v952
    %1803 = vmatpush1.msra.mxu0 %v951
    %1804 = vmatprep.subr.mxu0 %v956
    %1805 = vmatpush1.msra.mxu0 %v955
    %1806 = vmatprep.subr.mxu0 %v960
    %1807 = vmatpush1.msra.mxu0 %v959
    %1808 = vmatprep.subr.mxu0 %v964
    %1809 = vmatpush1.msra.mxu0 %v963
    %1810 = vmatprep.subr.mxu0 %v968
    %1811 = vmatpush1.msra.mxu0 %v967
    %1812 = vmatprep.subr.mxu0 %v972
    %1813 = vmatpush1.msra.mxu0 %v971
    %1814 = vmatprep.subr.mxu0 %v976
    %1815 = vmatpush1.msra.mxu0 %v975
    %1816 = vmatprep.subr.mxu0 %v980
    %1817 = vmatpush1.msra.mxu0 %v979
    %1818 = vmatprep.subr.mxu0 0.0
    %1819 = vmatpush1.msra.mxu0 0.0
    %1820 = vmatprep.subr.mxu0 0.0
    %1821 = vmatpush1.msra.mxu0 0.0
    %1822 = vmatprep.subr.mxu0 0.0
    %1823 = vmatpush1.msra.mxu0 0.0
    %1824 = vmatprep.subr.mxu0 0.0
    %1825 = vmatpush1.msra.mxu0 0.0
    %1826 = vmatprep.subr.mxu0 0.0
    %1827 = vmatpush1.msra.mxu0 0.0
    %1828 = vmatprep.subr.mxu0 0.0
    %1829 = vmatpush1.msra.mxu0 0.0
    %1830 = vmatprep.subr.mxu0 0.0
    %1831 = vmatpush1.msra.mxu0 0.0
    %1832 = vmatprep.subr.mxu0 0.0
    %1833 = vmatpush1.msra.mxu0 0.0
    %1834 = vmatprep.subr.mxu0 0.0
    %1835 = vmatpush1.msra.mxu0 0.0
    %1836 = vmatprep.subr.mxu0 0.0
    %1837 = vmatpush1.msra.mxu0 0.0
    %1838 = vmatprep.subr.mxu0 0.0
    %1839 = vmatpush1.msra.mxu0 0.0
    %1840 = vmatprep.subr.mxu0 0.0
    %1841 = vmatpush1.msra.mxu0 0.0
    %1842 = vmatprep.subr.mxu0 0.0
    %1843 = vmatpush1.msra.mxu0 0.0
    %1844 = vmatprep.subr.mxu0 0.0
    %1845 = vmatpush1.msra.mxu0 0.0
    %1846 = vmatprep.subr.mxu0 0.0
    %1847 = vmatpush1.msra.mxu0 0.0
    %1848 = vmatprep.subr.mxu0 0.0
    %1849 = vmatpush1.msra.mxu0 0.0
    %1850 = vmatprep.mubr.f32.mxu0 0.0
    %1851 = vmatmul.mubr.f32.gmra.mrb[0].mxu0 %v1713
    %v1852 = vpop.f32.mrb[0].mxu0
    %v1853 = vadd.f32 0.0, %v1852
    %v1854 = vpop.f32.mrb[0].mxu0
    %v1855 = vadd.f32 0.0, %v1854
    %1856 = vdwg.mxu0
    %v1861 = vrot.slane %v1782, 4
    %v1862 = vrot.slane %v1784, 4
    %v1863 = vrot.slane %v1853, 4
    %v1864 = vrot.slane %v1855, 4
    %v1869 = vadd.f32 %v913, %v1861
    %v1870 = vadd.f32 %v914, %v1862
    %v1871 = vadd.f32 %v915, %v1863
    %v1872 = vadd.f32 %v916, %v1864
    %v1873 = vxor.u32 %v1869, 2147483648
    %v1874 = vmul.f32 %v1873, 1.442695
    %v1875 = vpow.pop %v1874
    %v1876 = vadd.f32 %v1875, 1.0
    %v1877 = vrcp.pop %v1876
    %v1878 = vmul.f32 1.0, %v1877
    %v1879 = vxor.u32 %v1870, 2147483648
    %v1880 = vmul.f32 %v1879, 1.442695
    %v1881 = vpow.pop %v1880
    %v1882 = vadd.f32 %v1881, 1.0
    %v1883 = vrcp.pop %v1882
    %v1884 = vmul.f32 1.0, %v1883
    %v1885 = vtanh.pop %v1871
    %v1886 = vxor.u32 %v1872, 2147483648
    %v1887 = vmul.f32 %v1886, 1.442695
    %v1888 = vpow.pop %v1887
    %v1889 = vadd.f32 %v1888, 1.0
    %v1890 = vrcp.pop %v1889
    %v1891 = vmul.f32 1.0, %v1890
    %v1893 = vrot.slane %v1709, 7
    %v1895 = vmul.f32 %v1884, %v1893
    %v1896 = vmul.f32 %v1878, %v1885
    %v1897 = vadd.f32 %v1895, %v1896
    %v1898 = vtanh.pop %v1897
    %v1899 = vmul.f32 %v1891, %v1898
    %v1901 = vrot.slane %v1899, 4
    %1903 = vmatprep.subr.mxu0 %v918
    %1904 = vmatpush1.msra.mxu0 %v917
    %1905 = vmatprep.subr.mxu0 %v922
    %1906 = vmatpush1.msra.mxu0 %v921
    %1907 = vmatprep.subr.mxu0 %v926
    %1908 = vmatpush1.msra.mxu0 %v925
    %1909 = vmatprep.subr.mxu0 %v930
    %1910 = vmatpush1.msra.mxu0 %v929
    %1911 = vmatprep.subr.mxu0 %v934
    %1912 = vmatpush1.msra.mxu0 %v933
    %1913 = vmatprep.subr.mxu0 %v938
    %1914 = vmatpush1.msra.mxu0 %v937
    %1915 = vmatprep.subr.mxu0 %v942
    %1916 = vmatpush1.msra.mxu0 %v941
    %1917 = vmatprep.subr.mxu0 %v946
    %1918 = vmatpush1.msra.mxu0 %v945
    %1919 = vmatprep.subr.mxu0 %v950
    %1920 = vmatpush1.msra.mxu0 %v949
    %1921 = vmatprep.subr.mxu0 %v954
    %1922 = vmatpush1.msra.mxu0 %v953
    %1923 = vmatprep.subr.mxu0 %v958
    %1924 = vmatpush1.msra.mxu0 %v957
    %1925 = vmatprep.subr.mxu0 %v962
    %1926 = vmatpush1.msra.mxu0 %v961
    %1927 = vmatprep.subr.mxu0 %v966
    %1928 = vmatpush1.msra.mxu0 %v965
    %1929 = vmatprep.subr.mxu0 %v970
    %1930 = vmatpush1.msra.mxu0 %v969
    %1931 = vmatprep.subr.mxu0 %v974
    %1932 = vmatpush1.msra.mxu0 %v973
    %1933 = vmatprep.subr.mxu0 %v978
    %1934 = vmatpush1.msra.mxu0 %v977
    %1935 = vmatprep.subr.mxu0 0.0
    %1936 = vmatpush1.msra.mxu0 0.0
    %1937 = vmatprep.subr.mxu0 0.0
    %1938 = vmatpush1.msra.mxu0 0.0
    %1939 = vmatprep.subr.mxu0 0.0
    %1940 = vmatpush1.msra.mxu0 0.0
    %1941 = vmatprep.subr.mxu0 0.0
    %1942 = vmatpush1.msra.mxu0 0.0
    %1943 = vmatprep.subr.mxu0 0.0
    %1944 = vmatpush1.msra.mxu0 0.0
    %1945 = vmatprep.subr.mxu0 0.0
    %1946 = vmatpush1.msra.mxu0 0.0
    %1947 = vmatprep.subr.mxu0 0.0
    %1948 = vmatpush1.msra.mxu0 0.0
    %1949 = vmatprep.subr.mxu0 0.0
    %1950 = vmatpush1.msra.mxu0 0.0
    %1951 = vmatprep.subr.mxu0 0.0
    %1952 = vmatpush1.msra.mxu0 0.0
    %1953 = vmatprep.subr.mxu0 0.0
    %1954 = vmatpush1.msra.mxu0 0.0
    %1955 = vmatprep.subr.mxu0 0.0
    %1956 = vmatpush1.msra.mxu0 0.0
    %1957 = vmatprep.subr.mxu0 0.0
    %1958 = vmatpush1.msra.mxu0 0.0
    %1959 = vmatprep.subr.mxu0 0.0
    %1960 = vmatpush1.msra.mxu0 0.0
    %1961 = vmatprep.subr.mxu0 0.0
    %1962 = vmatpush1.msra.mxu0 0.0
    %1963 = vmatprep.subr.mxu0 0.0
    %1964 = vmatpush1.msra.mxu0 0.0
    %1965 = vmatprep.subr.mxu0 0.0
    %1966 = vmatpush1.msra.mxu0 0.0
    %1967 = vmatprep.mubr.f32.mxu0 0.0
    %1968 = vmatmul.mubr.f32.gmra.mrb[0].mxu0 %v1901
    %v1969 = vpop.f32.mrb[0].mxu0
    %v1970 = vadd.f32 0.0, %v1969
    %v1971 = vpop.f32.mrb[0].mxu0
    %v1972 = vadd.f32 0.0, %v1971
    %1973 = vdwg.mxu0
    %1974 = vmatprep.subr.mxu0 %v920
    %1975 = vmatpush1.msra.mxu0 %v919
    %1976 = vmatprep.subr.mxu0 %v924
    %1977 = vmatpush1.msra.mxu0 %v923
    %1978 = vmatprep.subr.mxu0 %v928
    %1979 = vmatpush1.msra.mxu0 %v927
    %1980 = vmatprep.subr.mxu0 %v932
    %1981 = vmatpush1.msra.mxu0 %v931
    %1982 = vmatprep.subr.mxu0 %v936
    %1983 = vmatpush1.msra.mxu0 %v935
    %1984 = vmatprep.subr.mxu0 %v940
    %1985 = vmatpush1.msra.mxu0 %v939
    %1986 = vmatprep.subr.mxu0 %v944
    %1987 = vmatpush1.msra.mxu0 %v943
    %1988 = vmatprep.subr.mxu0 %v948
    %1989 = vmatpush1.msra.mxu0 %v947
    %1990 = vmatprep.subr.mxu0 %v952
    %1991 = vmatpush1.msra.mxu0 %v951
    %1992 = vmatprep.subr.mxu0 %v956
    %1993 = vmatpush1.msra.mxu0 %v955
    %1994 = vmatprep.subr.mxu0 %v960
    %1995 = vmatpush1.msra.mxu0 %v959
    %1996 = vmatprep.subr.mxu0 %v964
    %1997 = vmatpush1.msra.mxu0 %v963
    %1998 = vmatprep.subr.mxu0 %v968
    %1999 = vmatpush1.msra.mxu0 %v967
    %2000 = vmatprep.subr.mxu0 %v972
    %2001 = vmatpush1.msra.mxu0 %v971
    %2002 = vmatprep.subr.mxu0 %v976
    %2003 = vmatpush1.msra.mxu0 %v975
    %2004 = vmatprep.subr.mxu0 %v980
    %2005 = vmatpush1.msra.mxu0 %v979
    %2006 = vmatprep.subr.mxu0 0.0
    %2007 = vmatpush1.msra.mxu0 0.0
    %2008 = vmatprep.subr.mxu0 0.0
    %2009 = vmatpush1.msra.mxu0 0.0
    %2010 = vmatprep.subr.mxu0 0.0
    %2011 = vmatpush1.msra.mxu0 0.0
    %2012 = vmatprep.subr.mxu0 0.0
    %2013 = vmatpush1.msra.mxu0 0.0
    %2014 = vmatprep.subr.mxu0 0.0
    %2015 = vmatpush1.msra.mxu0 0.0
    %2016 = vmatprep.subr.mxu0 0.0
    %2017 = vmatpush1.msra.mxu0 0.0
    %2018 = vmatprep.subr.mxu0 0.0
    %2019 = vmatpush1.msra.mxu0 0.0
    %2020 = vmatprep.subr.mxu0 0.0
    %2021 = vmatpush1.msra.mxu0 0.0
    %2022 = vmatprep.subr.mxu0 0.0
    %2023 = vmatpush1.msra.mxu0 0.0
    %2024 = vmatprep.subr.mxu0 0.0
    %2025 = vmatpush1.msra.mxu0 0.0
    %2026 = vmatprep.subr.mxu0 0.0
    %2027 = vmatpush1.msra.mxu0 0.0
    %2028 = vmatprep.subr.mxu0 0.0
    %2029 = vmatpush1.msra.mxu0 0.0
    %2030 = vmatprep.subr.mxu0 0.0
    %2031 = vmatpush1.msra.mxu0 0.0
    %2032 = vmatprep.subr.mxu0 0.0
    %2033 = vmatpush1.msra.mxu0 0.0
    %2034 = vmatprep.subr.mxu0 0.0
    %2035 = vmatpush1.msra.mxu0 0.0
    %2036 = vmatprep.subr.mxu0 0.0
    %2037 = vmatpush1.msra.mxu0 0.0
    %2038 = vmatprep.mubr.f32.mxu0 0.0
    %2039 = vmatmul.mubr.f32.gmra.mrb[0].mxu0 %v1901
    %v2040 = vpop.f32.mrb[0].mxu0
    %v2041 = vadd.f32 0.0, %v2040
    %v2042 = vpop.f32.mrb[0].mxu0
    %v2043 = vadd.f32 0.0, %v2042
    %2044 = vdwg.mxu0
    %v2049 = vrot.slane %v1970, 3
    %v2050 = vrot.slane %v1972, 3
    %v2051 = vrot.slane %v2041, 3
    %v2052 = vrot.slane %v2043, 3
    %v2057 = vadd.f32 %v913, %v2049
    %v2058 = vadd.f32 %v914, %v2050
    %v2059 = vadd.f32 %v915, %v2051
    %v2060 = vadd.f32 %v916, %v2052
    %v2061 = vxor.u32 %v2057, 2147483648
    %v2062 = vmul.f32 %v2061, 1.442695
    %v2063 = vpow.pop %v2062
    %v2064 = vadd.f32 %v2063, 1.0
    %v2065 = vrcp.pop %v2064
    %v2066 = vmul.f32 1.0, %v2065
    %v2067 = vxor.u32 %v2058, 2147483648
    %v2068 = vmul.f32 %v2067, 1.442695
    %v2069 = vpow.pop %v2068
    %v2070 = vadd.f32 %v2069, 1.0
    %v2071 = vrcp.pop %v2070
    %v2072 = vmul.f32 1.0, %v2071
    %v2073 = vtanh.pop %v2059
    %v2074 = vxor.u32 %v2060, 2147483648
    %v2075 = vmul.f32 %v2074, 1.442695
    %v2076 = vpow.pop %v2075
    %v2077 = vadd.f32 %v2076, 1.0
    %v2078 = vrcp.pop %v2077
    %v2079 = vmul.f32 1.0, %v2078
    %v2081 = vrot.slane %v1897, 7
    %v2083 = vmul.f32 %v2072, %v2081
    %v2084 = vmul.f32 %v2066, %v2073
    %v2085 = vadd.f32 %v2083, %v2084
    %v2086 = vtanh.pop %v2085
    %v2087 = vmul.f32 %v2079, %v2086
    %v2089 = vrot.slane %v2087, 5
    %2091 = vmatprep.subr.mxu0 %v918
    %2092 = vmatpush1.msra.mxu0 %v917
    %2093 = vmatprep.subr.mxu0 %v922
    %2094 = vmatpush1.msra.mxu0 %v921
    %2095 = vmatprep.subr.mxu0 %v926
    %2096 = vmatpush1.msra.mxu0 %v925
    %2097 = vmatprep.subr.mxu0 %v930
    %2098 = vmatpush1.msra.mxu0 %v929
    %2099 = vmatprep.subr.mxu0 %v934
    %2100 = vmatpush1.msra.mxu0 %v933
    %2101 = vmatprep.subr.mxu0 %v938
    %2102 = vmatpush1.msra.mxu0 %v937
    %2103 = vmatprep.subr.mxu0 %v942
    %2104 = vmatpush1.msra.mxu0 %v941
    %2105 = vmatprep.subr.mxu0 %v946
    %2106 = vmatpush1.msra.mxu0 %v945
    %2107 = vmatprep.subr.mxu0 %v950
    %2108 = vmatpush1.msra.mxu0 %v949
    %2109 = vmatprep.subr.mxu0 %v954
    %2110 = vmatpush1.msra.mxu0 %v953
    %2111 = vmatprep.subr.mxu0 %v958
    %2112 = vmatpush1.msra.mxu0 %v957
    %2113 = vmatprep.subr.mxu0 %v962
    %2114 = vmatpush1.msra.mxu0 %v961
    %2115 = vmatprep.subr.mxu0 %v966
    %2116 = vmatpush1.msra.mxu0 %v965
    %2117 = vmatprep.subr.mxu0 %v970
    %2118 = vmatpush1.msra.mxu0 %v969
    %2119 = vmatprep.subr.mxu0 %v974
    %2120 = vmatpush1.msra.mxu0 %v973
    %2121 = vmatprep.subr.mxu0 %v978
    %2122 = vmatpush1.msra.mxu0 %v977
    %2123 = vmatprep.subr.mxu0 0.0
    %2124 = vmatpush1.msra.mxu0 0.0
    %2125 = vmatprep.subr.mxu0 0.0
    %2126 = vmatpush1.msra.mxu0 0.0
    %2127 = vmatprep.subr.mxu0 0.0
    %2128 = vmatpush1.msra.mxu0 0.0
    %2129 = vmatprep.subr.mxu0 0.0
    %2130 = vmatpush1.msra.mxu0 0.0
    %2131 = vmatprep.subr.mxu0 0.0
    %2132 = vmatpush1.msra.mxu0 0.0
    %2133 = vmatprep.subr.mxu0 0.0
    %2134 = vmatpush1.msra.mxu0 0.0
    %2135 = vmatprep.subr.mxu0 0.0
    %2136 = vmatpush1.msra.mxu0 0.0
    %2137 = vmatprep.subr.mxu0 0.0
    %2138 = vmatpush1.msra.mxu0 0.0
    %2139 = vmatprep.subr.mxu0 0.0
    %2140 = vmatpush1.msra.mxu0 0.0
    %2141 = vmatprep.subr.mxu0 0.0
    %2142 = vmatpush1.msra.mxu0 0.0
    %2143 = vmatprep.subr.mxu0 0.0
    %2144 = vmatpush1.msra.mxu0 0.0
    %2145 = vmatprep.subr.mxu0 0.0
    %2146 = vmatpush1.msra.mxu0 0.0
    %2147 = vmatprep.subr.mxu0 0.0
    %2148 = vmatpush1.msra.mxu0 0.0
    %2149 = vmatprep.subr.mxu0 0.0
    %2150 = vmatpush1.msra.mxu0 0.0
    %2151 = vmatprep.subr.mxu0 0.0
    %2152 = vmatpush1.msra.mxu0 0.0
    %2153 = vmatprep.subr.mxu0 0.0
    %2154 = vmatpush1.msra.mxu0 0.0
    %2155 = vmatprep.mubr.f32.mxu0 0.0
    %2156 = vmatmul.mubr.f32.gmra.mrb[0].mxu0 %v2089
    %v2157 = vpop.f32.mrb[0].mxu0
    %v2158 = vadd.f32 0.0, %v2157
    %v2159 = vpop.f32.mrb[0].mxu0
    %v2160 = vadd.f32 0.0, %v2159
    %2161 = vdwg.mxu0
    %2162 = vmatprep.subr.mxu0 %v920
    %2163 = vmatpush1.msra.mxu0 %v919
    %2164 = vmatprep.subr.mxu0 %v924
    %2165 = vmatpush1.msra.mxu0 %v923
    %2166 = vmatprep.subr.mxu0 %v928
    %2167 = vmatpush1.msra.mxu0 %v927
    %2168 = vmatprep.subr.mxu0 %v932
    %2169 = vmatpush1.msra.mxu0 %v931
    %2170 = vmatprep.subr.mxu0 %v936
    %2171 = vmatpush1.msra.mxu0 %v935
    %2172 = vmatprep.subr.mxu0 %v940
    %2173 = vmatpush1.msra.mxu0 %v939
    %2174 = vmatprep.subr.mxu0 %v944
    %2175 = vmatpush1.msra.mxu0 %v943
    %2176 = vmatprep.subr.mxu0 %v948
    %2177 = vmatpush1.msra.mxu0 %v947
    %2178 = vmatprep.subr.mxu0 %v952
    %2179 = vmatpush1.msra.mxu0 %v951
    %2180 = vmatprep.subr.mxu0 %v956
    %2181 = vmatpush1.msra.mxu0 %v955
    %2182 = vmatprep.subr.mxu0 %v960
    %2183 = vmatpush1.msra.mxu0 %v959
    %2184 = vmatprep.subr.mxu0 %v964
    %2185 = vmatpush1.msra.mxu0 %v963
    %2186 = vmatprep.subr.mxu0 %v968
    %2187 = vmatpush1.msra.mxu0 %v967
    %2188 = vmatprep.subr.mxu0 %v972
    %2189 = vmatpush1.msra.mxu0 %v971
    %2190 = vmatprep.subr.mxu0 %v976
    %2191 = vmatpush1.msra.mxu0 %v975
    %2192 = vmatprep.subr.mxu0 %v980
    %2193 = vmatpush1.msra.mxu0 %v979
    %2194 = vmatprep.subr.mxu0 0.0
    %2195 = vmatpush1.msra.mxu0 0.0
    %2196 = vmatprep.subr.mxu0 0.0
    %2197 = vmatpush1.msra.mxu0 0.0
    %2198 = vmatprep.subr.mxu0 0.0
    %2199 = vmatpush1.msra.mxu0 0.0
    %2200 = vmatprep.subr.mxu0 0.0
    %2201 = vmatpush1.msra.mxu0 0.0
    %2202 = vmatprep.subr.mxu0 0.0
    %2203 = vmatpush1.msra.mxu0 0.0
    %2204 = vmatprep.subr.mxu0 0.0
    %2205 = vmatpush1.msra.mxu0 0.0
    %2206 = vmatprep.subr.mxu0 0.0
    %2207 = vmatpush1.msra.mxu0 0.0
    %2208 = vmatprep.subr.mxu0 0.0
    %2209 = vmatpush1.msra.mxu0 0.0
    %2210 = vmatprep.subr.mxu0 0.0
    %2211 = vmatpush1.msra.mxu0 0.0
    %2212 = vmatprep.subr.mxu0 0.0
    %2213 = vmatpush1.msra.mxu0 0.0
    %2214 = vmatprep.subr.mxu0 0.0
    %2215 = vmatpush1.msra.mxu0 0.0
    %2216 = vmatprep.subr.mxu0 0.0
    %2217 = vmatpush1.msra.mxu0 0.0
    %2218 = vmatprep.subr.mxu0 0.0
    %2219 = vmatpush1.msra.mxu0 0.0
    %2220 = vmatprep.subr.mxu0 0.0
    %2221 = vmatpush1.msra.mxu0 0.0
    %2222 = vmatprep.subr.mxu0 0.0
    %2223 = vmatpush1.msra.mxu0 0.0
    %2224 = vmatprep.subr.mxu0 0.0
    %2225 = vmatpush1.msra.mxu0 0.0
    %2226 = vmatprep.mubr.f32.mxu0 0.0
    %2227 = vmatmul.mubr.f32.gmra.mrb[0].mxu0 %v2089
    %v2228 = vpop.f32.mrb[0].mxu0
    %v2229 = vadd.f32 0.0, %v2228
    %v2230 = vpop.f32.mrb[0].mxu0
    %v2231 = vadd.f32 0.0, %v2230
    %2232 = vdwg.mxu0
    %v2237 = vrot.slane %v2158, 2
    %v2238 = vrot.slane %v2160, 2
    %v2239 = vrot.slane %v2229, 2
    %v2240 = vrot.slane %v2231, 2
    %v2245 = vadd.f32 %v913, %v2237
    %v2246 = vadd.f32 %v914, %v2238
    %v2247 = vadd.f32 %v915, %v2239
    %v2248 = vadd.f32 %v916, %v2240
    %v2249 = vxor.u32 %v2245, 2147483648
    %v2250 = vmul.f32 %v2249, 1.442695
    %v2251 = vpow.pop %v2250
    %v2252 = vadd.f32 %v2251, 1.0
    %v2253 = vrcp.pop %v2252
    %v2254 = vmul.f32 1.0, %v2253
    %v2255 = vxor.u32 %v2246, 2147483648
    %v2256 = vmul.f32 %v2255, 1.442695
    %v2257 = vpow.pop %v2256
    %v2258 = vadd.f32 %v2257, 1.0
    %v2259 = vrcp.pop %v2258
    %v2260 = vmul.f32 1.0, %v2259
    %v2261 = vtanh.pop %v2247
    %v2262 = vxor.u32 %v2248, 2147483648
    %v2263 = vmul.f32 %v2262, 1.442695
    %v2264 = vpow.pop %v2263
    %v2265 = vadd.f32 %v2264, 1.0
    %v2266 = vrcp.pop %v2265
    %v2267 = vmul.f32 1.0, %v2266
    %v2269 = vrot.slane %v2085, 7
    %v2271 = vmul.f32 %v2260, %v2269
    %v2272 = vmul.f32 %v2254, %v2261
    %v2273 = vadd.f32 %v2271, %v2272
    %v2274 = vtanh.pop %v2273
    %v2275 = vmul.f32 %v2267, %v2274
    %v2277 = vrot.slane %v2275, 6
    %2279 = vmatprep.subr.mxu0 %v918
    %2280 = vmatpush1.msra.mxu0 %v917
    %2281 = vmatprep.subr.mxu0 %v922
    %2282 = vmatpush1.msra.mxu0 %v921
    %2283 = vmatprep.subr.mxu0 %v926
    %2284 = vmatpush1.msra.mxu0 %v925
    %2285 = vmatprep.subr.mxu0 %v930
    %2286 = vmatpush1.msra.mxu0 %v929
    %2287 = vmatprep.subr.mxu0 %v934
    %2288 = vmatpush1.msra.mxu0 %v933
    %2289 = vmatprep.subr.mxu0 %v938
    %2290 = vmatpush1.msra.mxu0 %v937
    %2291 = vmatprep.subr.mxu0 %v942
    %2292 = vmatpush1.msra.mxu0 %v941
    %2293 = vmatprep.subr.mxu0 %v946
    %2294 = vmatpush1.msra.mxu0 %v945
    %2295 = vmatprep.subr.mxu0 %v950
    %2296 = vmatpush1.msra.mxu0 %v949
    %2297 = vmatprep.subr.mxu0 %v954
    %2298 = vmatpush1.msra.mxu0 %v953
    %2299 = vmatprep.subr.mxu0 %v958
    %2300 = vmatpush1.msra.mxu0 %v957
    %2301 = vmatprep.subr.mxu0 %v962
    %2302 = vmatpush1.msra.mxu0 %v961
    %2303 = vmatprep.subr.mxu0 %v966
    %2304 = vmatpush1.msra.mxu0 %v965
    %2305 = vmatprep.subr.mxu0 %v970
    %2306 = vmatpush1.msra.mxu0 %v969
    %2307 = vmatprep.subr.mxu0 %v974
    %2308 = vmatpush1.msra.mxu0 %v973
    %2309 = vmatprep.subr.mxu0 %v978
    %2310 = vmatpush1.msra.mxu0 %v977
    %2311 = vmatprep.subr.mxu0 0.0
    %2312 = vmatpush1.msra.mxu0 0.0
    %2313 = vmatprep.subr.mxu0 0.0
    %2314 = vmatpush1.msra.mxu0 0.0
    %2315 = vmatprep.subr.mxu0 0.0
    %2316 = vmatpush1.msra.mxu0 0.0
    %2317 = vmatprep.subr.mxu0 0.0
    %2318 = vmatpush1.msra.mxu0 0.0
    %2319 = vmatprep.subr.mxu0 0.0
    %2320 = vmatpush1.msra.mxu0 0.0
    %2321 = vmatprep.subr.mxu0 0.0
    %2322 = vmatpush1.msra.mxu0 0.0
    %2323 = vmatprep.subr.mxu0 0.0
    %2324 = vmatpush1.msra.mxu0 0.0
    %2325 = vmatprep.subr.mxu0 0.0
    %2326 = vmatpush1.msra.mxu0 0.0
    %2327 = vmatprep.subr.mxu0 0.0
    %2328 = vmatpush1.msra.mxu0 0.0
    %2329 = vmatprep.subr.mxu0 0.0
    %2330 = vmatpush1.msra.mxu0 0.0
    %2331 = vmatprep.subr.mxu0 0.0
    %2332 = vmatpush1.msra.mxu0 0.0
    %2333 = vmatprep.subr.mxu0 0.0
    %2334 = vmatpush1.msra.mxu0 0.0
    %2335 = vmatprep.subr.mxu0 0.0
    %2336 = vmatpush1.msra.mxu0 0.0
    %2337 = vmatprep.subr.mxu0 0.0
    %2338 = vmatpush1.msra.mxu0 0.0
    %2339 = vmatprep.subr.mxu0 0.0
    %2340 = vmatpush1.msra.mxu0 0.0
    %2341 = vmatprep.subr.mxu0 0.0
    %2342 = vmatpush1.msra.mxu0 0.0
    %2343 = vmatprep.mubr.f32.mxu0 0.0
    %2344 = vmatmul.mubr.f32.gmra.mrb[0].mxu0 %v2277
    %v2345 = vpop.f32.mrb[0].mxu0
    %v2346 = vadd.f32 0.0, %v2345
    %v2347 = vpop.f32.mrb[0].mxu0
    %v2348 = vadd.f32 0.0, %v2347
    %2349 = vdwg.mxu0
    %2350 = vmatprep.subr.mxu0 %v920
    %2351 = vmatpush1.msra.mxu0 %v919
    %2352 = vmatprep.subr.mxu0 %v924
    %2353 = vmatpush1.msra.mxu0 %v923
    %2354 = vmatprep.subr.mxu0 %v928
    %2355 = vmatpush1.msra.mxu0 %v927
    %2356 = vmatprep.subr.mxu0 %v932
    %2357 = vmatpush1.msra.mxu0 %v931
    %2358 = vmatprep.subr.mxu0 %v936
    %2359 = vmatpush1.msra.mxu0 %v935
    %2360 = vmatprep.subr.mxu0 %v940
    %2361 = vmatpush1.msra.mxu0 %v939
    %2362 = vmatprep.subr.mxu0 %v944
    %2363 = vmatpush1.msra.mxu0 %v943
    %2364 = vmatprep.subr.mxu0 %v948
    %2365 = vmatpush1.msra.mxu0 %v947
    %2366 = vmatprep.subr.mxu0 %v952
    %2367 = vmatpush1.msra.mxu0 %v951
    %2368 = vmatprep.subr.mxu0 %v956
    %2369 = vmatpush1.msra.mxu0 %v955
    %2370 = vmatprep.subr.mxu0 %v960
    %2371 = vmatpush1.msra.mxu0 %v959
    %2372 = vmatprep.subr.mxu0 %v964
    %2373 = vmatpush1.msra.mxu0 %v963
    %2374 = vmatprep.subr.mxu0 %v968
    %2375 = vmatpush1.msra.mxu0 %v967
    %2376 = vmatprep.subr.mxu0 %v972
    %2377 = vmatpush1.msra.mxu0 %v971
    %2378 = vmatprep.subr.mxu0 %v976
    %2379 = vmatpush1.msra.mxu0 %v975
    %2380 = vmatprep.subr.mxu0 %v980
    %2381 = vmatpush1.msra.mxu0 %v979
    %2382 = vmatprep.subr.mxu0 0.0
    %2383 = vmatpush1.msra.mxu0 0.0
    %2384 = vmatprep.subr.mxu0 0.0
    %2385 = vmatpush1.msra.mxu0 0.0
    %2386 = vmatprep.subr.mxu0 0.0
    %2387 = vmatpush1.msra.mxu0 0.0
    %2388 = vmatprep.subr.mxu0 0.0
    %2389 = vmatpush1.msra.mxu0 0.0
    %2390 = vmatprep.subr.mxu0 0.0
    %2391 = vmatpush1.msra.mxu0 0.0
    %2392 = vmatprep.subr.mxu0 0.0
    %2393 = vmatpush1.msra.mxu0 0.0
    %2394 = vmatprep.subr.mxu0 0.0
    %2395 = vmatpush1.msra.mxu0 0.0
    %2396 = vmatprep.subr.mxu0 0.0
    %2397 = vmatpush1.msra.mxu0 0.0
    %2398 = vmatprep.subr.mxu0 0.0
    %2399 = vmatpush1.msra.mxu0 0.0
    %2400 = vmatprep.subr.mxu0 0.0
    %2401 = vmatpush1.msra.mxu0 0.0
    %2402 = vmatprep.subr.mxu0 0.0
    %2403 = vmatpush1.msra.mxu0 0.0
    %2404 = vmatprep.subr.mxu0 0.0
    %2405 = vmatpush1.msra.mxu0 0.0
    %2406 = vmatprep.subr.mxu0 0.0
    %2407 = vmatpush1.msra.mxu0 0.0
    %2408 = vmatprep.subr.mxu0 0.0
    %2409 = vmatpush1.msra.mxu0 0.0
    %2410 = vmatprep.subr.mxu0 0.0
    %2411 = vmatpush1.msra.mxu0 0.0
    %2412 = vmatprep.subr.mxu0 0.0
    %2413 = vmatpush1.msra.mxu0 0.0
    %2414 = vmatprep.mubr.f32.mxu0 0.0
    %2415 = vmatmul.mubr.f32.gmra.mrb[0].mxu0 %v2277
    %v2416 = vpop.f32.mrb[0].mxu0
    %v2417 = vadd.f32 0.0, %v2416
    %v2418 = vpop.f32.mrb[0].mxu0
    %v2419 = vadd.f32 0.0, %v2418
    %2420 = vdwg.mxu0
    %v2425 = vrot.slane %v2346, 1
    %v2426 = vrot.slane %v2348, 1
    %v2427 = vrot.slane %v2417, 1
    %v2428 = vrot.slane %v2419, 1
    %v2433 = vadd.f32 %v913, %v2425
    %v2434 = vadd.f32 %v914, %v2426
    %v2435 = vadd.f32 %v915, %v2427
    %v2436 = vadd.f32 %v916, %v2428
    %v2437 = vxor.u32 %v2433, 2147483648
    %v2438 = vmul.f32 %v2437, 1.442695
    %v2439 = vpow.pop %v2438
    %v2440 = vadd.f32 %v2439, 1.0
    %v2441 = vrcp.pop %v2440
    %v2442 = vmul.f32 1.0, %v2441
    %v2443 = vxor.u32 %v2434, 2147483648
    %v2444 = vmul.f32 %v2443, 1.442695
    %v2445 = vpow.pop %v2444
    %v2446 = vadd.f32 %v2445, 1.0
    %v2447 = vrcp.pop %v2446
    %v2448 = vmul.f32 1.0, %v2447
    %v2449 = vtanh.pop %v2435
    %v2450 = vxor.u32 %v2436, 2147483648
    %v2451 = vmul.f32 %v2450, 1.442695
    %v2452 = vpow.pop %v2451
    %v2453 = vadd.f32 %v2452, 1.0
    %v2454 = vrcp.pop %v2453
    %v2455 = vmul.f32 1.0, %v2454
    %v2457 = vrot.slane %v2273, 7
    %v2459 = vmul.f32 %v2448, %v2457
    %v2460 = vmul.f32 %v2442, %v2449
    %v2461 = vadd.f32 %v2459, %v2460
    %v2462 = vtanh.pop %v2461
    %v2463 = vmul.f32 %v2455, %v2462
    %vm2464 = vcmask 1040384
    %v2465 = vsel %vm2464, %v1150, %v1335
    %vm2466 = vcmask 1041408
    %v2467 = vsel %vm2466, %v2465, %v1523
    %vm2468 = vcmask 1042432
    %v2469 = vsel %vm2468, %v2467, %v1711
    %vm2470 = vcmask 1043456
    %v2471 = vsel %vm2470, %v2469, %v1899
    %vm2472 = vcmask 1044480
    %v2473 = vsel %vm2472, %v2471, %v2087
    %vm2474 = vcmask 1045504
    %v2475 = vsel %vm2474, %v2473, %v2275
    %vm2476 = vcmask 1046528
    %v2477 = vsel %vm2476, %v2475, %v2463
    %v2478 = vld [vmem:[#allocation7] sm:$0xff]
    %v2479 = vld [vmem:[#allocation7 + $0x8] sm:$0xff]
    %v2480 = vld [vmem:[#allocation7 + $0x10] sm:$0xff]
    %v2481 = vld [vmem:[#allocation7 + $0x18] sm:$0xff]
    %v2482 = vld [vmem:[#allocation7 + $0x20] sm:$0xff]
    %v2483 = vld [vmem:[#allocation7 + $0x28] sm:$0xff]
    %v2484 = vld [vmem:[#allocation7 + $0x30] sm:$0xff]
    %v2485 = vld [vmem:[#allocation7 + $0x38] sm:$0xff]
    %v2486 = vld [vmem:[#allocation7 + $0x40] sm:$0xff]
    %v2487 = vld [vmem:[#allocation7 + $0x48] sm:$0xff]
    %v2488 = vld [vmem:[#allocation7 + $0x50] sm:$0xff]
    %v2489 = vld [vmem:[#allocation7 + $0x58] sm:$0xff]
    %v2490 = vld [vmem:[#allocation7 + $0x60] sm:$0xff]
    %v2491 = vld [vmem:[#allocation7 + $0x68] sm:$0xff]
    %v2492 = vld [vmem:[#allocation7 + $0x70] sm:$0xff]
    %v2493 = vld [vmem:[#allocation7 + $0x78] sm:$0xff]
    %v2494 = vld [vmem:[#allocation7 + $0x80] sm:$0xff]
    %v2495 = vld [vmem:[#allocation7 + $0x88] sm:$0xff]
    %v2496 = vld [vmem:[#allocation7 + $0x90] sm:$0xff]
    %v2497 = vld [vmem:[#allocation7 + $0x98] sm:$0xff]
    %v2498 = vld [vmem:[#allocation7 + $0xa0] sm:$0xff]
    %v2499 = vld [vmem:[#allocation7 + $0xa8] sm:$0xff]
    %v2500 = vld [vmem:[#allocation7 + $0xb0] sm:$0xff]
    %v2501 = vld [vmem:[#allocation7 + $0xb8] sm:$0xff]
    %v2502 = vld [vmem:[#allocation7 + $0xc0] sm:$0xff]
    %v2503 = vld [vmem:[#allocation7 + $0xc8] sm:$0xff]
    %v2504 = vld [vmem:[#allocation7 + $0xd0] sm:$0xff]
    %v2505 = vld [vmem:[#allocation7 + $0xd8] sm:$0xff]
    %v2506 = vld [vmem:[#allocation7 + $0xe0] sm:$0xff]
    %v2507 = vld [vmem:[#allocation7 + $0xe8] sm:$0xff]
    %v2508 = vld [vmem:[#allocation7 + $0xf0] sm:$0xff]
    %v2509 = vld [vmem:[#allocation7 + $0xf8] sm:$0xff]
    %v2510 = vld [vmem:[#allocation7 + $0x100] sm:$0xff]
    %v2511 = vld [vmem:[#allocation7 + $0x108] sm:$0xff]
    %v2512 = vld [vmem:[#allocation7 + $0x110] sm:$0xff]
    %v2513 = vld [vmem:[#allocation7 + $0x118] sm:$0xff]
    %v2514 = vld [vmem:[#allocation7 + $0x120] sm:$0xff]
    %v2515 = vld [vmem:[#allocation7 + $0x128] sm:$0xff]
    %v2516 = vld [vmem:[#allocation7 + $0x130] sm:$0xff]
    %v2517 = vld [vmem:[#allocation7 + $0x138] sm:$0xff]
    %v2518 = vld [vmem:[#allocation7 + $0x140] sm:$0xff]
    %v2519 = vld [vmem:[#allocation7 + $0x148] sm:$0xff]
    %v2520 = vld [vmem:[#allocation7 + $0x150] sm:$0xff]
    %v2521 = vld [vmem:[#allocation7 + $0x158] sm:$0xff]
    %v2522 = vld [vmem:[#allocation7 + $0x160] sm:$0xff]
    %v2523 = vld [vmem:[#allocation7 + $0x168] sm:$0xff]
    %v2524 = vld [vmem:[#allocation7 + $0x170] sm:$0xff]
    %v2525 = vld [vmem:[#allocation7 + $0x178] sm:$0xff]
    %v2526 = vld [vmem:[#allocation7 + $0x180] sm:$0xff]
    %v2527 = vld [vmem:[#allocation7 + $0x188] sm:$0xff]
    %v2528 = vld [vmem:[#allocation7 + $0x190] sm:$0xff]
    %v2529 = vld [vmem:[#allocation7 + $0x198] sm:$0xff]
    %v2530 = vld [vmem:[#allocation7 + $0x1a0] sm:$0xff]
    %v2531 = vld [vmem:[#allocation7 + $0x1a8] sm:$0xff]
    %v2532 = vld [vmem:[#allocation7 + $0x1b0] sm:$0xff]
    %v2533 = vld [vmem:[#allocation7 + $0x1b8] sm:$0xff]
    %v2534 = vld [vmem:[#allocation7 + $0x1c0] sm:$0xff]
    %v2535 = vld [vmem:[#allocation7 + $0x1c8] sm:$0xff]
    %v2536 = vld [vmem:[#allocation7 + $0x1d0] sm:$0xff]
    %v2537 = vld [vmem:[#allocation7 + $0x1d8] sm:$0xff]
    %v2538 = vld [vmem:[#allocation7 + $0x1e0] sm:$0xff]
    %v2539 = vld [vmem:[#allocation7 + $0x1e8] sm:$0xff]
    %v2540 = vld [vmem:[#allocation7 + $0x1f0] sm:$0xff]
    %v2541 = vld [vmem:[#allocation7 + $0x1f8] sm:$0xff]
    %s2542 = scalar_lea.vmem %s11, 4
    %v2543 = vld [vmem:[%s2542] sm:$0xf]
    %v2545 = vlaneseq
    %v2546 = vshrl.u32 %v2545, 7
    %v2547 = vsub.s32 0, %v2546
    %v2548 = vrot.slane %v2543, %v2547
    %v2549 = vlaneseq
    %v2550 = vshrl.u32 %v2549, 7
    %v2551 = vsub.s32 1, %v2550
    %v2552 = vrot.slane %v2543, %v2551
    %v2553 = vlaneseq
    %v2554 = vshrl.u32 %v2553, 7
    %v2555 = vsub.s32 2, %v2554
    %v2556 = vrot.slane %v2543, %v2555
    %v2557 = vlaneseq
    %v2558 = vshrl.u32 %v2557, 7
    %v2559 = vsub.s32 3, %v2558
    %v2560 = vrot.slane %v2543, %v2559
    %2565 = vmatprep.subr.mxu0 %v2479
    %2566 = vmatpush1.msra.mxu0 %v2478
    %2567 = vmatprep.subr.mxu0 %v2483
    %2568 = vmatpush1.msra.mxu0 %v2482
    %2569 = vmatprep.subr.mxu0 %v2487
    %2570 = vmatpush1.msra.mxu0 %v2486
    %2571 = vmatprep.subr.mxu0 %v2491
    %2572 = vmatpush1.msra.mxu0 %v2490
    %2573 = vmatprep.subr.mxu0 %v2495
    %2574 = vmatpush1.msra.mxu0 %v2494
    %2575 = vmatprep.subr.mxu0 %v2499
    %2576 = vmatpush1.msra.mxu0 %v2498
    %2577 = vmatprep.subr.mxu0 %v2503
    %2578 = vmatpush1.msra.mxu0 %v2502
    %2579 = vmatprep.subr.mxu0 %v2507
    %2580 = vmatpush1.msra.mxu0 %v2506
    %2581 = vmatprep.subr.mxu0 %v2511
    %2582 = vmatpush1.msra.mxu0 %v2510
    %2583 = vmatprep.subr.mxu0 %v2515
    %2584 = vmatpush1.msra.mxu0 %v2514
    %2585 = vmatprep.subr.mxu0 %v2519
    %2586 = vmatpush1.msra.mxu0 %v2518
    %2587 = vmatprep.subr.mxu0 %v2523
    %2588 = vmatpush1.msra.mxu0 %v2522
    %2589 = vmatprep.subr.mxu0 %v2527
    %2590 = vmatpush1.msra.mxu0 %v2526
    %2591 = vmatprep.subr.mxu0 %v2531
    %2592 = vmatpush1.msra.mxu0 %v2530
    %2593 = vmatprep.subr.mxu0 %v2535
    %2594 = vmatpush1.msra.mxu0 %v2534
    %2595 = vmatprep.subr.mxu0 %v2539
    %2596 = vmatpush1.msra.mxu0 %v2538
    %2597 = vmatprep.subr.mxu0 0.0
    %2598 = vmatpush1.msra.mxu0 0.0
    %2599 = vmatprep.subr.mxu0 0.0
    %2600 = vmatpush1.msra.mxu0 0.0
    %2601 = vmatprep.subr.mxu0 0.0
    %2602 = vmatpush1.msra.mxu0 0.0
    %2603 = vmatprep.subr.mxu0 0.0
    %2604 = vmatpush1.msra.mxu0 0.0
    %2605 = vmatprep.subr.mxu0 0.0
    %2606 = vmatpush1.msra.mxu0 0.0
    %2607 = vmatprep.subr.mxu0 0.0
    %2608 = vmatpush1.msra.mxu0 0.0
    %2609 = vmatprep.subr.mxu0 0.0
    %2610 = vmatpush1.msra.mxu0 0.0
    %2611 = vmatprep.subr.mxu0 0.0
    %2612 = vmatpush1.msra.mxu0 0.0
    %2613 = vmatprep.subr.mxu0 0.0
    %2614 = vmatpush1.msra.mxu0 0.0
    %2615 = vmatprep.subr.mxu0 0.0
    %2616 = vmatpush1.msra.mxu0 0.0
    %2617 = vmatprep.subr.mxu0 0.0
    %2618 = vmatpush1.msra.mxu0 0.0
    %2619 = vmatprep.subr.mxu0 0.0
    %2620 = vmatpush1.msra.mxu0 0.0
    %2621 = vmatprep.subr.mxu0 0.0
    %2622 = vmatpush1.msra.mxu0 0.0
    %2623 = vmatprep.subr.mxu0 0.0
    %2624 = vmatpush1.msra.mxu0 0.0
    %2625 = vmatprep.subr.mxu0 0.0
    %2626 = vmatpush1.msra.mxu0 0.0
    %2627 = vmatprep.subr.mxu0 0.0
    %2628 = vmatpush1.msra.mxu0 0.0
    %2629 = vmatprep.mubr.f32.mxu0 0.0
    %2630 = vmatmul.mubr.f32.gmra.mrb[0].mxu0 %v2477
    %v2631 = vpop.f32.mrb[0].mxu0
    %v2632 = vadd.f32 %v2548, %v2631
    %v2633 = vpop.f32.mrb[0].mxu0
    %v2634 = vadd.f32 %v2552, %v2633
    %2635 = vdwg.mxu0
    %2636 = vmatprep.subr.mxu0 %v2481
    %2637 = vmatpush1.msra.mxu0 %v2480
    %2638 = vmatprep.subr.mxu0 %v2485
    %2639 = vmatpush1.msra.mxu0 %v2484
    %2640 = vmatprep.subr.mxu0 %v2489
    %2641 = vmatpush1.msra.mxu0 %v2488
    %2642 = vmatprep.subr.mxu0 %v2493
    %2643 = vmatpush1.msra.mxu0 %v2492
    %2644 = vmatprep.subr.mxu0 %v2497
    %2645 = vmatpush1.msra.mxu0 %v2496
    %2646 = vmatprep.subr.mxu0 %v2501
    %2647 = vmatpush1.msra.mxu0 %v2500
    %2648 = vmatprep.subr.mxu0 %v2505
    %2649 = vmatpush1.msra.mxu0 %v2504
    %2650 = vmatprep.subr.mxu0 %v2509
    %2651 = vmatpush1.msra.mxu0 %v2508
    %2652 = vmatprep.subr.mxu0 %v2513
    %2653 = vmatpush1.msra.mxu0 %v2512
    %2654 = vmatprep.subr.mxu0 %v2517
    %2655 = vmatpush1.msra.mxu0 %v2516
    %2656 = vmatprep.subr.mxu0 %v2521
    %2657 = vmatpush1.msra.mxu0 %v2520
    %2658 = vmatprep.subr.mxu0 %v2525
    %2659 = vmatpush1.msra.mxu0 %v2524
    %2660 = vmatprep.subr.mxu0 %v2529
    %2661 = vmatpush1.msra.mxu0 %v2528
    %2662 = vmatprep.subr.mxu0 %v2533
    %2663 = vmatpush1.msra.mxu0 %v2532
    %2664 = vmatprep.subr.mxu0 %v2537
    %2665 = vmatpush1.msra.mxu0 %v2536
    %2666 = vmatprep.subr.mxu0 %v2541
    %2667 = vmatpush1.msra.mxu0 %v2540
    %2668 = vmatprep.subr.mxu0 0.0
    %2669 = vmatpush1.msra.mxu0 0.0
    %2670 = vmatprep.subr.mxu0 0.0
    %2671 = vmatpush1.msra.mxu0 0.0
    %2672 = vmatprep.subr.mxu0 0.0
    %2673 = vmatpush1.msra.mxu0 0.0
    %2674 = vmatprep.subr.mxu0 0.0
    %2675 = vmatpush1.msra.mxu0 0.0
    %2676 = vmatprep.subr.mxu0 0.0
    %2677 = vmatpush1.msra.mxu0 0.0
    %2678 = vmatprep.subr.mxu0 0.0
    %2679 = vmatpush1.msra.mxu0 0.0
    %2680 = vmatprep.subr.mxu0 0.0
    %2681 = vmatpush1.msra.mxu0 0.0
    %2682 = vmatprep.subr.mxu0 0.0
    %2683 = vmatpush1.msra.mxu0 0.0
    %2684 = vmatprep.subr.mxu0 0.0
    %2685 = vmatpush1.msra.mxu0 0.0
    %2686 = vmatprep.subr.mxu0 0.0
    %2687 = vmatpush1.msra.mxu0 0.0
    %2688 = vmatprep.subr.mxu0 0.0
    %2689 = vmatpush1.msra.mxu0 0.0
    %2690 = vmatprep.subr.mxu0 0.0
    %2691 = vmatpush1.msra.mxu0 0.0
    %2692 = vmatprep.subr.mxu0 0.0
    %2693 = vmatpush1.msra.mxu0 0.0
    %2694 = vmatprep.subr.mxu0 0.0
    %2695 = vmatpush1.msra.mxu0 0.0
    %2696 = vmatprep.subr.mxu0 0.0
    %2697 = vmatpush1.msra.mxu0 0.0
    %2698 = vmatprep.subr.mxu0 0.0
    %2699 = vmatpush1.msra.mxu0 0.0
    %2700 = vmatprep.mubr.f32.mxu0 0.0
    %2701 = vmatmul.mubr.f32.gmra.mrb[0].mxu0 %v2477
    %v2702 = vpop.f32.mrb[0].mxu0
    %v2703 = vadd.f32 %v2556, %v2702
    %v2704 = vpop.f32.mrb[0].mxu0
    %v2705 = vadd.f32 %v2560, %v2704
    %2706 = vdwg.mxu0
    %s2707 = scalar_lea.vmem [#allocation9], 512
    %v2708 = vld [vmem:[%s2707] sm:$0xff]
    %v2709 = vld [vmem:[%s2707 + $0x8] sm:$0xff]
    %v2710 = vld [vmem:[%s2707 + $0x10] sm:$0xff]
    %v2711 = vld [vmem:[%s2707 + $0x18] sm:$0xff]
    %v2712 = vld [vmem:[%s2707 + $0x20] sm:$0xff]
    %v2713 = vld [vmem:[%s2707 + $0x28] sm:$0xff]
    %v2714 = vld [vmem:[%s2707 + $0x30] sm:$0xff]
    %v2715 = vld [vmem:[%s2707 + $0x38] sm:$0xff]
    %v2716 = vld [vmem:[%s2707 + $0x40] sm:$0xff]
    %v2717 = vld [vmem:[%s2707 + $0x48] sm:$0xff]
    %v2718 = vld [vmem:[%s2707 + $0x50] sm:$0xff]
    %v2719 = vld [vmem:[%s2707 + $0x58] sm:$0xff]
    %v2720 = vld [vmem:[%s2707 + $0x60] sm:$0xff]
    %v2721 = vld [vmem:[%s2707 + $0x68] sm:$0xff]
    %v2722 = vld [vmem:[%s2707 + $0x70] sm:$0xff]
    %v2723 = vld [vmem:[%s2707 + $0x78] sm:$0xff]
    %v2724 = vld [vmem:[%s2707 + $0x80] sm:$0xff]
    %v2725 = vld [vmem:[%s2707 + $0x88] sm:$0xff]
    %v2726 = vld [vmem:[%s2707 + $0x90] sm:$0xff]
    %v2727 = vld [vmem:[%s2707 + $0x98] sm:$0xff]
    %v2728 = vld [vmem:[%s2707 + $0xa0] sm:$0xff]
    %v2729 = vld [vmem:[%s2707 + $0xa8] sm:$0xff]
    %v2730 = vld [vmem:[%s2707 + $0xb0] sm:$0xff]
    %v2731 = vld [vmem:[%s2707 + $0xb8] sm:$0xff]
    %v2732 = vld [vmem:[%s2707 + $0xc0] sm:$0xff]
    %v2733 = vld [vmem:[%s2707 + $0xc8] sm:$0xff]
    %v2734 = vld [vmem:[%s2707 + $0xd0] sm:$0xff]
    %v2735 = vld [vmem:[%s2707 + $0xd8] sm:$0xff]
    %v2736 = vld [vmem:[%s2707 + $0xe0] sm:$0xff]
    %v2737 = vld [vmem:[%s2707 + $0xe8] sm:$0xff]
    %v2738 = vld [vmem:[%s2707 + $0xf0] sm:$0xff]
    %v2739 = vld [vmem:[%s2707 + $0xf8] sm:$0xff]
    %v2740 = vld [vmem:[%s2707 + $0x100] sm:$0xff]
    %v2741 = vld [vmem:[%s2707 + $0x108] sm:$0xff]
    %v2742 = vld [vmem:[%s2707 + $0x110] sm:$0xff]
    %v2743 = vld [vmem:[%s2707 + $0x118] sm:$0xff]
    %v2744 = vld [vmem:[%s2707 + $0x120] sm:$0xff]
    %v2745 = vld [vmem:[%s2707 + $0x128] sm:$0xff]
    %v2746 = vld [vmem:[%s2707 + $0x130] sm:$0xff]
    %v2747 = vld [vmem:[%s2707 + $0x138] sm:$0xff]
    %v2748 = vld [vmem:[%s2707 + $0x140] sm:$0xff]
    %v2749 = vld [vmem:[%s2707 + $0x148] sm:$0xff]
    %v2750 = vld [vmem:[%s2707 + $0x150] sm:$0xff]
    %v2751 = vld [vmem:[%s2707 + $0x158] sm:$0xff]
    %v2752 = vld [vmem:[%s2707 + $0x160] sm:$0xff]
    %v2753 = vld [vmem:[%s2707 + $0x168] sm:$0xff]
    %v2754 = vld [vmem:[%s2707 + $0x170] sm:$0xff]
    %v2755 = vld [vmem:[%s2707 + $0x178] sm:$0xff]
    %v2756 = vld [vmem:[%s2707 + $0x180] sm:$0xff]
    %v2757 = vld [vmem:[%s2707 + $0x188] sm:$0xff]
    %v2758 = vld [vmem:[%s2707 + $0x190] sm:$0xff]
    %v2759 = vld [vmem:[%s2707 + $0x198] sm:$0xff]
    %v2760 = vld [vmem:[%s2707 + $0x1a0] sm:$0xff]
    %v2761 = vld [vmem:[%s2707 + $0x1a8] sm:$0xff]
    %v2762 = vld [vmem:[%s2707 + $0x1b0] sm:$0xff]
    %v2763 = vld [vmem:[%s2707 + $0x1b8] sm:$0xff]
    %v2764 = vld [vmem:[%s2707 + $0x1c0] sm:$0xff]
    %v2765 = vld [vmem:[%s2707 + $0x1c8] sm:$0xff]
    %v2766 = vld [vmem:[%s2707 + $0x1d0] sm:$0xff]
    %v2767 = vld [vmem:[%s2707 + $0x1d8] sm:$0xff]
    %v2768 = vld [vmem:[%s2707 + $0x1e0] sm:$0xff]
    %v2769 = vld [vmem:[%s2707 + $0x1e8] sm:$0xff]
    %v2770 = vld [vmem:[%s2707 + $0x1f0] sm:$0xff]
    %v2771 = vld [vmem:[%s2707 + $0x1f8] sm:$0xff]
    %2772 = vmatprep.subr.mxu0 %v2709
    %2773 = vmatpush1.msra.mxu0 %v2708
    %2774 = vmatprep.subr.mxu0 %v2713
    %2775 = vmatpush1.msra.mxu0 %v2712
    %2776 = vmatprep.subr.mxu0 %v2717
    %2777 = vmatpush1.msra.mxu0 %v2716
    %2778 = vmatprep.subr.mxu0 %v2721
    %2779 = vmatpush1.msra.mxu0 %v2720
    %2780 = vmatprep.subr.mxu0 %v2725
    %2781 = vmatpush1.msra.mxu0 %v2724
    %2782 = vmatprep.subr.mxu0 %v2729
    %2783 = vmatpush1.msra.mxu0 %v2728
    %2784 = vmatprep.subr.mxu0 %v2733
    %2785 = vmatpush1.msra.mxu0 %v2732
    %2786 = vmatprep.subr.mxu0 %v2737
    %2787 = vmatpush1.msra.mxu0 %v2736
    %2788 = vmatprep.subr.mxu0 %v2741
    %2789 = vmatpush1.msra.mxu0 %v2740
    %2790 = vmatprep.subr.mxu0 %v2745
    %2791 = vmatpush1.msra.mxu0 %v2744
    %2792 = vmatprep.subr.mxu0 %v2749
    %2793 = vmatpush1.msra.mxu0 %v2748
    %2794 = vmatprep.subr.mxu0 %v2753
    %2795 = vmatpush1.msra.mxu0 %v2752
    %2796 = vmatprep.subr.mxu0 %v2757
    %2797 = vmatpush1.msra.mxu0 %v2756
    %2798 = vmatprep.subr.mxu0 %v2761
    %2799 = vmatpush1.msra.mxu0 %v2760
    %2800 = vmatprep.subr.mxu0 %v2765
    %2801 = vmatpush1.msra.mxu0 %v2764
    %2802 = vmatprep.subr.mxu0 %v2769
    %2803 = vmatpush1.msra.mxu0 %v2768
    %2804 = vmatprep.subr.mxu0 0.0
    %2805 = vmatpush1.msra.mxu0 0.0
    %2806 = vmatprep.subr.mxu0 0.0
    %2807 = vmatpush1.msra.mxu0 0.0
    %2808 = vmatprep.subr.mxu0 0.0
    %2809 = vmatpush1.msra.mxu0 0.0
    %2810 = vmatprep.subr.mxu0 0.0
    %2811 = vmatpush1.msra.mxu0 0.0
    %2812 = vmatprep.subr.mxu0 0.0
    %2813 = vmatpush1.msra.mxu0 0.0
    %2814 = vmatprep.subr.mxu0 0.0
    %2815 = vmatpush1.msra.mxu0 0.0
    %2816 = vmatprep.subr.mxu0 0.0
    %2817 = vmatpush1.msra.mxu0 0.0
    %2818 = vmatprep.subr.mxu0 0.0
    %2819 = vmatpush1.msra.mxu0 0.0
    %2820 = vmatprep.subr.mxu0 0.0
    %2821 = vmatpush1.msra.mxu0 0.0
    %2822 = vmatprep.subr.mxu0 0.0
    %2823 = vmatpush1.msra.mxu0 0.0
    %2824 = vmatprep.subr.mxu0 0.0
    %2825 = vmatpush1.msra.mxu0 0.0
    %2826 = vmatprep.subr.mxu0 0.0
    %2827 = vmatpush1.msra.mxu0 0.0
    %2828 = vmatprep.subr.mxu0 0.0
    %2829 = vmatpush1.msra.mxu0 0.0
    %2830 = vmatprep.subr.mxu0 0.0
    %2831 = vmatpush1.msra.mxu0 0.0
    %2832 = vmatprep.subr.mxu0 0.0
    %2833 = vmatpush1.msra.mxu0 0.0
    %2834 = vmatprep.subr.mxu0 0.0
    %2835 = vmatpush1.msra.mxu0 0.0
    %2836 = vmatprep.mubr.f32.mxu0 0.0
    %2837 = vmatmul.mubr.f32.gmra.mrb[0].mxu0 0.0
    %v2838 = vpop.f32.mrb[0].mxu0
    %v2839 = vadd.f32 0.0, %v2838
    %v2840 = vpop.f32.mrb[0].mxu0
    %v2841 = vadd.f32 0.0, %v2840
    %2842 = vdwg.mxu0
    %2843 = vmatprep.subr.mxu0 %v2711
    %2844 = vmatpush1.msra.mxu0 %v2710
    %2845 = vmatprep.subr.mxu0 %v2715
    %2846 = vmatpush1.msra.mxu0 %v2714
    %2847 = vmatprep.subr.mxu0 %v2719
    %2848 = vmatpush1.msra.mxu0 %v2718
    %2849 = vmatprep.subr.mxu0 %v2723
    %2850 = vmatpush1.msra.mxu0 %v2722
    %2851 = vmatprep.subr.mxu0 %v2727
    %2852 = vmatpush1.msra.mxu0 %v2726
    %2853 = vmatprep.subr.mxu0 %v2731
    %2854 = vmatpush1.msra.mxu0 %v2730
    %2855 = vmatprep.subr.mxu0 %v2735
    %2856 = vmatpush1.msra.mxu0 %v2734
    %2857 = vmatprep.subr.mxu0 %v2739
    %2858 = vmatpush1.msra.mxu0 %v2738
    %2859 = vmatprep.subr.mxu0 %v2743
    %2860 = vmatpush1.msra.mxu0 %v2742
    %2861 = vmatprep.subr.mxu0 %v2747
    %2862 = vmatpush1.msra.mxu0 %v2746
    %2863 = vmatprep.subr.mxu0 %v2751
    %2864 = vmatpush1.msra.mxu0 %v2750
    %2865 = vmatprep.subr.mxu0 %v2755
    %2866 = vmatpush1.msra.mxu0 %v2754
    %2867 = vmatprep.subr.mxu0 %v2759
    %2868 = vmatpush1.msra.mxu0 %v2758
    %2869 = vmatprep.subr.mxu0 %v2763
    %2870 = vmatpush1.msra.mxu0 %v2762
    %2871 = vmatprep.subr.mxu0 %v2767
    %2872 = vmatpush1.msra.mxu0 %v2766
    %2873 = vmatprep.subr.mxu0 %v2771
    %2874 = vmatpush1.msra.mxu0 %v2770
    %2875 = vmatprep.subr.mxu0 0.0
    %2876 = vmatpush1.msra.mxu0 0.0
    %2877 = vmatprep.subr.mxu0 0.0
    %2878 = vmatpush1.msra.mxu0 0.0
    %2879 = vmatprep.subr.mxu0 0.0
    %2880 = vmatpush1.msra.mxu0 0.0
    %2881 = vmatprep.subr.mxu0 0.0
    %2882 = vmatpush1.msra.mxu0 0.0
    %2883 = vmatprep.subr.mxu0 0.0
    %2884 = vmatpush1.msra.mxu0 0.0
    %2885 = vmatprep.subr.mxu0 0.0
    %2886 = vmatpush1.msra.mxu0 0.0
    %2887 = vmatprep.subr.mxu0 0.0
    %2888 = vmatpush1.msra.mxu0 0.0
    %2889 = vmatprep.subr.mxu0 0.0
    %2890 = vmatpush1.msra.mxu0 0.0
    %2891 = vmatprep.subr.mxu0 0.0
    %2892 = vmatpush1.msra.mxu0 0.0
    %2893 = vmatprep.subr.mxu0 0.0
    %2894 = vmatpush1.msra.mxu0 0.0
    %2895 = vmatprep.subr.mxu0 0.0
    %2896 = vmatpush1.msra.mxu0 0.0
    %2897 = vmatprep.subr.mxu0 0.0
    %2898 = vmatpush1.msra.mxu0 0.0
    %2899 = vmatprep.subr.mxu0 0.0
    %2900 = vmatpush1.msra.mxu0 0.0
    %2901 = vmatprep.subr.mxu0 0.0
    %2902 = vmatpush1.msra.mxu0 0.0
    %2903 = vmatprep.subr.mxu0 0.0
    %2904 = vmatpush1.msra.mxu0 0.0
    %2905 = vmatprep.subr.mxu0 0.0
    %2906 = vmatpush1.msra.mxu0 0.0
    %2907 = vmatprep.mubr.f32.mxu0 0.0
    %2908 = vmatmul.mubr.f32.gmra.mrb[0].mxu0 0.0
    %v2909 = vpop.f32.mrb[0].mxu0
    %v2910 = vadd.f32 0.0, %v2909
    %v2911 = vpop.f32.mrb[0].mxu0
    %v2912 = vadd.f32 0.0, %v2911
    %2913 = vdwg.mxu0
    %v2914 = vadd.f32 %v2632, %v2839
    %v2915 = vadd.f32 %v2634, %v2841
    %v2916 = vadd.f32 %v2703, %v2910
    %v2917 = vadd.f32 %v2705, %v2912
    %v2918 = vxor.u32 %v2914, 2147483648
    %v2919 = vmul.f32 %v2918, 1.442695
    %v2920 = vpow.pop %v2919
    %v2921 = vadd.f32 %v2920, 1.0
    %v2922 = vrcp.pop %v2921
    %v2923 = vmul.f32 1.0, %v2922
    %v2924 = vxor.u32 %v2915, 2147483648
    %v2925 = vmul.f32 %v2924, 1.442695
    %v2926 = vpow.pop %v2925
    %v2927 = vadd.f32 %v2926, 1.0
    %v2928 = vrcp.pop %v2927
    %v2929 = vmul.f32 1.0, %v2928
    %v2930 = vtanh.pop %v2916
    %v2931 = vxor.u32 %v2917, 2147483648
    %v2932 = vmul.f32 %v2931, 1.442695
    %v2933 = vpow.pop %v2932
    %v2934 = vadd.f32 %v2933, 1.0
    %v2935 = vrcp.pop %v2934
    %v2936 = vmul.f32 1.0, %v2935
    %v2937 = vmul.f32 %v2929, 0.0
    %v2938 = vmul.f32 %v2923, %v2930
    %v2939 = vadd.f32 %v2937, %v2938
    %v2940 = vtanh.pop %v2939
    %v2941 = vmul.f32 %v2936, %v2940
    %2942 = vmatprep.subr.mxu0 %v2709
    %2943 = vmatpush1.msra.mxu0 %v2708
    %2944 = vmatprep.subr.mxu0 %v2713
    %2945 = vmatpush1.msra.mxu0 %v2712
    %2946 = vmatprep.subr.mxu0 %v2717
    %2947 = vmatpush1.msra.mxu0 %v2716
    %2948 = vmatprep.subr.mxu0 %v2721
    %2949 = vmatpush1.msra.mxu0 %v2720
    %2950 = vmatprep.subr.mxu0 %v2725
    %2951 = vmatpush1.msra.mxu0 %v2724
    %2952 = vmatprep.subr.mxu0 %v2729
    %2953 = vmatpush1.msra.mxu0 %v2728
    %2954 = vmatprep.subr.mxu0 %v2733
    %2955 = vmatpush1.msra.mxu0 %v2732
    %2956 = vmatprep.subr.mxu0 %v2737
    %2957 = vmatpush1.msra.mxu0 %v2736
    %2958 = vmatprep.subr.mxu0 %v2741
    %2959 = vmatpush1.msra.mxu0 %v2740
    %2960 = vmatprep.subr.mxu0 %v2745
    %2961 = vmatpush1.msra.mxu0 %v2744
    %2962 = vmatprep.subr.mxu0 %v2749
    %2963 = vmatpush1.msra.mxu0 %v2748
    %2964 = vmatprep.subr.mxu0 %v2753
    %2965 = vmatpush1.msra.mxu0 %v2752
    %2966 = vmatprep.subr.mxu0 %v2757
    %2967 = vmatpush1.msra.mxu0 %v2756
    %2968 = vmatprep.subr.mxu0 %v2761
    %2969 = vmatpush1.msra.mxu0 %v2760
    %2970 = vmatprep.subr.mxu0 %v2765
    %2971 = vmatpush1.msra.mxu0 %v2764
    %2972 = vmatprep.subr.mxu0 %v2769
    %2973 = vmatpush1.msra.mxu0 %v2768
    %2974 = vmatprep.subr.mxu0 0.0
    %2975 = vmatpush1.msra.mxu0 0.0
    %2976 = vmatprep.subr.mxu0 0.0
    %2977 = vmatpush1.msra.mxu0 0.0
    %2978 = vmatprep.subr.mxu0 0.0
    %2979 = vmatpush1.msra.mxu0 0.0
    %2980 = vmatprep.subr.mxu0 0.0
    %2981 = vmatpush1.msra.mxu0 0.0
    %2982 = vmatprep.subr.mxu0 0.0
    %2983 = vmatpush1.msra.mxu0 0.0
    %2984 = vmatprep.subr.mxu0 0.0
    %2985 = vmatpush1.msra.mxu0 0.0
    %2986 = vmatprep.subr.mxu0 0.0
    %2987 = vmatpush1.msra.mxu0 0.0
    %2988 = vmatprep.subr.mxu0 0.0
    %2989 = vmatpush1.msra.mxu0 0.0
    %2990 = vmatprep.subr.mxu0 0.0
    %2991 = vmatpush1.msra.mxu0 0.0
    %2992 = vmatprep.subr.mxu0 0.0
    %2993 = vmatpush1.msra.mxu0 0.0
    %2994 = vmatprep.subr.mxu0 0.0
    %2995 = vmatpush1.msra.mxu0 0.0
    %2996 = vmatprep.subr.mxu0 0.0
    %2997 = vmatpush1.msra.mxu0 0.0
    %2998 = vmatprep.subr.mxu0 0.0
    %2999 = vmatpush1.msra.mxu0 0.0
    %3000 = vmatprep.subr.mxu0 0.0
    %3001 = vmatpush1.msra.mxu0 0.0
    %3002 = vmatprep.subr.mxu0 0.0
    %3003 = vmatpush1.msra.mxu0 0.0
    %3004 = vmatprep.subr.mxu0 0.0
    %3005 = vmatpush1.msra.mxu0 0.0
    %3006 = vmatprep.mubr.f32.mxu0 0.0
    %3007 = vmatmul.mubr.f32.gmra.mrb[0].mxu0 %v2941
    %v3008 = vpop.f32.mrb[0].mxu0
    %v3009 = vadd.f32 0.0, %v3008
    %v3010 = vpop.f32.mrb[0].mxu0
    %v3011 = vadd.f32 0.0, %v3010
    %3012 = vdwg.mxu0
    %3013 = vmatprep.subr.mxu0 %v2711
    %3014 = vmatpush1.msra.mxu0 %v2710
    %3015 = vmatprep.subr.mxu0 %v2715
    %3016 = vmatpush1.msra.mxu0 %v2714
    %3017 = vmatprep.subr.mxu0 %v2719
    %3018 = vmatpush1.msra.mxu0 %v2718
    %3019 = vmatprep.subr.mxu0 %v2723
    %3020 = vmatpush1.msra.mxu0 %v2722
    %3021 = vmatprep.subr.mxu0 %v2727
    %3022 = vmatpush1.msra.mxu0 %v2726
    %3023 = vmatprep.subr.mxu0 %v2731
    %3024 = vmatpush1.msra.mxu0 %v2730
    %3025 = vmatprep.subr.mxu0 %v2735
    %3026 = vmatpush1.msra.mxu0 %v2734
    %3027 = vmatprep.subr.mxu0 %v2739
    %3028 = vmatpush1.msra.mxu0 %v2738
    %3029 = vmatprep.subr.mxu0 %v2743
    %3030 = vmatpush1.msra.mxu0 %v2742
    %3031 = vmatprep.subr.mxu0 %v2747
    %3032 = vmatpush1.msra.mxu0 %v2746
    %3033 = vmatprep.subr.mxu0 %v2751
    %3034 = vmatpush1.msra.mxu0 %v2750
    %3035 = vmatprep.subr.mxu0 %v2755
    %3036 = vmatpush1.msra.mxu0 %v2754
    %3037 = vmatprep.subr.mxu0 %v2759
    %3038 = vmatpush1.msra.mxu0 %v2758
    %3039 = vmatprep.subr.mxu0 %v2763
    %3040 = vmatpush1.msra.mxu0 %v2762
    %3041 = vmatprep.subr.mxu0 %v2767
    %3042 = vmatpush1.msra.mxu0 %v2766
    %3043 = vmatprep.subr.mxu0 %v2771
    %3044 = vmatpush1.msra.mxu0 %v2770
    %3045 = vmatprep.subr.mxu0 0.0
    %3046 = vmatpush1.msra.mxu0 0.0
    %3047 = vmatprep.subr.mxu0 0.0
    %3048 = vmatpush1.msra.mxu0 0.0
    %3049 = vmatprep.subr.mxu0 0.0
    %3050 = vmatpush1.msra.mxu0 0.0
    %3051 = vmatprep.subr.mxu0 0.0
    %3052 = vmatpush1.msra.mxu0 0.0
    %3053 = vmatprep.subr.mxu0 0.0
    %3054 = vmatpush1.msra.mxu0 0.0
    %3055 = vmatprep.subr.mxu0 0.0
    %3056 = vmatpush1.msra.mxu0 0.0
    %3057 = vmatprep.subr.mxu0 0.0
    %3058 = vmatpush1.msra.mxu0 0.0
    %3059 = vmatprep.subr.mxu0 0.0
    %3060 = vmatpush1.msra.mxu0 0.0
    %3061 = vmatprep.subr.mxu0 0.0
    %3062 = vmatpush1.msra.mxu0 0.0
    %3063 = vmatprep.subr.mxu0 0.0
    %3064 = vmatpush1.msra.mxu0 0.0
    %3065 = vmatprep.subr.mxu0 0.0
    %3066 = vmatpush1.msra.mxu0 0.0
    %3067 = vmatprep.subr.mxu0 0.0
    %3068 = vmatpush1.msra.mxu0 0.0
    %3069 = vmatprep.subr.mxu0 0.0
    %3070 = vmatpush1.msra.mxu0 0.0
    %3071 = vmatprep.subr.mxu0 0.0
    %3072 = vmatpush1.msra.mxu0 0.0
    %3073 = vmatprep.subr.mxu0 0.0
    %3074 = vmatpush1.msra.mxu0 0.0
    %3075 = vmatprep.subr.mxu0 0.0
    %3076 = vmatpush1.msra.mxu0 0.0
    %3077 = vmatprep.mubr.f32.mxu0 0.0
    %3078 = vmatmul.mubr.f32.gmra.mrb[0].mxu0 %v2941
    %v3079 = vpop.f32.mrb[0].mxu0
    %v3080 = vadd.f32 0.0, %v3079
    %v3081 = vpop.f32.mrb[0].mxu0
    %v3082 = vadd.f32 0.0, %v3081
    %3083 = vdwg.mxu0
    %v3088 = vrot.slane %v3009, 7
    %v3089 = vrot.slane %v3011, 7
    %v3090 = vrot.slane %v3080, 7
    %v3091 = vrot.slane %v3082, 7
    %v3096 = vadd.f32 %v2632, %v3088
    %v3097 = vadd.f32 %v2634, %v3089
    %v3098 = vadd.f32 %v2703, %v3090
    %v3099 = vadd.f32 %v2705, %v3091
    %v3100 = vxor.u32 %v3096, 2147483648
    %v3101 = vmul.f32 %v3100, 1.442695
    %v3102 = vpow.pop %v3101
    %v3103 = vadd.f32 %v3102, 1.0
    %v3104 = vrcp.pop %v3103
    %v3105 = vmul.f32 1.0, %v3104
    %v3106 = vxor.u32 %v3097, 2147483648
    %v3107 = vmul.f32 %v3106, 1.442695
    %v3108 = vpow.pop %v3107
    %v3109 = vadd.f32 %v3108, 1.0
    %v3110 = vrcp.pop %v3109
    %v3111 = vmul.f32 1.0, %v3110
    %v3112 = vtanh.pop %v3098
    %v3113 = vxor.u32 %v3099, 2147483648
    %v3114 = vmul.f32 %v3113, 1.442695
    %v3115 = vpow.pop %v3114
    %v3116 = vadd.f32 %v3115, 1.0
    %v3117 = vrcp.pop %v3116
    %v3118 = vmul.f32 1.0, %v3117
    %v3120 = vrot.slane %v2939, 7
    %v3122 = vmul.f32 %v3111, %v3120
    %v3123 = vmul.f32 %v3105, %v3112
    %v3124 = vadd.f32 %v3122, %v3123
    %v3125 = vtanh.pop %v3124
    %v3126 = vmul.f32 %v3118, %v3125
    %v3128 = vrot.slane %v3126, 1
    %3130 = vmatprep.subr.mxu0 %v2709
    %3131 = vmatpush1.msra.mxu0 %v2708
    %3132 = vmatprep.subr.mxu0 %v2713
    %3133 = vmatpush1.msra.mxu0 %v2712
    %3134 = vmatprep.subr.mxu0 %v2717
    %3135 = vmatpush1.msra.mxu0 %v2716
    %3136 = vmatprep.subr.mxu0 %v2721
    %3137 = vmatpush1.msra.mxu0 %v2720
    %3138 = vmatprep.subr.mxu0 %v2725
    %3139 = vmatpush1.msra.mxu0 %v2724
    %3140 = vmatprep.subr.mxu0 %v2729
    %3141 = vmatpush1.msra.mxu0 %v2728
    %3142 = vmatprep.subr.mxu0 %v2733
    %3143 = vmatpush1.msra.mxu0 %v2732
    %3144 = vmatprep.subr.mxu0 %v2737
    %3145 = vmatpush1.msra.mxu0 %v2736
    %3146 = vmatprep.subr.mxu0 %v2741
    %3147 = vmatpush1.msra.mxu0 %v2740
    %3148 = vmatprep.subr.mxu0 %v2745
    %3149 = vmatpush1.msra.mxu0 %v2744
    %3150 = vmatprep.subr.mxu0 %v2749
    %3151 = vmatpush1.msra.mxu0 %v2748
    %3152 = vmatprep.subr.mxu0 %v2753
    %3153 = vmatpush1.msra.mxu0 %v2752
    %3154 = vmatprep.subr.mxu0 %v2757
    %3155 = vmatpush1.msra.mxu0 %v2756
    %3156 = vmatprep.subr.mxu0 %v2761
    %3157 = vmatpush1.msra.mxu0 %v2760
    %3158 = vmatprep.subr.mxu0 %v2765
    %3159 = vmatpush1.msra.mxu0 %v2764
    %3160 = vmatprep.subr.mxu0 %v2769
    %3161 = vmatpush1.msra.mxu0 %v2768
    %3162 = vmatprep.subr.mxu0 0.0
    %3163 = vmatpush1.msra.mxu0 0.0
    %3164 = vmatprep.subr.mxu0 0.0
    %3165 = vmatpush1.msra.mxu0 0.0
    %3166 = vmatprep.subr.mxu0 0.0
    %3167 = vmatpush1.msra.mxu0 0.0
    %3168 = vmatprep.subr.mxu0 0.0
    %3169 = vmatpush1.msra.mxu0 0.0
    %3170 = vmatprep.subr.mxu0 0.0
    %3171 = vmatpush1.msra.mxu0 0.0
    %3172 = vmatprep.subr.mxu0 0.0
    %3173 = vmatpush1.msra.mxu0 0.0
    %3174 = vmatprep.subr.mxu0 0.0
    %3175 = vmatpush1.msra.mxu0 0.0
    %3176 = vmatprep.subr.mxu0 0.0
    %3177 = vmatpush1.msra.mxu0 0.0
    %3178 = vmatprep.subr.mxu0 0.0
    %3179 = vmatpush1.msra.mxu0 0.0
    %3180 = vmatprep.subr.mxu0 0.0
    %3181 = vmatpush1.msra.mxu0 0.0
    %3182 = vmatprep.subr.mxu0 0.0
    %3183 = vmatpush1.msra.mxu0 0.0
    %3184 = vmatprep.subr.mxu0 0.0
    %3185 = vmatpush1.msra.mxu0 0.0
    %3186 = vmatprep.subr.mxu0 0.0
    %3187 = vmatpush1.msra.mxu0 0.0
    %3188 = vmatprep.subr.mxu0 0.0
    %3189 = vmatpush1.msra.mxu0 0.0
    %3190 = vmatprep.subr.mxu0 0.0
    %3191 = vmatpush1.msra.mxu0 0.0
    %3192 = vmatprep.subr.mxu0 0.0
    %3193 = vmatpush1.msra.mxu0 0.0
    %3194 = vmatprep.mubr.f32.mxu0 0.0
    %3195 = vmatmul.mubr.f32.gmra.mrb[0].mxu0 %v3128
    %v3196 = vpop.f32.mrb[0].mxu0
    %v3197 = vadd.f32 0.0, %v3196
    %v3198 = vpop.f32.mrb[0].mxu0
    %v3199 = vadd.f32 0.0, %v3198
    %3200 = vdwg.mxu0
    %3201 = vmatprep.subr.mxu0 %v2711
    %3202 = vmatpush1.msra.mxu0 %v2710
    %3203 = vmatprep.subr.mxu0 %v2715
    %3204 = vmatpush1.msra.mxu0 %v2714
    %3205 = vmatprep.subr.mxu0 %v2719
    %3206 = vmatpush1.msra.mxu0 %v2718
    %3207 = vmatprep.subr.mxu0 %v2723
    %3208 = vmatpush1.msra.mxu0 %v2722
    %3209 = vmatprep.subr.mxu0 %v2727
    %3210 = vmatpush1.msra.mxu0 %v2726
    %3211 = vmatprep.subr.mxu0 %v2731
    %3212 = vmatpush1.msra.mxu0 %v2730
    %3213 = vmatprep.subr.mxu0 %v2735
    %3214 = vmatpush1.msra.mxu0 %v2734
    %3215 = vmatprep.subr.mxu0 %v2739
    %3216 = vmatpush1.msra.mxu0 %v2738
    %3217 = vmatprep.subr.mxu0 %v2743
    %3218 = vmatpush1.msra.mxu0 %v2742
    %3219 = vmatprep.subr.mxu0 %v2747
    %3220 = vmatpush1.msra.mxu0 %v2746
    %3221 = vmatprep.subr.mxu0 %v2751
    %3222 = vmatpush1.msra.mxu0 %v2750
    %3223 = vmatprep.subr.mxu0 %v2755
    %3224 = vmatpush1.msra.mxu0 %v2754
    %3225 = vmatprep.subr.mxu0 %v2759
    %3226 = vmatpush1.msra.mxu0 %v2758
    %3227 = vmatprep.subr.mxu0 %v2763
    %3228 = vmatpush1.msra.mxu0 %v2762
    %3229 = vmatprep.subr.mxu0 %v2767
    %3230 = vmatpush1.msra.mxu0 %v2766
    %3231 = vmatprep.subr.mxu0 %v2771
    %3232 = vmatpush1.msra.mxu0 %v2770
    %3233 = vmatprep.subr.mxu0 0.0
    %3234 = vmatpush1.msra.mxu0 0.0
    %3235 = vmatprep.subr.mxu0 0.0
    %3236 = vmatpush1.msra.mxu0 0.0
    %3237 = vmatprep.subr.mxu0 0.0
    %3238 = vmatpush1.msra.mxu0 0.0
    %3239 = vmatprep.subr.mxu0 0.0
    %3240 = vmatpush1.msra.mxu0 0.0
    %3241 = vmatprep.subr.mxu0 0.0
    %3242 = vmatpush1.msra.mxu0 0.0
    %3243 = vmatprep.subr.mxu0 0.0
    %3244 = vmatpush1.msra.mxu0 0.0
    %3245 = vmatprep.subr.mxu0 0.0
    %3246 = vmatpush1.msra.mxu0 0.0
    %3247 = vmatprep.subr.mxu0 0.0
    %3248 = vmatpush1.msra.mxu0 0.0
    %3249 = vmatprep.subr.mxu0 0.0
    %3250 = vmatpush1.msra.mxu0 0.0
    %3251 = vmatprep.subr.mxu0 0.0
    %3252 = vmatpush1.msra.mxu0 0.0
    %3253 = vmatprep.subr.mxu0 0.0
    %3254 = vmatpush1.msra.mxu0 0.0
    %3255 = vmatprep.subr.mxu0 0.0
    %3256 = vmatpush1.msra.mxu0 0.0
    %3257 = vmatprep.subr.mxu0 0.0
    %3258 = vmatpush1.msra.mxu0 0.0
    %3259 = vmatprep.subr.mxu0 0.0
    %3260 = vmatpush1.msra.mxu0 0.0
    %3261 = vmatprep.subr.mxu0 0.0
    %3262 = vmatpush1.msra.mxu0 0.0
    %3263 = vmatprep.subr.mxu0 0.0
    %3264 = vmatpush1.msra.mxu0 0.0
    %3265 = vmatprep.mubr.f32.mxu0 0.0
    %3266 = vmatmul.mubr.f32.gmra.mrb[0].mxu0 %v3128
    %v3267 = vpop.f32.mrb[0].mxu0
    %v3268 = vadd.f32 0.0, %v3267
    %v3269 = vpop.f32.mrb[0].mxu0
    %v3270 = vadd.f32 0.0, %v3269
    %3271 = vdwg.mxu0
    %v3276 = vrot.slane %v3197, 6
    %v3277 = vrot.slane %v3199, 6
    %v3278 = vrot.slane %v3268, 6
    %v3279 = vrot.slane %v3270, 6
    %v3284 = vadd.f32 %v2632, %v3276
    %v3285 = vadd.f32 %v2634, %v3277
    %v3286 = vadd.f32 %v2703, %v3278
    %v3287 = vadd.f32 %v2705, %v3279
    %v3288 = vxor.u32 %v3284, 2147483648
    %v3289 = vmul.f32 %v3288, 1.442695
    %v3290 = vpow.pop %v3289
    %v3291 = vadd.f32 %v3290, 1.0
    %v3292 = vrcp.pop %v3291
    %v3293 = vmul.f32 1.0, %v3292
    %v3294 = vxor.u32 %v3285, 2147483648
    %v3295 = vmul.f32 %v3294, 1.442695
    %v3296 = vpow.pop %v3295
    %v3297 = vadd.f32 %v3296, 1.0
    %v3298 = vrcp.pop %v3297
    %v3299 = vmul.f32 1.0, %v3298
    %v3300 = vtanh.pop %v3286
    %v3301 = vxor.u32 %v3287, 2147483648
    %v3302 = vmul.f32 %v3301, 1.442695
    %v3303 = vpow.pop %v3302
    %v3304 = vadd.f32 %v3303, 1.0
    %v3305 = vrcp.pop %v3304
    %v3306 = vmul.f32 1.0, %v3305
    %v3308 = vrot.slane %v3124, 7
    %v3310 = vmul.f32 %v3299, %v3308
    %v3311 = vmul.f32 %v3293, %v3300
    %v3312 = vadd.f32 %v3310, %v3311
    %v3313 = vtanh.pop %v3312
    %v3314 = vmul.f32 %v3306, %v3313
    %v3316 = vrot.slane %v3314, 2
    %3318 = vmatprep.subr.mxu0 %v2709
    %3319 = vmatpush1.msra.mxu0 %v2708
    %3320 = vmatprep.subr.mxu0 %v2713
    %3321 = vmatpush1.msra.mxu0 %v2712
    %3322 = vmatprep.subr.mxu0 %v2717
    %3323 = vmatpush1.msra.mxu0 %v2716
    %3324 = vmatprep.subr.mxu0 %v2721
    %3325 = vmatpush1.msra.mxu0 %v2720
    %3326 = vmatprep.subr.mxu0 %v2725
    %3327 = vmatpush1.msra.mxu0 %v2724
    %3328 = vmatprep.subr.mxu0 %v2729
    %3329 = vmatpush1.msra.mxu0 %v2728
    %3330 = vmatprep.subr.mxu0 %v2733
    %3331 = vmatpush1.msra.mxu0 %v2732
    %3332 = vmatprep.subr.mxu0 %v2737
    %3333 = vmatpush1.msra.mxu0 %v2736
    %3334 = vmatprep.subr.mxu0 %v2741
    %3335 = vmatpush1.msra.mxu0 %v2740
    %3336 = vmatprep.subr.mxu0 %v2745
    %3337 = vmatpush1.msra.mxu0 %v2744
    %3338 = vmatprep.subr.mxu0 %v2749
    %3339 = vmatpush1.msra.mxu0 %v2748
    %3340 = vmatprep.subr.mxu0 %v2753
    %3341 = vmatpush1.msra.mxu0 %v2752
    %3342 = vmatprep.subr.mxu0 %v2757
    %3343 = vmatpush1.msra.mxu0 %v2756
    %3344 = vmatprep.subr.mxu0 %v2761
    %3345 = vmatpush1.msra.mxu0 %v2760
    %3346 = vmatprep.subr.mxu0 %v2765
    %3347 = vmatpush1.msra.mxu0 %v2764
    %3348 = vmatprep.subr.mxu0 %v2769
    %3349 = vmatpush1.msra.mxu0 %v2768
    %3350 = vmatprep.subr.mxu0 0.0
    %3351 = vmatpush1.msra.mxu0 0.0
    %3352 = vmatprep.subr.mxu0 0.0
    %3353 = vmatpush1.msra.mxu0 0.0
    %3354 = vmatprep.subr.mxu0 0.0
    %3355 = vmatpush1.msra.mxu0 0.0
    %3356 = vmatprep.subr.mxu0 0.0
    %3357 = vmatpush1.msra.mxu0 0.0
    %3358 = vmatprep.subr.mxu0 0.0
    %3359 = vmatpush1.msra.mxu0 0.0
    %3360 = vmatprep.subr.mxu0 0.0
    %3361 = vmatpush1.msra.mxu0 0.0
    %3362 = vmatprep.subr.mxu0 0.0
    %3363 = vmatpush1.msra.mxu0 0.0
    %3364 = vmatprep.subr.mxu0 0.0
    %3365 = vmatpush1.msra.mxu0 0.0
    %3366 = vmatprep.subr.mxu0 0.0
    %3367 = vmatpush1.msra.mxu0 0.0
    %3368 = vmatprep.subr.mxu0 0.0
    %3369 = vmatpush1.msra.mxu0 0.0
    %3370 = vmatprep.subr.mxu0 0.0
    %3371 = vmatpush1.msra.mxu0 0.0
    %3372 = vmatprep.subr.mxu0 0.0
    %3373 = vmatpush1.msra.mxu0 0.0
    %3374 = vmatprep.subr.mxu0 0.0
    %3375 = vmatpush1.msra.mxu0 0.0
    %3376 = vmatprep.subr.mxu0 0.0
    %3377 = vmatpush1.msra.mxu0 0.0
    %3378 = vmatprep.subr.mxu0 0.0
    %3379 = vmatpush1.msra.mxu0 0.0
    %3380 = vmatprep.subr.mxu0 0.0
    %3381 = vmatpush1.msra.mxu0 0.0
    %3382 = vmatprep.mubr.f32.mxu0 0.0
    %3383 = vmatmul.mubr.f32.gmra.mrb[0].mxu0 %v3316
    %v3384 = vpop.f32.mrb[0].mxu0
    %v3385 = vadd.f32 0.0, %v3384
    %v3386 = vpop.f32.mrb[0].mxu0
    %v3387 = vadd.f32 0.0, %v3386
    %3388 = vdwg.mxu0
    %3389 = vmatprep.subr.mxu0 %v2711
    %3390 = vmatpush1.msra.mxu0 %v2710
    %3391 = vmatprep.subr.mxu0 %v2715
    %3392 = vmatpush1.msra.mxu0 %v2714
    %3393 = vmatprep.subr.mxu0 %v2719
    %3394 = vmatpush1.msra.mxu0 %v2718
    %3395 = vmatprep.subr.mxu0 %v2723
    %3396 = vmatpush1.msra.mxu0 %v2722
    %3397 = vmatprep.subr.mxu0 %v2727
    %3398 = vmatpush1.msra.mxu0 %v2726
    %3399 = vmatprep.subr.mxu0 %v2731
    %3400 = vmatpush1.msra.mxu0 %v2730
    %3401 = vmatprep.subr.mxu0 %v2735
    %3402 = vmatpush1.msra.mxu0 %v2734
    %3403 = vmatprep.subr.mxu0 %v2739
    %3404 = vmatpush1.msra.mxu0 %v2738
    %3405 = vmatprep.subr.mxu0 %v2743
    %3406 = vmatpush1.msra.mxu0 %v2742
    %3407 = vmatprep.subr.mxu0 %v2747
    %3408 = vmatpush1.msra.mxu0 %v2746
    %3409 = vmatprep.subr.mxu0 %v2751
    %3410 = vmatpush1.msra.mxu0 %v2750
    %3411 = vmatprep.subr.mxu0 %v2755
    %3412 = vmatpush1.msra.mxu0 %v2754
    %3413 = vmatprep.subr.mxu0 %v2759
    %3414 = vmatpush1.msra.mxu0 %v2758
    %3415 = vmatprep.subr.mxu0 %v2763
    %3416 = vmatpush1.msra.mxu0 %v2762
    %3417 = vmatprep.subr.mxu0 %v2767
    %3418 = vmatpush1.msra.mxu0 %v2766
    %3419 = vmatprep.subr.mxu0 %v2771
    %3420 = vmatpush1.msra.mxu0 %v2770
    %3421 = vmatprep.subr.mxu0 0.0
    %3422 = vmatpush1.msra.mxu0 0.0
    %3423 = vmatprep.subr.mxu0 0.0
    %3424 = vmatpush1.msra.mxu0 0.0
    %3425 = vmatprep.subr.mxu0 0.0
    %3426 = vmatpush1.msra.mxu0 0.0
    %3427 = vmatprep.subr.mxu0 0.0
    %3428 = vmatpush1.msra.mxu0 0.0
    %3429 = vmatprep.subr.mxu0 0.0
    %3430 = vmatpush1.msra.mxu0 0.0
    %3431 = vmatprep.subr.mxu0 0.0
    %3432 = vmatpush1.msra.mxu0 0.0
    %3433 = vmatprep.subr.mxu0 0.0
    %3434 = vmatpush1.msra.mxu0 0.0
    %3435 = vmatprep.subr.mxu0 0.0
    %3436 = vmatpush1.msra.mxu0 0.0
    %3437 = vmatprep.subr.mxu0 0.0
    %3438 = vmatpush1.msra.mxu0 0.0
    %3439 = vmatprep.subr.mxu0 0.0
    %3440 = vmatpush1.msra.mxu0 0.0
    %3441 = vmatprep.subr.mxu0 0.0
    %3442 = vmatpush1.msra.mxu0 0.0
    %3443 = vmatprep.subr.mxu0 0.0
    %3444 = vmatpush1.msra.mxu0 0.0
    %3445 = vmatprep.subr.mxu0 0.0
    %3446 = vmatpush1.msra.mxu0 0.0
    %3447 = vmatprep.subr.mxu0 0.0
    %3448 = vmatpush1.msra.mxu0 0.0
    %3449 = vmatprep.subr.mxu0 0.0
    %3450 = vmatpush1.msra.mxu0 0.0
    %3451 = vmatprep.subr.mxu0 0.0
    %3452 = vmatpush1.msra.mxu0 0.0
    %3453 = vmatprep.mubr.f32.mxu0 0.0
    %3454 = vmatmul.mubr.f32.gmra.mrb[0].mxu0 %v3316
    %v3455 = vpop.f32.mrb[0].mxu0
    %v3456 = vadd.f32 0.0, %v3455
    %v3457 = vpop.f32.mrb[0].mxu0
    %v3458 = vadd.f32 0.0, %v3457
    %3459 = vdwg.mxu0
    %v3464 = vrot.slane %v3385, 5
    %v3465 = vrot.slane %v3387, 5
    %v3466 = vrot.slane %v3456, 5
    %v3467 = vrot.slane %v3458, 5
    %v3472 = vadd.f32 %v2632, %v3464
    %v3473 = vadd.f32 %v2634, %v3465
    %v3474 = vadd.f32 %v2703, %v3466
    %v3475 = vadd.f32 %v2705, %v3467
    %v3476 = vxor.u32 %v3472, 2147483648
    %v3477 = vmul.f32 %v3476, 1.442695
    %v3478 = vpow.pop %v3477
    %v3479 = vadd.f32 %v3478, 1.0
    %v3480 = vrcp.pop %v3479
    %v3481 = vmul.f32 1.0, %v3480
    %v3482 = vxor.u32 %v3473, 2147483648
    %v3483 = vmul.f32 %v3482, 1.442695
    %v3484 = vpow.pop %v3483
    %v3485 = vadd.f32 %v3484, 1.0
    %v3486 = vrcp.pop %v3485
    %v3487 = vmul.f32 1.0, %v3486
    %v3488 = vtanh.pop %v3474
    %v3489 = vxor.u32 %v3475, 2147483648
    %v3490 = vmul.f32 %v3489, 1.442695
    %v3491 = vpow.pop %v3490
    %v3492 = vadd.f32 %v3491, 1.0
    %v3493 = vrcp.pop %v3492
    %v3494 = vmul.f32 1.0, %v3493
    %v3496 = vrot.slane %v3312, 7
    %v3498 = vmul.f32 %v3487, %v3496
    %v3499 = vmul.f32 %v3481, %v3488
    %v3500 = vadd.f32 %v3498, %v3499
    %v3501 = vtanh.pop %v3500
    %v3502 = vmul.f32 %v3494, %v3501
    %v3504 = vrot.slane %v3502, 3
    %3506 = vmatprep.subr.mxu0 %v2709
    %3507 = vmatpush1.msra.mxu0 %v2708
    %3508 = vmatprep.subr.mxu0 %v2713
    %3509 = vmatpush1.msra.mxu0 %v2712
    %3510 = vmatprep.subr.mxu0 %v2717
    %3511 = vmatpush1.msra.mxu0 %v2716
    %3512 = vmatprep.subr.mxu0 %v2721
    %3513 = vmatpush1.msra.mxu0 %v2720
    %3514 = vmatprep.subr.mxu0 %v2725
    %3515 = vmatpush1.msra.mxu0 %v2724
    %3516 = vmatprep.subr.mxu0 %v2729
    %3517 = vmatpush1.msra.mxu0 %v2728
    %3518 = vmatprep.subr.mxu0 %v2733
    %3519 = vmatpush1.msra.mxu0 %v2732
    %3520 = vmatprep.subr.mxu0 %v2737
    %3521 = vmatpush1.msra.mxu0 %v2736
    %3522 = vmatprep.subr.mxu0 %v2741
    %3523 = vmatpush1.msra.mxu0 %v2740
    %3524 = vmatprep.subr.mxu0 %v2745
    %3525 = vmatpush1.msra.mxu0 %v2744
    %3526 = vmatprep.subr.mxu0 %v2749
    %3527 = vmatpush1.msra.mxu0 %v2748
    %3528 = vmatprep.subr.mxu0 %v2753
    %3529 = vmatpush1.msra.mxu0 %v2752
    %3530 = vmatprep.subr.mxu0 %v2757
    %3531 = vmatpush1.msra.mxu0 %v2756
    %3532 = vmatprep.subr.mxu0 %v2761
    %3533 = vmatpush1.msra.mxu0 %v2760
    %3534 = vmatprep.subr.mxu0 %v2765
    %3535 = vmatpush1.msra.mxu0 %v2764
    %3536 = vmatprep.subr.mxu0 %v2769
    %3537 = vmatpush1.msra.mxu0 %v2768
    %3538 = vmatprep.subr.mxu0 0.0
    %3539 = vmatpush1.msra.mxu0 0.0
    %3540 = vmatprep.subr.mxu0 0.0
    %3541 = vmatpush1.msra.mxu0 0.0
    %3542 = vmatprep.subr.mxu0 0.0
    %3543 = vmatpush1.msra.mxu0 0.0
    %3544 = vmatprep.subr.mxu0 0.0
    %3545 = vmatpush1.msra.mxu0 0.0
    %3546 = vmatprep.subr.mxu0 0.0
    %3547 = vmatpush1.msra.mxu0 0.0
    %3548 = vmatprep.subr.mxu0 0.0
    %3549 = vmatpush1.msra.mxu0 0.0
    %3550 = vmatprep.subr.mxu0 0.0
    %3551 = vmatpush1.msra.mxu0 0.0
    %3552 = vmatprep.subr.mxu0 0.0
    %3553 = vmatpush1.msra.mxu0 0.0
    %3554 = vmatprep.subr.mxu0 0.0
    %3555 = vmatpush1.msra.mxu0 0.0
    %3556 = vmatprep.subr.mxu0 0.0
    %3557 = vmatpush1.msra.mxu0 0.0
    %3558 = vmatprep.subr.mxu0 0.0
    %3559 = vmatpush1.msra.mxu0 0.0
    %3560 = vmatprep.subr.mxu0 0.0
    %3561 = vmatpush1.msra.mxu0 0.0
    %3562 = vmatprep.subr.mxu0 0.0
    %3563 = vmatpush1.msra.mxu0 0.0
    %3564 = vmatprep.subr.mxu0 0.0
    %3565 = vmatpush1.msra.mxu0 0.0
    %3566 = vmatprep.subr.mxu0 0.0
    %3567 = vmatpush1.msra.mxu0 0.0
    %3568 = vmatprep.subr.mxu0 0.0
    %3569 = vmatpush1.msra.mxu0 0.0
    %3570 = vmatprep.mubr.f32.mxu0 0.0
    %3571 = vmatmul.mubr.f32.gmra.mrb[0].mxu0 %v3504
    %v3572 = vpop.f32.mrb[0].mxu0
    %v3573 = vadd.f32 0.0, %v3572
    %v3574 = vpop.f32.mrb[0].mxu0
    %v3575 = vadd.f32 0.0, %v3574
    %3576 = vdwg.mxu0
    %3577 = vmatprep.subr.mxu0 %v2711
    %3578 = vmatpush1.msra.mxu0 %v2710
    %3579 = vmatprep.subr.mxu0 %v2715
    %3580 = vmatpush1.msra.mxu0 %v2714
    %3581 = vmatprep.subr.mxu0 %v2719
    %3582 = vmatpush1.msra.mxu0 %v2718
    %3583 = vmatprep.subr.mxu0 %v2723
    %3584 = vmatpush1.msra.mxu0 %v2722
    %3585 = vmatprep.subr.mxu0 %v2727
    %3586 = vmatpush1.msra.mxu0 %v2726
    %3587 = vmatprep.subr.mxu0 %v2731
    %3588 = vmatpush1.msra.mxu0 %v2730
    %3589 = vmatprep.subr.mxu0 %v2735
    %3590 = vmatpush1.msra.mxu0 %v2734
    %3591 = vmatprep.subr.mxu0 %v2739
    %3592 = vmatpush1.msra.mxu0 %v2738
    %3593 = vmatprep.subr.mxu0 %v2743
    %3594 = vmatpush1.msra.mxu0 %v2742
    %3595 = vmatprep.subr.mxu0 %v2747
    %3596 = vmatpush1.msra.mxu0 %v2746
    %3597 = vmatprep.subr.mxu0 %v2751
    %3598 = vmatpush1.msra.mxu0 %v2750
    %3599 = vmatprep.subr.mxu0 %v2755
    %3600 = vmatpush1.msra.mxu0 %v2754
    %3601 = vmatprep.subr.mxu0 %v2759
    %3602 = vmatpush1.msra.mxu0 %v2758
    %3603 = vmatprep.subr.mxu0 %v2763
    %3604 = vmatpush1.msra.mxu0 %v2762
    %3605 = vmatprep.subr.mxu0 %v2767
    %3606 = vmatpush1.msra.mxu0 %v2766
    %3607 = vmatprep.subr.mxu0 %v2771
    %3608 = vmatpush1.msra.mxu0 %v2770
    %3609 = vmatprep.subr.mxu0 0.0
    %3610 = vmatpush1.msra.mxu0 0.0
    %3611 = vmatprep.subr.mxu0 0.0
    %3612 = vmatpush1.msra.mxu0 0.0
    %3613 = vmatprep.subr.mxu0 0.0
    %3614 = vmatpush1.msra.mxu0 0.0
    %3615 = vmatprep.subr.mxu0 0.0
    %3616 = vmatpush1.msra.mxu0 0.0
    %3617 = vmatprep.subr.mxu0 0.0
    %3618 = vmatpush1.msra.mxu0 0.0
    %3619 = vmatprep.subr.mxu0 0.0
    %3620 = vmatpush1.msra.mxu0 0.0
    %3621 = vmatprep.subr.mxu0 0.0
    %3622 = vmatpush1.msra.mxu0 0.0
    %3623 = vmatprep.subr.mxu0 0.0
    %3624 = vmatpush1.msra.mxu0 0.0
    %3625 = vmatprep.subr.mxu0 0.0
    %3626 = vmatpush1.msra.mxu0 0.0
    %3627 = vmatprep.subr.mxu0 0.0
    %3628 = vmatpush1.msra.mxu0 0.0
    %3629 = vmatprep.subr.mxu0 0.0
    %3630 = vmatpush1.msra.mxu0 0.0
    %3631 = vmatprep.subr.mxu0 0.0
    %3632 = vmatpush1.msra.mxu0 0.0
    %3633 = vmatprep.subr.mxu0 0.0
    %3634 = vmatpush1.msra.mxu0 0.0
    %3635 = vmatprep.subr.mxu0 0.0
    %3636 = vmatpush1.msra.mxu0 0.0
    %3637 = vmatprep.subr.mxu0 0.0
    %3638 = vmatpush1.msra.mxu0 0.0
    %3639 = vmatprep.subr.mxu0 0.0
    %3640 = vmatpush1.msra.mxu0 0.0
    %3641 = vmatprep.mubr.f32.mxu0 0.0
    %3642 = vmatmul.mubr.f32.gmra.mrb[0].mxu0 %v3504
    %v3643 = vpop.f32.mrb[0].mxu0
    %v3644 = vadd.f32 0.0, %v3643
    %v3645 = vpop.f32.mrb[0].mxu0
    %v3646 = vadd.f32 0.0, %v3645
    %3647 = vdwg.mxu0
    %v3652 = vrot.slane %v3573, 4
    %v3653 = vrot.slane %v3575, 4
    %v3654 = vrot.slane %v3644, 4
    %v3655 = vrot.slane %v3646, 4
    %v3660 = vadd.f32 %v2632, %v3652
    %v3661 = vadd.f32 %v2634, %v3653
    %v3662 = vadd.f32 %v2703, %v3654
    %v3663 = vadd.f32 %v2705, %v3655
    %v3664 = vxor.u32 %v3660, 2147483648
    %v3665 = vmul.f32 %v3664, 1.442695
    %v3666 = vpow.pop %v3665
    %v3667 = vadd.f32 %v3666, 1.0
    %v3668 = vrcp.pop %v3667
    %v3669 = vmul.f32 1.0, %v3668
    %v3670 = vxor.u32 %v3661, 2147483648
    %v3671 = vmul.f32 %v3670, 1.442695
    %v3672 = vpow.pop %v3671
    %v3673 = vadd.f32 %v3672, 1.0
    %v3674 = vrcp.pop %v3673
    %v3675 = vmul.f32 1.0, %v3674
    %v3676 = vtanh.pop %v3662
    %v3677 = vxor.u32 %v3663, 2147483648
    %v3678 = vmul.f32 %v3677, 1.442695
    %v3679 = vpow.pop %v3678
    %v3680 = vadd.f32 %v3679, 1.0
    %v3681 = vrcp.pop %v3680
    %v3682 = vmul.f32 1.0, %v3681
    %v3684 = vrot.slane %v3500, 7
    %v3686 = vmul.f32 %v3675, %v3684
    %v3687 = vmul.f32 %v3669, %v3676
    %v3688 = vadd.f32 %v3686, %v3687
    %v3689 = vtanh.pop %v3688
    %v3690 = vmul.f32 %v3682, %v3689
    %v3692 = vrot.slane %v3690, 4
    %3694 = vmatprep.subr.mxu0 %v2709
    %3695 = vmatpush1.msra.mxu0 %v2708
    %3696 = vmatprep.subr.mxu0 %v2713
    %3697 = vmatpush1.msra.mxu0 %v2712
    %3698 = vmatprep.subr.mxu0 %v2717
    %3699 = vmatpush1.msra.mxu0 %v2716
    %3700 = vmatprep.subr.mxu0 %v2721
    %3701 = vmatpush1.msra.mxu0 %v2720
    %3702 = vmatprep.subr.mxu0 %v2725
    %3703 = vmatpush1.msra.mxu0 %v2724
    %3704 = vmatprep.subr.mxu0 %v2729
    %3705 = vmatpush1.msra.mxu0 %v2728
    %3706 = vmatprep.subr.mxu0 %v2733
    %3707 = vmatpush1.msra.mxu0 %v2732
    %3708 = vmatprep.subr.mxu0 %v2737
    %3709 = vmatpush1.msra.mxu0 %v2736
    %3710 = vmatprep.subr.mxu0 %v2741
    %3711 = vmatpush1.msra.mxu0 %v2740
    %3712 = vmatprep.subr.mxu0 %v2745
    %3713 = vmatpush1.msra.mxu0 %v2744
    %3714 = vmatprep.subr.mxu0 %v2749
    %3715 = vmatpush1.msra.mxu0 %v2748
    %3716 = vmatprep.subr.mxu0 %v2753
    %3717 = vmatpush1.msra.mxu0 %v2752
    %3718 = vmatprep.subr.mxu0 %v2757
    %3719 = vmatpush1.msra.mxu0 %v2756
    %3720 = vmatprep.subr.mxu0 %v2761
    %3721 = vmatpush1.msra.mxu0 %v2760
    %3722 = vmatprep.subr.mxu0 %v2765
    %3723 = vmatpush1.msra.mxu0 %v2764
    %3724 = vmatprep.subr.mxu0 %v2769
    %3725 = vmatpush1.msra.mxu0 %v2768
    %3726 = vmatprep.subr.mxu0 0.0
    %3727 = vmatpush1.msra.mxu0 0.0
    %3728 = vmatprep.subr.mxu0 0.0
    %3729 = vmatpush1.msra.mxu0 0.0
    %3730 = vmatprep.subr.mxu0 0.0
    %3731 = vmatpush1.msra.mxu0 0.0
    %3732 = vmatprep.subr.mxu0 0.0
    %3733 = vmatpush1.msra.mxu0 0.0
    %3734 = vmatprep.subr.mxu0 0.0
    %3735 = vmatpush1.msra.mxu0 0.0
    %3736 = vmatprep.subr.mxu0 0.0
    %3737 = vmatpush1.msra.mxu0 0.0
    %3738 = vmatprep.subr.mxu0 0.0
    %3739 = vmatpush1.msra.mxu0 0.0
    %3740 = vmatprep.subr.mxu0 0.0
    %3741 = vmatpush1.msra.mxu0 0.0
    %3742 = vmatprep.subr.mxu0 0.0
    %3743 = vmatpush1.msra.mxu0 0.0
    %3744 = vmatprep.subr.mxu0 0.0
    %3745 = vmatpush1.msra.mxu0 0.0
    %3746 = vmatprep.subr.mxu0 0.0
    %3747 = vmatpush1.msra.mxu0 0.0
    %3748 = vmatprep.subr.mxu0 0.0
    %3749 = vmatpush1.msra.mxu0 0.0
    %3750 = vmatprep.subr.mxu0 0.0
    %3751 = vmatpush1.msra.mxu0 0.0
    %3752 = vmatprep.subr.mxu0 0.0
    %3753 = vmatpush1.msra.mxu0 0.0
    %3754 = vmatprep.subr.mxu0 0.0
    %3755 = vmatpush1.msra.mxu0 0.0
    %3756 = vmatprep.subr.mxu0 0.0
    %3757 = vmatpush1.msra.mxu0 0.0
    %3758 = vmatprep.mubr.f32.mxu0 0.0
    %3759 = vmatmul.mubr.f32.gmra.mrb[0].mxu0 %v3692
    %v3760 = vpop.f32.mrb[0].mxu0
    %v3761 = vadd.f32 0.0, %v3760
    %v3762 = vpop.f32.mrb[0].mxu0
    %v3763 = vadd.f32 0.0, %v3762
    %3764 = vdwg.mxu0
    %3765 = vmatprep.subr.mxu0 %v2711
    %3766 = vmatpush1.msra.mxu0 %v2710
    %3767 = vmatprep.subr.mxu0 %v2715
    %3768 = vmatpush1.msra.mxu0 %v2714
    %3769 = vmatprep.subr.mxu0 %v2719
    %3770 = vmatpush1.msra.mxu0 %v2718
    %3771 = vmatprep.subr.mxu0 %v2723
    %3772 = vmatpush1.msra.mxu0 %v2722
    %3773 = vmatprep.subr.mxu0 %v2727
    %3774 = vmatpush1.msra.mxu0 %v2726
    %3775 = vmatprep.subr.mxu0 %v2731
    %3776 = vmatpush1.msra.mxu0 %v2730
    %3777 = vmatprep.subr.mxu0 %v2735
    %3778 = vmatpush1.msra.mxu0 %v2734
    %3779 = vmatprep.subr.mxu0 %v2739
    %3780 = vmatpush1.msra.mxu0 %v2738
    %3781 = vmatprep.subr.mxu0 %v2743
    %3782 = vmatpush1.msra.mxu0 %v2742
    %3783 = vmatprep.subr.mxu0 %v2747
    %3784 = vmatpush1.msra.mxu0 %v2746
    %3785 = vmatprep.subr.mxu0 %v2751
    %3786 = vmatpush1.msra.mxu0 %v2750
    %3787 = vmatprep.subr.mxu0 %v2755
    %3788 = vmatpush1.msra.mxu0 %v2754
    %3789 = vmatprep.subr.mxu0 %v2759
    %3790 = vmatpush1.msra.mxu0 %v2758
    %3791 = vmatprep.subr.mxu0 %v2763
    %3792 = vmatpush1.msra.mxu0 %v2762
    %3793 = vmatprep.subr.mxu0 %v2767
    %3794 = vmatpush1.msra.mxu0 %v2766
    %3795 = vmatprep.subr.mxu0 %v2771
    %3796 = vmatpush1.msra.mxu0 %v2770
    %3797 = vmatprep.subr.mxu0 0.0
    %3798 = vmatpush1.msra.mxu0 0.0
    %3799 = vmatprep.subr.mxu0 0.0
    %3800 = vmatpush1.msra.mxu0 0.0
    %3801 = vmatprep.subr.mxu0 0.0
    %3802 = vmatpush1.msra.mxu0 0.0
    %3803 = vmatprep.subr.mxu0 0.0
    %3804 = vmatpush1.msra.mxu0 0.0
    %3805 = vmatprep.subr.mxu0 0.0
    %3806 = vmatpush1.msra.mxu0 0.0
    %3807 = vmatprep.subr.mxu0 0.0
    %3808 = vmatpush1.msra.mxu0 0.0
    %3809 = vmatprep.subr.mxu0 0.0
    %3810 = vmatpush1.msra.mxu0 0.0
    %3811 = vmatprep.subr.mxu0 0.0
    %3812 = vmatpush1.msra.mxu0 0.0
    %3813 = vmatprep.subr.mxu0 0.0
    %3814 = vmatpush1.msra.mxu0 0.0
    %3815 = vmatprep.subr.mxu0 0.0
    %3816 = vmatpush1.msra.mxu0 0.0
    %3817 = vmatprep.subr.mxu0 0.0
    %3818 = vmatpush1.msra.mxu0 0.0
    %3819 = vmatprep.subr.mxu0 0.0
    %3820 = vmatpush1.msra.mxu0 0.0
    %3821 = vmatprep.subr.mxu0 0.0
    %3822 = vmatpush1.msra.mxu0 0.0
    %3823 = vmatprep.subr.mxu0 0.0
    %3824 = vmatpush1.msra.mxu0 0.0
    %3825 = vmatprep.subr.mxu0 0.0
    %3826 = vmatpush1.msra.mxu0 0.0
    %3827 = vmatprep.subr.mxu0 0.0
    %3828 = vmatpush1.msra.mxu0 0.0
    %3829 = vmatprep.mubr.f32.mxu0 0.0
    %3830 = vmatmul.mubr.f32.gmra.mrb[0].mxu0 %v3692
    %v3831 = vpop.f32.mrb[0].mxu0
    %v3832 = vadd.f32 0.0, %v3831
    %v3833 = vpop.f32.mrb[0].mxu0
    %v3834 = vadd.f32 0.0, %v3833
    %3835 = vdwg.mxu0
    %v3840 = vrot.slane %v3761, 3
    %v3841 = vrot.slane %v3763, 3
    %v3842 = vrot.slane %v3832, 3
    %v3843 = vrot.slane %v3834, 3
    %v3848 = vadd.f32 %v2632, %v3840
    %v3849 = vadd.f32 %v2634, %v3841
    %v3850 = vadd.f32 %v2703, %v3842
    %v3851 = vadd.f32 %v2705, %v3843
    %v3852 = vxor.u32 %v3848, 2147483648
    %v3853 = vmul.f32 %v3852, 1.442695
    %v3854 = vpow.pop %v3853
    %v3855 = vadd.f32 %v3854, 1.0
    %v3856 = vrcp.pop %v3855
    %v3857 = vmul.f32 1.0, %v3856
    %v3858 = vxor.u32 %v3849, 2147483648
    %v3859 = vmul.f32 %v3858, 1.442695
    %v3860 = vpow.pop %v3859
    %v3861 = vadd.f32 %v3860, 1.0
    %v3862 = vrcp.pop %v3861
    %v3863 = vmul.f32 1.0, %v3862
    %v3864 = vtanh.pop %v3850
    %v3865 = vxor.u32 %v3851, 2147483648
    %v3866 = vmul.f32 %v3865, 1.442695
    %v3867 = vpow.pop %v3866
    %v3868 = vadd.f32 %v3867, 1.0
    %v3869 = vrcp.pop %v3868
    %v3870 = vmul.f32 1.0, %v3869
    %v3872 = vrot.slane %v3688, 7
    %v3874 = vmul.f32 %v3863, %v3872
    %v3875 = vmul.f32 %v3857, %v3864
    %v3876 = vadd.f32 %v3874, %v3875
    %v3877 = vtanh.pop %v3876
    %v3878 = vmul.f32 %v3870, %v3877
    %v3880 = vrot.slane %v3878, 5
    %3882 = vmatprep.subr.mxu0 %v2709
    %3883 = vmatpush1.msra.mxu0 %v2708
    %3884 = vmatprep.subr.mxu0 %v2713
    %3885 = vmatpush1.msra.mxu0 %v2712
    %3886 = vmatprep.subr.mxu0 %v2717
    %3887 = vmatpush1.msra.mxu0 %v2716
    %3888 = vmatprep.subr.mxu0 %v2721
    %3889 = vmatpush1.msra.mxu0 %v2720
    %3890 = vmatprep.subr.mxu0 %v2725
    %3891 = vmatpush1.msra.mxu0 %v2724
    %3892 = vmatprep.subr.mxu0 %v2729
    %3893 = vmatpush1.msra.mxu0 %v2728
    %3894 = vmatprep.subr.mxu0 %v2733
    %3895 = vmatpush1.msra.mxu0 %v2732
    %3896 = vmatprep.subr.mxu0 %v2737
    %3897 = vmatpush1.msra.mxu0 %v2736
    %3898 = vmatprep.subr.mxu0 %v2741
    %3899 = vmatpush1.msra.mxu0 %v2740
    %3900 = vmatprep.subr.mxu0 %v2745
    %3901 = vmatpush1.msra.mxu0 %v2744
    %3902 = vmatprep.subr.mxu0 %v2749
    %3903 = vmatpush1.msra.mxu0 %v2748
    %3904 = vmatprep.subr.mxu0 %v2753
    %3905 = vmatpush1.msra.mxu0 %v2752
    %3906 = vmatprep.subr.mxu0 %v2757
    %3907 = vmatpush1.msra.mxu0 %v2756
    %3908 = vmatprep.subr.mxu0 %v2761
    %3909 = vmatpush1.msra.mxu0 %v2760
    %3910 = vmatprep.subr.mxu0 %v2765
    %3911 = vmatpush1.msra.mxu0 %v2764
    %3912 = vmatprep.subr.mxu0 %v2769
    %3913 = vmatpush1.msra.mxu0 %v2768
    %3914 = vmatprep.subr.mxu0 0.0
    %3915 = vmatpush1.msra.mxu0 0.0
    %3916 = vmatprep.subr.mxu0 0.0
    %3917 = vmatpush1.msra.mxu0 0.0
    %3918 = vmatprep.subr.mxu0 0.0
    %3919 = vmatpush1.msra.mxu0 0.0
    %3920 = vmatprep.subr.mxu0 0.0
    %3921 = vmatpush1.msra.mxu0 0.0
    %3922 = vmatprep.subr.mxu0 0.0
    %3923 = vmatpush1.msra.mxu0 0.0
    %3924 = vmatprep.subr.mxu0 0.0
    %3925 = vmatpush1.msra.mxu0 0.0
    %3926 = vmatprep.subr.mxu0 0.0
    %3927 = vmatpush1.msra.mxu0 0.0
    %3928 = vmatprep.subr.mxu0 0.0
    %3929 = vmatpush1.msra.mxu0 0.0
    %3930 = vmatprep.subr.mxu0 0.0
    %3931 = vmatpush1.msra.mxu0 0.0
    %3932 = vmatprep.subr.mxu0 0.0
    %3933 = vmatpush1.msra.mxu0 0.0
    %3934 = vmatprep.subr.mxu0 0.0
    %3935 = vmatpush1.msra.mxu0 0.0
    %3936 = vmatprep.subr.mxu0 0.0
    %3937 = vmatpush1.msra.mxu0 0.0
    %3938 = vmatprep.subr.mxu0 0.0
    %3939 = vmatpush1.msra.mxu0 0.0
    %3940 = vmatprep.subr.mxu0 0.0
    %3941 = vmatpush1.msra.mxu0 0.0
    %3942 = vmatprep.subr.mxu0 0.0
    %3943 = vmatpush1.msra.mxu0 0.0
    %3944 = vmatprep.subr.mxu0 0.0
    %3945 = vmatpush1.msra.mxu0 0.0
    %3946 = vmatprep.mubr.f32.mxu0 0.0
    %3947 = vmatmul.mubr.f32.gmra.mrb[0].mxu0 %v3880
    %v3948 = vpop.f32.mrb[0].mxu0
    %v3949 = vadd.f32 0.0, %v3948
    %v3950 = vpop.f32.mrb[0].mxu0
    %v3951 = vadd.f32 0.0, %v3950
    %3952 = vdwg.mxu0
    %3953 = vmatprep.subr.mxu0 %v2711
    %3954 = vmatpush1.msra.mxu0 %v2710
    %3955 = vmatprep.subr.mxu0 %v2715
    %3956 = vmatpush1.msra.mxu0 %v2714
    %3957 = vmatprep.subr.mxu0 %v2719
    %3958 = vmatpush1.msra.mxu0 %v2718
    %3959 = vmatprep.subr.mxu0 %v2723
    %3960 = vmatpush1.msra.mxu0 %v2722
    %3961 = vmatprep.subr.mxu0 %v2727
    %3962 = vmatpush1.msra.mxu0 %v2726
    %3963 = vmatprep.subr.mxu0 %v2731
    %3964 = vmatpush1.msra.mxu0 %v2730
    %3965 = vmatprep.subr.mxu0 %v2735
    %3966 = vmatpush1.msra.mxu0 %v2734
    %3967 = vmatprep.subr.mxu0 %v2739
    %3968 = vmatpush1.msra.mxu0 %v2738
    %3969 = vmatprep.subr.mxu0 %v2743
    %3970 = vmatpush1.msra.mxu0 %v2742
    %3971 = vmatprep.subr.mxu0 %v2747
    %3972 = vmatpush1.msra.mxu0 %v2746
    %3973 = vmatprep.subr.mxu0 %v2751
    %3974 = vmatpush1.msra.mxu0 %v2750
    %3975 = vmatprep.subr.mxu0 %v2755
    %3976 = vmatpush1.msra.mxu0 %v2754
    %3977 = vmatprep.subr.mxu0 %v2759
    %3978 = vmatpush1.msra.mxu0 %v2758
    %3979 = vmatprep.subr.mxu0 %v2763
    %3980 = vmatpush1.msra.mxu0 %v2762
    %3981 = vmatprep.subr.mxu0 %v2767
    %3982 = vmatpush1.msra.mxu0 %v2766
    %3983 = vmatprep.subr.mxu0 %v2771
    %3984 = vmatpush1.msra.mxu0 %v2770
    %3985 = vmatprep.subr.mxu0 0.0
    %3986 = vmatpush1.msra.mxu0 0.0
    %3987 = vmatprep.subr.mxu0 0.0
    %3988 = vmatpush1.msra.mxu0 0.0
    %3989 = vmatprep.subr.mxu0 0.0
    %3990 = vmatpush1.msra.mxu0 0.0
    %3991 = vmatprep.subr.mxu0 0.0
    %3992 = vmatpush1.msra.mxu0 0.0
    %3993 = vmatprep.subr.mxu0 0.0
    %3994 = vmatpush1.msra.mxu0 0.0
    %3995 = vmatprep.subr.mxu0 0.0
    %3996 = vmatpush1.msra.mxu0 0.0
    %3997 = vmatprep.subr.mxu0 0.0
    %3998 = vmatpush1.msra.mxu0 0.0
    %3999 = vmatprep.subr.mxu0 0.0
    %4000 = vmatpush1.msra.mxu0 0.0
    %4001 = vmatprep.subr.mxu0 0.0
    %4002 = vmatpush1.msra.mxu0 0.0
    %4003 = vmatprep.subr.mxu0 0.0
    %4004 = vmatpush1.msra.mxu0 0.0
    %4005 = vmatprep.subr.mxu0 0.0
    %4006 = vmatpush1.msra.mxu0 0.0
    %4007 = vmatprep.subr.mxu0 0.0
    %4008 = vmatpush1.msra.mxu0 0.0
    %4009 = vmatprep.subr.mxu0 0.0
    %4010 = vmatpush1.msra.mxu0 0.0
    %4011 = vmatprep.subr.mxu0 0.0
    %4012 = vmatpush1.msra.mxu0 0.0
    %4013 = vmatprep.subr.mxu0 0.0
    %4014 = vmatpush1.msra.mxu0 0.0
    %4015 = vmatprep.subr.mxu0 0.0
    %4016 = vmatpush1.msra.mxu0 0.0
    %4017 = vmatprep.mubr.f32.mxu0 0.0
    %4018 = vmatmul.mubr.f32.gmra.mrb[0].mxu0 %v3880
    %v4019 = vpop.f32.mrb[0].mxu0
    %v4020 = vadd.f32 0.0, %v4019
    %v4021 = vpop.f32.mrb[0].mxu0
    %v4022 = vadd.f32 0.0, %v4021
    %4023 = vdwg.mxu0
    %v4028 = vrot.slane %v3949, 2
    %v4029 = vrot.slane %v3951, 2
    %v4030 = vrot.slane %v4020, 2
    %v4031 = vrot.slane %v4022, 2
    %v4036 = vadd.f32 %v2632, %v4028
    %v4037 = vadd.f32 %v2634, %v4029
    %v4038 = vadd.f32 %v2703, %v4030
    %v4039 = vadd.f32 %v2705, %v4031
    %v4040 = vxor.u32 %v4036, 2147483648
    %v4041 = vmul.f32 %v4040, 1.442695
    %v4042 = vpow.pop %v4041
    %v4043 = vadd.f32 %v4042, 1.0
    %v4044 = vrcp.pop %v4043
    %v4045 = vmul.f32 1.0, %v4044
    %v4046 = vxor.u32 %v4037, 2147483648
    %v4047 = vmul.f32 %v4046, 1.442695
    %v4048 = vpow.pop %v4047
    %v4049 = vadd.f32 %v4048, 1.0
    %v4050 = vrcp.pop %v4049
    %v4051 = vmul.f32 1.0, %v4050
    %v4052 = vtanh.pop %v4038
    %v4053 = vxor.u32 %v4039, 2147483648
    %v4054 = vmul.f32 %v4053, 1.442695
    %v4055 = vpow.pop %v4054
    %v4056 = vadd.f32 %v4055, 1.0
    %v4057 = vrcp.pop %v4056
    %v4058 = vmul.f32 1.0, %v4057
    %v4060 = vrot.slane %v3876, 7
    %v4062 = vmul.f32 %v4051, %v4060
    %v4063 = vmul.f32 %v4045, %v4052
    %v4064 = vadd.f32 %v4062, %v4063
    %v4065 = vtanh.pop %v4064
    %v4066 = vmul.f32 %v4058, %v4065
    %v4068 = vrot.slane %v4066, 6
    %4070 = vmatprep.subr.mxu0 %v2709
    %4071 = vmatpush1.msra.mxu0 %v2708
    %4072 = vmatprep.subr.mxu0 %v2713
    %4073 = vmatpush1.msra.mxu0 %v2712
    %4074 = vmatprep.subr.mxu0 %v2717
    %4075 = vmatpush1.msra.mxu0 %v2716
    %4076 = vmatprep.subr.mxu0 %v2721
    %4077 = vmatpush1.msra.mxu0 %v2720
    %4078 = vmatprep.subr.mxu0 %v2725
    %4079 = vmatpush1.msra.mxu0 %v2724
    %4080 = vmatprep.subr.mxu0 %v2729
    %4081 = vmatpush1.msra.mxu0 %v2728
    %4082 = vmatprep.subr.mxu0 %v2733
    %4083 = vmatpush1.msra.mxu0 %v2732
    %4084 = vmatprep.subr.mxu0 %v2737
    %4085 = vmatpush1.msra.mxu0 %v2736
    %4086 = vmatprep.subr.mxu0 %v2741
    %4087 = vmatpush1.msra.mxu0 %v2740
    %4088 = vmatprep.subr.mxu0 %v2745
    %4089 = vmatpush1.msra.mxu0 %v2744
    %4090 = vmatprep.subr.mxu0 %v2749
    %4091 = vmatpush1.msra.mxu0 %v2748
    %4092 = vmatprep.subr.mxu0 %v2753
    %4093 = vmatpush1.msra.mxu0 %v2752
    %4094 = vmatprep.subr.mxu0 %v2757
    %4095 = vmatpush1.msra.mxu0 %v2756
    %4096 = vmatprep.subr.mxu0 %v2761
    %4097 = vmatpush1.msra.mxu0 %v2760
    %4098 = vmatprep.subr.mxu0 %v2765
    %4099 = vmatpush1.msra.mxu0 %v2764
    %4100 = vmatprep.subr.mxu0 %v2769
    %4101 = vmatpush1.msra.mxu0 %v2768
    %4102 = vmatprep.subr.mxu0 0.0
    %4103 = vmatpush1.msra.mxu0 0.0
    %4104 = vmatprep.subr.mxu0 0.0
    %4105 = vmatpush1.msra.mxu0 0.0
    %4106 = vmatprep.subr.mxu0 0.0
    %4107 = vmatpush1.msra.mxu0 0.0
    %4108 = vmatprep.subr.mxu0 0.0
    %4109 = vmatpush1.msra.mxu0 0.0
    %4110 = vmatprep.subr.mxu0 0.0
    %4111 = vmatpush1.msra.mxu0 0.0
    %4112 = vmatprep.subr.mxu0 0.0
    %4113 = vmatpush1.msra.mxu0 0.0
    %4114 = vmatprep.subr.mxu0 0.0
    %4115 = vmatpush1.msra.mxu0 0.0
    %4116 = vmatprep.subr.mxu0 0.0
    %4117 = vmatpush1.msra.mxu0 0.0
    %4118 = vmatprep.subr.mxu0 0.0
    %4119 = vmatpush1.msra.mxu0 0.0
    %4120 = vmatprep.subr.mxu0 0.0
    %4121 = vmatpush1.msra.mxu0 0.0
    %4122 = vmatprep.subr.mxu0 0.0
    %4123 = vmatpush1.msra.mxu0 0.0
    %4124 = vmatprep.subr.mxu0 0.0
    %4125 = vmatpush1.msra.mxu0 0.0
    %4126 = vmatprep.subr.mxu0 0.0
    %4127 = vmatpush1.msra.mxu0 0.0
    %4128 = vmatprep.subr.mxu0 0.0
    %4129 = vmatpush1.msra.mxu0 0.0
    %4130 = vmatprep.subr.mxu0 0.0
    %4131 = vmatpush1.msra.mxu0 0.0
    %4132 = vmatprep.subr.mxu0 0.0
    %4133 = vmatpush1.msra.mxu0 0.0
    %4134 = vmatprep.mubr.f32.mxu0 0.0
    %4135 = vmatmul.mubr.f32.gmra.mrb[0].mxu0 %v4068
    %v4136 = vpop.f32.mrb[0].mxu0
    %v4137 = vadd.f32 0.0, %v4136
    %v4138 = vpop.f32.mrb[0].mxu0
    %v4139 = vadd.f32 0.0, %v4138
    %4140 = vdwg.mxu0
    %4141 = vmatprep.subr.mxu0 %v2711
    %4142 = vmatpush1.msra.mxu0 %v2710
    %4143 = vmatprep.subr.mxu0 %v2715
    %4144 = vmatpush1.msra.mxu0 %v2714
    %4145 = vmatprep.subr.mxu0 %v2719
    %4146 = vmatpush1.msra.mxu0 %v2718
    %4147 = vmatprep.subr.mxu0 %v2723
    %4148 = vmatpush1.msra.mxu0 %v2722
    %4149 = vmatprep.subr.mxu0 %v2727
    %4150 = vmatpush1.msra.mxu0 %v2726
    %4151 = vmatprep.subr.mxu0 %v2731
    %4152 = vmatpush1.msra.mxu0 %v2730
    %4153 = vmatprep.subr.mxu0 %v2735
    %4154 = vmatpush1.msra.mxu0 %v2734
    %4155 = vmatprep.subr.mxu0 %v2739
    %4156 = vmatpush1.msra.mxu0 %v2738
    %4157 = vmatprep.subr.mxu0 %v2743
    %4158 = vmatpush1.msra.mxu0 %v2742
    %4159 = vmatprep.subr.mxu0 %v2747
    %4160 = vmatpush1.msra.mxu0 %v2746
    %4161 = vmatprep.subr.mxu0 %v2751
    %4162 = vmatpush1.msra.mxu0 %v2750
    %4163 = vmatprep.subr.mxu0 %v2755
    %4164 = vmatpush1.msra.mxu0 %v2754
    %4165 = vmatprep.subr.mxu0 %v2759
    %4166 = vmatpush1.msra.mxu0 %v2758
    %4167 = vmatprep.subr.mxu0 %v2763
    %4168 = vmatpush1.msra.mxu0 %v2762
    %4169 = vmatprep.subr.mxu0 %v2767
    %4170 = vmatpush1.msra.mxu0 %v2766
    %4171 = vmatprep.subr.mxu0 %v2771
    %4172 = vmatpush1.msra.mxu0 %v2770
    %4173 = vmatprep.subr.mxu0 0.0
    %4174 = vmatpush1.msra.mxu0 0.0
    %4175 = vmatprep.subr.mxu0 0.0
    %4176 = vmatpush1.msra.mxu0 0.0
    %4177 = vmatprep.subr.mxu0 0.0
    %4178 = vmatpush1.msra.mxu0 0.0
    %4179 = vmatprep.subr.mxu0 0.0
    %4180 = vmatpush1.msra.mxu0 0.0
    %4181 = vmatprep.subr.mxu0 0.0
    %4182 = vmatpush1.msra.mxu0 0.0
    %4183 = vmatprep.subr.mxu0 0.0
    %4184 = vmatpush1.msra.mxu0 0.0
    %4185 = vmatprep.subr.mxu0 0.0
    %4186 = vmatpush1.msra.mxu0 0.0
    %4187 = vmatprep.subr.mxu0 0.0
    %4188 = vmatpush1.msra.mxu0 0.0
    %4189 = vmatprep.subr.mxu0 0.0
    %4190 = vmatpush1.msra.mxu0 0.0
    %4191 = vmatprep.subr.mxu0 0.0
    %4192 = vmatpush1.msra.mxu0 0.0
    %4193 = vmatprep.subr.mxu0 0.0
    %4194 = vmatpush1.msra.mxu0 0.0
    %4195 = vmatprep.subr.mxu0 0.0
    %4196 = vmatpush1.msra.mxu0 0.0
    %4197 = vmatprep.subr.mxu0 0.0
    %4198 = vmatpush1.msra.mxu0 0.0
    %4199 = vmatprep.subr.mxu0 0.0
    %4200 = vmatpush1.msra.mxu0 0.0
    %4201 = vmatprep.subr.mxu0 0.0
    %4202 = vmatpush1.msra.mxu0 0.0
    %4203 = vmatprep.subr.mxu0 0.0
    %4204 = vmatpush1.msra.mxu0 0.0
    %4205 = vmatprep.mubr.f32.mxu0 0.0
    %4206 = vmatmul.mubr.f32.gmra.mrb[0].mxu0 %v4068
    %v4207 = vpop.f32.mrb[0].mxu0
    %v4208 = vadd.f32 0.0, %v4207
    %v4209 = vpop.f32.mrb[0].mxu0
    %v4210 = vadd.f32 0.0, %v4209
    %4211 = vdwg.mxu0
    %v4216 = vrot.slane %v4137, 1
    %v4217 = vrot.slane %v4139, 1
    %v4218 = vrot.slane %v4208, 1
    %v4219 = vrot.slane %v4210, 1
    %v4224 = vadd.f32 %v2632, %v4216
    %v4225 = vadd.f32 %v2634, %v4217
    %v4226 = vadd.f32 %v2703, %v4218
    %v4227 = vadd.f32 %v2705, %v4219
    %v4228 = vxor.u32 %v4224, 2147483648
    %v4229 = vmul.f32 %v4228, 1.442695
    %v4230 = vpow.pop %v4229
    %v4231 = vadd.f32 %v4230, 1.0
    %v4232 = vrcp.pop %v4231
    %v4233 = vmul.f32 1.0, %v4232
    %v4234 = vxor.u32 %v4225, 2147483648
    %v4235 = vmul.f32 %v4234, 1.442695
    %v4236 = vpow.pop %v4235
    %v4237 = vadd.f32 %v4236, 1.0
    %v4238 = vrcp.pop %v4237
    %v4239 = vmul.f32 1.0, %v4238
    %v4240 = vtanh.pop %v4226
    %v4241 = vxor.u32 %v4227, 2147483648
    %v4242 = vmul.f32 %v4241, 1.442695
    %v4243 = vpow.pop %v4242
    %v4244 = vadd.f32 %v4243, 1.0
    %v4245 = vrcp.pop %v4244
    %v4246 = vmul.f32 1.0, %v4245
    %v4248 = vrot.slane %v4064, 7
    %v4250 = vmul.f32 %v4239, %v4248
    %v4251 = vmul.f32 %v4233, %v4240
    %v4252 = vadd.f32 %v4250, %v4251
    %v4253 = vtanh.pop %v4252
    %v4254 = vmul.f32 %v4246, %v4253
    %v4255 = vsel %vm2464, %v2941, %v3126
    %v4256 = vsel %vm2466, %v4255, %v3314
    %v4257 = vsel %vm2468, %v4256, %v3502
    %v4258 = vsel %vm2470, %v4257, %v3690
    %v4259 = vsel %vm2472, %v4258, %v3878
    %v4260 = vsel %vm2474, %v4259, %v4066
    %v4261 = vsel %vm2476, %v4260, %v4254
    %4262 = vmatprep.subr.mxu0 0.0
    %4263 = vmatpush1.msra.mxu0 %v4261
    %4264 = vmatprep.subr.mxu0 0.0
    %4265 = vmatpush1.msra.mxu0 0.0
    %4266 = vmatprep.subr.mxu0 0.0
    %4267 = vmatpush1.msra.mxu0 0.0
    %4268 = vmatprep.subr.mxu0 0.0
    %4269 = vmatpush1.msra.mxu0 0.0
    %4270 = vmatprep.subr.mxu0 0.0
    %4271 = vmatpush1.msra.mxu0 0.0
    %4272 = vmatprep.subr.mxu0 0.0
    %4273 = vmatpush1.msra.mxu0 0.0
    %4274 = vmatprep.subr.mxu0 0.0
    %4275 = vmatpush1.msra.mxu0 0.0
    %4276 = vmatprep.subr.mxu0 0.0
    %4277 = vmatpush1.msra.mxu0 0.0
    %4278 = vmatprep.subr.mxu0 0.0
    %4279 = vmatpush1.msra.mxu0 0.0
    %4280 = vmatprep.subr.mxu0 0.0
    %4281 = vmatpush1.msra.mxu0 0.0
    %4282 = vmatprep.subr.mxu0 0.0
    %4283 = vmatpush1.msra.mxu0 0.0
    %4284 = vmatprep.subr.mxu0 0.0
    %4285 = vmatpush1.msra.mxu0 0.0
    %4286 = vmatprep.subr.mxu0 0.0
    %4287 = vmatpush1.msra.mxu0 0.0
    %4288 = vmatprep.subr.mxu0 0.0
    %4289 = vmatpush1.msra.mxu0 0.0
    %4290 = vmatprep.subr.mxu0 0.0
    %4291 = vmatpush1.msra.mxu0 0.0
    %4292 = vmatprep.subr.mxu0 0.0
    %4293 = vmatpush1.msra.mxu0 0.0
    %4294 = vmatprep.subr.mxu0 0.0
    %4295 = vmatpush1.msra.mxu0 0.0
    %4296 = vmatprep.subr.mxu0 0.0
    %4297 = vmatpush1.msra.mxu0 0.0
    %4298 = vmatprep.subr.mxu0 0.0
    %4299 = vmatpush1.msra.mxu0 0.0
    %4300 = vmatprep.subr.mxu0 0.0
    %4301 = vmatpush1.msra.mxu0 0.0
    %4302 = vmatprep.subr.mxu0 0.0
    %4303 = vmatpush1.msra.mxu0 0.0
    %4304 = vmatprep.subr.mxu0 0.0
    %4305 = vmatpush1.msra.mxu0 0.0
    %4306 = vmatprep.subr.mxu0 0.0
    %4307 = vmatpush1.msra.mxu0 0.0
    %4308 = vmatprep.subr.mxu0 0.0
    %4309 = vmatpush1.msra.mxu0 0.0
    %4310 = vmatprep.subr.mxu0 0.0
    %4311 = vmatpush1.msra.mxu0 0.0
    %4312 = vmatprep.subr.mxu0 0.0
    %4313 = vmatpush1.msra.mxu0 0.0
    %4314 = vmatprep.subr.mxu0 0.0
    %4315 = vmatpush1.msra.mxu0 0.0
    %4316 = vmatprep.subr.mxu0 0.0
    %4317 = vmatpush1.msra.mxu0 0.0
    %4318 = vmatprep.subr.mxu0 0.0
    %4319 = vmatpush1.msra.mxu0 0.0
    %4320 = vmatprep.subr.mxu0 0.0
    %4321 = vmatpush1.msra.mxu0 0.0
    %4322 = vmatprep.subr.mxu0 0.0
    %4323 = vmatpush1.msra.mxu0 0.0
    %4324 = vmatprep.subr.mxu0 0.0
    %4325 = vmatpush1.msra.mxu0 0.0
    %4326 = vmatprep.mubr.f32.mxu0 0.0
    %4327 = vmatmul.mubr.f32.gmra.mrb[0].mxu0 %v214
    %v4328 = vpop.f32.mrb[0].mxu0
    %v4329 = vadd.f32 0.0, %v4328
    %v4330 = vpop.f32.mrb[0].mxu0
    %4331 = vdwg.mxu0
    %4332 = vmatprep.subr.mxu0 0.0
    %4333 = vmatpush1.msra.mxu0 %v4261
    %4334 = vmatprep.subr.mxu0 0.0
    %4335 = vmatpush1.msra.mxu0 0.0
    %4336 = vmatprep.subr.mxu0 0.0
    %4337 = vmatpush1.msra.mxu0 0.0
    %4338 = vmatprep.subr.mxu0 0.0
    %4339 = vmatpush1.msra.mxu0 0.0
    %4340 = vmatprep.subr.mxu0 0.0
    %4341 = vmatpush1.msra.mxu0 0.0
    %4342 = vmatprep.subr.mxu0 0.0
    %4343 = vmatpush1.msra.mxu0 0.0
    %4344 = vmatprep.subr.mxu0 0.0
    %4345 = vmatpush1.msra.mxu0 0.0
    %4346 = vmatprep.subr.mxu0 0.0
    %4347 = vmatpush1.msra.mxu0 0.0
    %4348 = vmatprep.subr.mxu0 0.0
    %4349 = vmatpush1.msra.mxu0 0.0
    %4350 = vmatprep.subr.mxu0 0.0
    %4351 = vmatpush1.msra.mxu0 0.0
    %4352 = vmatprep.subr.mxu0 0.0
    %4353 = vmatpush1.msra.mxu0 0.0
    %4354 = vmatprep.subr.mxu0 0.0
    %4355 = vmatpush1.msra.mxu0 0.0
    %4356 = vmatprep.subr.mxu0 0.0
    %4357 = vmatpush1.msra.mxu0 0.0
    %4358 = vmatprep.subr.mxu0 0.0
    %4359 = vmatpush1.msra.mxu0 0.0
    %4360 = vmatprep.subr.mxu0 0.0
    %4361 = vmatpush1.msra.mxu0 0.0
    %4362 = vmatprep.subr.mxu0 0.0
    %4363 = vmatpush1.msra.mxu0 0.0
    %4364 = vmatprep.subr.mxu0 0.0
    %4365 = vmatpush1.msra.mxu0 0.0
    %4366 = vmatprep.subr.mxu0 0.0
    %4367 = vmatpush1.msra.mxu0 0.0
    %4368 = vmatprep.subr.mxu0 0.0
    %4369 = vmatpush1.msra.mxu0 0.0
    %4370 = vmatprep.subr.mxu0 0.0
    %4371 = vmatpush1.msra.mxu0 0.0
    %4372 = vmatprep.subr.mxu0 0.0
    %4373 = vmatpush1.msra.mxu0 0.0
    %4374 = vmatprep.subr.mxu0 0.0
    %4375 = vmatpush1.msra.mxu0 0.0
    %4376 = vmatprep.subr.mxu0 0.0
    %4377 = vmatpush1.msra.mxu0 0.0
    %4378 = vmatprep.subr.mxu0 0.0
    %4379 = vmatpush1.msra.mxu0 0.0
    %4380 = vmatprep.subr.mxu0 0.0
    %4381 = vmatpush1.msra.mxu0 0.0
    %4382 = vmatprep.subr.mxu0 0.0
    %4383 = vmatpush1.msra.mxu0 0.0
    %4384 = vmatprep.subr.mxu0 0.0
    %4385 = vmatpush1.msra.mxu0 0.0
    %4386 = vmatprep.subr.mxu0 0.0
    %4387 = vmatpush1.msra.mxu0 0.0
    %4388 = vmatprep.subr.mxu0 0.0
    %4389 = vmatpush1.msra.mxu0 0.0
    %4390 = vmatprep.subr.mxu0 0.0
    %4391 = vmatpush1.msra.mxu0 0.0
    %4392 = vmatprep.subr.mxu0 0.0
    %4393 = vmatpush1.msra.mxu0 0.0
    %4394 = vmatprep.subr.mxu0 0.0
    %4395 = vmatpush1.msra.mxu0 0.0
    %4396 = vmatprep.mubr.f32.mxu0 0.0
    %4397 = vmatmul.mubr.f32.gmra.mrb[0].mxu0 %v287
    %v4398 = vpop.f32.mrb[0].mxu0
    %v4399 = vadd.f32 0.0, %v4398
    %v4400 = vpop.f32.mrb[0].mxu0
    %4401 = vdwg.mxu0
    %s4402 = scalar_lea.vmem [#allocation2], 128
    %v4403 = vld [vmem:[%s4402] sm:$0xff]
    %v4404 = vld [vmem:[%s4402 + $0x8] sm:$0xff]
    %v4405 = vld [vmem:[%s4402 + $0x10] sm:$0xff]
    %v4406 = vld [vmem:[%s4402 + $0x18] sm:$0xff]
    %v4407 = vld [vmem:[%s4402 + $0x20] sm:$0xff]
    %v4408 = vld [vmem:[%s4402 + $0x28] sm:$0xff]
    %v4409 = vld [vmem:[%s4402 + $0x30] sm:$0xff]
    %v4410 = vld [vmem:[%s4402 + $0x38] sm:$0xff]
    %v4411 = vld [vmem:[%s4402 + $0x40] sm:$0xff]
    %v4412 = vld [vmem:[%s4402 + $0x48] sm:$0xff]
    %v4413 = vld [vmem:[%s4402 + $0x50] sm:$0xff]
    %v4414 = vld [vmem:[%s4402 + $0x58] sm:$0xff]
    %v4415 = vld [vmem:[%s4402 + $0x60] sm:$0xff]
    %v4416 = vld [vmem:[%s4402 + $0x68] sm:$0xff]
    %v4417 = vld [vmem:[%s4402 + $0x70] sm:$0xff]
    %v4418 = vld [vmem:[%s4402 + $0x78] sm:$0xff]
    %s4419 = scalar_lea.vmem [#allocation4], 128
    %v4420 = vld [vmem:[%s4419] sm:$0xff]
    %v4421 = vld [vmem:[%s4419 + $0x8] sm:$0xff]
    %v4422 = vld [vmem:[%s4419 + $0x10] sm:$0xff]
    %v4423 = vld [vmem:[%s4419 + $0x18] sm:$0xff]
    %v4424 = vld [vmem:[%s4419 + $0x20] sm:$0xff]
    %v4425 = vld [vmem:[%s4419 + $0x28] sm:$0xff]
    %v4426 = vld [vmem:[%s4419 + $0x30] sm:$0xff]
    %v4427 = vld [vmem:[%s4419 + $0x38] sm:$0xff]
    %v4428 = vld [vmem:[%s4419 + $0x40] sm:$0xff]
    %v4429 = vld [vmem:[%s4419 + $0x48] sm:$0xff]
    %v4430 = vld [vmem:[%s4419 + $0x50] sm:$0xff]
    %v4431 = vld [vmem:[%s4419 + $0x58] sm:$0xff]
    %v4432 = vld [vmem:[%s4419 + $0x60] sm:$0xff]
    %v4433 = vld [vmem:[%s4419 + $0x68] sm:$0xff]
    %v4434 = vld [vmem:[%s4419 + $0x70] sm:$0xff]
    %v4435 = vld [vmem:[%s4419 + $0x78] sm:$0xff]
    %4436 = vmatprep.subr.mxu0 0.0
    %4437 = vmatpush1.msra.mxu0 %v4420
    %4438 = vmatprep.subr.mxu0 0.0
    %4439 = vmatpush1.msra.mxu0 %v4421
    %4440 = vmatprep.subr.mxu0 0.0
    %4441 = vmatpush1.msra.mxu0 %v4422
    %4442 = vmatprep.subr.mxu0 0.0
    %4443 = vmatpush1.msra.mxu0 %v4423
    %4444 = vmatprep.subr.mxu0 0.0
    %4445 = vmatpush1.msra.mxu0 %v4424
    %4446 = vmatprep.subr.mxu0 0.0
    %4447 = vmatpush1.msra.mxu0 %v4425
    %4448 = vmatprep.subr.mxu0 0.0
    %4449 = vmatpush1.msra.mxu0 %v4426
    %4450 = vmatprep.subr.mxu0 0.0
    %4451 = vmatpush1.msra.mxu0 %v4427
    %4452 = vmatprep.subr.mxu0 0.0
    %4453 = vmatpush1.msra.mxu0 %v4428
    %4454 = vmatprep.subr.mxu0 0.0
    %4455 = vmatpush1.msra.mxu0 %v4429
    %4456 = vmatprep.subr.mxu0 0.0
    %4457 = vmatpush1.msra.mxu0 %v4430
    %4458 = vmatprep.subr.mxu0 0.0
    %4459 = vmatpush1.msra.mxu0 %v4431
    %4460 = vmatprep.subr.mxu0 0.0
    %4461 = vmatpush1.msra.mxu0 %v4432
    %4462 = vmatprep.subr.mxu0 0.0
    %4463 = vmatpush1.msra.mxu0 %v4433
    %4464 = vmatprep.subr.mxu0 0.0
    %4465 = vmatpush1.msra.mxu0 %v4434
    %4466 = vmatprep.subr.mxu0 0.0
    %4467 = vmatpush1.msra.mxu0 %v4435
    %4468 = vmatprep.subr.mxu0 0.0
    %4469 = vmatpush1.msra.mxu0 0.0
    %4470 = vmatprep.subr.mxu0 0.0
    %4471 = vmatpush1.msra.mxu0 0.0
    %4472 = vmatprep.subr.mxu0 0.0
    %4473 = vmatpush1.msra.mxu0 0.0
    %4474 = vmatprep.subr.mxu0 0.0
    %4475 = vmatpush1.msra.mxu0 0.0
    %4476 = vmatprep.subr.mxu0 0.0
    %4477 = vmatpush1.msra.mxu0 0.0
    %4478 = vmatprep.subr.mxu0 0.0
    %4479 = vmatpush1.msra.mxu0 0.0
    %4480 = vmatprep.subr.mxu0 0.0
    %4481 = vmatpush1.msra.mxu0 0.0
    %4482 = vmatprep.subr.mxu0 0.0
    %4483 = vmatpush1.msra.mxu0 0.0
    %4484 = vmatprep.subr.mxu0 0.0
    %4485 = vmatpush1.msra.mxu0 0.0
    %4486 = vmatprep.subr.mxu0 0.0
    %4487 = vmatpush1.msra.mxu0 0.0
    %4488 = vmatprep.subr.mxu0 0.0
    %4489 = vmatpush1.msra.mxu0 0.0
    %4490 = vmatprep.subr.mxu0 0.0
    %4491 = vmatpush1.msra.mxu0 0.0
    %4492 = vmatprep.subr.mxu0 0.0
    %4493 = vmatpush1.msra.mxu0 0.0
    %4494 = vmatprep.subr.mxu0 0.0
    %4495 = vmatpush1.msra.mxu0 0.0
    %4496 = vmatprep.subr.mxu0 0.0
    %4497 = vmatpush1.msra.mxu0 0.0
    %4498 = vmatprep.subr.mxu0 0.0
    %4499 = vmatpush1.msra.mxu0 0.0
    %4500 = vmatprep.mubr.f32.mxu0 0.0
    %4501 = vmatmul.mubr.f32.gmra.mrb[0].mxu0 %v4399
    %v4502 = vpop.f32.mrb[0].mxu0
    %v4503 = vadd.f32 0.0, %v4502
    %v4504 = vpop.f32.mrb[0].mxu0
    %4505 = vdwg.mxu0
    %4506 = vmatprep.subr.mxu0 0.0
    %4507 = vmatpush1.msra.mxu0 %v4403
    %4508 = vmatprep.subr.mxu0 0.0
    %4509 = vmatpush1.msra.mxu0 %v4404
    %4510 = vmatprep.subr.mxu0 0.0
    %4511 = vmatpush1.msra.mxu0 %v4405
    %4512 = vmatprep.subr.mxu0 0.0
    %4513 = vmatpush1.msra.mxu0 %v4406
    %4514 = vmatprep.subr.mxu0 0.0
    %4515 = vmatpush1.msra.mxu0 %v4407
    %4516 = vmatprep.subr.mxu0 0.0
    %4517 = vmatpush1.msra.mxu0 %v4408
    %4518 = vmatprep.subr.mxu0 0.0
    %4519 = vmatpush1.msra.mxu0 %v4409
    %4520 = vmatprep.subr.mxu0 0.0
    %4521 = vmatpush1.msra.mxu0 %v4410
    %4522 = vmatprep.subr.mxu0 0.0
    %4523 = vmatpush1.msra.mxu0 %v4411
    %4524 = vmatprep.subr.mxu0 0.0
    %4525 = vmatpush1.msra.mxu0 %v4412
    %4526 = vmatprep.subr.mxu0 0.0
    %4527 = vmatpush1.msra.mxu0 %v4413
    %4528 = vmatprep.subr.mxu0 0.0
    %4529 = vmatpush1.msra.mxu0 %v4414
    %4530 = vmatprep.subr.mxu0 0.0
    %4531 = vmatpush1.msra.mxu0 %v4415
    %4532 = vmatprep.subr.mxu0 0.0
    %4533 = vmatpush1.msra.mxu0 %v4416
    %4534 = vmatprep.subr.mxu0 0.0
    %4535 = vmatpush1.msra.mxu0 %v4417
    %4536 = vmatprep.subr.mxu0 0.0
    %4537 = vmatpush1.msra.mxu0 %v4418
    %4538 = vmatprep.subr.mxu0 0.0
    %4539 = vmatpush1.msra.mxu0 0.0
    %4540 = vmatprep.subr.mxu0 0.0
    %4541 = vmatpush1.msra.mxu0 0.0
    %4542 = vmatprep.subr.mxu0 0.0
    %4543 = vmatpush1.msra.mxu0 0.0
    %4544 = vmatprep.subr.mxu0 0.0
    %4545 = vmatpush1.msra.mxu0 0.0
    %4546 = vmatprep.subr.mxu0 0.0
    %4547 = vmatpush1.msra.mxu0 0.0
    %4548 = vmatprep.subr.mxu0 0.0
    %4549 = vmatpush1.msra.mxu0 0.0
    %4550 = vmatprep.subr.mxu0 0.0
    %4551 = vmatpush1.msra.mxu0 0.0
    %4552 = vmatprep.subr.mxu0 0.0
    %4553 = vmatpush1.msra.mxu0 0.0
    %4554 = vmatprep.subr.mxu0 0.0
    %4555 = vmatpush1.msra.mxu0 0.0
    %4556 = vmatprep.subr.mxu0 0.0
    %4557 = vmatpush1.msra.mxu0 0.0
    %4558 = vmatprep.subr.mxu0 0.0
    %4559 = vmatpush1.msra.mxu0 0.0
    %4560 = vmatprep.subr.mxu0 0.0
    %4561 = vmatpush1.msra.mxu0 0.0
    %4562 = vmatprep.subr.mxu0 0.0
    %4563 = vmatpush1.msra.mxu0 0.0
    %4564 = vmatprep.subr.mxu0 0.0
    %4565 = vmatpush1.msra.mxu0 0.0
    %4566 = vmatprep.subr.mxu0 0.0
    %4567 = vmatpush1.msra.mxu0 0.0
    %4568 = vmatprep.subr.mxu0 0.0
    %4569 = vmatpush1.msra.mxu0 0.0
    %4570 = vmatprep.mubr.f32.mxu0 0.0
    %4571 = vmatmul.mubr.f32.gmra.mrb[0].mxu0 %v4329
    %v4572 = vpop.f32.mrb[0].mxu0
    %v4573 = vadd.f32 %v4503, %v4572
    %v4574 = vpop.f32.mrb[0].mxu0
    %4575 = vdwg.mxu0
    %s4576 = scalar_lea.vmem %s6, 1
    %v4577 = vld [vmem:[%s4576] sm:$0x1]
    %v4579 = vlaneseq
    %v4580 = vshrl.u32 %v4579, 7
    %v4581 = vsub.s32 0, %v4580
    %v4582 = vrot.slane %v4577, %v4581
    %v4584 = vadd.f32 %v4573, %v4582
    %s4585 = scalar_lea.vmem %s7, 32
    %v4586 = vld [vmem:[%s4585] sm:$0xff]
    %v4587 = vld [vmem:[%s4585 + $0x8] sm:$0xff]
    %v4588 = vld [vmem:[%s4585 + $0x10] sm:$0xff]
    %v4589 = vld [vmem:[%s4585 + $0x18] sm:$0xff]
    %s4590 = scalar_lea.vmem [#allocation6], 512
    %v4591 = vld [vmem:[%s4590] sm:$0xff]
    %v4592 = vld [vmem:[%s4590 + $0x8] sm:$0xff]
    %v4593 = vld [vmem:[%s4590 + $0x10] sm:$0xff]
    %v4594 = vld [vmem:[%s4590 + $0x18] sm:$0xff]
    %v4595 = vld [vmem:[%s4590 + $0x20] sm:$0xff]
    %v4596 = vld [vmem:[%s4590 + $0x28] sm:$0xff]
    %v4597 = vld [vmem:[%s4590 + $0x30] sm:$0xff]
    %v4598 = vld [vmem:[%s4590 + $0x38] sm:$0xff]
    %v4599 = vld [vmem:[%s4590 + $0x40] sm:$0xff]
    %v4600 = vld [vmem:[%s4590 + $0x48] sm:$0xff]
    %v4601 = vld [vmem:[%s4590 + $0x50] sm:$0xff]
    %v4602 = vld [vmem:[%s4590 + $0x58] sm:$0xff]
    %v4603 = vld [vmem:[%s4590 + $0x60] sm:$0xff]
    %v4604 = vld [vmem:[%s4590 + $0x68] sm:$0xff]
    %v4605 = vld [vmem:[%s4590 + $0x70] sm:$0xff]
    %v4606 = vld [vmem:[%s4590 + $0x78] sm:$0xff]
    %v4607 = vld [vmem:[%s4590 + $0x80] sm:$0xff]
    %v4608 = vld [vmem:[%s4590 + $0x88] sm:$0xff]
    %v4609 = vld [vmem:[%s4590 + $0x90] sm:$0xff]
    %v4610 = vld [vmem:[%s4590 + $0x98] sm:$0xff]
    %v4611 = vld [vmem:[%s4590 + $0xa0] sm:$0xff]
    %v4612 = vld [vmem:[%s4590 + $0xa8] sm:$0xff]
    %v4613 = vld [vmem:[%s4590 + $0xb0] sm:$0xff]
    %v4614 = vld [vmem:[%s4590 + $0xb8] sm:$0xff]
    %v4615 = vld [vmem:[%s4590 + $0xc0] sm:$0xff]
    %v4616 = vld [vmem:[%s4590 + $0xc8] sm:$0xff]
    %v4617 = vld [vmem:[%s4590 + $0xd0] sm:$0xff]
    %v4618 = vld [vmem:[%s4590 + $0xd8] sm:$0xff]
    %v4619 = vld [vmem:[%s4590 + $0xe0] sm:$0xff]
    %v4620 = vld [vmem:[%s4590 + $0xe8] sm:$0xff]
    %v4621 = vld [vmem:[%s4590 + $0xf0] sm:$0xff]
    %v4622 = vld [vmem:[%s4590 + $0xf8] sm:$0xff]
    %v4623 = vld [vmem:[%s4590 + $0x100] sm:$0xff]
    %v4624 = vld [vmem:[%s4590 + $0x108] sm:$0xff]
    %v4625 = vld [vmem:[%s4590 + $0x110] sm:$0xff]
    %v4626 = vld [vmem:[%s4590 + $0x118] sm:$0xff]
    %v4627 = vld [vmem:[%s4590 + $0x120] sm:$0xff]
    %v4628 = vld [vmem:[%s4590 + $0x128] sm:$0xff]
    %v4629 = vld [vmem:[%s4590 + $0x130] sm:$0xff]
    %v4630 = vld [vmem:[%s4590 + $0x138] sm:$0xff]
    %v4631 = vld [vmem:[%s4590 + $0x140] sm:$0xff]
    %v4632 = vld [vmem:[%s4590 + $0x148] sm:$0xff]
    %v4633 = vld [vmem:[%s4590 + $0x150] sm:$0xff]
    %v4634 = vld [vmem:[%s4590 + $0x158] sm:$0xff]
    %v4635 = vld [vmem:[%s4590 + $0x160] sm:$0xff]
    %v4636 = vld [vmem:[%s4590 + $0x168] sm:$0xff]
    %v4637 = vld [vmem:[%s4590 + $0x170] sm:$0xff]
    %v4638 = vld [vmem:[%s4590 + $0x178] sm:$0xff]
    %v4639 = vld [vmem:[%s4590 + $0x180] sm:$0xff]
    %v4640 = vld [vmem:[%s4590 + $0x188] sm:$0xff]
    %v4641 = vld [vmem:[%s4590 + $0x190] sm:$0xff]
    %v4642 = vld [vmem:[%s4590 + $0x198] sm:$0xff]
    %v4643 = vld [vmem:[%s4590 + $0x1a0] sm:$0xff]
    %v4644 = vld [vmem:[%s4590 + $0x1a8] sm:$0xff]
    %v4645 = vld [vmem:[%s4590 + $0x1b0] sm:$0xff]
    %v4646 = vld [vmem:[%s4590 + $0x1b8] sm:$0xff]
    %v4647 = vld [vmem:[%s4590 + $0x1c0] sm:$0xff]
    %v4648 = vld [vmem:[%s4590 + $0x1c8] sm:$0xff]
    %v4649 = vld [vmem:[%s4590 + $0x1d0] sm:$0xff]
    %v4650 = vld [vmem:[%s4590 + $0x1d8] sm:$0xff]
    %v4651 = vld [vmem:[%s4590 + $0x1e0] sm:$0xff]
    %v4652 = vld [vmem:[%s4590 + $0x1e8] sm:$0xff]
    %v4653 = vld [vmem:[%s4590 + $0x1f0] sm:$0xff]
    %v4654 = vld [vmem:[%s4590 + $0x1f8] sm:$0xff]
    %4655 = vmatprep.subr.mxu0 %v4592
    %4656 = vmatpush1.msra.mxu0 %v4591
    %4657 = vmatprep.subr.mxu0 %v4596
    %4658 = vmatpush1.msra.mxu0 %v4595
    %4659 = vmatprep.subr.mxu0 %v4600
    %4660 = vmatpush1.msra.mxu0 %v4599
    %4661 = vmatprep.subr.mxu0 %v4604
    %4662 = vmatpush1.msra.mxu0 %v4603
    %4663 = vmatprep.subr.mxu0 %v4608
    %4664 = vmatpush1.msra.mxu0 %v4607
    %4665 = vmatprep.subr.mxu0 %v4612
    %4666 = vmatpush1.msra.mxu0 %v4611
    %4667 = vmatprep.subr.mxu0 %v4616
    %4668 = vmatpush1.msra.mxu0 %v4615
    %4669 = vmatprep.subr.mxu0 %v4620
    %4670 = vmatpush1.msra.mxu0 %v4619
    %4671 = vmatprep.subr.mxu0 %v4624
    %4672 = vmatpush1.msra.mxu0 %v4623
    %4673 = vmatprep.subr.mxu0 %v4628
    %4674 = vmatpush1.msra.mxu0 %v4627
    %4675 = vmatprep.subr.mxu0 %v4632
    %4676 = vmatpush1.msra.mxu0 %v4631
    %4677 = vmatprep.subr.mxu0 %v4636
    %4678 = vmatpush1.msra.mxu0 %v4635
    %4679 = vmatprep.subr.mxu0 %v4640
    %4680 = vmatpush1.msra.mxu0 %v4639
    %4681 = vmatprep.subr.mxu0 %v4644
    %4682 = vmatpush1.msra.mxu0 %v4643
    %4683 = vmatprep.subr.mxu0 %v4648
    %4684 = vmatpush1.msra.mxu0 %v4647
    %4685 = vmatprep.subr.mxu0 %v4652
    %4686 = vmatpush1.msra.mxu0 %v4651
    %4687 = vmatprep.subr.mxu0 0.0
    %4688 = vmatpush1.msra.mxu0 0.0
    %4689 = vmatprep.subr.mxu0 0.0
    %4690 = vmatpush1.msra.mxu0 0.0
    %4691 = vmatprep.subr.mxu0 0.0
    %4692 = vmatpush1.msra.mxu0 0.0
    %4693 = vmatprep.subr.mxu0 0.0
    %4694 = vmatpush1.msra.mxu0 0.0
    %4695 = vmatprep.subr.mxu0 0.0
    %4696 = vmatpush1.msra.mxu0 0.0
    %4697 = vmatprep.subr.mxu0 0.0
    %4698 = vmatpush1.msra.mxu0 0.0
    %4699 = vmatprep.subr.mxu0 0.0
    %4700 = vmatpush1.msra.mxu0 0.0
    %4701 = vmatprep.subr.mxu0 0.0
    %4702 = vmatpush1.msra.mxu0 0.0
    %4703 = vmatprep.subr.mxu0 0.0
    %4704 = vmatpush1.msra.mxu0 0.0
    %4705 = vmatprep.subr.mxu0 0.0
    %4706 = vmatpush1.msra.mxu0 0.0
    %4707 = vmatprep.subr.mxu0 0.0
    %4708 = vmatpush1.msra.mxu0 0.0
    %4709 = vmatprep.subr.mxu0 0.0
    %4710 = vmatpush1.msra.mxu0 0.0
    %4711 = vmatprep.subr.mxu0 0.0
    %4712 = vmatpush1.msra.mxu0 0.0
    %4713 = vmatprep.subr.mxu0 0.0
    %4714 = vmatpush1.msra.mxu0 0.0
    %4715 = vmatprep.subr.mxu0 0.0
    %4716 = vmatpush1.msra.mxu0 0.0
    %4717 = vmatprep.subr.mxu0 0.0
    %4718 = vmatpush1.msra.mxu0 0.0
    %4719 = vmatprep.mubr.f32.mxu0 0.0
    %4720 = vmatmul.mubr.f32.gmra.mrb[0].mxu0 %v4584
    %v4721 = vpop.f32.mrb[0].mxu0
    %v4722 = vadd.f32 0.0, %v4721
    %v4723 = vpop.f32.mrb[0].mxu0
    %v4724 = vadd.f32 0.0, %v4723
    %4725 = vdwg.mxu0
    %4726 = vmatprep.subr.mxu0 %v4594
    %4727 = vmatpush1.msra.mxu0 %v4593
    %4728 = vmatprep.subr.mxu0 %v4598
    %4729 = vmatpush1.msra.mxu0 %v4597
    %4730 = vmatprep.subr.mxu0 %v4602
    %4731 = vmatpush1.msra.mxu0 %v4601
    %4732 = vmatprep.subr.mxu0 %v4606
    %4733 = vmatpush1.msra.mxu0 %v4605
    %4734 = vmatprep.subr.mxu0 %v4610
    %4735 = vmatpush1.msra.mxu0 %v4609
    %4736 = vmatprep.subr.mxu0 %v4614
    %4737 = vmatpush1.msra.mxu0 %v4613
    %4738 = vmatprep.subr.mxu0 %v4618
    %4739 = vmatpush1.msra.mxu0 %v4617
    %4740 = vmatprep.subr.mxu0 %v4622
    %4741 = vmatpush1.msra.mxu0 %v4621
    %4742 = vmatprep.subr.mxu0 %v4626
    %4743 = vmatpush1.msra.mxu0 %v4625
    %4744 = vmatprep.subr.mxu0 %v4630
    %4745 = vmatpush1.msra.mxu0 %v4629
    %4746 = vmatprep.subr.mxu0 %v4634
    %4747 = vmatpush1.msra.mxu0 %v4633
    %4748 = vmatprep.subr.mxu0 %v4638
    %4749 = vmatpush1.msra.mxu0 %v4637
    %4750 = vmatprep.subr.mxu0 %v4642
    %4751 = vmatpush1.msra.mxu0 %v4641
    %4752 = vmatprep.subr.mxu0 %v4646
    %4753 = vmatpush1.msra.mxu0 %v4645
    %4754 = vmatprep.subr.mxu0 %v4650
    %4755 = vmatpush1.msra.mxu0 %v4649
    %4756 = vmatprep.subr.mxu0 %v4654
    %4757 = vmatpush1.msra.mxu0 %v4653
    %4758 = vmatprep.subr.mxu0 0.0
    %4759 = vmatpush1.msra.mxu0 0.0
    %4760 = vmatprep.subr.mxu0 0.0
    %4761 = vmatpush1.msra.mxu0 0.0
    %4762 = vmatprep.subr.mxu0 0.0
    %4763 = vmatpush1.msra.mxu0 0.0
    %4764 = vmatprep.subr.mxu0 0.0
    %4765 = vmatpush1.msra.mxu0 0.0
    %4766 = vmatprep.subr.mxu0 0.0
    %4767 = vmatpush1.msra.mxu0 0.0
    %4768 = vmatprep.subr.mxu0 0.0
    %4769 = vmatpush1.msra.mxu0 0.0
    %4770 = vmatprep.subr.mxu0 0.0
    %4771 = vmatpush1.msra.mxu0 0.0
    %4772 = vmatprep.subr.mxu0 0.0
    %4773 = vmatpush1.msra.mxu0 0.0
    %4774 = vmatprep.subr.mxu0 0.0
    %4775 = vmatpush1.msra.mxu0 0.0
    %4776 = vmatprep.subr.mxu0 0.0
    %4777 = vmatpush1.msra.mxu0 0.0
    %4778 = vmatprep.subr.mxu0 0.0
    %4779 = vmatpush1.msra.mxu0 0.0
    %4780 = vmatprep.subr.mxu0 0.0
    %4781 = vmatpush1.msra.mxu0 0.0
    %4782 = vmatprep.subr.mxu0 0.0
    %4783 = vmatpush1.msra.mxu0 0.0
    %4784 = vmatprep.subr.mxu0 0.0
    %4785 = vmatpush1.msra.mxu0 0.0
    %4786 = vmatprep.subr.mxu0 0.0
    %4787 = vmatpush1.msra.mxu0 0.0
    %4788 = vmatprep.subr.mxu0 0.0
    %4789 = vmatpush1.msra.mxu0 0.0
    %4790 = vmatprep.mubr.f32.mxu0 0.0
    %4791 = vmatmul.mubr.f32.gmra.mrb[0].mxu0 %v4584
    %v4792 = vpop.f32.mrb[0].mxu0
    %v4793 = vadd.f32 0.0, %v4792
    %v4794 = vpop.f32.mrb[0].mxu0
    %v4795 = vadd.f32 0.0, %v4794
    %4796 = vdwg.mxu0
    %4797 = vmatprep.subr.mxu0 %v4587
    %4798 = vmatpush1.msra.mxu0 %v4586
    %4799 = vmatprep.subr.mxu0 0.0
    %4800 = vmatpush1.msra.mxu0 0.0
    %4801 = vmatprep.subr.mxu0 0.0
    %4802 = vmatpush1.msra.mxu0 0.0
    %4803 = vmatprep.subr.mxu0 0.0
    %4804 = vmatpush1.msra.mxu0 0.0
    %4805 = vmatprep.subr.mxu0 0.0
    %4806 = vmatpush1.msra.mxu0 0.0
    %4807 = vmatprep.subr.mxu0 0.0
    %4808 = vmatpush1.msra.mxu0 0.0
    %4809 = vmatprep.subr.mxu0 0.0
    %4810 = vmatpush1.msra.mxu0 0.0
    %4811 = vmatprep.subr.mxu0 0.0
    %4812 = vmatpush1.msra.mxu0 0.0
    %4813 = vmatprep.subr.mxu0 0.0
    %4814 = vmatpush1.msra.mxu0 0.0
    %4815 = vmatprep.subr.mxu0 0.0
    %4816 = vmatpush1.msra.mxu0 0.0
    %4817 = vmatprep.subr.mxu0 0.0
    %4818 = vmatpush1.msra.mxu0 0.0
    %4819 = vmatprep.subr.mxu0 0.0
    %4820 = vmatpush1.msra.mxu0 0.0
    %4821 = vmatprep.subr.mxu0 0.0
    %4822 = vmatpush1.msra.mxu0 0.0
    %4823 = vmatprep.subr.mxu0 0.0
    %4824 = vmatpush1.msra.mxu0 0.0
    %4825 = vmatprep.subr.mxu0 0.0
    %4826 = vmatpush1.msra.mxu0 0.0
    %4827 = vmatprep.subr.mxu0 0.0
    %4828 = vmatpush1.msra.mxu0 0.0
    %4829 = vmatprep.subr.mxu0 0.0
    %4830 = vmatpush1.msra.mxu0 0.0
    %4831 = vmatprep.subr.mxu0 0.0
    %4832 = vmatpush1.msra.mxu0 0.0
    %4833 = vmatprep.subr.mxu0 0.0
    %4834 = vmatpush1.msra.mxu0 0.0
    %4835 = vmatprep.subr.mxu0 0.0
    %4836 = vmatpush1.msra.mxu0 0.0
    %4837 = vmatprep.subr.mxu0 0.0
    %4838 = vmatpush1.msra.mxu0 0.0
    %4839 = vmatprep.subr.mxu0 0.0
    %4840 = vmatpush1.msra.mxu0 0.0
    %4841 = vmatprep.subr.mxu0 0.0
    %4842 = vmatpush1.msra.mxu0 0.0
    %4843 = vmatprep.subr.mxu0 0.0
    %4844 = vmatpush1.msra.mxu0 0.0
    %4845 = vmatprep.subr.mxu0 0.0
    %4846 = vmatpush1.msra.mxu0 0.0
    %4847 = vmatprep.subr.mxu0 0.0
    %4848 = vmatpush1.msra.mxu0 0.0
    %4849 = vmatprep.subr.mxu0 0.0
    %4850 = vmatpush1.msra.mxu0 0.0
    %4851 = vmatprep.subr.mxu0 0.0
    %4852 = vmatpush1.msra.mxu0 0.0
    %4853 = vmatprep.subr.mxu0 0.0
    %4854 = vmatpush1.msra.mxu0 0.0
    %4855 = vmatprep.subr.mxu0 0.0
    %4856 = vmatpush1.msra.mxu0 0.0
    %4857 = vmatprep.subr.mxu0 0.0
    %4858 = vmatpush1.msra.mxu0 0.0
    %4859 = vmatprep.subr.mxu0 0.0
    %4860 = vmatpush1.msra.mxu0 0.0
    %4861 = vmatprep.mubr.f32.mxu0 0.0
    %4862 = vmatmul.mubr.f32.gmra.mrb[0].mxu0 %v126
    %v4863 = vpop.f32.mrb[0].mxu0
    %v4864 = vadd.f32 %v4722, %v4863
    %v4865 = vpop.f32.mrb[0].mxu0
    %v4866 = vadd.f32 %v4724, %v4865
    %4867 = vdwg.mxu0
    %4868 = vmatprep.subr.mxu0 %v4589
    %4869 = vmatpush1.msra.mxu0 %v4588
    %4870 = vmatprep.subr.mxu0 0.0
    %4871 = vmatpush1.msra.mxu0 0.0
    %4872 = vmatprep.subr.mxu0 0.0
    %4873 = vmatpush1.msra.mxu0 0.0
    %4874 = vmatprep.subr.mxu0 0.0
    %4875 = vmatpush1.msra.mxu0 0.0
    %4876 = vmatprep.subr.mxu0 0.0
    %4877 = vmatpush1.msra.mxu0 0.0
    %4878 = vmatprep.subr.mxu0 0.0
    %4879 = vmatpush1.msra.mxu0 0.0
    %4880 = vmatprep.subr.mxu0 0.0
    %4881 = vmatpush1.msra.mxu0 0.0
    %4882 = vmatprep.subr.mxu0 0.0
    %4883 = vmatpush1.msra.mxu0 0.0
    %4884 = vmatprep.subr.mxu0 0.0
    %4885 = vmatpush1.msra.mxu0 0.0
    %4886 = vmatprep.subr.mxu0 0.0
    %4887 = vmatpush1.msra.mxu0 0.0
    %4888 = vmatprep.subr.mxu0 0.0
    %4889 = vmatpush1.msra.mxu0 0.0
    %4890 = vmatprep.subr.mxu0 0.0
    %4891 = vmatpush1.msra.mxu0 0.0
    %4892 = vmatprep.subr.mxu0 0.0
    %4893 = vmatpush1.msra.mxu0 0.0
    %4894 = vmatprep.subr.mxu0 0.0
    %4895 = vmatpush1.msra.mxu0 0.0
    %4896 = vmatprep.subr.mxu0 0.0
    %4897 = vmatpush1.msra.mxu0 0.0
    %4898 = vmatprep.subr.mxu0 0.0
    %4899 = vmatpush1.msra.mxu0 0.0
    %4900 = vmatprep.subr.mxu0 0.0
    %4901 = vmatpush1.msra.mxu0 0.0
    %4902 = vmatprep.subr.mxu0 0.0
    %4903 = vmatpush1.msra.mxu0 0.0
    %4904 = vmatprep.subr.mxu0 0.0
    %4905 = vmatpush1.msra.mxu0 0.0
    %4906 = vmatprep.subr.mxu0 0.0
    %4907 = vmatpush1.msra.mxu0 0.0
    %4908 = vmatprep.subr.mxu0 0.0
    %4909 = vmatpush1.msra.mxu0 0.0
    %4910 = vmatprep.subr.mxu0 0.0
    %4911 = vmatpush1.msra.mxu0 0.0
    %4912 = vmatprep.subr.mxu0 0.0
    %4913 = vmatpush1.msra.mxu0 0.0
    %4914 = vmatprep.subr.mxu0 0.0
    %4915 = vmatpush1.msra.mxu0 0.0
    %4916 = vmatprep.subr.mxu0 0.0
    %4917 = vmatpush1.msra.mxu0 0.0
    %4918 = vmatprep.subr.mxu0 0.0
    %4919 = vmatpush1.msra.mxu0 0.0
    %4920 = vmatprep.subr.mxu0 0.0
    %4921 = vmatpush1.msra.mxu0 0.0
    %4922 = vmatprep.subr.mxu0 0.0
    %4923 = vmatpush1.msra.mxu0 0.0
    %4924 = vmatprep.subr.mxu0 0.0
    %4925 = vmatpush1.msra.mxu0 0.0
    %4926 = vmatprep.subr.mxu0 0.0
    %4927 = vmatpush1.msra.mxu0 0.0
    %4928 = vmatprep.subr.mxu0 0.0
    %4929 = vmatpush1.msra.mxu0 0.0
    %4930 = vmatprep.subr.mxu0 0.0
    %4931 = vmatpush1.msra.mxu0 0.0
    %4932 = vmatprep.mubr.f32.mxu0 0.0
    %4933 = vmatmul.mubr.f32.gmra.mrb[0].mxu0 %v126
    %v4934 = vpop.f32.mrb[0].mxu0
    %v4935 = vadd.f32 %v4793, %v4934
    %v4936 = vpop.f32.mrb[0].mxu0
    %v4937 = vadd.f32 %v4795, %v4936
    %4938 = vdwg.mxu0
    %s4939 = scalar_lea.vmem %s11, 8
    %v4940 = vld [vmem:[%s4939] sm:$0xf]
    %v4942 = vlaneseq
    %v4943 = vshrl.u32 %v4942, 7
    %v4944 = vsub.s32 0, %v4943
    %v4945 = vrot.slane %v4940, %v4944
    %v4946 = vlaneseq
    %v4947 = vshrl.u32 %v4946, 7
    %v4948 = vsub.s32 1, %v4947
    %v4949 = vrot.slane %v4940, %v4948
    %v4950 = vlaneseq
    %v4951 = vshrl.u32 %v4950, 7
    %v4952 = vsub.s32 2, %v4951
    %v4953 = vrot.slane %v4940, %v4952
    %v4954 = vlaneseq
    %v4955 = vshrl.u32 %v4954, 7
    %v4956 = vsub.s32 3, %v4955
    %v4957 = vrot.slane %v4940, %v4956
    %v4962 = vadd.f32 %v4864, %v4945
    %v4963 = vadd.f32 %v4866, %v4949
    %v4964 = vadd.f32 %v4935, %v4953
    %v4965 = vadd.f32 %v4937, %v4957
    %s4966 = scalar_lea.vmem [#allocation9], 1024
    %v4967 = vld [vmem:[%s4966] sm:$0xff]
    %v4968 = vld [vmem:[%s4966 + $0x8] sm:$0xff]
    %v4969 = vld [vmem:[%s4966 + $0x10] sm:$0xff]
    %v4970 = vld [vmem:[%s4966 + $0x18] sm:$0xff]
    %v4971 = vld [vmem:[%s4966 + $0x20] sm:$0xff]
    %v4972 = vld [vmem:[%s4966 + $0x28] sm:$0xff]
    %v4973 = vld [vmem:[%s4966 + $0x30] sm:$0xff]
    %v4974 = vld [vmem:[%s4966 + $0x38] sm:$0xff]
    %v4975 = vld [vmem:[%s4966 + $0x40] sm:$0xff]
    %v4976 = vld [vmem:[%s4966 + $0x48] sm:$0xff]
    %v4977 = vld [vmem:[%s4966 + $0x50] sm:$0xff]
    %v4978 = vld [vmem:[%s4966 + $0x58] sm:$0xff]
    %v4979 = vld [vmem:[%s4966 + $0x60] sm:$0xff]
    %v4980 = vld [vmem:[%s4966 + $0x68] sm:$0xff]
    %v4981 = vld [vmem:[%s4966 + $0x70] sm:$0xff]
    %v4982 = vld [vmem:[%s4966 + $0x78] sm:$0xff]
    %v4983 = vld [vmem:[%s4966 + $0x80] sm:$0xff]
    %v4984 = vld [vmem:[%s4966 + $0x88] sm:$0xff]
    %v4985 = vld [vmem:[%s4966 + $0x90] sm:$0xff]
    %v4986 = vld [vmem:[%s4966 + $0x98] sm:$0xff]
    %v4987 = vld [vmem:[%s4966 + $0xa0] sm:$0xff]
    %v4988 = vld [vmem:[%s4966 + $0xa8] sm:$0xff]
    %v4989 = vld [vmem:[%s4966 + $0xb0] sm:$0xff]
    %v4990 = vld [vmem:[%s4966 + $0xb8] sm:$0xff]
    %v4991 = vld [vmem:[%s4966 + $0xc0] sm:$0xff]
    %v4992 = vld [vmem:[%s4966 + $0xc8] sm:$0xff]
    %v4993 = vld [vmem:[%s4966 + $0xd0] sm:$0xff]
    %v4994 = vld [vmem:[%s4966 + $0xd8] sm:$0xff]
    %v4995 = vld [vmem:[%s4966 + $0xe0] sm:$0xff]
    %v4996 = vld [vmem:[%s4966 + $0xe8] sm:$0xff]
    %v4997 = vld [vmem:[%s4966 + $0xf0] sm:$0xff]
    %v4998 = vld [vmem:[%s4966 + $0xf8] sm:$0xff]
    %v4999 = vld [vmem:[%s4966 + $0x100] sm:$0xff]
    %v5000 = vld [vmem:[%s4966 + $0x108] sm:$0xff]
    %v5001 = vld [vmem:[%s4966 + $0x110] sm:$0xff]
    %v5002 = vld [vmem:[%s4966 + $0x118] sm:$0xff]
    %v5003 = vld [vmem:[%s4966 + $0x120] sm:$0xff]
    %v5004 = vld [vmem:[%s4966 + $0x128] sm:$0xff]
    %v5005 = vld [vmem:[%s4966 + $0x130] sm:$0xff]
    %v5006 = vld [vmem:[%s4966 + $0x138] sm:$0xff]
    %v5007 = vld [vmem:[%s4966 + $0x140] sm:$0xff]
    %v5008 = vld [vmem:[%s4966 + $0x148] sm:$0xff]
    %v5009 = vld [vmem:[%s4966 + $0x150] sm:$0xff]
    %v5010 = vld [vmem:[%s4966 + $0x158] sm:$0xff]
    %v5011 = vld [vmem:[%s4966 + $0x160] sm:$0xff]
    %v5012 = vld [vmem:[%s4966 + $0x168] sm:$0xff]
    %v5013 = vld [vmem:[%s4966 + $0x170] sm:$0xff]
    %v5014 = vld [vmem:[%s4966 + $0x178] sm:$0xff]
    %v5015 = vld [vmem:[%s4966 + $0x180] sm:$0xff]
    %v5016 = vld [vmem:[%s4966 + $0x188] sm:$0xff]
    %v5017 = vld [vmem:[%s4966 + $0x190] sm:$0xff]
    %v5018 = vld [vmem:[%s4966 + $0x198] sm:$0xff]
    %v5019 = vld [vmem:[%s4966 + $0x1a0] sm:$0xff]
    %v5020 = vld [vmem:[%s4966 + $0x1a8] sm:$0xff]
    %v5021 = vld [vmem:[%s4966 + $0x1b0] sm:$0xff]
    %v5022 = vld [vmem:[%s4966 + $0x1b8] sm:$0xff]
    %v5023 = vld [vmem:[%s4966 + $0x1c0] sm:$0xff]
    %v5024 = vld [vmem:[%s4966 + $0x1c8] sm:$0xff]
    %v5025 = vld [vmem:[%s4966 + $0x1d0] sm:$0xff]
    %v5026 = vld [vmem:[%s4966 + $0x1d8] sm:$0xff]
    %v5027 = vld [vmem:[%s4966 + $0x1e0] sm:$0xff]
    %v5028 = vld [vmem:[%s4966 + $0x1e8] sm:$0xff]
    %v5029 = vld [vmem:[%s4966 + $0x1f0] sm:$0xff]
    %v5030 = vld [vmem:[%s4966 + $0x1f8] sm:$0xff]
    %5031 = vmatprep.subr.mxu0 %v4968
    %5032 = vmatpush1.msra.mxu0 %v4967
    %5033 = vmatprep.subr.mxu0 %v4972
    %5034 = vmatpush1.msra.mxu0 %v4971
    %5035 = vmatprep.subr.mxu0 %v4976
    %5036 = vmatpush1.msra.mxu0 %v4975
    %5037 = vmatprep.subr.mxu0 %v4980
    %5038 = vmatpush1.msra.mxu0 %v4979
    %5039 = vmatprep.subr.mxu0 %v4984
    %5040 = vmatpush1.msra.mxu0 %v4983
    %5041 = vmatprep.subr.mxu0 %v4988
    %5042 = vmatpush1.msra.mxu0 %v4987
    %5043 = vmatprep.subr.mxu0 %v4992
    %5044 = vmatpush1.msra.mxu0 %v4991
    %5045 = vmatprep.subr.mxu0 %v4996
    %5046 = vmatpush1.msra.mxu0 %v4995
    %5047 = vmatprep.subr.mxu0 %v5000
    %5048 = vmatpush1.msra.mxu0 %v4999
    %5049 = vmatprep.subr.mxu0 %v5004
    %5050 = vmatpush1.msra.mxu0 %v5003
    %5051 = vmatprep.subr.mxu0 %v5008
    %5052 = vmatpush1.msra.mxu0 %v5007
    %5053 = vmatprep.subr.mxu0 %v5012
    %5054 = vmatpush1.msra.mxu0 %v5011
    %5055 = vmatprep.subr.mxu0 %v5016
    %5056 = vmatpush1.msra.mxu0 %v5015
    %5057 = vmatprep.subr.mxu0 %v5020
    %5058 = vmatpush1.msra.mxu0 %v5019
    %5059 = vmatprep.subr.mxu0 %v5024
    %5060 = vmatpush1.msra.mxu0 %v5023
    %5061 = vmatprep.subr.mxu0 %v5028
    %5062 = vmatpush1.msra.mxu0 %v5027
    %5063 = vmatprep.subr.mxu0 0.0
    %5064 = vmatpush1.msra.mxu0 0.0
    %5065 = vmatprep.subr.mxu0 0.0
    %5066 = vmatpush1.msra.mxu0 0.0
    %5067 = vmatprep.subr.mxu0 0.0
    %5068 = vmatpush1.msra.mxu0 0.0
    %5069 = vmatprep.subr.mxu0 0.0
    %5070 = vmatpush1.msra.mxu0 0.0
    %5071 = vmatprep.subr.mxu0 0.0
    %5072 = vmatpush1.msra.mxu0 0.0
    %5073 = vmatprep.subr.mxu0 0.0
    %5074 = vmatpush1.msra.mxu0 0.0
    %5075 = vmatprep.subr.mxu0 0.0
    %5076 = vmatpush1.msra.mxu0 0.0
    %5077 = vmatprep.subr.mxu0 0.0
    %5078 = vmatpush1.msra.mxu0 0.0
    %5079 = vmatprep.subr.mxu0 0.0
    %5080 = vmatpush1.msra.mxu0 0.0
    %5081 = vmatprep.subr.mxu0 0.0
    %5082 = vmatpush1.msra.mxu0 0.0
    %5083 = vmatprep.subr.mxu0 0.0
    %5084 = vmatpush1.msra.mxu0 0.0
    %5085 = vmatprep.subr.mxu0 0.0
    %5086 = vmatpush1.msra.mxu0 0.0
    %5087 = vmatprep.subr.mxu0 0.0
    %5088 = vmatpush1.msra.mxu0 0.0
    %5089 = vmatprep.subr.mxu0 0.0
    %5090 = vmatpush1.msra.mxu0 0.0
    %5091 = vmatprep.subr.mxu0 0.0
    %5092 = vmatpush1.msra.mxu0 0.0
    %5093 = vmatprep.subr.mxu0 0.0
    %5094 = vmatpush1.msra.mxu0 0.0
    %5095 = vmatprep.mubr.f32.mxu0 0.0
    %5096 = vmatmul.mubr.f32.gmra.mrb[0].mxu0 0.0
    %v5097 = vpop.f32.mrb[0].mxu0
    %v5098 = vadd.f32 0.0, %v5097
    %v5099 = vpop.f32.mrb[0].mxu0
    %v5100 = vadd.f32 0.0, %v5099
    %5101 = vdwg.mxu0
    %5102 = vmatprep.subr.mxu0 %v4970
    %5103 = vmatpush1.msra.mxu0 %v4969
    %5104 = vmatprep.subr.mxu0 %v4974
    %5105 = vmatpush1.msra.mxu0 %v4973
    %5106 = vmatprep.subr.mxu0 %v4978
    %5107 = vmatpush1.msra.mxu0 %v4977
    %5108 = vmatprep.subr.mxu0 %v4982
    %5109 = vmatpush1.msra.mxu0 %v4981
    %5110 = vmatprep.subr.mxu0 %v4986
    %5111 = vmatpush1.msra.mxu0 %v4985
    %5112 = vmatprep.subr.mxu0 %v4990
    %5113 = vmatpush1.msra.mxu0 %v4989
    %5114 = vmatprep.subr.mxu0 %v4994
    %5115 = vmatpush1.msra.mxu0 %v4993
    %5116 = vmatprep.subr.mxu0 %v4998
    %5117 = vmatpush1.msra.mxu0 %v4997
    %5118 = vmatprep.subr.mxu0 %v5002
    %5119 = vmatpush1.msra.mxu0 %v5001
    %5120 = vmatprep.subr.mxu0 %v5006
    %5121 = vmatpush1.msra.mxu0 %v5005
    %5122 = vmatprep.subr.mxu0 %v5010
    %5123 = vmatpush1.msra.mxu0 %v5009
    %5124 = vmatprep.subr.mxu0 %v5014
    %5125 = vmatpush1.msra.mxu0 %v5013
    %5126 = vmatprep.subr.mxu0 %v5018
    %5127 = vmatpush1.msra.mxu0 %v5017
    %5128 = vmatprep.subr.mxu0 %v5022
    %5129 = vmatpush1.msra.mxu0 %v5021
    %5130 = vmatprep.subr.mxu0 %v5026
    %5131 = vmatpush1.msra.mxu0 %v5025
    %5132 = vmatprep.subr.mxu0 %v5030
    %5133 = vmatpush1.msra.mxu0 %v5029
    %5134 = vmatprep.subr.mxu0 0.0
    %5135 = vmatpush1.msra.mxu0 0.0
    %5136 = vmatprep.subr.mxu0 0.0
    %5137 = vmatpush1.msra.mxu0 0.0
    %5138 = vmatprep.subr.mxu0 0.0
    %5139 = vmatpush1.msra.mxu0 0.0
    %5140 = vmatprep.subr.mxu0 0.0
    %5141 = vmatpush1.msra.mxu0 0.0
    %5142 = vmatprep.subr.mxu0 0.0
    %5143 = vmatpush1.msra.mxu0 0.0
    %5144 = vmatprep.subr.mxu0 0.0
    %5145 = vmatpush1.msra.mxu0 0.0
    %5146 = vmatprep.subr.mxu0 0.0
    %5147 = vmatpush1.msra.mxu0 0.0
    %5148 = vmatprep.subr.mxu0 0.0
    %5149 = vmatpush1.msra.mxu0 0.0
    %5150 = vmatprep.subr.mxu0 0.0
    %5151 = vmatpush1.msra.mxu0 0.0
    %5152 = vmatprep.subr.mxu0 0.0
    %5153 = vmatpush1.msra.mxu0 0.0
    %5154 = vmatprep.subr.mxu0 0.0
    %5155 = vmatpush1.msra.mxu0 0.0
    %5156 = vmatprep.subr.mxu0 0.0
    %5157 = vmatpush1.msra.mxu0 0.0
    %5158 = vmatprep.subr.mxu0 0.0
    %5159 = vmatpush1.msra.mxu0 0.0
    %5160 = vmatprep.subr.mxu0 0.0
    %5161 = vmatpush1.msra.mxu0 0.0
    %5162 = vmatprep.subr.mxu0 0.0
    %5163 = vmatpush1.msra.mxu0 0.0
    %5164 = vmatprep.subr.mxu0 0.0
    %5165 = vmatpush1.msra.mxu0 0.0
    %5166 = vmatprep.mubr.f32.mxu0 0.0
    %5167 = vmatmul.mubr.f32.gmra.mrb[0].mxu0 0.0
    %v5168 = vpop.f32.mrb[0].mxu0
    %v5169 = vadd.f32 0.0, %v5168
    %v5170 = vpop.f32.mrb[0].mxu0
    %v5171 = vadd.f32 0.0, %v5170
    %5172 = vdwg.mxu0
    %v5173 = vadd.f32 %v4962, %v5098
    %v5174 = vadd.f32 %v4963, %v5100
    %v5175 = vadd.f32 %v4964, %v5169
    %v5176 = vadd.f32 %v4965, %v5171
    %v5177 = vxor.u32 %v5173, 2147483648
    %v5178 = vmul.f32 %v5177, 1.442695
    %v5179 = vpow.pop %v5178
    %v5180 = vadd.f32 %v5179, 1.0
    %v5181 = vrcp.pop %v5180
    %v5182 = vmul.f32 1.0, %v5181
    %v5183 = vxor.u32 %v5174, 2147483648
    %v5184 = vmul.f32 %v5183, 1.442695
    %v5185 = vpow.pop %v5184
    %v5186 = vadd.f32 %v5185, 1.0
    %v5187 = vrcp.pop %v5186
    %v5188 = vmul.f32 1.0, %v5187
    %v5189 = vtanh.pop %v5175
    %v5190 = vxor.u32 %v5176, 2147483648
    %v5191 = vmul.f32 %v5190, 1.442695
    %v5192 = vpow.pop %v5191
    %v5193 = vadd.f32 %v5192, 1.0
    %v5194 = vrcp.pop %v5193
    %v5195 = vmul.f32 1.0, %v5194
    %v5196 = vmul.f32 %v5188, 0.0
    %v5197 = vmul.f32 %v5182, %v5189
    %v5198 = vadd.f32 %v5196, %v5197
    %v5199 = vtanh.pop %v5198
    %v5200 = vmul.f32 %v5195, %v5199
    %5201 = vmatprep.subr.mxu0 %v4968
    %5202 = vmatpush1.msra.mxu0 %v4967
    %5203 = vmatprep.subr.mxu0 %v4972
    %5204 = vmatpush1.msra.mxu0 %v4971
    %5205 = vmatprep.subr.mxu0 %v4976
    %5206 = vmatpush1.msra.mxu0 %v4975
    %5207 = vmatprep.subr.mxu0 %v4980
    %5208 = vmatpush1.msra.mxu0 %v4979
    %5209 = vmatprep.subr.mxu0 %v4984
    %5210 = vmatpush1.msra.mxu0 %v4983
    %5211 = vmatprep.subr.mxu0 %v4988
    %5212 = vmatpush1.msra.mxu0 %v4987
    %5213 = vmatprep.subr.mxu0 %v4992
    %5214 = vmatpush1.msra.mxu0 %v4991
    %5215 = vmatprep.subr.mxu0 %v4996
    %5216 = vmatpush1.msra.mxu0 %v4995
    %5217 = vmatprep.subr.mxu0 %v5000
    %5218 = vmatpush1.msra.mxu0 %v4999
    %5219 = vmatprep.subr.mxu0 %v5004
    %5220 = vmatpush1.msra.mxu0 %v5003
    %5221 = vmatprep.subr.mxu0 %v5008
    %5222 = vmatpush1.msra.mxu0 %v5007
    %5223 = vmatprep.subr.mxu0 %v5012
    %5224 = vmatpush1.msra.mxu0 %v5011
    %5225 = vmatprep.subr.mxu0 %v5016
    %5226 = vmatpush1.msra.mxu0 %v5015
    %5227 = vmatprep.subr.mxu0 %v5020
    %5228 = vmatpush1.msra.mxu0 %v5019
    %5229 = vmatprep.subr.mxu0 %v5024
    %5230 = vmatpush1.msra.mxu0 %v5023
    %5231 = vmatprep.subr.mxu0 %v5028
    %5232 = vmatpush1.msra.mxu0 %v5027
    %5233 = vmatprep.subr.mxu0 0.0
    %5234 = vmatpush1.msra.mxu0 0.0
    %5235 = vmatprep.subr.mxu0 0.0
    %5236 = vmatpush1.msra.mxu0 0.0
    %5237 = vmatprep.subr.mxu0 0.0
    %5238 = vmatpush1.msra.mxu0 0.0
    %5239 = vmatprep.subr.mxu0 0.0
    %5240 = vmatpush1.msra.mxu0 0.0
    %5241 = vmatprep.subr.mxu0 0.0
    %5242 = vmatpush1.msra.mxu0 0.0
    %5243 = vmatprep.subr.mxu0 0.0
    %5244 = vmatpush1.msra.mxu0 0.0
    %5245 = vmatprep.subr.mxu0 0.0
    %5246 = vmatpush1.msra.mxu0 0.0
    %5247 = vmatprep.subr.mxu0 0.0
    %5248 = vmatpush1.msra.mxu0 0.0
    %5249 = vmatprep.subr.mxu0 0.0
    %5250 = vmatpush1.msra.mxu0 0.0
    %5251 = vmatprep.subr.mxu0 0.0
    %5252 = vmatpush1.msra.mxu0 0.0
    %5253 = vmatprep.subr.mxu0 0.0
    %5254 = vmatpush1.msra.mxu0 0.0
    %5255 = vmatprep.subr.mxu0 0.0
    %5256 = vmatpush1.msra.mxu0 0.0
    %5257 = vmatprep.subr.mxu0 0.0
    %5258 = vmatpush1.msra.mxu0 0.0
    %5259 = vmatprep.subr.mxu0 0.0
    %5260 = vmatpush1.msra.mxu0 0.0
    %5261 = vmatprep.subr.mxu0 0.0
    %5262 = vmatpush1.msra.mxu0 0.0
    %5263 = vmatprep.subr.mxu0 0.0
    %5264 = vmatpush1.msra.mxu0 0.0
    %5265 = vmatprep.mubr.f32.mxu0 0.0
    %5266 = vmatmul.mubr.f32.gmra.mrb[0].mxu0 %v5200
    %v5267 = vpop.f32.mrb[0].mxu0
    %v5268 = vadd.f32 0.0, %v5267
    %v5269 = vpop.f32.mrb[0].mxu0
    %v5270 = vadd.f32 0.0, %v5269
    %5271 = vdwg.mxu0
    %5272 = vmatprep.subr.mxu0 %v4970
    %5273 = vmatpush1.msra.mxu0 %v4969
    %5274 = vmatprep.subr.mxu0 %v4974
    %5275 = vmatpush1.msra.mxu0 %v4973
    %5276 = vmatprep.subr.mxu0 %v4978
    %5277 = vmatpush1.msra.mxu0 %v4977
    %5278 = vmatprep.subr.mxu0 %v4982
    %5279 = vmatpush1.msra.mxu0 %v4981
    %5280 = vmatprep.subr.mxu0 %v4986
    %5281 = vmatpush1.msra.mxu0 %v4985
    %5282 = vmatprep.subr.mxu0 %v4990
    %5283 = vmatpush1.msra.mxu0 %v4989
    %5284 = vmatprep.subr.mxu0 %v4994
    %5285 = vmatpush1.msra.mxu0 %v4993
    %5286 = vmatprep.subr.mxu0 %v4998
    %5287 = vmatpush1.msra.mxu0 %v4997
    %5288 = vmatprep.subr.mxu0 %v5002
    %5289 = vmatpush1.msra.mxu0 %v5001
    %5290 = vmatprep.subr.mxu0 %v5006
    %5291 = vmatpush1.msra.mxu0 %v5005
    %5292 = vmatprep.subr.mxu0 %v5010
    %5293 = vmatpush1.msra.mxu0 %v5009
    %5294 = vmatprep.subr.mxu0 %v5014
    %5295 = vmatpush1.msra.mxu0 %v5013
    %5296 = vmatprep.subr.mxu0 %v5018
    %5297 = vmatpush1.msra.mxu0 %v5017
    %5298 = vmatprep.subr.mxu0 %v5022
    %5299 = vmatpush1.msra.mxu0 %v5021
    %5300 = vmatprep.subr.mxu0 %v5026
    %5301 = vmatpush1.msra.mxu0 %v5025
    %5302 = vmatprep.subr.mxu0 %v5030
    %5303 = vmatpush1.msra.mxu0 %v5029
    %5304 = vmatprep.subr.mxu0 0.0
    %5305 = vmatpush1.msra.mxu0 0.0
    %5306 = vmatprep.subr.mxu0 0.0
    %5307 = vmatpush1.msra.mxu0 0.0
    %5308 = vmatprep.subr.mxu0 0.0
    %5309 = vmatpush1.msra.mxu0 0.0
    %5310 = vmatprep.subr.mxu0 0.0
    %5311 = vmatpush1.msra.mxu0 0.0
    %5312 = vmatprep.subr.mxu0 0.0
    %5313 = vmatpush1.msra.mxu0 0.0
    %5314 = vmatprep.subr.mxu0 0.0
    %5315 = vmatpush1.msra.mxu0 0.0
    %5316 = vmatprep.subr.mxu0 0.0
    %5317 = vmatpush1.msra.mxu0 0.0
    %5318 = vmatprep.subr.mxu0 0.0
    %5319 = vmatpush1.msra.mxu0 0.0
    %5320 = vmatprep.subr.mxu0 0.0
    %5321 = vmatpush1.msra.mxu0 0.0
    %5322 = vmatprep.subr.mxu0 0.0
    %5323 = vmatpush1.msra.mxu0 0.0
    %5324 = vmatprep.subr.mxu0 0.0
    %5325 = vmatpush1.msra.mxu0 0.0
    %5326 = vmatprep.subr.mxu0 0.0
    %5327 = vmatpush1.msra.mxu0 0.0
    %5328 = vmatprep.subr.mxu0 0.0
    %5329 = vmatpush1.msra.mxu0 0.0
    %5330 = vmatprep.subr.mxu0 0.0
    %5331 = vmatpush1.msra.mxu0 0.0
    %5332 = vmatprep.subr.mxu0 0.0
    %5333 = vmatpush1.msra.mxu0 0.0
    %5334 = vmatprep.subr.mxu0 0.0
    %5335 = vmatpush1.msra.mxu0 0.0
    %5336 = vmatprep.mubr.f32.mxu0 0.0
    %5337 = vmatmul.mubr.f32.gmra.mrb[0].mxu0 %v5200
    %v5338 = vpop.f32.mrb[0].mxu0
    %v5339 = vadd.f32 0.0, %v5338
    %v5340 = vpop.f32.mrb[0].mxu0
    %v5341 = vadd.f32 0.0, %v5340
    %5342 = vdwg.mxu0
    %v5347 = vrot.slane %v5268, 7
    %v5348 = vrot.slane %v5270, 7
    %v5349 = vrot.slane %v5339, 7
    %v5350 = vrot.slane %v5341, 7
    %v5355 = vadd.f32 %v4962, %v5347
    %v5356 = vadd.f32 %v4963, %v5348
    %v5357 = vadd.f32 %v4964, %v5349
    %v5358 = vadd.f32 %v4965, %v5350
    %v5359 = vxor.u32 %v5355, 2147483648
    %v5360 = vmul.f32 %v5359, 1.442695
    %v5361 = vpow.pop %v5360
    %v5362 = vadd.f32 %v5361, 1.0
    %v5363 = vrcp.pop %v5362
    %v5364 = vmul.f32 1.0, %v5363
    %v5365 = vxor.u32 %v5356, 2147483648
    %v5366 = vmul.f32 %v5365, 1.442695
    %v5367 = vpow.pop %v5366
    %v5368 = vadd.f32 %v5367, 1.0
    %v5369 = vrcp.pop %v5368
    %v5370 = vmul.f32 1.0, %v5369
    %v5371 = vtanh.pop %v5357
    %v5372 = vxor.u32 %v5358, 2147483648
    %v5373 = vmul.f32 %v5372, 1.442695
    %v5374 = vpow.pop %v5373
    %v5375 = vadd.f32 %v5374, 1.0
    %v5376 = vrcp.pop %v5375
    %v5377 = vmul.f32 1.0, %v5376
    %v5379 = vrot.slane %v5198, 7
    %v5381 = vmul.f32 %v5370, %v5379
    %v5382 = vmul.f32 %v5364, %v5371
    %v5383 = vadd.f32 %v5381, %v5382
    %v5384 = vtanh.pop %v5383
    %v5385 = vmul.f32 %v5377, %v5384
    %v5387 = vrot.slane %v5385, 1
    %5389 = vmatprep.subr.mxu0 %v4968
    %5390 = vmatpush1.msra.mxu0 %v4967
    %5391 = vmatprep.subr.mxu0 %v4972
    %5392 = vmatpush1.msra.mxu0 %v4971
    %5393 = vmatprep.subr.mxu0 %v4976
    %5394 = vmatpush1.msra.mxu0 %v4975
    %5395 = vmatprep.subr.mxu0 %v4980
    %5396 = vmatpush1.msra.mxu0 %v4979
    %5397 = vmatprep.subr.mxu0 %v4984
    %5398 = vmatpush1.msra.mxu0 %v4983
    %5399 = vmatprep.subr.mxu0 %v4988
    %5400 = vmatpush1.msra.mxu0 %v4987
    %5401 = vmatprep.subr.mxu0 %v4992
    %5402 = vmatpush1.msra.mxu0 %v4991
    %5403 = vmatprep.subr.mxu0 %v4996
    %5404 = vmatpush1.msra.mxu0 %v4995
    %5405 = vmatprep.subr.mxu0 %v5000
    %5406 = vmatpush1.msra.mxu0 %v4999
    %5407 = vmatprep.subr.mxu0 %v5004
    %5408 = vmatpush1.msra.mxu0 %v5003
    %5409 = vmatprep.subr.mxu0 %v5008
    %5410 = vmatpush1.msra.mxu0 %v5007
    %5411 = vmatprep.subr.mxu0 %v5012
    %5412 = vmatpush1.msra.mxu0 %v5011
    %5413 = vmatprep.subr.mxu0 %v5016
    %5414 = vmatpush1.msra.mxu0 %v5015
    %5415 = vmatprep.subr.mxu0 %v5020
    %5416 = vmatpush1.msra.mxu0 %v5019
    %5417 = vmatprep.subr.mxu0 %v5024
    %5418 = vmatpush1.msra.mxu0 %v5023
    %5419 = vmatprep.subr.mxu0 %v5028
    %5420 = vmatpush1.msra.mxu0 %v5027
    %5421 = vmatprep.subr.mxu0 0.0
    %5422 = vmatpush1.msra.mxu0 0.0
    %5423 = vmatprep.subr.mxu0 0.0
    %5424 = vmatpush1.msra.mxu0 0.0
    %5425 = vmatprep.subr.mxu0 0.0
    %5426 = vmatpush1.msra.mxu0 0.0
    %5427 = vmatprep.subr.mxu0 0.0
    %5428 = vmatpush1.msra.mxu0 0.0
    %5429 = vmatprep.subr.mxu0 0.0
    %5430 = vmatpush1.msra.mxu0 0.0
    %5431 = vmatprep.subr.mxu0 0.0
    %5432 = vmatpush1.msra.mxu0 0.0
    %5433 = vmatprep.subr.mxu0 0.0
    %5434 = vmatpush1.msra.mxu0 0.0
    %5435 = vmatprep.subr.mxu0 0.0
    %5436 = vmatpush1.msra.mxu0 0.0
    %5437 = vmatprep.subr.mxu0 0.0
    %5438 = vmatpush1.msra.mxu0 0.0
    %5439 = vmatprep.subr.mxu0 0.0
    %5440 = vmatpush1.msra.mxu0 0.0
    %5441 = vmatprep.subr.mxu0 0.0
    %5442 = vmatpush1.msra.mxu0 0.0
    %5443 = vmatprep.subr.mxu0 0.0
    %5444 = vmatpush1.msra.mxu0 0.0
    %5445 = vmatprep.subr.mxu0 0.0
    %5446 = vmatpush1.msra.mxu0 0.0
    %5447 = vmatprep.subr.mxu0 0.0
    %5448 = vmatpush1.msra.mxu0 0.0
    %5449 = vmatprep.subr.mxu0 0.0
    %5450 = vmatpush1.msra.mxu0 0.0
    %5451 = vmatprep.subr.mxu0 0.0
    %5452 = vmatpush1.msra.mxu0 0.0
    %5453 = vmatprep.mubr.f32.mxu0 0.0
    %5454 = vmatmul.mubr.f32.gmra.mrb[0].mxu0 %v5387
    %v5455 = vpop.f32.mrb[0].mxu0
    %v5456 = vadd.f32 0.0, %v5455
    %v5457 = vpop.f32.mrb[0].mxu0
    %v5458 = vadd.f32 0.0, %v5457
    %5459 = vdwg.mxu0
    %5460 = vmatprep.subr.mxu0 %v4970
    %5461 = vmatpush1.msra.mxu0 %v4969
    %5462 = vmatprep.subr.mxu0 %v4974
    %5463 = vmatpush1.msra.mxu0 %v4973
    %5464 = vmatprep.subr.mxu0 %v4978
    %5465 = vmatpush1.msra.mxu0 %v4977
    %5466 = vmatprep.subr.mxu0 %v4982
    %5467 = vmatpush1.msra.mxu0 %v4981
    %5468 = vmatprep.subr.mxu0 %v4986
    %5469 = vmatpush1.msra.mxu0 %v4985
    %5470 = vmatprep.subr.mxu0 %v4990
    %5471 = vmatpush1.msra.mxu0 %v4989
    %5472 = vmatprep.subr.mxu0 %v4994
    %5473 = vmatpush1.msra.mxu0 %v4993
    %5474 = vmatprep.subr.mxu0 %v4998
    %5475 = vmatpush1.msra.mxu0 %v4997
    %5476 = vmatprep.subr.mxu0 %v5002
    %5477 = vmatpush1.msra.mxu0 %v5001
    %5478 = vmatprep.subr.mxu0 %v5006
    %5479 = vmatpush1.msra.mxu0 %v5005
    %5480 = vmatprep.subr.mxu0 %v5010
    %5481 = vmatpush1.msra.mxu0 %v5009
    %5482 = vmatprep.subr.mxu0 %v5014
    %5483 = vmatpush1.msra.mxu0 %v5013
    %5484 = vmatprep.subr.mxu0 %v5018
    %5485 = vmatpush1.msra.mxu0 %v5017
    %5486 = vmatprep.subr.mxu0 %v5022
    %5487 = vmatpush1.msra.mxu0 %v5021
    %5488 = vmatprep.subr.mxu0 %v5026
    %5489 = vmatpush1.msra.mxu0 %v5025
    %5490 = vmatprep.subr.mxu0 %v5030
    %5491 = vmatpush1.msra.mxu0 %v5029
    %5492 = vmatprep.subr.mxu0 0.0
    %5493 = vmatpush1.msra.mxu0 0.0
    %5494 = vmatprep.subr.mxu0 0.0
    %5495 = vmatpush1.msra.mxu0 0.0
    %5496 = vmatprep.subr.mxu0 0.0
    %5497 = vmatpush1.msra.mxu0 0.0
    %5498 = vmatprep.subr.mxu0 0.0
    %5499 = vmatpush1.msra.mxu0 0.0
    %5500 = vmatprep.subr.mxu0 0.0
    %5501 = vmatpush1.msra.mxu0 0.0
    %5502 = vmatprep.subr.mxu0 0.0
    %5503 = vmatpush1.msra.mxu0 0.0
    %5504 = vmatprep.subr.mxu0 0.0
    %5505 = vmatpush1.msra.mxu0 0.0
    %5506 = vmatprep.subr.mxu0 0.0
    %5507 = vmatpush1.msra.mxu0 0.0
    %5508 = vmatprep.subr.mxu0 0.0
    %5509 = vmatpush1.msra.mxu0 0.0
    %5510 = vmatprep.subr.mxu0 0.0
    %5511 = vmatpush1.msra.mxu0 0.0
    %5512 = vmatprep.subr.mxu0 0.0
    %5513 = vmatpush1.msra.mxu0 0.0
    %5514 = vmatprep.subr.mxu0 0.0
    %5515 = vmatpush1.msra.mxu0 0.0
    %5516 = vmatprep.subr.mxu0 0.0
    %5517 = vmatpush1.msra.mxu0 0.0
    %5518 = vmatprep.subr.mxu0 0.0
    %5519 = vmatpush1.msra.mxu0 0.0
    %5520 = vmatprep.subr.mxu0 0.0
    %5521 = vmatpush1.msra.mxu0 0.0
    %5522 = vmatprep.subr.mxu0 0.0
    %5523 = vmatpush1.msra.mxu0 0.0
    %5524 = vmatprep.mubr.f32.mxu0 0.0
    %5525 = vmatmul.mubr.f32.gmra.mrb[0].mxu0 %v5387
    %v5526 = vpop.f32.mrb[0].mxu0
    %v5527 = vadd.f32 0.0, %v5526
    %v5528 = vpop.f32.mrb[0].mxu0
    %v5529 = vadd.f32 0.0, %v5528
    %5530 = vdwg.mxu0
    %v5535 = vrot.slane %v5456, 6
    %v5536 = vrot.slane %v5458, 6
    %v5537 = vrot.slane %v5527, 6
    %v5538 = vrot.slane %v5529, 6
    %v5543 = vadd.f32 %v4962, %v5535
    %v5544 = vadd.f32 %v4963, %v5536
    %v5545 = vadd.f32 %v4964, %v5537
    %v5546 = vadd.f32 %v4965, %v5538
    %v5547 = vxor.u32 %v5543, 2147483648
    %v5548 = vmul.f32 %v5547, 1.442695
    %v5549 = vpow.pop %v5548
    %v5550 = vadd.f32 %v5549, 1.0
    %v5551 = vrcp.pop %v5550
    %v5552 = vmul.f32 1.0, %v5551
    %v5553 = vxor.u32 %v5544, 2147483648
    %v5554 = vmul.f32 %v5553, 1.442695
    %v5555 = vpow.pop %v5554
    %v5556 = vadd.f32 %v5555, 1.0
    %v5557 = vrcp.pop %v5556
    %v5558 = vmul.f32 1.0, %v5557
    %v5559 = vtanh.pop %v5545
    %v5560 = vxor.u32 %v5546, 2147483648
    %v5561 = vmul.f32 %v5560, 1.442695
    %v5562 = vpow.pop %v5561
    %v5563 = vadd.f32 %v5562, 1.0
    %v5564 = vrcp.pop %v5563
    %v5565 = vmul.f32 1.0, %v5564
    %v5567 = vrot.slane %v5383, 7
    %v5569 = vmul.f32 %v5558, %v5567
    %v5570 = vmul.f32 %v5552, %v5559
    %v5571 = vadd.f32 %v5569, %v5570
    %v5572 = vtanh.pop %v5571
    %v5573 = vmul.f32 %v5565, %v5572
    %v5575 = vrot.slane %v5573, 2
    %5577 = vmatprep.subr.mxu0 %v4968
    %5578 = vmatpush1.msra.mxu0 %v4967
    %5579 = vmatprep.subr.mxu0 %v4972
    %5580 = vmatpush1.msra.mxu0 %v4971
    %5581 = vmatprep.subr.mxu0 %v4976
    %5582 = vmatpush1.msra.mxu0 %v4975
    %5583 = vmatprep.subr.mxu0 %v4980
    %5584 = vmatpush1.msra.mxu0 %v4979
    %5585 = vmatprep.subr.mxu0 %v4984
    %5586 = vmatpush1.msra.mxu0 %v4983
    %5587 = vmatprep.subr.mxu0 %v4988
    %5588 = vmatpush1.msra.mxu0 %v4987
    %5589 = vmatprep.subr.mxu0 %v4992
    %5590 = vmatpush1.msra.mxu0 %v4991
    %5591 = vmatprep.subr.mxu0 %v4996
    %5592 = vmatpush1.msra.mxu0 %v4995
    %5593 = vmatprep.subr.mxu0 %v5000
    %5594 = vmatpush1.msra.mxu0 %v4999
    %5595 = vmatprep.subr.mxu0 %v5004
    %5596 = vmatpush1.msra.mxu0 %v5003
    %5597 = vmatprep.subr.mxu0 %v5008
    %5598 = vmatpush1.msra.mxu0 %v5007
    %5599 = vmatprep.subr.mxu0 %v5012
    %5600 = vmatpush1.msra.mxu0 %v5011
    %5601 = vmatprep.subr.mxu0 %v5016
    %5602 = vmatpush1.msra.mxu0 %v5015
    %5603 = vmatprep.subr.mxu0 %v5020
    %5604 = vmatpush1.msra.mxu0 %v5019
    %5605 = vmatprep.subr.mxu0 %v5024
    %5606 = vmatpush1.msra.mxu0 %v5023
    %5607 = vmatprep.subr.mxu0 %v5028
    %5608 = vmatpush1.msra.mxu0 %v5027
    %5609 = vmatprep.subr.mxu0 0.0
    %5610 = vmatpush1.msra.mxu0 0.0
    %5611 = vmatprep.subr.mxu0 0.0
    %5612 = vmatpush1.msra.mxu0 0.0
    %5613 = vmatprep.subr.mxu0 0.0
    %5614 = vmatpush1.msra.mxu0 0.0
    %5615 = vmatprep.subr.mxu0 0.0
    %5616 = vmatpush1.msra.mxu0 0.0
    %5617 = vmatprep.subr.mxu0 0.0
    %5618 = vmatpush1.msra.mxu0 0.0
    %5619 = vmatprep.subr.mxu0 0.0
    %5620 = vmatpush1.msra.mxu0 0.0
    %5621 = vmatprep.subr.mxu0 0.0
    %5622 = vmatpush1.msra.mxu0 0.0
    %5623 = vmatprep.subr.mxu0 0.0
    %5624 = vmatpush1.msra.mxu0 0.0
    %5625 = vmatprep.subr.mxu0 0.0
    %5626 = vmatpush1.msra.mxu0 0.0
    %5627 = vmatprep.subr.mxu0 0.0
    %5628 = vmatpush1.msra.mxu0 0.0
    %5629 = vmatprep.subr.mxu0 0.0
    %5630 = vmatpush1.msra.mxu0 0.0
    %5631 = vmatprep.subr.mxu0 0.0
    %5632 = vmatpush1.msra.mxu0 0.0
    %5633 = vmatprep.subr.mxu0 0.0
    %5634 = vmatpush1.msra.mxu0 0.0
    %5635 = vmatprep.subr.mxu0 0.0
    %5636 = vmatpush1.msra.mxu0 0.0
    %5637 = vmatprep.subr.mxu0 0.0
    %5638 = vmatpush1.msra.mxu0 0.0
    %5639 = vmatprep.subr.mxu0 0.0
    %5640 = vmatpush1.msra.mxu0 0.0
    %5641 = vmatprep.mubr.f32.mxu0 0.0
    %5642 = vmatmul.mubr.f32.gmra.mrb[0].mxu0 %v5575
    %v5643 = vpop.f32.mrb[0].mxu0
    %v5644 = vadd.f32 0.0, %v5643
    %v5645 = vpop.f32.mrb[0].mxu0
    %v5646 = vadd.f32 0.0, %v5645
    %5647 = vdwg.mxu0
    %5648 = vmatprep.subr.mxu0 %v4970
    %5649 = vmatpush1.msra.mxu0 %v4969
    %5650 = vmatprep.subr.mxu0 %v4974
    %5651 = vmatpush1.msra.mxu0 %v4973
    %5652 = vmatprep.subr.mxu0 %v4978
    %5653 = vmatpush1.msra.mxu0 %v4977
    %5654 = vmatprep.subr.mxu0 %v4982
    %5655 = vmatpush1.msra.mxu0 %v4981
    %5656 = vmatprep.subr.mxu0 %v4986
    %5657 = vmatpush1.msra.mxu0 %v4985
    %5658 = vmatprep.subr.mxu0 %v4990
    %5659 = vmatpush1.msra.mxu0 %v4989
    %5660 = vmatprep.subr.mxu0 %v4994
    %5661 = vmatpush1.msra.mxu0 %v4993
    %5662 = vmatprep.subr.mxu0 %v4998
    %5663 = vmatpush1.msra.mxu0 %v4997
    %5664 = vmatprep.subr.mxu0 %v5002
    %5665 = vmatpush1.msra.mxu0 %v5001
    %5666 = vmatprep.subr.mxu0 %v5006
    %5667 = vmatpush1.msra.mxu0 %v5005
    %5668 = vmatprep.subr.mxu0 %v5010
    %5669 = vmatpush1.msra.mxu0 %v5009
    %5670 = vmatprep.subr.mxu0 %v5014
    %5671 = vmatpush1.msra.mxu0 %v5013
    %5672 = vmatprep.subr.mxu0 %v5018
    %5673 = vmatpush1.msra.mxu0 %v5017
    %5674 = vmatprep.subr.mxu0 %v5022
    %5675 = vmatpush1.msra.mxu0 %v5021
    %5676 = vmatprep.subr.mxu0 %v5026
    %5677 = vmatpush1.msra.mxu0 %v5025
    %5678 = vmatprep.subr.mxu0 %v5030
    %5679 = vmatpush1.msra.mxu0 %v5029
    %5680 = vmatprep.subr.mxu0 0.0
    %5681 = vmatpush1.msra.mxu0 0.0
    %5682 = vmatprep.subr.mxu0 0.0
    %5683 = vmatpush1.msra.mxu0 0.0
    %5684 = vmatprep.subr.mxu0 0.0
    %5685 = vmatpush1.msra.mxu0 0.0
    %5686 = vmatprep.subr.mxu0 0.0
    %5687 = vmatpush1.msra.mxu0 0.0
    %5688 = vmatprep.subr.mxu0 0.0
    %5689 = vmatpush1.msra.mxu0 0.0
    %5690 = vmatprep.subr.mxu0 0.0
    %5691 = vmatpush1.msra.mxu0 0.0
    %5692 = vmatprep.subr.mxu0 0.0
    %5693 = vmatpush1.msra.mxu0 0.0
    %5694 = vmatprep.subr.mxu0 0.0
    %5695 = vmatpush1.msra.mxu0 0.0
    %5696 = vmatprep.subr.mxu0 0.0
    %5697 = vmatpush1.msra.mxu0 0.0
    %5698 = vmatprep.subr.mxu0 0.0
    %5699 = vmatpush1.msra.mxu0 0.0
    %5700 = vmatprep.subr.mxu0 0.0
    %5701 = vmatpush1.msra.mxu0 0.0
    %5702 = vmatprep.subr.mxu0 0.0
    %5703 = vmatpush1.msra.mxu0 0.0
    %5704 = vmatprep.subr.mxu0 0.0
    %5705 = vmatpush1.msra.mxu0 0.0
    %5706 = vmatprep.subr.mxu0 0.0
    %5707 = vmatpush1.msra.mxu0 0.0
    %5708 = vmatprep.subr.mxu0 0.0
    %5709 = vmatpush1.msra.mxu0 0.0
    %5710 = vmatprep.subr.mxu0 0.0
    %5711 = vmatpush1.msra.mxu0 0.0
    %5712 = vmatprep.mubr.f32.mxu0 0.0
    %5713 = vmatmul.mubr.f32.gmra.mrb[0].mxu0 %v5575
    %v5714 = vpop.f32.mrb[0].mxu0
    %v5715 = vadd.f32 0.0, %v5714
    %v5716 = vpop.f32.mrb[0].mxu0
    %v5717 = vadd.f32 0.0, %v5716
    %5718 = vdwg.mxu0
    %v5723 = vrot.slane %v5644, 5
    %v5724 = vrot.slane %v5646, 5
    %v5725 = vrot.slane %v5715, 5
    %v5726 = vrot.slane %v5717, 5
    %v5731 = vadd.f32 %v4962, %v5723
    %v5732 = vadd.f32 %v4963, %v5724
    %v5733 = vadd.f32 %v4964, %v5725
    %v5734 = vadd.f32 %v4965, %v5726
    %v5735 = vxor.u32 %v5731, 2147483648
    %v5736 = vmul.f32 %v5735, 1.442695
    %v5737 = vpow.pop %v5736
    %v5738 = vadd.f32 %v5737, 1.0
    %v5739 = vrcp.pop %v5738
    %v5740 = vmul.f32 1.0, %v5739
    %v5741 = vxor.u32 %v5732, 2147483648
    %v5742 = vmul.f32 %v5741, 1.442695
    %v5743 = vpow.pop %v5742
    %v5744 = vadd.f32 %v5743, 1.0
    %v5745 = vrcp.pop %v5744
    %v5746 = vmul.f32 1.0, %v5745
    %v5747 = vtanh.pop %v5733
    %v5748 = vxor.u32 %v5734, 2147483648
    %v5749 = vmul.f32 %v5748, 1.442695
    %v5750 = vpow.pop %v5749
    %v5751 = vadd.f32 %v5750, 1.0
    %v5752 = vrcp.pop %v5751
    %v5753 = vmul.f32 1.0, %v5752
    %v5755 = vrot.slane %v5571, 7
    %v5757 = vmul.f32 %v5746, %v5755
    %v5758 = vmul.f32 %v5740, %v5747
    %v5759 = vadd.f32 %v5757, %v5758
    %v5760 = vtanh.pop %v5759
    %v5761 = vmul.f32 %v5753, %v5760
    %v5763 = vrot.slane %v5761, 3
    %5765 = vmatprep.subr.mxu0 %v4968
    %5766 = vmatpush1.msra.mxu0 %v4967
    %5767 = vmatprep.subr.mxu0 %v4972
    %5768 = vmatpush1.msra.mxu0 %v4971
    %5769 = vmatprep.subr.mxu0 %v4976
    %5770 = vmatpush1.msra.mxu0 %v4975
    %5771 = vmatprep.subr.mxu0 %v4980
    %5772 = vmatpush1.msra.mxu0 %v4979
    %5773 = vmatprep.subr.mxu0 %v4984
    %5774 = vmatpush1.msra.mxu0 %v4983
    %5775 = vmatprep.subr.mxu0 %v4988
    %5776 = vmatpush1.msra.mxu0 %v4987
    %5777 = vmatprep.subr.mxu0 %v4992
    %5778 = vmatpush1.msra.mxu0 %v4991
    %5779 = vmatprep.subr.mxu0 %v4996
    %5780 = vmatpush1.msra.mxu0 %v4995
    %5781 = vmatprep.subr.mxu0 %v5000
    %5782 = vmatpush1.msra.mxu0 %v4999
    %5783 = vmatprep.subr.mxu0 %v5004
    %5784 = vmatpush1.msra.mxu0 %v5003
    %5785 = vmatprep.subr.mxu0 %v5008
    %5786 = vmatpush1.msra.mxu0 %v5007
    %5787 = vmatprep.subr.mxu0 %v5012
    %5788 = vmatpush1.msra.mxu0 %v5011
    %5789 = vmatprep.subr.mxu0 %v5016
    %5790 = vmatpush1.msra.mxu0 %v5015
    %5791 = vmatprep.subr.mxu0 %v5020
    %5792 = vmatpush1.msra.mxu0 %v5019
    %5793 = vmatprep.subr.mxu0 %v5024
    %5794 = vmatpush1.msra.mxu0 %v5023
    %5795 = vmatprep.subr.mxu0 %v5028
    %5796 = vmatpush1.msra.mxu0 %v5027
    %5797 = vmatprep.subr.mxu0 0.0
    %5798 = vmatpush1.msra.mxu0 0.0
    %5799 = vmatprep.subr.mxu0 0.0
    %5800 = vmatpush1.msra.mxu0 0.0
    %5801 = vmatprep.subr.mxu0 0.0
    %5802 = vmatpush1.msra.mxu0 0.0
    %5803 = vmatprep.subr.mxu0 0.0
    %5804 = vmatpush1.msra.mxu0 0.0
    %5805 = vmatprep.subr.mxu0 0.0
    %5806 = vmatpush1.msra.mxu0 0.0
    %5807 = vmatprep.subr.mxu0 0.0
    %5808 = vmatpush1.msra.mxu0 0.0
    %5809 = vmatprep.subr.mxu0 0.0
    %5810 = vmatpush1.msra.mxu0 0.0
    %5811 = vmatprep.subr.mxu0 0.0
    %5812 = vmatpush1.msra.mxu0 0.0
    %5813 = vmatprep.subr.mxu0 0.0
    %5814 = vmatpush1.msra.mxu0 0.0
    %5815 = vmatprep.subr.mxu0 0.0
    %5816 = vmatpush1.msra.mxu0 0.0
    %5817 = vmatprep.subr.mxu0 0.0
    %5818 = vmatpush1.msra.mxu0 0.0
    %5819 = vmatprep.subr.mxu0 0.0
    %5820 = vmatpush1.msra.mxu0 0.0
    %5821 = vmatprep.subr.mxu0 0.0
    %5822 = vmatpush1.msra.mxu0 0.0
    %5823 = vmatprep.subr.mxu0 0.0
    %5824 = vmatpush1.msra.mxu0 0.0
    %5825 = vmatprep.subr.mxu0 0.0
    %5826 = vmatpush1.msra.mxu0 0.0
    %5827 = vmatprep.subr.mxu0 0.0
    %5828 = vmatpush1.msra.mxu0 0.0
    %5829 = vmatprep.mubr.f32.mxu0 0.0
    %5830 = vmatmul.mubr.f32.gmra.mrb[0].mxu0 %v5763
    %v5831 = vpop.f32.mrb[0].mxu0
    %v5832 = vadd.f32 0.0, %v5831
    %v5833 = vpop.f32.mrb[0].mxu0
    %v5834 = vadd.f32 0.0, %v5833
    %5835 = vdwg.mxu0
    %5836 = vmatprep.subr.mxu0 %v4970
    %5837 = vmatpush1.msra.mxu0 %v4969
    %5838 = vmatprep.subr.mxu0 %v4974
    %5839 = vmatpush1.msra.mxu0 %v4973
    %5840 = vmatprep.subr.mxu0 %v4978
    %5841 = vmatpush1.msra.mxu0 %v4977
    %5842 = vmatprep.subr.mxu0 %v4982
    %5843 = vmatpush1.msra.mxu0 %v4981
    %5844 = vmatprep.subr.mxu0 %v4986
    %5845 = vmatpush1.msra.mxu0 %v4985
    %5846 = vmatprep.subr.mxu0 %v4990
    %5847 = vmatpush1.msra.mxu0 %v4989
    %5848 = vmatprep.subr.mxu0 %v4994
    %5849 = vmatpush1.msra.mxu0 %v4993
    %5850 = vmatprep.subr.mxu0 %v4998
    %5851 = vmatpush1.msra.mxu0 %v4997
    %5852 = vmatprep.subr.mxu0 %v5002
    %5853 = vmatpush1.msra.mxu0 %v5001
    %5854 = vmatprep.subr.mxu0 %v5006
    %5855 = vmatpush1.msra.mxu0 %v5005
    %5856 = vmatprep.subr.mxu0 %v5010
    %5857 = vmatpush1.msra.mxu0 %v5009
    %5858 = vmatprep.subr.mxu0 %v5014
    %5859 = vmatpush1.msra.mxu0 %v5013
    %5860 = vmatprep.subr.mxu0 %v5018
    %5861 = vmatpush1.msra.mxu0 %v5017
    %5862 = vmatprep.subr.mxu0 %v5022
    %5863 = vmatpush1.msra.mxu0 %v5021
    %5864 = vmatprep.subr.mxu0 %v5026
    %5865 = vmatpush1.msra.mxu0 %v5025
    %5866 = vmatprep.subr.mxu0 %v5030
    %5867 = vmatpush1.msra.mxu0 %v5029
    %5868 = vmatprep.subr.mxu0 0.0
    %5869 = vmatpush1.msra.mxu0 0.0
    %5870 = vmatprep.subr.mxu0 0.0
    %5871 = vmatpush1.msra.mxu0 0.0
    %5872 = vmatprep.subr.mxu0 0.0
    %5873 = vmatpush1.msra.mxu0 0.0
    %5874 = vmatprep.subr.mxu0 0.0
    %5875 = vmatpush1.msra.mxu0 0.0
    %5876 = vmatprep.subr.mxu0 0.0
    %5877 = vmatpush1.msra.mxu0 0.0
    %5878 = vmatprep.subr.mxu0 0.0
    %5879 = vmatpush1.msra.mxu0 0.0
    %5880 = vmatprep.subr.mxu0 0.0
    %5881 = vmatpush1.msra.mxu0 0.0
    %5882 = vmatprep.subr.mxu0 0.0
    %5883 = vmatpush1.msra.mxu0 0.0
    %5884 = vmatprep.subr.mxu0 0.0
    %5885 = vmatpush1.msra.mxu0 0.0
    %5886 = vmatprep.subr.mxu0 0.0
    %5887 = vmatpush1.msra.mxu0 0.0
    %5888 = vmatprep.subr.mxu0 0.0
    %5889 = vmatpush1.msra.mxu0 0.0
    %5890 = vmatprep.subr.mxu0 0.0
    %5891 = vmatpush1.msra.mxu0 0.0
    %5892 = vmatprep.subr.mxu0 0.0
    %5893 = vmatpush1.msra.mxu0 0.0
    %5894 = vmatprep.subr.mxu0 0.0
    %5895 = vmatpush1.msra.mxu0 0.0
    %5896 = vmatprep.subr.mxu0 0.0
    %5897 = vmatpush1.msra.mxu0 0.0
    %5898 = vmatprep.subr.mxu0 0.0
    %5899 = vmatpush1.msra.mxu0 0.0
    %5900 = vmatprep.mubr.f32.mxu0 0.0
    %5901 = vmatmul.mubr.f32.gmra.mrb[0].mxu0 %v5763
    %v5902 = vpop.f32.mrb[0].mxu0
    %v5903 = vadd.f32 0.0, %v5902
    %v5904 = vpop.f32.mrb[0].mxu0
    %v5905 = vadd.f32 0.0, %v5904
    %5906 = vdwg.mxu0
    %v5911 = vrot.slane %v5832, 4
    %v5912 = vrot.slane %v5834, 4
    %v5913 = vrot.slane %v5903, 4
    %v5914 = vrot.slane %v5905, 4
    %v5919 = vadd.f32 %v4962, %v5911
    %v5920 = vadd.f32 %v4963, %v5912
    %v5921 = vadd.f32 %v4964, %v5913
    %v5922 = vadd.f32 %v4965, %v5914
    %v5923 = vxor.u32 %v5919, 2147483648
    %v5924 = vmul.f32 %v5923, 1.442695
    %v5925 = vpow.pop %v5924
    %v5926 = vadd.f32 %v5925, 1.0
    %v5927 = vrcp.pop %v5926
    %v5928 = vmul.f32 1.0, %v5927
    %v5929 = vxor.u32 %v5920, 2147483648
    %v5930 = vmul.f32 %v5929, 1.442695
    %v5931 = vpow.pop %v5930
    %v5932 = vadd.f32 %v5931, 1.0
    %v5933 = vrcp.pop %v5932
    %v5934 = vmul.f32 1.0, %v5933
    %v5935 = vtanh.pop %v5921
    %v5936 = vxor.u32 %v5922, 2147483648
    %v5937 = vmul.f32 %v5936, 1.442695
    %v5938 = vpow.pop %v5937
    %v5939 = vadd.f32 %v5938, 1.0
    %v5940 = vrcp.pop %v5939
    %v5941 = vmul.f32 1.0, %v5940
    %v5943 = vrot.slane %v5759, 7
    %v5945 = vmul.f32 %v5934, %v5943
    %v5946 = vmul.f32 %v5928, %v5935
    %v5947 = vadd.f32 %v5945, %v5946
    %v5948 = vtanh.pop %v5947
    %v5949 = vmul.f32 %v5941, %v5948
    %v5951 = vrot.slane %v5949, 4
    %5953 = vmatprep.subr.mxu0 %v4968
    %5954 = vmatpush1.msra.mxu0 %v4967
    %5955 = vmatprep.subr.mxu0 %v4972
    %5956 = vmatpush1.msra.mxu0 %v4971
    %5957 = vmatprep.subr.mxu0 %v4976
    %5958 = vmatpush1.msra.mxu0 %v4975
    %5959 = vmatprep.subr.mxu0 %v4980
    %5960 = vmatpush1.msra.mxu0 %v4979
    %5961 = vmatprep.subr.mxu0 %v4984
    %5962 = vmatpush1.msra.mxu0 %v4983
    %5963 = vmatprep.subr.mxu0 %v4988
    %5964 = vmatpush1.msra.mxu0 %v4987
    %5965 = vmatprep.subr.mxu0 %v4992
    %5966 = vmatpush1.msra.mxu0 %v4991
    %5967 = vmatprep.subr.mxu0 %v4996
    %5968 = vmatpush1.msra.mxu0 %v4995
    %5969 = vmatprep.subr.mxu0 %v5000
    %5970 = vmatpush1.msra.mxu0 %v4999
    %5971 = vmatprep.subr.mxu0 %v5004
    %5972 = vmatpush1.msra.mxu0 %v5003
    %5973 = vmatprep.subr.mxu0 %v5008
    %5974 = vmatpush1.msra.mxu0 %v5007
    %5975 = vmatprep.subr.mxu0 %v5012
    %5976 = vmatpush1.msra.mxu0 %v5011
    %5977 = vmatprep.subr.mxu0 %v5016
    %5978 = vmatpush1.msra.mxu0 %v5015
    %5979 = vmatprep.subr.mxu0 %v5020
    %5980 = vmatpush1.msra.mxu0 %v5019
    %5981 = vmatprep.subr.mxu0 %v5024
    %5982 = vmatpush1.msra.mxu0 %v5023
    %5983 = vmatprep.subr.mxu0 %v5028
    %5984 = vmatpush1.msra.mxu0 %v5027
    %5985 = vmatprep.subr.mxu0 0.0
    %5986 = vmatpush1.msra.mxu0 0.0
    %5987 = vmatprep.subr.mxu0 0.0
    %5988 = vmatpush1.msra.mxu0 0.0
    %5989 = vmatprep.subr.mxu0 0.0
    %5990 = vmatpush1.msra.mxu0 0.0
    %5991 = vmatprep.subr.mxu0 0.0
    %5992 = vmatpush1.msra.mxu0 0.0
    %5993 = vmatprep.subr.mxu0 0.0
    %5994 = vmatpush1.msra.mxu0 0.0
    %5995 = vmatprep.subr.mxu0 0.0
    %5996 = vmatpush1.msra.mxu0 0.0
    %5997 = vmatprep.subr.mxu0 0.0
    %5998 = vmatpush1.msra.mxu0 0.0
    %5999 = vmatprep.subr.mxu0 0.0
    %6000 = vmatpush1.msra.mxu0 0.0
    %6001 = vmatprep.subr.mxu0 0.0
    %6002 = vmatpush1.msra.mxu0 0.0
    %6003 = vmatprep.subr.mxu0 0.0
    %6004 = vmatpush1.msra.mxu0 0.0
    %6005 = vmatprep.subr.mxu0 0.0
    %6006 = vmatpush1.msra.mxu0 0.0
    %6007 = vmatprep.subr.mxu0 0.0
    %6008 = vmatpush1.msra.mxu0 0.0
    %6009 = vmatprep.subr.mxu0 0.0
    %6010 = vmatpush1.msra.mxu0 0.0
    %6011 = vmatprep.subr.mxu0 0.0
    %6012 = vmatpush1.msra.mxu0 0.0
    %6013 = vmatprep.subr.mxu0 0.0
    %6014 = vmatpush1.msra.mxu0 0.0
    %6015 = vmatprep.subr.mxu0 0.0
    %6016 = vmatpush1.msra.mxu0 0.0
    %6017 = vmatprep.mubr.f32.mxu0 0.0
    %6018 = vmatmul.mubr.f32.gmra.mrb[0].mxu0 %v5951
    %v6019 = vpop.f32.mrb[0].mxu0
    %v6020 = vadd.f32 0.0, %v6019
    %v6021 = vpop.f32.mrb[0].mxu0
    %v6022 = vadd.f32 0.0, %v6021
    %6023 = vdwg.mxu0
    %6024 = vmatprep.subr.mxu0 %v4970
    %6025 = vmatpush1.msra.mxu0 %v4969
    %6026 = vmatprep.subr.mxu0 %v4974
    %6027 = vmatpush1.msra.mxu0 %v4973
    %6028 = vmatprep.subr.mxu0 %v4978
    %6029 = vmatpush1.msra.mxu0 %v4977
    %6030 = vmatprep.subr.mxu0 %v4982
    %6031 = vmatpush1.msra.mxu0 %v4981
    %6032 = vmatprep.subr.mxu0 %v4986
    %6033 = vmatpush1.msra.mxu0 %v4985
    %6034 = vmatprep.subr.mxu0 %v4990
    %6035 = vmatpush1.msra.mxu0 %v4989
    %6036 = vmatprep.subr.mxu0 %v4994
    %6037 = vmatpush1.msra.mxu0 %v4993
    %6038 = vmatprep.subr.mxu0 %v4998
    %6039 = vmatpush1.msra.mxu0 %v4997
    %6040 = vmatprep.subr.mxu0 %v5002
    %6041 = vmatpush1.msra.mxu0 %v5001
    %6042 = vmatprep.subr.mxu0 %v5006
    %6043 = vmatpush1.msra.mxu0 %v5005
    %6044 = vmatprep.subr.mxu0 %v5010
    %6045 = vmatpush1.msra.mxu0 %v5009
    %6046 = vmatprep.subr.mxu0 %v5014
    %6047 = vmatpush1.msra.mxu0 %v5013
    %6048 = vmatprep.subr.mxu0 %v5018
    %6049 = vmatpush1.msra.mxu0 %v5017
    %6050 = vmatprep.subr.mxu0 %v5022
    %6051 = vmatpush1.msra.mxu0 %v5021
    %6052 = vmatprep.subr.mxu0 %v5026
    %6053 = vmatpush1.msra.mxu0 %v5025
    %6054 = vmatprep.subr.mxu0 %v5030
    %6055 = vmatpush1.msra.mxu0 %v5029
    %6056 = vmatprep.subr.mxu0 0.0
    %6057 = vmatpush1.msra.mxu0 0.0
    %6058 = vmatprep.subr.mxu0 0.0
    %6059 = vmatpush1.msra.mxu0 0.0
    %6060 = vmatprep.subr.mxu0 0.0
    %6061 = vmatpush1.msra.mxu0 0.0
    %6062 = vmatprep.subr.mxu0 0.0
    %6063 = vmatpush1.msra.mxu0 0.0
    %6064 = vmatprep.subr.mxu0 0.0
    %6065 = vmatpush1.msra.mxu0 0.0
    %6066 = vmatprep.subr.mxu0 0.0
    %6067 = vmatpush1.msra.mxu0 0.0
    %6068 = vmatprep.subr.mxu0 0.0
    %6069 = vmatpush1.msra.mxu0 0.0
    %6070 = vmatprep.subr.mxu0 0.0
    %6071 = vmatpush1.msra.mxu0 0.0
    %6072 = vmatprep.subr.mxu0 0.0
    %6073 = vmatpush1.msra.mxu0 0.0
    %6074 = vmatprep.subr.mxu0 0.0
    %6075 = vmatpush1.msra.mxu0 0.0
    %6076 = vmatprep.subr.mxu0 0.0
    %6077 = vmatpush1.msra.mxu0 0.0
    %6078 = vmatprep.subr.mxu0 0.0
    %6079 = vmatpush1.msra.mxu0 0.0
    %6080 = vmatprep.subr.mxu0 0.0
    %6081 = vmatpush1.msra.mxu0 0.0
    %6082 = vmatprep.subr.mxu0 0.0
    %6083 = vmatpush1.msra.mxu0 0.0
    %6084 = vmatprep.subr.mxu0 0.0
    %6085 = vmatpush1.msra.mxu0 0.0
    %6086 = vmatprep.subr.mxu0 0.0
    %6087 = vmatpush1.msra.mxu0 0.0
    %6088 = vmatprep.mubr.f32.mxu0 0.0
    %6089 = vmatmul.mubr.f32.gmra.mrb[0].mxu0 %v5951
    %v6090 = vpop.f32.mrb[0].mxu0
    %v6091 = vadd.f32 0.0, %v6090
    %v6092 = vpop.f32.mrb[0].mxu0
    %v6093 = vadd.f32 0.0, %v6092
    %6094 = vdwg.mxu0
    %v6099 = vrot.slane %v6020, 3
    %v6100 = vrot.slane %v6022, 3
    %v6101 = vrot.slane %v6091, 3
    %v6102 = vrot.slane %v6093, 3
    %v6107 = vadd.f32 %v4962, %v6099
    %v6108 = vadd.f32 %v4963, %v6100
    %v6109 = vadd.f32 %v4964, %v6101
    %v6110 = vadd.f32 %v4965, %v6102
    %v6111 = vxor.u32 %v6107, 2147483648
    %v6112 = vmul.f32 %v6111, 1.442695
    %v6113 = vpow.pop %v6112
    %v6114 = vadd.f32 %v6113, 1.0
    %v6115 = vrcp.pop %v6114
    %v6116 = vmul.f32 1.0, %v6115
    %v6117 = vxor.u32 %v6108, 2147483648
    %v6118 = vmul.f32 %v6117, 1.442695
    %v6119 = vpow.pop %v6118
    %v6120 = vadd.f32 %v6119, 1.0
    %v6121 = vrcp.pop %v6120
    %v6122 = vmul.f32 1.0, %v6121
    %v6123 = vtanh.pop %v6109
    %v6124 = vxor.u32 %v6110, 2147483648
    %v6125 = vmul.f32 %v6124, 1.442695
    %v6126 = vpow.pop %v6125
    %v6127 = vadd.f32 %v6126, 1.0
    %v6128 = vrcp.pop %v6127
    %v6129 = vmul.f32 1.0, %v6128
    %v6131 = vrot.slane %v5947, 7
    %v6133 = vmul.f32 %v6122, %v6131
    %v6134 = vmul.f32 %v6116, %v6123
    %v6135 = vadd.f32 %v6133, %v6134
    %v6136 = vtanh.pop %v6135
    %v6137 = vmul.f32 %v6129, %v6136
    %v6139 = vrot.slane %v6137, 5
    %6141 = vmatprep.subr.mxu0 %v4968
    %6142 = vmatpush1.msra.mxu0 %v4967
    %6143 = vmatprep.subr.mxu0 %v4972
    %6144 = vmatpush1.msra.mxu0 %v4971
    %6145 = vmatprep.subr.mxu0 %v4976
    %6146 = vmatpush1.msra.mxu0 %v4975
    %6147 = vmatprep.subr.mxu0 %v4980
    %6148 = vmatpush1.msra.mxu0 %v4979
    %6149 = vmatprep.subr.mxu0 %v4984
    %6150 = vmatpush1.msra.mxu0 %v4983
    %6151 = vmatprep.subr.mxu0 %v4988
    %6152 = vmatpush1.msra.mxu0 %v4987
    %6153 = vmatprep.subr.mxu0 %v4992
    %6154 = vmatpush1.msra.mxu0 %v4991
    %6155 = vmatprep.subr.mxu0 %v4996
    %6156 = vmatpush1.msra.mxu0 %v4995
    %6157 = vmatprep.subr.mxu0 %v5000
    %6158 = vmatpush1.msra.mxu0 %v4999
    %6159 = vmatprep.subr.mxu0 %v5004
    %6160 = vmatpush1.msra.mxu0 %v5003
    %6161 = vmatprep.subr.mxu0 %v5008
    %6162 = vmatpush1.msra.mxu0 %v5007
    %6163 = vmatprep.subr.mxu0 %v5012
    %6164 = vmatpush1.msra.mxu0 %v5011
    %6165 = vmatprep.subr.mxu0 %v5016
    %6166 = vmatpush1.msra.mxu0 %v5015
    %6167 = vmatprep.subr.mxu0 %v5020
    %6168 = vmatpush1.msra.mxu0 %v5019
    %6169 = vmatprep.subr.mxu0 %v5024
    %6170 = vmatpush1.msra.mxu0 %v5023
    %6171 = vmatprep.subr.mxu0 %v5028
    %6172 = vmatpush1.msra.mxu0 %v5027
    %6173 = vmatprep.subr.mxu0 0.0
    %6174 = vmatpush1.msra.mxu0 0.0
    %6175 = vmatprep.subr.mxu0 0.0
    %6176 = vmatpush1.msra.mxu0 0.0
    %6177 = vmatprep.subr.mxu0 0.0
    %6178 = vmatpush1.msra.mxu0 0.0
    %6179 = vmatprep.subr.mxu0 0.0
    %6180 = vmatpush1.msra.mxu0 0.0
    %6181 = vmatprep.subr.mxu0 0.0
    %6182 = vmatpush1.msra.mxu0 0.0
    %6183 = vmatprep.subr.mxu0 0.0
    %6184 = vmatpush1.msra.mxu0 0.0
    %6185 = vmatprep.subr.mxu0 0.0
    %6186 = vmatpush1.msra.mxu0 0.0
    %6187 = vmatprep.subr.mxu0 0.0
    %6188 = vmatpush1.msra.mxu0 0.0
    %6189 = vmatprep.subr.mxu0 0.0
    %6190 = vmatpush1.msra.mxu0 0.0
    %6191 = vmatprep.subr.mxu0 0.0
    %6192 = vmatpush1.msra.mxu0 0.0
    %6193 = vmatprep.subr.mxu0 0.0
    %6194 = vmatpush1.msra.mxu0 0.0
    %6195 = vmatprep.subr.mxu0 0.0
    %6196 = vmatpush1.msra.mxu0 0.0
    %6197 = vmatprep.subr.mxu0 0.0
    %6198 = vmatpush1.msra.mxu0 0.0
    %6199 = vmatprep.subr.mxu0 0.0
    %6200 = vmatpush1.msra.mxu0 0.0
    %6201 = vmatprep.subr.mxu0 0.0
    %6202 = vmatpush1.msra.mxu0 0.0
    %6203 = vmatprep.subr.mxu0 0.0
    %6204 = vmatpush1.msra.mxu0 0.0
    %6205 = vmatprep.mubr.f32.mxu0 0.0
    %6206 = vmatmul.mubr.f32.gmra.mrb[0].mxu0 %v6139
    %v6207 = vpop.f32.mrb[0].mxu0
    %v6208 = vadd.f32 0.0, %v6207
    %v6209 = vpop.f32.mrb[0].mxu0
    %v6210 = vadd.f32 0.0, %v6209
    %6211 = vdwg.mxu0
    %6212 = vmatprep.subr.mxu0 %v4970
    %6213 = vmatpush1.msra.mxu0 %v4969
    %6214 = vmatprep.subr.mxu0 %v4974
    %6215 = vmatpush1.msra.mxu0 %v4973
    %6216 = vmatprep.subr.mxu0 %v4978
    %6217 = vmatpush1.msra.mxu0 %v4977
    %6218 = vmatprep.subr.mxu0 %v4982
    %6219 = vmatpush1.msra.mxu0 %v4981
    %6220 = vmatprep.subr.mxu0 %v4986
    %6221 = vmatpush1.msra.mxu0 %v4985
    %6222 = vmatprep.subr.mxu0 %v4990
    %6223 = vmatpush1.msra.mxu0 %v4989
    %6224 = vmatprep.subr.mxu0 %v4994
    %6225 = vmatpush1.msra.mxu0 %v4993
    %6226 = vmatprep.subr.mxu0 %v4998
    %6227 = vmatpush1.msra.mxu0 %v4997
    %6228 = vmatprep.subr.mxu0 %v5002
    %6229 = vmatpush1.msra.mxu0 %v5001
    %6230 = vmatprep.subr.mxu0 %v5006
    %6231 = vmatpush1.msra.mxu0 %v5005
    %6232 = vmatprep.subr.mxu0 %v5010
    %6233 = vmatpush1.msra.mxu0 %v5009
    %6234 = vmatprep.subr.mxu0 %v5014
    %6235 = vmatpush1.msra.mxu0 %v5013
    %6236 = vmatprep.subr.mxu0 %v5018
    %6237 = vmatpush1.msra.mxu0 %v5017
    %6238 = vmatprep.subr.mxu0 %v5022
    %6239 = vmatpush1.msra.mxu0 %v5021
    %6240 = vmatprep.subr.mxu0 %v5026
    %6241 = vmatpush1.msra.mxu0 %v5025
    %6242 = vmatprep.subr.mxu0 %v5030
    %6243 = vmatpush1.msra.mxu0 %v5029
    %6244 = vmatprep.subr.mxu0 0.0
    %6245 = vmatpush1.msra.mxu0 0.0
    %6246 = vmatprep.subr.mxu0 0.0
    %6247 = vmatpush1.msra.mxu0 0.0
    %6248 = vmatprep.subr.mxu0 0.0
    %6249 = vmatpush1.msra.mxu0 0.0
    %6250 = vmatprep.subr.mxu0 0.0
    %6251 = vmatpush1.msra.mxu0 0.0
    %6252 = vmatprep.subr.mxu0 0.0
    %6253 = vmatpush1.msra.mxu0 0.0
    %6254 = vmatprep.subr.mxu0 0.0
    %6255 = vmatpush1.msra.mxu0 0.0
    %6256 = vmatprep.subr.mxu0 0.0
    %6257 = vmatpush1.msra.mxu0 0.0
    %6258 = vmatprep.subr.mxu0 0.0
    %6259 = vmatpush1.msra.mxu0 0.0
    %6260 = vmatprep.subr.mxu0 0.0
    %6261 = vmatpush1.msra.mxu0 0.0
    %6262 = vmatprep.subr.mxu0 0.0
    %6263 = vmatpush1.msra.mxu0 0.0
    %6264 = vmatprep.subr.mxu0 0.0
    %6265 = vmatpush1.msra.mxu0 0.0
    %6266 = vmatprep.subr.mxu0 0.0
    %6267 = vmatpush1.msra.mxu0 0.0
    %6268 = vmatprep.subr.mxu0 0.0
    %6269 = vmatpush1.msra.mxu0 0.0
    %6270 = vmatprep.subr.mxu0 0.0
    %6271 = vmatpush1.msra.mxu0 0.0
    %6272 = vmatprep.subr.mxu0 0.0
    %6273 = vmatpush1.msra.mxu0 0.0
    %6274 = vmatprep.subr.mxu0 0.0
    %6275 = vmatpush1.msra.mxu0 0.0
    %6276 = vmatprep.mubr.f32.mxu0 0.0
    %6277 = vmatmul.mubr.f32.gmra.mrb[0].mxu0 %v6139
    %v6278 = vpop.f32.mrb[0].mxu0
    %v6279 = vadd.f32 0.0, %v6278
    %v6280 = vpop.f32.mrb[0].mxu0
    %v6281 = vadd.f32 0.0, %v6280
    %6282 = vdwg.mxu0
    %v6287 = vrot.slane %v6208, 2
    %v6288 = vrot.slane %v6210, 2
    %v6289 = vrot.slane %v6279, 2
    %v6290 = vrot.slane %v6281, 2
    %v6295 = vadd.f32 %v4962, %v6287
    %v6296 = vadd.f32 %v4963, %v6288
    %v6297 = vadd.f32 %v4964, %v6289
    %v6298 = vadd.f32 %v4965, %v6290
    %v6299 = vxor.u32 %v6295, 2147483648
    %v6300 = vmul.f32 %v6299, 1.442695
    %v6301 = vpow.pop %v6300
    %v6302 = vadd.f32 %v6301, 1.0
    %v6303 = vrcp.pop %v6302
    %v6304 = vmul.f32 1.0, %v6303
    %v6305 = vxor.u32 %v6296, 2147483648
    %v6306 = vmul.f32 %v6305, 1.442695
    %v6307 = vpow.pop %v6306
    %v6308 = vadd.f32 %v6307, 1.0
    %v6309 = vrcp.pop %v6308
    %v6310 = vmul.f32 1.0, %v6309
    %v6311 = vtanh.pop %v6297
    %v6312 = vxor.u32 %v6298, 2147483648
    %v6313 = vmul.f32 %v6312, 1.442695
    %v6314 = vpow.pop %v6313
    %v6315 = vadd.f32 %v6314, 1.0
    %v6316 = vrcp.pop %v6315
    %v6317 = vmul.f32 1.0, %v6316
    %v6319 = vrot.slane %v6135, 7
    %v6321 = vmul.f32 %v6310, %v6319
    %v6322 = vmul.f32 %v6304, %v6311
    %v6323 = vadd.f32 %v6321, %v6322
    %v6324 = vtanh.pop %v6323
    %v6325 = vmul.f32 %v6317, %v6324
    %v6327 = vrot.slane %v6325, 6
    %6329 = vmatprep.subr.mxu0 %v4968
    %6330 = vmatpush1.msra.mxu0 %v4967
    %6331 = vmatprep.subr.mxu0 %v4972
    %6332 = vmatpush1.msra.mxu0 %v4971
    %6333 = vmatprep.subr.mxu0 %v4976
    %6334 = vmatpush1.msra.mxu0 %v4975
    %6335 = vmatprep.subr.mxu0 %v4980
    %6336 = vmatpush1.msra.mxu0 %v4979
    %6337 = vmatprep.subr.mxu0 %v4984
    %6338 = vmatpush1.msra.mxu0 %v4983
    %6339 = vmatprep.subr.mxu0 %v4988
    %6340 = vmatpush1.msra.mxu0 %v4987
    %6341 = vmatprep.subr.mxu0 %v4992
    %6342 = vmatpush1.msra.mxu0 %v4991
    %6343 = vmatprep.subr.mxu0 %v4996
    %6344 = vmatpush1.msra.mxu0 %v4995
    %6345 = vmatprep.subr.mxu0 %v5000
    %6346 = vmatpush1.msra.mxu0 %v4999
    %6347 = vmatprep.subr.mxu0 %v5004
    %6348 = vmatpush1.msra.mxu0 %v5003
    %6349 = vmatprep.subr.mxu0 %v5008
    %6350 = vmatpush1.msra.mxu0 %v5007
    %6351 = vmatprep.subr.mxu0 %v5012
    %6352 = vmatpush1.msra.mxu0 %v5011
    %6353 = vmatprep.subr.mxu0 %v5016
    %6354 = vmatpush1.msra.mxu0 %v5015
    %6355 = vmatprep.subr.mxu0 %v5020
    %6356 = vmatpush1.msra.mxu0 %v5019
    %6357 = vmatprep.subr.mxu0 %v5024
    %6358 = vmatpush1.msra.mxu0 %v5023
    %6359 = vmatprep.subr.mxu0 %v5028
    %6360 = vmatpush1.msra.mxu0 %v5027
    %6361 = vmatprep.subr.mxu0 0.0
    %6362 = vmatpush1.msra.mxu0 0.0
    %6363 = vmatprep.subr.mxu0 0.0
    %6364 = vmatpush1.msra.mxu0 0.0
    %6365 = vmatprep.subr.mxu0 0.0
    %6366 = vmatpush1.msra.mxu0 0.0
    %6367 = vmatprep.subr.mxu0 0.0
    %6368 = vmatpush1.msra.mxu0 0.0
    %6369 = vmatprep.subr.mxu0 0.0
    %6370 = vmatpush1.msra.mxu0 0.0
    %6371 = vmatprep.subr.mxu0 0.0
    %6372 = vmatpush1.msra.mxu0 0.0
    %6373 = vmatprep.subr.mxu0 0.0
    %6374 = vmatpush1.msra.mxu0 0.0
    %6375 = vmatprep.subr.mxu0 0.0
    %6376 = vmatpush1.msra.mxu0 0.0
    %6377 = vmatprep.subr.mxu0 0.0
    %6378 = vmatpush1.msra.mxu0 0.0
    %6379 = vmatprep.subr.mxu0 0.0
    %6380 = vmatpush1.msra.mxu0 0.0
    %6381 = vmatprep.subr.mxu0 0.0
    %6382 = vmatpush1.msra.mxu0 0.0
    %6383 = vmatprep.subr.mxu0 0.0
    %6384 = vmatpush1.msra.mxu0 0.0
    %6385 = vmatprep.subr.mxu0 0.0
    %6386 = vmatpush1.msra.mxu0 0.0
    %6387 = vmatprep.subr.mxu0 0.0
    %6388 = vmatpush1.msra.mxu0 0.0
    %6389 = vmatprep.subr.mxu0 0.0
    %6390 = vmatpush1.msra.mxu0 0.0
    %6391 = vmatprep.subr.mxu0 0.0
    %6392 = vmatpush1.msra.mxu0 0.0
    %6393 = vmatprep.mubr.f32.mxu0 0.0
    %6394 = vmatmul.mubr.f32.gmra.mrb[0].mxu0 %v6327
    %v6395 = vpop.f32.mrb[0].mxu0
    %v6396 = vadd.f32 0.0, %v6395
    %v6397 = vpop.f32.mrb[0].mxu0
    %v6398 = vadd.f32 0.0, %v6397
    %6399 = vdwg.mxu0
    %6400 = vmatprep.subr.mxu0 %v4970
    %6401 = vmatpush1.msra.mxu0 %v4969
    %6402 = vmatprep.subr.mxu0 %v4974
    %6403 = vmatpush1.msra.mxu0 %v4973
    %6404 = vmatprep.subr.mxu0 %v4978
    %6405 = vmatpush1.msra.mxu0 %v4977
    %6406 = vmatprep.subr.mxu0 %v4982
    %6407 = vmatpush1.msra.mxu0 %v4981
    %6408 = vmatprep.subr.mxu0 %v4986
    %6409 = vmatpush1.msra.mxu0 %v4985
    %6410 = vmatprep.subr.mxu0 %v4990
    %6411 = vmatpush1.msra.mxu0 %v4989
    %6412 = vmatprep.subr.mxu0 %v4994
    %6413 = vmatpush1.msra.mxu0 %v4993
    %6414 = vmatprep.subr.mxu0 %v4998
    %6415 = vmatpush1.msra.mxu0 %v4997
    %6416 = vmatprep.subr.mxu0 %v5002
    %6417 = vmatpush1.msra.mxu0 %v5001
    %6418 = vmatprep.subr.mxu0 %v5006
    %6419 = vmatpush1.msra.mxu0 %v5005
    %6420 = vmatprep.subr.mxu0 %v5010
    %6421 = vmatpush1.msra.mxu0 %v5009
    %6422 = vmatprep.subr.mxu0 %v5014
    %6423 = vmatpush1.msra.mxu0 %v5013
    %6424 = vmatprep.subr.mxu0 %v5018
    %6425 = vmatpush1.msra.mxu0 %v5017
    %6426 = vmatprep.subr.mxu0 %v5022
    %6427 = vmatpush1.msra.mxu0 %v5021
    %6428 = vmatprep.subr.mxu0 %v5026
    %6429 = vmatpush1.msra.mxu0 %v5025
    %6430 = vmatprep.subr.mxu0 %v5030
    %6431 = vmatpush1.msra.mxu0 %v5029
    %6432 = vmatprep.subr.mxu0 0.0
    %6433 = vmatpush1.msra.mxu0 0.0
    %6434 = vmatprep.subr.mxu0 0.0
    %6435 = vmatpush1.msra.mxu0 0.0
    %6436 = vmatprep.subr.mxu0 0.0
    %6437 = vmatpush1.msra.mxu0 0.0
    %6438 = vmatprep.subr.mxu0 0.0
    %6439 = vmatpush1.msra.mxu0 0.0
    %6440 = vmatprep.subr.mxu0 0.0
    %6441 = vmatpush1.msra.mxu0 0.0
    %6442 = vmatprep.subr.mxu0 0.0
    %6443 = vmatpush1.msra.mxu0 0.0
    %6444 = vmatprep.subr.mxu0 0.0
    %6445 = vmatpush1.msra.mxu0 0.0
    %6446 = vmatprep.subr.mxu0 0.0
    %6447 = vmatpush1.msra.mxu0 0.0
    %6448 = vmatprep.subr.mxu0 0.0
    %6449 = vmatpush1.msra.mxu0 0.0
    %6450 = vmatprep.subr.mxu0 0.0
    %6451 = vmatpush1.msra.mxu0 0.0
    %6452 = vmatprep.subr.mxu0 0.0
    %6453 = vmatpush1.msra.mxu0 0.0
    %6454 = vmatprep.subr.mxu0 0.0
    %6455 = vmatpush1.msra.mxu0 0.0
    %6456 = vmatprep.subr.mxu0 0.0
    %6457 = vmatpush1.msra.mxu0 0.0
    %6458 = vmatprep.subr.mxu0 0.0
    %6459 = vmatpush1.msra.mxu0 0.0
    %6460 = vmatprep.subr.mxu0 0.0
    %6461 = vmatpush1.msra.mxu0 0.0
    %6462 = vmatprep.subr.mxu0 0.0
    %6463 = vmatpush1.msra.mxu0 0.0
    %6464 = vmatprep.mubr.f32.mxu0 0.0
    %6465 = vmatmul.mubr.f32.gmra.mrb[0].mxu0 %v6327
    %v6466 = vpop.f32.mrb[0].mxu0
    %v6467 = vadd.f32 0.0, %v6466
    %v6468 = vpop.f32.mrb[0].mxu0
    %v6469 = vadd.f32 0.0, %v6468
    %6470 = vdwg.mxu0
    %v6475 = vrot.slane %v6396, 1
    %v6476 = vrot.slane %v6398, 1
    %v6477 = vrot.slane %v6467, 1
    %v6478 = vrot.slane %v6469, 1
    %v6483 = vadd.f32 %v4962, %v6475
    %v6484 = vadd.f32 %v4963, %v6476
    %v6485 = vadd.f32 %v4964, %v6477
    %v6486 = vadd.f32 %v4965, %v6478
    %v6487 = vxor.u32 %v6483, 2147483648
    %v6488 = vmul.f32 %v6487, 1.442695
    %v6489 = vpow.pop %v6488
    %v6490 = vadd.f32 %v6489, 1.0
    %v6491 = vrcp.pop %v6490
    %v6492 = vmul.f32 1.0, %v6491
    %v6493 = vxor.u32 %v6484, 2147483648
    %v6494 = vmul.f32 %v6493, 1.442695
    %v6495 = vpow.pop %v6494
    %v6496 = vadd.f32 %v6495, 1.0
    %v6497 = vrcp.pop %v6496
    %v6498 = vmul.f32 1.0, %v6497
    %v6499 = vtanh.pop %v6485
    %v6500 = vxor.u32 %v6486, 2147483648
    %v6501 = vmul.f32 %v6500, 1.442695
    %v6502 = vpow.pop %v6501
    %v6503 = vadd.f32 %v6502, 1.0
    %v6504 = vrcp.pop %v6503
    %v6505 = vmul.f32 1.0, %v6504
    %v6507 = vrot.slane %v6323, 7
    %v6509 = vmul.f32 %v6498, %v6507
    %v6510 = vmul.f32 %v6492, %v6499
    %v6511 = vadd.f32 %v6509, %v6510
    %v6512 = vtanh.pop %v6511
    %v6513 = vmul.f32 %v6505, %v6512
    %v6514 = vsel %vm2464, %v5200, %v5385
    %v6515 = vsel %vm2466, %v6514, %v5573
    %v6516 = vsel %vm2468, %v6515, %v5761
    %v6517 = vsel %vm2470, %v6516, %v5949
    %v6518 = vsel %vm2472, %v6517, %v6137
    %v6519 = vsel %vm2474, %v6518, %v6325
    %v6520 = vsel %vm2476, %v6519, %v6513
    %s6521 = scalar_lea.vmem [#allocation7], 512
    %v6522 = vld [vmem:[%s6521] sm:$0xff]
    %v6523 = vld [vmem:[%s6521 + $0x8] sm:$0xff]
    %v6524 = vld [vmem:[%s6521 + $0x10] sm:$0xff]
    %v6525 = vld [vmem:[%s6521 + $0x18] sm:$0xff]
    %v6526 = vld [vmem:[%s6521 + $0x20] sm:$0xff]
    %v6527 = vld [vmem:[%s6521 + $0x28] sm:$0xff]
    %v6528 = vld [vmem:[%s6521 + $0x30] sm:$0xff]
    %v6529 = vld [vmem:[%s6521 + $0x38] sm:$0xff]
    %v6530 = vld [vmem:[%s6521 + $0x40] sm:$0xff]
    %v6531 = vld [vmem:[%s6521 + $0x48] sm:$0xff]
    %v6532 = vld [vmem:[%s6521 + $0x50] sm:$0xff]
    %v6533 = vld [vmem:[%s6521 + $0x58] sm:$0xff]
    %v6534 = vld [vmem:[%s6521 + $0x60] sm:$0xff]
    %v6535 = vld [vmem:[%s6521 + $0x68] sm:$0xff]
    %v6536 = vld [vmem:[%s6521 + $0x70] sm:$0xff]
    %v6537 = vld [vmem:[%s6521 + $0x78] sm:$0xff]
    %v6538 = vld [vmem:[%s6521 + $0x80] sm:$0xff]
    %v6539 = vld [vmem:[%s6521 + $0x88] sm:$0xff]
    %v6540 = vld [vmem:[%s6521 + $0x90] sm:$0xff]
    %v6541 = vld [vmem:[%s6521 + $0x98] sm:$0xff]
    %v6542 = vld [vmem:[%s6521 + $0xa0] sm:$0xff]
    %v6543 = vld [vmem:[%s6521 + $0xa8] sm:$0xff]
    %v6544 = vld [vmem:[%s6521 + $0xb0] sm:$0xff]
    %v6545 = vld [vmem:[%s6521 + $0xb8] sm:$0xff]
    %v6546 = vld [vmem:[%s6521 + $0xc0] sm:$0xff]
    %v6547 = vld [vmem:[%s6521 + $0xc8] sm:$0xff]
    %v6548 = vld [vmem:[%s6521 + $0xd0] sm:$0xff]
    %v6549 = vld [vmem:[%s6521 + $0xd8] sm:$0xff]
    %v6550 = vld [vmem:[%s6521 + $0xe0] sm:$0xff]
    %v6551 = vld [vmem:[%s6521 + $0xe8] sm:$0xff]
    %v6552 = vld [vmem:[%s6521 + $0xf0] sm:$0xff]
    %v6553 = vld [vmem:[%s6521 + $0xf8] sm:$0xff]
    %v6554 = vld [vmem:[%s6521 + $0x100] sm:$0xff]
    %v6555 = vld [vmem:[%s6521 + $0x108] sm:$0xff]
    %v6556 = vld [vmem:[%s6521 + $0x110] sm:$0xff]
    %v6557 = vld [vmem:[%s6521 + $0x118] sm:$0xff]
    %v6558 = vld [vmem:[%s6521 + $0x120] sm:$0xff]
    %v6559 = vld [vmem:[%s6521 + $0x128] sm:$0xff]
    %v6560 = vld [vmem:[%s6521 + $0x130] sm:$0xff]
    %v6561 = vld [vmem:[%s6521 + $0x138] sm:$0xff]
    %v6562 = vld [vmem:[%s6521 + $0x140] sm:$0xff]
    %v6563 = vld [vmem:[%s6521 + $0x148] sm:$0xff]
    %v6564 = vld [vmem:[%s6521 + $0x150] sm:$0xff]
    %v6565 = vld [vmem:[%s6521 + $0x158] sm:$0xff]
    %v6566 = vld [vmem:[%s6521 + $0x160] sm:$0xff]
    %v6567 = vld [vmem:[%s6521 + $0x168] sm:$0xff]
    %v6568 = vld [vmem:[%s6521 + $0x170] sm:$0xff]
    %v6569 = vld [vmem:[%s6521 + $0x178] sm:$0xff]
    %v6570 = vld [vmem:[%s6521 + $0x180] sm:$0xff]
    %v6571 = vld [vmem:[%s6521 + $0x188] sm:$0xff]
    %v6572 = vld [vmem:[%s6521 + $0x190] sm:$0xff]
    %v6573 = vld [vmem:[%s6521 + $0x198] sm:$0xff]
    %v6574 = vld [vmem:[%s6521 + $0x1a0] sm:$0xff]
    %v6575 = vld [vmem:[%s6521 + $0x1a8] sm:$0xff]
    %v6576 = vld [vmem:[%s6521 + $0x1b0] sm:$0xff]
    %v6577 = vld [vmem:[%s6521 + $0x1b8] sm:$0xff]
    %v6578 = vld [vmem:[%s6521 + $0x1c0] sm:$0xff]
    %v6579 = vld [vmem:[%s6521 + $0x1c8] sm:$0xff]
    %v6580 = vld [vmem:[%s6521 + $0x1d0] sm:$0xff]
    %v6581 = vld [vmem:[%s6521 + $0x1d8] sm:$0xff]
    %v6582 = vld [vmem:[%s6521 + $0x1e0] sm:$0xff]
    %v6583 = vld [vmem:[%s6521 + $0x1e8] sm:$0xff]
    %v6584 = vld [vmem:[%s6521 + $0x1f0] sm:$0xff]
    %v6585 = vld [vmem:[%s6521 + $0x1f8] sm:$0xff]
    %s6586 = scalar_lea.vmem %s11, 12
    %v6587 = vld [vmem:[%s6586] sm:$0xf]
    %v6589 = vlaneseq
    %v6590 = vshrl.u32 %v6589, 7
    %v6591 = vsub.s32 0, %v6590
    %v6592 = vrot.slane %v6587, %v6591
    %v6593 = vlaneseq
    %v6594 = vshrl.u32 %v6593, 7
    %v6595 = vsub.s32 1, %v6594
    %v6596 = vrot.slane %v6587, %v6595
    %v6597 = vlaneseq
    %v6598 = vshrl.u32 %v6597, 7
    %v6599 = vsub.s32 2, %v6598
    %v6600 = vrot.slane %v6587, %v6599
    %v6601 = vlaneseq
    %v6602 = vshrl.u32 %v6601, 7
    %v6603 = vsub.s32 3, %v6602
    %v6604 = vrot.slane %v6587, %v6603
    %6609 = vmatprep.subr.mxu0 %v6523
    %6610 = vmatpush1.msra.mxu0 %v6522
    %6611 = vmatprep.subr.mxu0 %v6527
    %6612 = vmatpush1.msra.mxu0 %v6526
    %6613 = vmatprep.subr.mxu0 %v6531
    %6614 = vmatpush1.msra.mxu0 %v6530
    %6615 = vmatprep.subr.mxu0 %v6535
    %6616 = vmatpush1.msra.mxu0 %v6534
    %6617 = vmatprep.subr.mxu0 %v6539
    %6618 = vmatpush1.msra.mxu0 %v6538
    %6619 = vmatprep.subr.mxu0 %v6543
    %6620 = vmatpush1.msra.mxu0 %v6542
    %6621 = vmatprep.subr.mxu0 %v6547
    %6622 = vmatpush1.msra.mxu0 %v6546
    %6623 = vmatprep.subr.mxu0 %v6551
    %6624 = vmatpush1.msra.mxu0 %v6550
    %6625 = vmatprep.subr.mxu0 %v6555
    %6626 = vmatpush1.msra.mxu0 %v6554
    %6627 = vmatprep.subr.mxu0 %v6559
    %6628 = vmatpush1.msra.mxu0 %v6558
    %6629 = vmatprep.subr.mxu0 %v6563
    %6630 = vmatpush1.msra.mxu0 %v6562
    %6631 = vmatprep.subr.mxu0 %v6567
    %6632 = vmatpush1.msra.mxu0 %v6566
    %6633 = vmatprep.subr.mxu0 %v6571
    %6634 = vmatpush1.msra.mxu0 %v6570
    %6635 = vmatprep.subr.mxu0 %v6575
    %6636 = vmatpush1.msra.mxu0 %v6574
    %6637 = vmatprep.subr.mxu0 %v6579
    %6638 = vmatpush1.msra.mxu0 %v6578
    %6639 = vmatprep.subr.mxu0 %v6583
    %6640 = vmatpush1.msra.mxu0 %v6582
    %6641 = vmatprep.subr.mxu0 0.0
    %6642 = vmatpush1.msra.mxu0 0.0
    %6643 = vmatprep.subr.mxu0 0.0
    %6644 = vmatpush1.msra.mxu0 0.0
    %6645 = vmatprep.subr.mxu0 0.0
    %6646 = vmatpush1.msra.mxu0 0.0
    %6647 = vmatprep.subr.mxu0 0.0
    %6648 = vmatpush1.msra.mxu0 0.0
    %6649 = vmatprep.subr.mxu0 0.0
    %6650 = vmatpush1.msra.mxu0 0.0
    %6651 = vmatprep.subr.mxu0 0.0
    %6652 = vmatpush1.msra.mxu0 0.0
    %6653 = vmatprep.subr.mxu0 0.0
    %6654 = vmatpush1.msra.mxu0 0.0
    %6655 = vmatprep.subr.mxu0 0.0
    %6656 = vmatpush1.msra.mxu0 0.0
    %6657 = vmatprep.subr.mxu0 0.0
    %6658 = vmatpush1.msra.mxu0 0.0
    %6659 = vmatprep.subr.mxu0 0.0
    %6660 = vmatpush1.msra.mxu0 0.0
    %6661 = vmatprep.subr.mxu0 0.0
    %6662 = vmatpush1.msra.mxu0 0.0
    %6663 = vmatprep.subr.mxu0 0.0
    %6664 = vmatpush1.msra.mxu0 0.0
    %6665 = vmatprep.subr.mxu0 0.0
    %6666 = vmatpush1.msra.mxu0 0.0
    %6667 = vmatprep.subr.mxu0 0.0
    %6668 = vmatpush1.msra.mxu0 0.0
    %6669 = vmatprep.subr.mxu0 0.0
    %6670 = vmatpush1.msra.mxu0 0.0
    %6671 = vmatprep.subr.mxu0 0.0
    %6672 = vmatpush1.msra.mxu0 0.0
    %6673 = vmatprep.mubr.f32.mxu0 0.0
    %6674 = vmatmul.mubr.f32.gmra.mrb[0].mxu0 %v6520
    %v6675 = vpop.f32.mrb[0].mxu0
    %v6676 = vadd.f32 %v6592, %v6675
    %v6677 = vpop.f32.mrb[0].mxu0
    %v6678 = vadd.f32 %v6596, %v6677
    %6679 = vdwg.mxu0
    %6680 = vmatprep.subr.mxu0 %v6525
    %6681 = vmatpush1.msra.mxu0 %v6524
    %6682 = vmatprep.subr.mxu0 %v6529
    %6683 = vmatpush1.msra.mxu0 %v6528
    %6684 = vmatprep.subr.mxu0 %v6533
    %6685 = vmatpush1.msra.mxu0 %v6532
    %6686 = vmatprep.subr.mxu0 %v6537
    %6687 = vmatpush1.msra.mxu0 %v6536
    %6688 = vmatprep.subr.mxu0 %v6541
    %6689 = vmatpush1.msra.mxu0 %v6540
    %6690 = vmatprep.subr.mxu0 %v6545
    %6691 = vmatpush1.msra.mxu0 %v6544
    %6692 = vmatprep.subr.mxu0 %v6549
    %6693 = vmatpush1.msra.mxu0 %v6548
    %6694 = vmatprep.subr.mxu0 %v6553
    %6695 = vmatpush1.msra.mxu0 %v6552
    %6696 = vmatprep.subr.mxu0 %v6557
    %6697 = vmatpush1.msra.mxu0 %v6556
    %6698 = vmatprep.subr.mxu0 %v6561
    %6699 = vmatpush1.msra.mxu0 %v6560
    %6700 = vmatprep.subr.mxu0 %v6565
    %6701 = vmatpush1.msra.mxu0 %v6564
    %6702 = vmatprep.subr.mxu0 %v6569
    %6703 = vmatpush1.msra.mxu0 %v6568
    %6704 = vmatprep.subr.mxu0 %v6573
    %6705 = vmatpush1.msra.mxu0 %v6572
    %6706 = vmatprep.subr.mxu0 %v6577
    %6707 = vmatpush1.msra.mxu0 %v6576
    %6708 = vmatprep.subr.mxu0 %v6581
    %6709 = vmatpush1.msra.mxu0 %v6580
    %6710 = vmatprep.subr.mxu0 %v6585
    %6711 = vmatpush1.msra.mxu0 %v6584
    %6712 = vmatprep.subr.mxu0 0.0
    %6713 = vmatpush1.msra.mxu0 0.0
    %6714 = vmatprep.subr.mxu0 0.0
    %6715 = vmatpush1.msra.mxu0 0.0
    %6716 = vmatprep.subr.mxu0 0.0
    %6717 = vmatpush1.msra.mxu0 0.0
    %6718 = vmatprep.subr.mxu0 0.0
    %6719 = vmatpush1.msra.mxu0 0.0
    %6720 = vmatprep.subr.mxu0 0.0
    %6721 = vmatpush1.msra.mxu0 0.0
    %6722 = vmatprep.subr.mxu0 0.0
    %6723 = vmatpush1.msra.mxu0 0.0
    %6724 = vmatprep.subr.mxu0 0.0
    %6725 = vmatpush1.msra.mxu0 0.0
    %6726 = vmatprep.subr.mxu0 0.0
    %6727 = vmatpush1.msra.mxu0 0.0
    %6728 = vmatprep.subr.mxu0 0.0
    %6729 = vmatpush1.msra.mxu0 0.0
    %6730 = vmatprep.subr.mxu0 0.0
    %6731 = vmatpush1.msra.mxu0 0.0
    %6732 = vmatprep.subr.mxu0 0.0
    %6733 = vmatpush1.msra.mxu0 0.0
    %6734 = vmatprep.subr.mxu0 0.0
    %6735 = vmatpush1.msra.mxu0 0.0
    %6736 = vmatprep.subr.mxu0 0.0
    %6737 = vmatpush1.msra.mxu0 0.0
    %6738 = vmatprep.subr.mxu0 0.0
    %6739 = vmatpush1.msra.mxu0 0.0
    %6740 = vmatprep.subr.mxu0 0.0
    %6741 = vmatpush1.msra.mxu0 0.0
    %6742 = vmatprep.subr.mxu0 0.0
    %6743 = vmatpush1.msra.mxu0 0.0
    %6744 = vmatprep.mubr.f32.mxu0 0.0
    %6745 = vmatmul.mubr.f32.gmra.mrb[0].mxu0 %v6520
    %v6746 = vpop.f32.mrb[0].mxu0
    %v6747 = vadd.f32 %v6600, %v6746
    %v6748 = vpop.f32.mrb[0].mxu0
    %v6749 = vadd.f32 %v6604, %v6748
    %6750 = vdwg.mxu0
    %s6751 = scalar_lea.vmem [#allocation9], 1536
    %v6752 = vld [vmem:[%s6751] sm:$0xff]
    %v6753 = vld [vmem:[%s6751 + $0x8] sm:$0xff]
    %v6754 = vld [vmem:[%s6751 + $0x10] sm:$0xff]
    %v6755 = vld [vmem:[%s6751 + $0x18] sm:$0xff]
    %v6756 = vld [vmem:[%s6751 + $0x20] sm:$0xff]
    %v6757 = vld [vmem:[%s6751 + $0x28] sm:$0xff]
    %v6758 = vld [vmem:[%s6751 + $0x30] sm:$0xff]
    %v6759 = vld [vmem:[%s6751 + $0x38] sm:$0xff]
    %v6760 = vld [vmem:[%s6751 + $0x40] sm:$0xff]
    %v6761 = vld [vmem:[%s6751 + $0x48] sm:$0xff]
    %v6762 = vld [vmem:[%s6751 + $0x50] sm:$0xff]
    %v6763 = vld [vmem:[%s6751 + $0x58] sm:$0xff]
    %v6764 = vld [vmem:[%s6751 + $0x60] sm:$0xff]
    %v6765 = vld [vmem:[%s6751 + $0x68] sm:$0xff]
    %v6766 = vld [vmem:[%s6751 + $0x70] sm:$0xff]
    %v6767 = vld [vmem:[%s6751 + $0x78] sm:$0xff]
    %v6768 = vld [vmem:[%s6751 + $0x80] sm:$0xff]
    %v6769 = vld [vmem:[%s6751 + $0x88] sm:$0xff]
    %v6770 = vld [vmem:[%s6751 + $0x90] sm:$0xff]
    %v6771 = vld [vmem:[%s6751 + $0x98] sm:$0xff]
    %v6772 = vld [vmem:[%s6751 + $0xa0] sm:$0xff]
    %v6773 = vld [vmem:[%s6751 + $0xa8] sm:$0xff]
    %v6774 = vld [vmem:[%s6751 + $0xb0] sm:$0xff]
    %v6775 = vld [vmem:[%s6751 + $0xb8] sm:$0xff]
    %v6776 = vld [vmem:[%s6751 + $0xc0] sm:$0xff]
    %v6777 = vld [vmem:[%s6751 + $0xc8] sm:$0xff]
    %v6778 = vld [vmem:[%s6751 + $0xd0] sm:$0xff]
    %v6779 = vld [vmem:[%s6751 + $0xd8] sm:$0xff]
    %v6780 = vld [vmem:[%s6751 + $0xe0] sm:$0xff]
    %v6781 = vld [vmem:[%s6751 + $0xe8] sm:$0xff]
    %v6782 = vld [vmem:[%s6751 + $0xf0] sm:$0xff]
    %v6783 = vld [vmem:[%s6751 + $0xf8] sm:$0xff]
    %v6784 = vld [vmem:[%s6751 + $0x100] sm:$0xff]
    %v6785 = vld [vmem:[%s6751 + $0x108] sm:$0xff]
    %v6786 = vld [vmem:[%s6751 + $0x110] sm:$0xff]
    %v6787 = vld [vmem:[%s6751 + $0x118] sm:$0xff]
    %v6788 = vld [vmem:[%s6751 + $0x120] sm:$0xff]
    %v6789 = vld [vmem:[%s6751 + $0x128] sm:$0xff]
    %v6790 = vld [vmem:[%s6751 + $0x130] sm:$0xff]
    %v6791 = vld [vmem:[%s6751 + $0x138] sm:$0xff]
    %v6792 = vld [vmem:[%s6751 + $0x140] sm:$0xff]
    %v6793 = vld [vmem:[%s6751 + $0x148] sm:$0xff]
    %v6794 = vld [vmem:[%s6751 + $0x150] sm:$0xff]
    %v6795 = vld [vmem:[%s6751 + $0x158] sm:$0xff]
    %v6796 = vld [vmem:[%s6751 + $0x160] sm:$0xff]
    %v6797 = vld [vmem:[%s6751 + $0x168] sm:$0xff]
    %v6798 = vld [vmem:[%s6751 + $0x170] sm:$0xff]
    %v6799 = vld [vmem:[%s6751 + $0x178] sm:$0xff]
    %v6800 = vld [vmem:[%s6751 + $0x180] sm:$0xff]
    %v6801 = vld [vmem:[%s6751 + $0x188] sm:$0xff]
    %v6802 = vld [vmem:[%s6751 + $0x190] sm:$0xff]
    %v6803 = vld [vmem:[%s6751 + $0x198] sm:$0xff]
    %v6804 = vld [vmem:[%s6751 + $0x1a0] sm:$0xff]
    %v6805 = vld [vmem:[%s6751 + $0x1a8] sm:$0xff]
    %v6806 = vld [vmem:[%s6751 + $0x1b0] sm:$0xff]
    %v6807 = vld [vmem:[%s6751 + $0x1b8] sm:$0xff]
    %v6808 = vld [vmem:[%s6751 + $0x1c0] sm:$0xff]
    %v6809 = vld [vmem:[%s6751 + $0x1c8] sm:$0xff]
    %v6810 = vld [vmem:[%s6751 + $0x1d0] sm:$0xff]
    %v6811 = vld [vmem:[%s6751 + $0x1d8] sm:$0xff]
    %v6812 = vld [vmem:[%s6751 + $0x1e0] sm:$0xff]
    %v6813 = vld [vmem:[%s6751 + $0x1e8] sm:$0xff]
    %v6814 = vld [vmem:[%s6751 + $0x1f0] sm:$0xff]
    %v6815 = vld [vmem:[%s6751 + $0x1f8] sm:$0xff]
    %6816 = vmatprep.subr.mxu0 %v6753
    %6817 = vmatpush1.msra.mxu0 %v6752
    %6818 = vmatprep.subr.mxu0 %v6757
    %6819 = vmatpush1.msra.mxu0 %v6756
    %6820 = vmatprep.subr.mxu0 %v6761
    %6821 = vmatpush1.msra.mxu0 %v6760
    %6822 = vmatprep.subr.mxu0 %v6765
    %6823 = vmatpush1.msra.mxu0 %v6764
    %6824 = vmatprep.subr.mxu0 %v6769
    %6825 = vmatpush1.msra.mxu0 %v6768
    %6826 = vmatprep.subr.mxu0 %v6773
    %6827 = vmatpush1.msra.mxu0 %v6772
    %6828 = vmatprep.subr.mxu0 %v6777
    %6829 = vmatpush1.msra.mxu0 %v6776
    %6830 = vmatprep.subr.mxu0 %v6781
    %6831 = vmatpush1.msra.mxu0 %v6780
    %6832 = vmatprep.subr.mxu0 %v6785
    %6833 = vmatpush1.msra.mxu0 %v6784
    %6834 = vmatprep.subr.mxu0 %v6789
    %6835 = vmatpush1.msra.mxu0 %v6788
    %6836 = vmatprep.subr.mxu0 %v6793
    %6837 = vmatpush1.msra.mxu0 %v6792
    %6838 = vmatprep.subr.mxu0 %v6797
    %6839 = vmatpush1.msra.mxu0 %v6796
    %6840 = vmatprep.subr.mxu0 %v6801
    %6841 = vmatpush1.msra.mxu0 %v6800
    %6842 = vmatprep.subr.mxu0 %v6805
    %6843 = vmatpush1.msra.mxu0 %v6804
    %6844 = vmatprep.subr.mxu0 %v6809
    %6845 = vmatpush1.msra.mxu0 %v6808
    %6846 = vmatprep.subr.mxu0 %v6813
    %6847 = vmatpush1.msra.mxu0 %v6812
    %6848 = vmatprep.subr.mxu0 0.0
    %6849 = vmatpush1.msra.mxu0 0.0
    %6850 = vmatprep.subr.mxu0 0.0
    %6851 = vmatpush1.msra.mxu0 0.0
    %6852 = vmatprep.subr.mxu0 0.0
    %6853 = vmatpush1.msra.mxu0 0.0
    %6854 = vmatprep.subr.mxu0 0.0
    %6855 = vmatpush1.msra.mxu0 0.0
    %6856 = vmatprep.subr.mxu0 0.0
    %6857 = vmatpush1.msra.mxu0 0.0
    %6858 = vmatprep.subr.mxu0 0.0
    %6859 = vmatpush1.msra.mxu0 0.0
    %6860 = vmatprep.subr.mxu0 0.0
    %6861 = vmatpush1.msra.mxu0 0.0
    %6862 = vmatprep.subr.mxu0 0.0
    %6863 = vmatpush1.msra.mxu0 0.0
    %6864 = vmatprep.subr.mxu0 0.0
    %6865 = vmatpush1.msra.mxu0 0.0
    %6866 = vmatprep.subr.mxu0 0.0
    %6867 = vmatpush1.msra.mxu0 0.0
    %6868 = vmatprep.subr.mxu0 0.0
    %6869 = vmatpush1.msra.mxu0 0.0
    %6870 = vmatprep.subr.mxu0 0.0
    %6871 = vmatpush1.msra.mxu0 0.0
    %6872 = vmatprep.subr.mxu0 0.0
    %6873 = vmatpush1.msra.mxu0 0.0
    %6874 = vmatprep.subr.mxu0 0.0
    %6875 = vmatpush1.msra.mxu0 0.0
    %6876 = vmatprep.subr.mxu0 0.0
    %6877 = vmatpush1.msra.mxu0 0.0
    %6878 = vmatprep.subr.mxu0 0.0
    %6879 = vmatpush1.msra.mxu0 0.0
    %6880 = vmatprep.mubr.f32.mxu0 0.0
    %6881 = vmatmul.mubr.f32.gmra.mrb[0].mxu0 0.0
    %v6882 = vpop.f32.mrb[0].mxu0
    %v6883 = vadd.f32 0.0, %v6882
    %v6884 = vpop.f32.mrb[0].mxu0
    %v6885 = vadd.f32 0.0, %v6884
    %6886 = vdwg.mxu0
    %6887 = vmatprep.subr.mxu0 %v6755
    %6888 = vmatpush1.msra.mxu0 %v6754
    %6889 = vmatprep.subr.mxu0 %v6759
    %6890 = vmatpush1.msra.mxu0 %v6758
    %6891 = vmatprep.subr.mxu0 %v6763
    %6892 = vmatpush1.msra.mxu0 %v6762
    %6893 = vmatprep.subr.mxu0 %v6767
    %6894 = vmatpush1.msra.mxu0 %v6766
    %6895 = vmatprep.subr.mxu0 %v6771
    %6896 = vmatpush1.msra.mxu0 %v6770
    %6897 = vmatprep.subr.mxu0 %v6775
    %6898 = vmatpush1.msra.mxu0 %v6774
    %6899 = vmatprep.subr.mxu0 %v6779
    %6900 = vmatpush1.msra.mxu0 %v6778
    %6901 = vmatprep.subr.mxu0 %v6783
    %6902 = vmatpush1.msra.mxu0 %v6782
    %6903 = vmatprep.subr.mxu0 %v6787
    %6904 = vmatpush1.msra.mxu0 %v6786
    %6905 = vmatprep.subr.mxu0 %v6791
    %6906 = vmatpush1.msra.mxu0 %v6790
    %6907 = vmatprep.subr.mxu0 %v6795
    %6908 = vmatpush1.msra.mxu0 %v6794
    %6909 = vmatprep.subr.mxu0 %v6799
    %6910 = vmatpush1.msra.mxu0 %v6798
    %6911 = vmatprep.subr.mxu0 %v6803
    %6912 = vmatpush1.msra.mxu0 %v6802
    %6913 = vmatprep.subr.mxu0 %v6807
    %6914 = vmatpush1.msra.mxu0 %v6806
    %6915 = vmatprep.subr.mxu0 %v6811
    %6916 = vmatpush1.msra.mxu0 %v6810
    %6917 = vmatprep.subr.mxu0 %v6815
    %6918 = vmatpush1.msra.mxu0 %v6814
    %6919 = vmatprep.subr.mxu0 0.0
    %6920 = vmatpush1.msra.mxu0 0.0
    %6921 = vmatprep.subr.mxu0 0.0
    %6922 = vmatpush1.msra.mxu0 0.0
    %6923 = vmatprep.subr.mxu0 0.0
    %6924 = vmatpush1.msra.mxu0 0.0
    %6925 = vmatprep.subr.mxu0 0.0
    %6926 = vmatpush1.msra.mxu0 0.0
    %6927 = vmatprep.subr.mxu0 0.0
    %6928 = vmatpush1.msra.mxu0 0.0
    %6929 = vmatprep.subr.mxu0 0.0
    %6930 = vmatpush1.msra.mxu0 0.0
    %6931 = vmatprep.subr.mxu0 0.0
    %6932 = vmatpush1.msra.mxu0 0.0
    %6933 = vmatprep.subr.mxu0 0.0
    %6934 = vmatpush1.msra.mxu0 0.0
    %6935 = vmatprep.subr.mxu0 0.0
    %6936 = vmatpush1.msra.mxu0 0.0
    %6937 = vmatprep.subr.mxu0 0.0
    %6938 = vmatpush1.msra.mxu0 0.0
    %6939 = vmatprep.subr.mxu0 0.0
    %6940 = vmatpush1.msra.mxu0 0.0
    %6941 = vmatprep.subr.mxu0 0.0
    %6942 = vmatpush1.msra.mxu0 0.0
    %6943 = vmatprep.subr.mxu0 0.0
    %6944 = vmatpush1.msra.mxu0 0.0
    %6945 = vmatprep.subr.mxu0 0.0
    %6946 = vmatpush1.msra.mxu0 0.0
    %6947 = vmatprep.subr.mxu0 0.0
    %6948 = vmatpush1.msra.mxu0 0.0
    %6949 = vmatprep.subr.mxu0 0.0
    %6950 = vmatpush1.msra.mxu0 0.0
    %6951 = vmatprep.mubr.f32.mxu0 0.0
    %6952 = vmatmul.mubr.f32.gmra.mrb[0].mxu0 0.0
    %v6953 = vpop.f32.mrb[0].mxu0
    %v6954 = vadd.f32 0.0, %v6953
    %v6955 = vpop.f32.mrb[0].mxu0
    %v6956 = vadd.f32 0.0, %v6955
    %6957 = vdwg.mxu0
    %v6958 = vadd.f32 %v6676, %v6883
    %v6959 = vadd.f32 %v6678, %v6885
    %v6960 = vadd.f32 %v6747, %v6954
    %v6961 = vadd.f32 %v6749, %v6956
    %v6962 = vxor.u32 %v6958, 2147483648
    %v6963 = vmul.f32 %v6962, 1.442695
    %v6964 = vpow.pop %v6963
    %v6965 = vadd.f32 %v6964, 1.0
    %v6966 = vrcp.pop %v6965
    %v6967 = vmul.f32 1.0, %v6966
    %v6968 = vxor.u32 %v6959, 2147483648
    %v6969 = vmul.f32 %v6968, 1.442695
    %v6970 = vpow.pop %v6969
    %v6971 = vadd.f32 %v6970, 1.0
    %v6972 = vrcp.pop %v6971
    %v6973 = vmul.f32 1.0, %v6972
    %v6974 = vtanh.pop %v6960
    %v6975 = vxor.u32 %v6961, 2147483648
    %v6976 = vmul.f32 %v6975, 1.442695
    %v6977 = vpow.pop %v6976
    %v6978 = vadd.f32 %v6977, 1.0
    %v6979 = vrcp.pop %v6978
    %v6980 = vmul.f32 1.0, %v6979
    %v6981 = vmul.f32 %v6973, 0.0
    %v6982 = vmul.f32 %v6967, %v6974
    %v6983 = vadd.f32 %v6981, %v6982
    %v6984 = vtanh.pop %v6983
    %v6985 = vmul.f32 %v6980, %v6984
    %6986 = vmatprep.subr.mxu0 %v6753
    %6987 = vmatpush1.msra.mxu0 %v6752
    %6988 = vmatprep.subr.mxu0 %v6757
    %6989 = vmatpush1.msra.mxu0 %v6756
    %6990 = vmatprep.subr.mxu0 %v6761
    %6991 = vmatpush1.msra.mxu0 %v6760
    %6992 = vmatprep.subr.mxu0 %v6765
    %6993 = vmatpush1.msra.mxu0 %v6764
    %6994 = vmatprep.subr.mxu0 %v6769
    %6995 = vmatpush1.msra.mxu0 %v6768
    %6996 = vmatprep.subr.mxu0 %v6773
    %6997 = vmatpush1.msra.mxu0 %v6772
    %6998 = vmatprep.subr.mxu0 %v6777
    %6999 = vmatpush1.msra.mxu0 %v6776
    %7000 = vmatprep.subr.mxu0 %v6781
    %7001 = vmatpush1.msra.mxu0 %v6780
    %7002 = vmatprep.subr.mxu0 %v6785
    %7003 = vmatpush1.msra.mxu0 %v6784
    %7004 = vmatprep.subr.mxu0 %v6789
    %7005 = vmatpush1.msra.mxu0 %v6788
    %7006 = vmatprep.subr.mxu0 %v6793
    %7007 = vmatpush1.msra.mxu0 %v6792
    %7008 = vmatprep.subr.mxu0 %v6797
    %7009 = vmatpush1.msra.mxu0 %v6796
    %7010 = vmatprep.subr.mxu0 %v6801
    %7011 = vmatpush1.msra.mxu0 %v6800
    %7012 = vmatprep.subr.mxu0 %v6805
    %7013 = vmatpush1.msra.mxu0 %v6804
    %7014 = vmatprep.subr.mxu0 %v6809
    %7015 = vmatpush1.msra.mxu0 %v6808
    %7016 = vmatprep.subr.mxu0 %v6813
    %7017 = vmatpush1.msra.mxu0 %v6812
    %7018 = vmatprep.subr.mxu0 0.0
    %7019 = vmatpush1.msra.mxu0 0.0
    %7020 = vmatprep.subr.mxu0 0.0
    %7021 = vmatpush1.msra.mxu0 0.0
    %7022 = vmatprep.subr.mxu0 0.0
    %7023 = vmatpush1.msra.mxu0 0.0
    %7024 = vmatprep.subr.mxu0 0.0
    %7025 = vmatpush1.msra.mxu0 0.0
    %7026 = vmatprep.subr.mxu0 0.0
    %7027 = vmatpush1.msra.mxu0 0.0
    %7028 = vmatprep.subr.mxu0 0.0
    %7029 = vmatpush1.msra.mxu0 0.0
    %7030 = vmatprep.subr.mxu0 0.0
    %7031 = vmatpush1.msra.mxu0 0.0
    %7032 = vmatprep.subr.mxu0 0.0
    %7033 = vmatpush1.msra.mxu0 0.0
    %7034 = vmatprep.subr.mxu0 0.0
    %7035 = vmatpush1.msra.mxu0 0.0
    %7036 = vmatprep.subr.mxu0 0.0
    %7037 = vmatpush1.msra.mxu0 0.0
    %7038 = vmatprep.subr.mxu0 0.0
    %7039 = vmatpush1.msra.mxu0 0.0
    %7040 = vmatprep.subr.mxu0 0.0
    %7041 = vmatpush1.msra.mxu0 0.0
    %7042 = vmatprep.subr.mxu0 0.0
    %7043 = vmatpush1.msra.mxu0 0.0
    %7044 = vmatprep.subr.mxu0 0.0
    %7045 = vmatpush1.msra.mxu0 0.0
    %7046 = vmatprep.subr.mxu0 0.0
    %7047 = vmatpush1.msra.mxu0 0.0
    %7048 = vmatprep.subr.mxu0 0.0
    %7049 = vmatpush1.msra.mxu0 0.0
    %7050 = vmatprep.mubr.f32.mxu0 0.0
    %7051 = vmatmul.mubr.f32.gmra.mrb[0].mxu0 %v6985
    %v7052 = vpop.f32.mrb[0].mxu0
    %v7053 = vadd.f32 0.0, %v7052
    %v7054 = vpop.f32.mrb[0].mxu0
    %v7055 = vadd.f32 0.0, %v7054
    %7056 = vdwg.mxu0
    %7057 = vmatprep.subr.mxu0 %v6755
    %7058 = vmatpush1.msra.mxu0 %v6754
    %7059 = vmatprep.subr.mxu0 %v6759
    %7060 = vmatpush1.msra.mxu0 %v6758
    %7061 = vmatprep.subr.mxu0 %v6763
    %7062 = vmatpush1.msra.mxu0 %v6762
    %7063 = vmatprep.subr.mxu0 %v6767
    %7064 = vmatpush1.msra.mxu0 %v6766
    %7065 = vmatprep.subr.mxu0 %v6771
    %7066 = vmatpush1.msra.mxu0 %v6770
    %7067 = vmatprep.subr.mxu0 %v6775
    %7068 = vmatpush1.msra.mxu0 %v6774
    %7069 = vmatprep.subr.mxu0 %v6779
    %7070 = vmatpush1.msra.mxu0 %v6778
    %7071 = vmatprep.subr.mxu0 %v6783
    %7072 = vmatpush1.msra.mxu0 %v6782
    %7073 = vmatprep.subr.mxu0 %v6787
    %7074 = vmatpush1.msra.mxu0 %v6786
    %7075 = vmatprep.subr.mxu0 %v6791
    %7076 = vmatpush1.msra.mxu0 %v6790
    %7077 = vmatprep.subr.mxu0 %v6795
    %7078 = vmatpush1.msra.mxu0 %v6794
    %7079 = vmatprep.subr.mxu0 %v6799
    %7080 = vmatpush1.msra.mxu0 %v6798
    %7081 = vmatprep.subr.mxu0 %v6803
    %7082 = vmatpush1.msra.mxu0 %v6802
    %7083 = vmatprep.subr.mxu0 %v6807
    %7084 = vmatpush1.msra.mxu0 %v6806
    %7085 = vmatprep.subr.mxu0 %v6811
    %7086 = vmatpush1.msra.mxu0 %v6810
    %7087 = vmatprep.subr.mxu0 %v6815
    %7088 = vmatpush1.msra.mxu0 %v6814
    %7089 = vmatprep.subr.mxu0 0.0
    %7090 = vmatpush1.msra.mxu0 0.0
    %7091 = vmatprep.subr.mxu0 0.0
    %7092 = vmatpush1.msra.mxu0 0.0
    %7093 = vmatprep.subr.mxu0 0.0
    %7094 = vmatpush1.msra.mxu0 0.0
    %7095 = vmatprep.subr.mxu0 0.0
    %7096 = vmatpush1.msra.mxu0 0.0
    %7097 = vmatprep.subr.mxu0 0.0
    %7098 = vmatpush1.msra.mxu0 0.0
    %7099 = vmatprep.subr.mxu0 0.0
    %7100 = vmatpush1.msra.mxu0 0.0
    %7101 = vmatprep.subr.mxu0 0.0
    %7102 = vmatpush1.msra.mxu0 0.0
    %7103 = vmatprep.subr.mxu0 0.0
    %7104 = vmatpush1.msra.mxu0 0.0
    %7105 = vmatprep.subr.mxu0 0.0
    %7106 = vmatpush1.msra.mxu0 0.0
    %7107 = vmatprep.subr.mxu0 0.0
    %7108 = vmatpush1.msra.mxu0 0.0
    %7109 = vmatprep.subr.mxu0 0.0
    %7110 = vmatpush1.msra.mxu0 0.0
    %7111 = vmatprep.subr.mxu0 0.0
    %7112 = vmatpush1.msra.mxu0 0.0
    %7113 = vmatprep.subr.mxu0 0.0
    %7114 = vmatpush1.msra.mxu0 0.0
    %7115 = vmatprep.subr.mxu0 0.0
    %7116 = vmatpush1.msra.mxu0 0.0
    %7117 = vmatprep.subr.mxu0 0.0
    %7118 = vmatpush1.msra.mxu0 0.0
    %7119 = vmatprep.subr.mxu0 0.0
    %7120 = vmatpush1.msra.mxu0 0.0
    %7121 = vmatprep.mubr.f32.mxu0 0.0
    %7122 = vmatmul.mubr.f32.gmra.mrb[0].mxu0 %v6985
    %v7123 = vpop.f32.mrb[0].mxu0
    %v7124 = vadd.f32 0.0, %v7123
    %v7125 = vpop.f32.mrb[0].mxu0
    %v7126 = vadd.f32 0.0, %v7125
    %7127 = vdwg.mxu0
    %v7132 = vrot.slane %v7053, 7
    %v7133 = vrot.slane %v7055, 7
    %v7134 = vrot.slane %v7124, 7
    %v7135 = vrot.slane %v7126, 7
    %v7140 = vadd.f32 %v6676, %v7132
    %v7141 = vadd.f32 %v6678, %v7133
    %v7142 = vadd.f32 %v6747, %v7134
    %v7143 = vadd.f32 %v6749, %v7135
    %v7144 = vxor.u32 %v7140, 2147483648
    %v7145 = vmul.f32 %v7144, 1.442695
    %v7146 = vpow.pop %v7145
    %v7147 = vadd.f32 %v7146, 1.0
    %v7148 = vrcp.pop %v7147
    %v7149 = vmul.f32 1.0, %v7148
    %v7150 = vxor.u32 %v7141, 2147483648
    %v7151 = vmul.f32 %v7150, 1.442695
    %v7152 = vpow.pop %v7151
    %v7153 = vadd.f32 %v7152, 1.0
    %v7154 = vrcp.pop %v7153
    %v7155 = vmul.f32 1.0, %v7154
    %v7156 = vtanh.pop %v7142
    %v7157 = vxor.u32 %v7143, 2147483648
    %v7158 = vmul.f32 %v7157, 1.442695
    %v7159 = vpow.pop %v7158
    %v7160 = vadd.f32 %v7159, 1.0
    %v7161 = vrcp.pop %v7160
    %v7162 = vmul.f32 1.0, %v7161
    %v7164 = vrot.slane %v6983, 7
    %v7166 = vmul.f32 %v7155, %v7164
    %v7167 = vmul.f32 %v7149, %v7156
    %v7168 = vadd.f32 %v7166, %v7167
    %v7169 = vtanh.pop %v7168
    %v7170 = vmul.f32 %v7162, %v7169
    %v7172 = vrot.slane %v7170, 1
    %7174 = vmatprep.subr.mxu0 %v6753
    %7175 = vmatpush1.msra.mxu0 %v6752
    %7176 = vmatprep.subr.mxu0 %v6757
    %7177 = vmatpush1.msra.mxu0 %v6756
    %7178 = vmatprep.subr.mxu0 %v6761
    %7179 = vmatpush1.msra.mxu0 %v6760
    %7180 = vmatprep.subr.mxu0 %v6765
    %7181 = vmatpush1.msra.mxu0 %v6764
    %7182 = vmatprep.subr.mxu0 %v6769
    %7183 = vmatpush1.msra.mxu0 %v6768
    %7184 = vmatprep.subr.mxu0 %v6773
    %7185 = vmatpush1.msra.mxu0 %v6772
    %7186 = vmatprep.subr.mxu0 %v6777
    %7187 = vmatpush1.msra.mxu0 %v6776
    %7188 = vmatprep.subr.mxu0 %v6781
    %7189 = vmatpush1.msra.mxu0 %v6780
    %7190 = vmatprep.subr.mxu0 %v6785
    %7191 = vmatpush1.msra.mxu0 %v6784
    %7192 = vmatprep.subr.mxu0 %v6789
    %7193 = vmatpush1.msra.mxu0 %v6788
    %7194 = vmatprep.subr.mxu0 %v6793
    %7195 = vmatpush1.msra.mxu0 %v6792
    %7196 = vmatprep.subr.mxu0 %v6797
    %7197 = vmatpush1.msra.mxu0 %v6796
    %7198 = vmatprep.subr.mxu0 %v6801
    %7199 = vmatpush1.msra.mxu0 %v6800
    %7200 = vmatprep.subr.mxu0 %v6805
    %7201 = vmatpush1.msra.mxu0 %v6804
    %7202 = vmatprep.subr.mxu0 %v6809
    %7203 = vmatpush1.msra.mxu0 %v6808
    %7204 = vmatprep.subr.mxu0 %v6813
    %7205 = vmatpush1.msra.mxu0 %v6812
    %7206 = vmatprep.subr.mxu0 0.0
    %7207 = vmatpush1.msra.mxu0 0.0
    %7208 = vmatprep.subr.mxu0 0.0
    %7209 = vmatpush1.msra.mxu0 0.0
    %7210 = vmatprep.subr.mxu0 0.0
    %7211 = vmatpush1.msra.mxu0 0.0
    %7212 = vmatprep.subr.mxu0 0.0
    %7213 = vmatpush1.msra.mxu0 0.0
    %7214 = vmatprep.subr.mxu0 0.0
    %7215 = vmatpush1.msra.mxu0 0.0
    %7216 = vmatprep.subr.mxu0 0.0
    %7217 = vmatpush1.msra.mxu0 0.0
    %7218 = vmatprep.subr.mxu0 0.0
    %7219 = vmatpush1.msra.mxu0 0.0
    %7220 = vmatprep.subr.mxu0 0.0
    %7221 = vmatpush1.msra.mxu0 0.0
    %7222 = vmatprep.subr.mxu0 0.0
    %7223 = vmatpush1.msra.mxu0 0.0
    %7224 = vmatprep.subr.mxu0 0.0
    %7225 = vmatpush1.msra.mxu0 0.0
    %7226 = vmatprep.subr.mxu0 0.0
    %7227 = vmatpush1.msra.mxu0 0.0
    %7228 = vmatprep.subr.mxu0 0.0
    %7229 = vmatpush1.msra.mxu0 0.0
    %7230 = vmatprep.subr.mxu0 0.0
    %7231 = vmatpush1.msra.mxu0 0.0
    %7232 = vmatprep.subr.mxu0 0.0
    %7233 = vmatpush1.msra.mxu0 0.0
    %7234 = vmatprep.subr.mxu0 0.0
    %7235 = vmatpush1.msra.mxu0 0.0
    %7236 = vmatprep.subr.mxu0 0.0
    %7237 = vmatpush1.msra.mxu0 0.0
    %7238 = vmatprep.mubr.f32.mxu0 0.0
    %7239 = vmatmul.mubr.f32.gmra.mrb[0].mxu0 %v7172
    %v7240 = vpop.f32.mrb[0].mxu0
    %v7241 = vadd.f32 0.0, %v7240
    %v7242 = vpop.f32.mrb[0].mxu0
    %v7243 = vadd.f32 0.0, %v7242
    %7244 = vdwg.mxu0
    %7245 = vmatprep.subr.mxu0 %v6755
    %7246 = vmatpush1.msra.mxu0 %v6754
    %7247 = vmatprep.subr.mxu0 %v6759
    %7248 = vmatpush1.msra.mxu0 %v6758
    %7249 = vmatprep.subr.mxu0 %v6763
    %7250 = vmatpush1.msra.mxu0 %v6762
    %7251 = vmatprep.subr.mxu0 %v6767
    %7252 = vmatpush1.msra.mxu0 %v6766
    %7253 = vmatprep.subr.mxu0 %v6771
    %7254 = vmatpush1.msra.mxu0 %v6770
    %7255 = vmatprep.subr.mxu0 %v6775
    %7256 = vmatpush1.msra.mxu0 %v6774
    %7257 = vmatprep.subr.mxu0 %v6779
    %7258 = vmatpush1.msra.mxu0 %v6778
    %7259 = vmatprep.subr.mxu0 %v6783
    %7260 = vmatpush1.msra.mxu0 %v6782
    %7261 = vmatprep.subr.mxu0 %v6787
    %7262 = vmatpush1.msra.mxu0 %v6786
    %7263 = vmatprep.subr.mxu0 %v6791
    %7264 = vmatpush1.msra.mxu0 %v6790
    %7265 = vmatprep.subr.mxu0 %v6795
    %7266 = vmatpush1.msra.mxu0 %v6794
    %7267 = vmatprep.subr.mxu0 %v6799
    %7268 = vmatpush1.msra.mxu0 %v6798
    %7269 = vmatprep.subr.mxu0 %v6803
    %7270 = vmatpush1.msra.mxu0 %v6802
    %7271 = vmatprep.subr.mxu0 %v6807
    %7272 = vmatpush1.msra.mxu0 %v6806
    %7273 = vmatprep.subr.mxu0 %v6811
    %7274 = vmatpush1.msra.mxu0 %v6810
    %7275 = vmatprep.subr.mxu0 %v6815
    %7276 = vmatpush1.msra.mxu0 %v6814
    %7277 = vmatprep.subr.mxu0 0.0
    %7278 = vmatpush1.msra.mxu0 0.0
    %7279 = vmatprep.subr.mxu0 0.0
    %7280 = vmatpush1.msra.mxu0 0.0
    %7281 = vmatprep.subr.mxu0 0.0
    %7282 = vmatpush1.msra.mxu0 0.0
    %7283 = vmatprep.subr.mxu0 0.0
    %7284 = vmatpush1.msra.mxu0 0.0
    %7285 = vmatprep.subr.mxu0 0.0
    %7286 = vmatpush1.msra.mxu0 0.0
    %7287 = vmatprep.subr.mxu0 0.0
    %7288 = vmatpush1.msra.mxu0 0.0
    %7289 = vmatprep.subr.mxu0 0.0
    %7290 = vmatpush1.msra.mxu0 0.0
    %7291 = vmatprep.subr.mxu0 0.0
    %7292 = vmatpush1.msra.mxu0 0.0
    %7293 = vmatprep.subr.mxu0 0.0
    %7294 = vmatpush1.msra.mxu0 0.0
    %7295 = vmatprep.subr.mxu0 0.0
    %7296 = vmatpush1.msra.mxu0 0.0
    %7297 = vmatprep.subr.mxu0 0.0
    %7298 = vmatpush1.msra.mxu0 0.0
    %7299 = vmatprep.subr.mxu0 0.0
    %7300 = vmatpush1.msra.mxu0 0.0
    %7301 = vmatprep.subr.mxu0 0.0
    %7302 = vmatpush1.msra.mxu0 0.0
    %7303 = vmatprep.subr.mxu0 0.0
    %7304 = vmatpush1.msra.mxu0 0.0
    %7305 = vmatprep.subr.mxu0 0.0
    %7306 = vmatpush1.msra.mxu0 0.0
    %7307 = vmatprep.subr.mxu0 0.0
    %7308 = vmatpush1.msra.mxu0 0.0
    %7309 = vmatprep.mubr.f32.mxu0 0.0
    %7310 = vmatmul.mubr.f32.gmra.mrb[0].mxu0 %v7172
    %v7311 = vpop.f32.mrb[0].mxu0
    %v7312 = vadd.f32 0.0, %v7311
    %v7313 = vpop.f32.mrb[0].mxu0
    %v7314 = vadd.f32 0.0, %v7313
    %7315 = vdwg.mxu0
    %v7320 = vrot.slane %v7241, 6
    %v7321 = vrot.slane %v7243, 6
    %v7322 = vrot.slane %v7312, 6
    %v7323 = vrot.slane %v7314, 6
    %v7328 = vadd.f32 %v6676, %v7320
    %v7329 = vadd.f32 %v6678, %v7321
    %v7330 = vadd.f32 %v6747, %v7322
    %v7331 = vadd.f32 %v6749, %v7323
    %v7332 = vxor.u32 %v7328, 2147483648
    %v7333 = vmul.f32 %v7332, 1.442695
    %v7334 = vpow.pop %v7333
    %v7335 = vadd.f32 %v7334, 1.0
    %v7336 = vrcp.pop %v7335
    %v7337 = vmul.f32 1.0, %v7336
    %v7338 = vxor.u32 %v7329, 2147483648
    %v7339 = vmul.f32 %v7338, 1.442695
    %v7340 = vpow.pop %v7339
    %v7341 = vadd.f32 %v7340, 1.0
    %v7342 = vrcp.pop %v7341
    %v7343 = vmul.f32 1.0, %v7342
    %v7344 = vtanh.pop %v7330
    %v7345 = vxor.u32 %v7331, 2147483648
    %v7346 = vmul.f32 %v7345, 1.442695
    %v7347 = vpow.pop %v7346
    %v7348 = vadd.f32 %v7347, 1.0
    %v7349 = vrcp.pop %v7348
    %v7350 = vmul.f32 1.0, %v7349
    %v7352 = vrot.slane %v7168, 7
    %v7354 = vmul.f32 %v7343, %v7352
    %v7355 = vmul.f32 %v7337, %v7344
    %v7356 = vadd.f32 %v7354, %v7355
    %v7357 = vtanh.pop %v7356
    %v7358 = vmul.f32 %v7350, %v7357
    %v7360 = vrot.slane %v7358, 2
    %7362 = vmatprep.subr.mxu0 %v6753
    %7363 = vmatpush1.msra.mxu0 %v6752
    %7364 = vmatprep.subr.mxu0 %v6757
    %7365 = vmatpush1.msra.mxu0 %v6756
    %7366 = vmatprep.subr.mxu0 %v6761
    %7367 = vmatpush1.msra.mxu0 %v6760
    %7368 = vmatprep.subr.mxu0 %v6765
    %7369 = vmatpush1.msra.mxu0 %v6764
    %7370 = vmatprep.subr.mxu0 %v6769
    %7371 = vmatpush1.msra.mxu0 %v6768
    %7372 = vmatprep.subr.mxu0 %v6773
    %7373 = vmatpush1.msra.mxu0 %v6772
    %7374 = vmatprep.subr.mxu0 %v6777
    %7375 = vmatpush1.msra.mxu0 %v6776
    %7376 = vmatprep.subr.mxu0 %v6781
    %7377 = vmatpush1.msra.mxu0 %v6780
    %7378 = vmatprep.subr.mxu0 %v6785
    %7379 = vmatpush1.msra.mxu0 %v6784
    %7380 = vmatprep.subr.mxu0 %v6789
    %7381 = vmatpush1.msra.mxu0 %v6788
    %7382 = vmatprep.subr.mxu0 %v6793
    %7383 = vmatpush1.msra.mxu0 %v6792
    %7384 = vmatprep.subr.mxu0 %v6797
    %7385 = vmatpush1.msra.mxu0 %v6796
    %7386 = vmatprep.subr.mxu0 %v6801
    %7387 = vmatpush1.msra.mxu0 %v6800
    %7388 = vmatprep.subr.mxu0 %v6805
    %7389 = vmatpush1.msra.mxu0 %v6804
    %7390 = vmatprep.subr.mxu0 %v6809
    %7391 = vmatpush1.msra.mxu0 %v6808
    %7392 = vmatprep.subr.mxu0 %v6813
    %7393 = vmatpush1.msra.mxu0 %v6812
    %7394 = vmatprep.subr.mxu0 0.0
    %7395 = vmatpush1.msra.mxu0 0.0
    %7396 = vmatprep.subr.mxu0 0.0
    %7397 = vmatpush1.msra.mxu0 0.0
    %7398 = vmatprep.subr.mxu0 0.0
    %7399 = vmatpush1.msra.mxu0 0.0
    %7400 = vmatprep.subr.mxu0 0.0
    %7401 = vmatpush1.msra.mxu0 0.0
    %7402 = vmatprep.subr.mxu0 0.0
    %7403 = vmatpush1.msra.mxu0 0.0
    %7404 = vmatprep.subr.mxu0 0.0
    %7405 = vmatpush1.msra.mxu0 0.0
    %7406 = vmatprep.subr.mxu0 0.0
    %7407 = vmatpush1.msra.mxu0 0.0
    %7408 = vmatprep.subr.mxu0 0.0
    %7409 = vmatpush1.msra.mxu0 0.0
    %7410 = vmatprep.subr.mxu0 0.0
    %7411 = vmatpush1.msra.mxu0 0.0
    %7412 = vmatprep.subr.mxu0 0.0
    %7413 = vmatpush1.msra.mxu0 0.0
    %7414 = vmatprep.subr.mxu0 0.0
    %7415 = vmatpush1.msra.mxu0 0.0
    %7416 = vmatprep.subr.mxu0 0.0
    %7417 = vmatpush1.msra.mxu0 0.0
    %7418 = vmatprep.subr.mxu0 0.0
    %7419 = vmatpush1.msra.mxu0 0.0
    %7420 = vmatprep.subr.mxu0 0.0
    %7421 = vmatpush1.msra.mxu0 0.0
    %7422 = vmatprep.subr.mxu0 0.0
    %7423 = vmatpush1.msra.mxu0 0.0
    %7424 = vmatprep.subr.mxu0 0.0
    %7425 = vmatpush1.msra.mxu0 0.0
    %7426 = vmatprep.mubr.f32.mxu0 0.0
    %7427 = vmatmul.mubr.f32.gmra.mrb[0].mxu0 %v7360
    %v7428 = vpop.f32.mrb[0].mxu0
    %v7429 = vadd.f32 0.0, %v7428
    %v7430 = vpop.f32.mrb[0].mxu0
    %v7431 = vadd.f32 0.0, %v7430
    %7432 = vdwg.mxu0
    %7433 = vmatprep.subr.mxu0 %v6755
    %7434 = vmatpush1.msra.mxu0 %v6754
    %7435 = vmatprep.subr.mxu0 %v6759
    %7436 = vmatpush1.msra.mxu0 %v6758
    %7437 = vmatprep.subr.mxu0 %v6763
    %7438 = vmatpush1.msra.mxu0 %v6762
    %7439 = vmatprep.subr.mxu0 %v6767
    %7440 = vmatpush1.msra.mxu0 %v6766
    %7441 = vmatprep.subr.mxu0 %v6771
    %7442 = vmatpush1.msra.mxu0 %v6770
    %7443 = vmatprep.subr.mxu0 %v6775
    %7444 = vmatpush1.msra.mxu0 %v6774
    %7445 = vmatprep.subr.mxu0 %v6779
    %7446 = vmatpush1.msra.mxu0 %v6778
    %7447 = vmatprep.subr.mxu0 %v6783
    %7448 = vmatpush1.msra.mxu0 %v6782
    %7449 = vmatprep.subr.mxu0 %v6787
    %7450 = vmatpush1.msra.mxu0 %v6786
    %7451 = vmatprep.subr.mxu0 %v6791
    %7452 = vmatpush1.msra.mxu0 %v6790
    %7453 = vmatprep.subr.mxu0 %v6795
    %7454 = vmatpush1.msra.mxu0 %v6794
    %7455 = vmatprep.subr.mxu0 %v6799
    %7456 = vmatpush1.msra.mxu0 %v6798
    %7457 = vmatprep.subr.mxu0 %v6803
    %7458 = vmatpush1.msra.mxu0 %v6802
    %7459 = vmatprep.subr.mxu0 %v6807
    %7460 = vmatpush1.msra.mxu0 %v6806
    %7461 = vmatprep.subr.mxu0 %v6811
    %7462 = vmatpush1.msra.mxu0 %v6810
    %7463 = vmatprep.subr.mxu0 %v6815
    %7464 = vmatpush1.msra.mxu0 %v6814
    %7465 = vmatprep.subr.mxu0 0.0
    %7466 = vmatpush1.msra.mxu0 0.0
    %7467 = vmatprep.subr.mxu0 0.0
    %7468 = vmatpush1.msra.mxu0 0.0
    %7469 = vmatprep.subr.mxu0 0.0
    %7470 = vmatpush1.msra.mxu0 0.0
    %7471 = vmatprep.subr.mxu0 0.0
    %7472 = vmatpush1.msra.mxu0 0.0
    %7473 = vmatprep.subr.mxu0 0.0
    %7474 = vmatpush1.msra.mxu0 0.0
    %7475 = vmatprep.subr.mxu0 0.0
    %7476 = vmatpush1.msra.mxu0 0.0
    %7477 = vmatprep.subr.mxu0 0.0
    %7478 = vmatpush1.msra.mxu0 0.0
    %7479 = vmatprep.subr.mxu0 0.0
    %7480 = vmatpush1.msra.mxu0 0.0
    %7481 = vmatprep.subr.mxu0 0.0
    %7482 = vmatpush1.msra.mxu0 0.0
    %7483 = vmatprep.subr.mxu0 0.0
    %7484 = vmatpush1.msra.mxu0 0.0
    %7485 = vmatprep.subr.mxu0 0.0
    %7486 = vmatpush1.msra.mxu0 0.0
    %7487 = vmatprep.subr.mxu0 0.0
    %7488 = vmatpush1.msra.mxu0 0.0
    %7489 = vmatprep.subr.mxu0 0.0
    %7490 = vmatpush1.msra.mxu0 0.0
    %7491 = vmatprep.subr.mxu0 0.0
    %7492 = vmatpush1.msra.mxu0 0.0
    %7493 = vmatprep.subr.mxu0 0.0
    %7494 = vmatpush1.msra.mxu0 0.0
    %7495 = vmatprep.subr.mxu0 0.0
    %7496 = vmatpush1.msra.mxu0 0.0
    %7497 = vmatprep.mubr.f32.mxu0 0.0
    %7498 = vmatmul.mubr.f32.gmra.mrb[0].mxu0 %v7360
    %v7499 = vpop.f32.mrb[0].mxu0
    %v7500 = vadd.f32 0.0, %v7499
    %v7501 = vpop.f32.mrb[0].mxu0
    %v7502 = vadd.f32 0.0, %v7501
    %7503 = vdwg.mxu0
    %v7508 = vrot.slane %v7429, 5
    %v7509 = vrot.slane %v7431, 5
    %v7510 = vrot.slane %v7500, 5
    %v7511 = vrot.slane %v7502, 5
    %v7516 = vadd.f32 %v6676, %v7508
    %v7517 = vadd.f32 %v6678, %v7509
    %v7518 = vadd.f32 %v6747, %v7510
    %v7519 = vadd.f32 %v6749, %v7511
    %v7520 = vxor.u32 %v7516, 2147483648
    %v7521 = vmul.f32 %v7520, 1.442695
    %v7522 = vpow.pop %v7521
    %v7523 = vadd.f32 %v7522, 1.0
    %v7524 = vrcp.pop %v7523
    %v7525 = vmul.f32 1.0, %v7524
    %v7526 = vxor.u32 %v7517, 2147483648
    %v7527 = vmul.f32 %v7526, 1.442695
    %v7528 = vpow.pop %v7527
    %v7529 = vadd.f32 %v7528, 1.0
    %v7530 = vrcp.pop %v7529
    %v7531 = vmul.f32 1.0, %v7530
    %v7532 = vtanh.pop %v7518
    %v7533 = vxor.u32 %v7519, 2147483648
    %v7534 = vmul.f32 %v7533, 1.442695
    %v7535 = vpow.pop %v7534
    %v7536 = vadd.f32 %v7535, 1.0
    %v7537 = vrcp.pop %v7536
    %v7538 = vmul.f32 1.0, %v7537
    %v7540 = vrot.slane %v7356, 7
    %v7542 = vmul.f32 %v7531, %v7540
    %v7543 = vmul.f32 %v7525, %v7532
    %v7544 = vadd.f32 %v7542, %v7543
    %v7545 = vtanh.pop %v7544
    %v7546 = vmul.f32 %v7538, %v7545
    %v7548 = vrot.slane %v7546, 3
    %7550 = vmatprep.subr.mxu0 %v6753
    %7551 = vmatpush1.msra.mxu0 %v6752
    %7552 = vmatprep.subr.mxu0 %v6757
    %7553 = vmatpush1.msra.mxu0 %v6756
    %7554 = vmatprep.subr.mxu0 %v6761
    %7555 = vmatpush1.msra.mxu0 %v6760
    %7556 = vmatprep.subr.mxu0 %v6765
    %7557 = vmatpush1.msra.mxu0 %v6764
    %7558 = vmatprep.subr.mxu0 %v6769
    %7559 = vmatpush1.msra.mxu0 %v6768
    %7560 = vmatprep.subr.mxu0 %v6773
    %7561 = vmatpush1.msra.mxu0 %v6772
    %7562 = vmatprep.subr.mxu0 %v6777
    %7563 = vmatpush1.msra.mxu0 %v6776
    %7564 = vmatprep.subr.mxu0 %v6781
    %7565 = vmatpush1.msra.mxu0 %v6780
    %7566 = vmatprep.subr.mxu0 %v6785
    %7567 = vmatpush1.msra.mxu0 %v6784
    %7568 = vmatprep.subr.mxu0 %v6789
    %7569 = vmatpush1.msra.mxu0 %v6788
    %7570 = vmatprep.subr.mxu0 %v6793
    %7571 = vmatpush1.msra.mxu0 %v6792
    %7572 = vmatprep.subr.mxu0 %v6797
    %7573 = vmatpush1.msra.mxu0 %v6796
    %7574 = vmatprep.subr.mxu0 %v6801
    %7575 = vmatpush1.msra.mxu0 %v6800
    %7576 = vmatprep.subr.mxu0 %v6805
    %7577 = vmatpush1.msra.mxu0 %v6804
    %7578 = vmatprep.subr.mxu0 %v6809
    %7579 = vmatpush1.msra.mxu0 %v6808
    %7580 = vmatprep.subr.mxu0 %v6813
    %7581 = vmatpush1.msra.mxu0 %v6812
    %7582 = vmatprep.subr.mxu0 0.0
    %7583 = vmatpush1.msra.mxu0 0.0
    %7584 = vmatprep.subr.mxu0 0.0
    %7585 = vmatpush1.msra.mxu0 0.0
    %7586 = vmatprep.subr.mxu0 0.0
    %7587 = vmatpush1.msra.mxu0 0.0
    %7588 = vmatprep.subr.mxu0 0.0
    %7589 = vmatpush1.msra.mxu0 0.0
    %7590 = vmatprep.subr.mxu0 0.0
    %7591 = vmatpush1.msra.mxu0 0.0
    %7592 = vmatprep.subr.mxu0 0.0
    %7593 = vmatpush1.msra.mxu0 0.0
    %7594 = vmatprep.subr.mxu0 0.0
    %7595 = vmatpush1.msra.mxu0 0.0
    %7596 = vmatprep.subr.mxu0 0.0
    %7597 = vmatpush1.msra.mxu0 0.0
    %7598 = vmatprep.subr.mxu0 0.0
    %7599 = vmatpush1.msra.mxu0 0.0
    %7600 = vmatprep.subr.mxu0 0.0
    %7601 = vmatpush1.msra.mxu0 0.0
    %7602 = vmatprep.subr.mxu0 0.0
    %7603 = vmatpush1.msra.mxu0 0.0
    %7604 = vmatprep.subr.mxu0 0.0
    %7605 = vmatpush1.msra.mxu0 0.0
    %7606 = vmatprep.subr.mxu0 0.0
    %7607 = vmatpush1.msra.mxu0 0.0
    %7608 = vmatprep.subr.mxu0 0.0
    %7609 = vmatpush1.msra.mxu0 0.0
    %7610 = vmatprep.subr.mxu0 0.0
    %7611 = vmatpush1.msra.mxu0 0.0
    %7612 = vmatprep.subr.mxu0 0.0
    %7613 = vmatpush1.msra.mxu0 0.0
    %7614 = vmatprep.mubr.f32.mxu0 0.0
    %7615 = vmatmul.mubr.f32.gmra.mrb[0].mxu0 %v7548
    %v7616 = vpop.f32.mrb[0].mxu0
    %v7617 = vadd.f32 0.0, %v7616
    %v7618 = vpop.f32.mrb[0].mxu0
    %v7619 = vadd.f32 0.0, %v7618
    %7620 = vdwg.mxu0
    %7621 = vmatprep.subr.mxu0 %v6755
    %7622 = vmatpush1.msra.mxu0 %v6754
    %7623 = vmatprep.subr.mxu0 %v6759
    %7624 = vmatpush1.msra.mxu0 %v6758
    %7625 = vmatprep.subr.mxu0 %v6763
    %7626 = vmatpush1.msra.mxu0 %v6762
    %7627 = vmatprep.subr.mxu0 %v6767
    %7628 = vmatpush1.msra.mxu0 %v6766
    %7629 = vmatprep.subr.mxu0 %v6771
    %7630 = vmatpush1.msra.mxu0 %v6770
    %7631 = vmatprep.subr.mxu0 %v6775
    %7632 = vmatpush1.msra.mxu0 %v6774
    %7633 = vmatprep.subr.mxu0 %v6779
    %7634 = vmatpush1.msra.mxu0 %v6778
    %7635 = vmatprep.subr.mxu0 %v6783
    %7636 = vmatpush1.msra.mxu0 %v6782
    %7637 = vmatprep.subr.mxu0 %v6787
    %7638 = vmatpush1.msra.mxu0 %v6786
    %7639 = vmatprep.subr.mxu0 %v6791
    %7640 = vmatpush1.msra.mxu0 %v6790
    %7641 = vmatprep.subr.mxu0 %v6795
    %7642 = vmatpush1.msra.mxu0 %v6794
    %7643 = vmatprep.subr.mxu0 %v6799
    %7644 = vmatpush1.msra.mxu0 %v6798
    %7645 = vmatprep.subr.mxu0 %v6803
    %7646 = vmatpush1.msra.mxu0 %v6802
    %7647 = vmatprep.subr.mxu0 %v6807
    %7648 = vmatpush1.msra.mxu0 %v6806
    %7649 = vmatprep.subr.mxu0 %v6811
    %7650 = vmatpush1.msra.mxu0 %v6810
    %7651 = vmatprep.subr.mxu0 %v6815
    %7652 = vmatpush1.msra.mxu0 %v6814
    %7653 = vmatprep.subr.mxu0 0.0
    %7654 = vmatpush1.msra.mxu0 0.0
    %7655 = vmatprep.subr.mxu0 0.0
    %7656 = vmatpush1.msra.mxu0 0.0
    %7657 = vmatprep.subr.mxu0 0.0
    %7658 = vmatpush1.msra.mxu0 0.0
    %7659 = vmatprep.subr.mxu0 0.0
    %7660 = vmatpush1.msra.mxu0 0.0
    %7661 = vmatprep.subr.mxu0 0.0
    %7662 = vmatpush1.msra.mxu0 0.0
    %7663 = vmatprep.subr.mxu0 0.0
    %7664 = vmatpush1.msra.mxu0 0.0
    %7665 = vmatprep.subr.mxu0 0.0
    %7666 = vmatpush1.msra.mxu0 0.0
    %7667 = vmatprep.subr.mxu0 0.0
    %7668 = vmatpush1.msra.mxu0 0.0
    %7669 = vmatprep.subr.mxu0 0.0
    %7670 = vmatpush1.msra.mxu0 0.0
    %7671 = vmatprep.subr.mxu0 0.0
    %7672 = vmatpush1.msra.mxu0 0.0
    %7673 = vmatprep.subr.mxu0 0.0
    %7674 = vmatpush1.msra.mxu0 0.0
    %7675 = vmatprep.subr.mxu0 0.0
    %7676 = vmatpush1.msra.mxu0 0.0
    %7677 = vmatprep.subr.mxu0 0.0
    %7678 = vmatpush1.msra.mxu0 0.0
    %7679 = vmatprep.subr.mxu0 0.0
    %7680 = vmatpush1.msra.mxu0 0.0
    %7681 = vmatprep.subr.mxu0 0.0
    %7682 = vmatpush1.msra.mxu0 0.0
    %7683 = vmatprep.subr.mxu0 0.0
    %7684 = vmatpush1.msra.mxu0 0.0
    %7685 = vmatprep.mubr.f32.mxu0 0.0
    %7686 = vmatmul.mubr.f32.gmra.mrb[0].mxu0 %v7548
    %v7687 = vpop.f32.mrb[0].mxu0
    %v7688 = vadd.f32 0.0, %v7687
    %v7689 = vpop.f32.mrb[0].mxu0
    %v7690 = vadd.f32 0.0, %v7689
    %7691 = vdwg.mxu0
    %v7696 = vrot.slane %v7617, 4
    %v7697 = vrot.slane %v7619, 4
    %v7698 = vrot.slane %v7688, 4
    %v7699 = vrot.slane %v7690, 4
    %v7704 = vadd.f32 %v6676, %v7696
    %v7705 = vadd.f32 %v6678, %v7697
    %v7706 = vadd.f32 %v6747, %v7698
    %v7707 = vadd.f32 %v6749, %v7699
    %v7708 = vxor.u32 %v7704, 2147483648
    %v7709 = vmul.f32 %v7708, 1.442695
    %v7710 = vpow.pop %v7709
    %v7711 = vadd.f32 %v7710, 1.0
    %v7712 = vrcp.pop %v7711
    %v7713 = vmul.f32 1.0, %v7712
    %v7714 = vxor.u32 %v7705, 2147483648
    %v7715 = vmul.f32 %v7714, 1.442695
    %v7716 = vpow.pop %v7715
    %v7717 = vadd.f32 %v7716, 1.0
    %v7718 = vrcp.pop %v7717
    %v7719 = vmul.f32 1.0, %v7718
    %v7720 = vtanh.pop %v7706
    %v7721 = vxor.u32 %v7707, 2147483648
    %v7722 = vmul.f32 %v7721, 1.442695
    %v7723 = vpow.pop %v7722
    %v7724 = vadd.f32 %v7723, 1.0
    %v7725 = vrcp.pop %v7724
    %v7726 = vmul.f32 1.0, %v7725
    %v7728 = vrot.slane %v7544, 7
    %v7730 = vmul.f32 %v7719, %v7728
    %v7731 = vmul.f32 %v7713, %v7720
    %v7732 = vadd.f32 %v7730, %v7731
    %v7733 = vtanh.pop %v7732
    %v7734 = vmul.f32 %v7726, %v7733
    %v7736 = vrot.slane %v7734, 4
    %7738 = vmatprep.subr.mxu0 %v6753
    %7739 = vmatpush1.msra.mxu0 %v6752
    %7740 = vmatprep.subr.mxu0 %v6757
    %7741 = vmatpush1.msra.mxu0 %v6756
    %7742 = vmatprep.subr.mxu0 %v6761
    %7743 = vmatpush1.msra.mxu0 %v6760
    %7744 = vmatprep.subr.mxu0 %v6765
    %7745 = vmatpush1.msra.mxu0 %v6764
    %7746 = vmatprep.subr.mxu0 %v6769
    %7747 = vmatpush1.msra.mxu0 %v6768
    %7748 = vmatprep.subr.mxu0 %v6773
    %7749 = vmatpush1.msra.mxu0 %v6772
    %7750 = vmatprep.subr.mxu0 %v6777
    %7751 = vmatpush1.msra.mxu0 %v6776
    %7752 = vmatprep.subr.mxu0 %v6781
    %7753 = vmatpush1.msra.mxu0 %v6780
    %7754 = vmatprep.subr.mxu0 %v6785
    %7755 = vmatpush1.msra.mxu0 %v6784
    %7756 = vmatprep.subr.mxu0 %v6789
    %7757 = vmatpush1.msra.mxu0 %v6788
    %7758 = vmatprep.subr.mxu0 %v6793
    %7759 = vmatpush1.msra.mxu0 %v6792
    %7760 = vmatprep.subr.mxu0 %v6797
    %7761 = vmatpush1.msra.mxu0 %v6796
    %7762 = vmatprep.subr.mxu0 %v6801
    %7763 = vmatpush1.msra.mxu0 %v6800
    %7764 = vmatprep.subr.mxu0 %v6805
    %7765 = vmatpush1.msra.mxu0 %v6804
    %7766 = vmatprep.subr.mxu0 %v6809
    %7767 = vmatpush1.msra.mxu0 %v6808
    %7768 = vmatprep.subr.mxu0 %v6813
    %7769 = vmatpush1.msra.mxu0 %v6812
    %7770 = vmatprep.subr.mxu0 0.0
    %7771 = vmatpush1.msra.mxu0 0.0
    %7772 = vmatprep.subr.mxu0 0.0
    %7773 = vmatpush1.msra.mxu0 0.0
    %7774 = vmatprep.subr.mxu0 0.0
    %7775 = vmatpush1.msra.mxu0 0.0
    %7776 = vmatprep.subr.mxu0 0.0
    %7777 = vmatpush1.msra.mxu0 0.0
    %7778 = vmatprep.subr.mxu0 0.0
    %7779 = vmatpush1.msra.mxu0 0.0
    %7780 = vmatprep.subr.mxu0 0.0
    %7781 = vmatpush1.msra.mxu0 0.0
    %7782 = vmatprep.subr.mxu0 0.0
    %7783 = vmatpush1.msra.mxu0 0.0
    %7784 = vmatprep.subr.mxu0 0.0
    %7785 = vmatpush1.msra.mxu0 0.0
    %7786 = vmatprep.subr.mxu0 0.0
    %7787 = vmatpush1.msra.mxu0 0.0
    %7788 = vmatprep.subr.mxu0 0.0
    %7789 = vmatpush1.msra.mxu0 0.0
    %7790 = vmatprep.subr.mxu0 0.0
    %7791 = vmatpush1.msra.mxu0 0.0
    %7792 = vmatprep.subr.mxu0 0.0
    %7793 = vmatpush1.msra.mxu0 0.0
    %7794 = vmatprep.subr.mxu0 0.0
    %7795 = vmatpush1.msra.mxu0 0.0
    %7796 = vmatprep.subr.mxu0 0.0
    %7797 = vmatpush1.msra.mxu0 0.0
    %7798 = vmatprep.subr.mxu0 0.0
    %7799 = vmatpush1.msra.mxu0 0.0
    %7800 = vmatprep.subr.mxu0 0.0
    %7801 = vmatpush1.msra.mxu0 0.0
    %7802 = vmatprep.mubr.f32.mxu0 0.0
    %7803 = vmatmul.mubr.f32.gmra.mrb[0].mxu0 %v7736
    %v7804 = vpop.f32.mrb[0].mxu0
    %v7805 = vadd.f32 0.0, %v7804
    %v7806 = vpop.f32.mrb[0].mxu0
    %v7807 = vadd.f32 0.0, %v7806
    %7808 = vdwg.mxu0
    %7809 = vmatprep.subr.mxu0 %v6755
    %7810 = vmatpush1.msra.mxu0 %v6754
    %7811 = vmatprep.subr.mxu0 %v6759
    %7812 = vmatpush1.msra.mxu0 %v6758
    %7813 = vmatprep.subr.mxu0 %v6763
    %7814 = vmatpush1.msra.mxu0 %v6762
    %7815 = vmatprep.subr.mxu0 %v6767
    %7816 = vmatpush1.msra.mxu0 %v6766
    %7817 = vmatprep.subr.mxu0 %v6771
    %7818 = vmatpush1.msra.mxu0 %v6770
    %7819 = vmatprep.subr.mxu0 %v6775
    %7820 = vmatpush1.msra.mxu0 %v6774
    %7821 = vmatprep.subr.mxu0 %v6779
    %7822 = vmatpush1.msra.mxu0 %v6778
    %7823 = vmatprep.subr.mxu0 %v6783
    %7824 = vmatpush1.msra.mxu0 %v6782
    %7825 = vmatprep.subr.mxu0 %v6787
    %7826 = vmatpush1.msra.mxu0 %v6786
    %7827 = vmatprep.subr.mxu0 %v6791
    %7828 = vmatpush1.msra.mxu0 %v6790
    %7829 = vmatprep.subr.mxu0 %v6795
    %7830 = vmatpush1.msra.mxu0 %v6794
    %7831 = vmatprep.subr.mxu0 %v6799
    %7832 = vmatpush1.msra.mxu0 %v6798
    %7833 = vmatprep.subr.mxu0 %v6803
    %7834 = vmatpush1.msra.mxu0 %v6802
    %7835 = vmatprep.subr.mxu0 %v6807
    %7836 = vmatpush1.msra.mxu0 %v6806
    %7837 = vmatprep.subr.mxu0 %v6811
    %7838 = vmatpush1.msra.mxu0 %v6810
    %7839 = vmatprep.subr.mxu0 %v6815
    %7840 = vmatpush1.msra.mxu0 %v6814
    %7841 = vmatprep.subr.mxu0 0.0
    %7842 = vmatpush1.msra.mxu0 0.0
    %7843 = vmatprep.subr.mxu0 0.0
    %7844 = vmatpush1.msra.mxu0 0.0
    %7845 = vmatprep.subr.mxu0 0.0
    %7846 = vmatpush1.msra.mxu0 0.0
    %7847 = vmatprep.subr.mxu0 0.0
    %7848 = vmatpush1.msra.mxu0 0.0
    %7849 = vmatprep.subr.mxu0 0.0
    %7850 = vmatpush1.msra.mxu0 0.0
    %7851 = vmatprep.subr.mxu0 0.0
    %7852 = vmatpush1.msra.mxu0 0.0
    %7853 = vmatprep.subr.mxu0 0.0
    %7854 = vmatpush1.msra.mxu0 0.0
    %7855 = vmatprep.subr.mxu0 0.0
    %7856 = vmatpush1.msra.mxu0 0.0
    %7857 = vmatprep.subr.mxu0 0.0
    %7858 = vmatpush1.msra.mxu0 0.0
    %7859 = vmatprep.subr.mxu0 0.0
    %7860 = vmatpush1.msra.mxu0 0.0
    %7861 = vmatprep.subr.mxu0 0.0
    %7862 = vmatpush1.msra.mxu0 0.0
    %7863 = vmatprep.subr.mxu0 0.0
    %7864 = vmatpush1.msra.mxu0 0.0
    %7865 = vmatprep.subr.mxu0 0.0
    %7866 = vmatpush1.msra.mxu0 0.0
    %7867 = vmatprep.subr.mxu0 0.0
    %7868 = vmatpush1.msra.mxu0 0.0
    %7869 = vmatprep.subr.mxu0 0.0
    %7870 = vmatpush1.msra.mxu0 0.0
    %7871 = vmatprep.subr.mxu0 0.0
    %7872 = vmatpush1.msra.mxu0 0.0
    %7873 = vmatprep.mubr.f32.mxu0 0.0
    %7874 = vmatmul.mubr.f32.gmra.mrb[0].mxu0 %v7736
    %v7875 = vpop.f32.mrb[0].mxu0
    %v7876 = vadd.f32 0.0, %v7875
    %v7877 = vpop.f32.mrb[0].mxu0
    %v7878 = vadd.f32 0.0, %v7877
    %7879 = vdwg.mxu0
    %v7884 = vrot.slane %v7805, 3
    %v7885 = vrot.slane %v7807, 3
    %v7886 = vrot.slane %v7876, 3
    %v7887 = vrot.slane %v7878, 3
    %v7892 = vadd.f32 %v6676, %v7884
    %v7893 = vadd.f32 %v6678, %v7885
    %v7894 = vadd.f32 %v6747, %v7886
    %v7895 = vadd.f32 %v6749, %v7887
    %v7896 = vxor.u32 %v7892, 2147483648
    %v7897 = vmul.f32 %v7896, 1.442695
    %v7898 = vpow.pop %v7897
    %v7899 = vadd.f32 %v7898, 1.0
    %v7900 = vrcp.pop %v7899
    %v7901 = vmul.f32 1.0, %v7900
    %v7902 = vxor.u32 %v7893, 2147483648
    %v7903 = vmul.f32 %v7902, 1.442695
    %v7904 = vpow.pop %v7903
    %v7905 = vadd.f32 %v7904, 1.0
    %v7906 = vrcp.pop %v7905
    %v7907 = vmul.f32 1.0, %v7906
    %v7908 = vtanh.pop %v7894
    %v7909 = vxor.u32 %v7895, 2147483648
    %v7910 = vmul.f32 %v7909, 1.442695
    %v7911 = vpow.pop %v7910
    %v7912 = vadd.f32 %v7911, 1.0
    %v7913 = vrcp.pop %v7912
    %v7914 = vmul.f32 1.0, %v7913
    %v7916 = vrot.slane %v7732, 7
    %v7918 = vmul.f32 %v7907, %v7916
    %v7919 = vmul.f32 %v7901, %v7908
    %v7920 = vadd.f32 %v7918, %v7919
    %v7921 = vtanh.pop %v7920
    %v7922 = vmul.f32 %v7914, %v7921
    %v7924 = vrot.slane %v7922, 5
    %7926 = vmatprep.subr.mxu0 %v6753
    %7927 = vmatpush1.msra.mxu0 %v6752
    %7928 = vmatprep.subr.mxu0 %v6757
    %7929 = vmatpush1.msra.mxu0 %v6756
    %7930 = vmatprep.subr.mxu0 %v6761
    %7931 = vmatpush1.msra.mxu0 %v6760
    %7932 = vmatprep.subr.mxu0 %v6765
    %7933 = vmatpush1.msra.mxu0 %v6764
    %7934 = vmatprep.subr.mxu0 %v6769
    %7935 = vmatpush1.msra.mxu0 %v6768
    %7936 = vmatprep.subr.mxu0 %v6773
    %7937 = vmatpush1.msra.mxu0 %v6772
    %7938 = vmatprep.subr.mxu0 %v6777
    %7939 = vmatpush1.msra.mxu0 %v6776
    %7940 = vmatprep.subr.mxu0 %v6781
    %7941 = vmatpush1.msra.mxu0 %v6780
    %7942 = vmatprep.subr.mxu0 %v6785
    %7943 = vmatpush1.msra.mxu0 %v6784
    %7944 = vmatprep.subr.mxu0 %v6789
    %7945 = vmatpush1.msra.mxu0 %v6788
    %7946 = vmatprep.subr.mxu0 %v6793
    %7947 = vmatpush1.msra.mxu0 %v6792
    %7948 = vmatprep.subr.mxu0 %v6797
    %7949 = vmatpush1.msra.mxu0 %v6796
    %7950 = vmatprep.subr.mxu0 %v6801
    %7951 = vmatpush1.msra.mxu0 %v6800
    %7952 = vmatprep.subr.mxu0 %v6805
    %7953 = vmatpush1.msra.mxu0 %v6804
    %7954 = vmatprep.subr.mxu0 %v6809
    %7955 = vmatpush1.msra.mxu0 %v6808
    %7956 = vmatprep.subr.mxu0 %v6813
    %7957 = vmatpush1.msra.mxu0 %v6812
    %7958 = vmatprep.subr.mxu0 0.0
    %7959 = vmatpush1.msra.mxu0 0.0
    %7960 = vmatprep.subr.mxu0 0.0
    %7961 = vmatpush1.msra.mxu0 0.0
    %7962 = vmatprep.subr.mxu0 0.0
    %7963 = vmatpush1.msra.mxu0 0.0
    %7964 = vmatprep.subr.mxu0 0.0
    %7965 = vmatpush1.msra.mxu0 0.0
    %7966 = vmatprep.subr.mxu0 0.0
    %7967 = vmatpush1.msra.mxu0 0.0
    %7968 = vmatprep.subr.mxu0 0.0
    %7969 = vmatpush1.msra.mxu0 0.0
    %7970 = vmatprep.subr.mxu0 0.0
    %7971 = vmatpush1.msra.mxu0 0.0
    %7972 = vmatprep.subr.mxu0 0.0
    %7973 = vmatpush1.msra.mxu0 0.0
    %7974 = vmatprep.subr.mxu0 0.0
    %7975 = vmatpush1.msra.mxu0 0.0
    %7976 = vmatprep.subr.mxu0 0.0
    %7977 = vmatpush1.msra.mxu0 0.0
    %7978 = vmatprep.subr.mxu0 0.0
    %7979 = vmatpush1.msra.mxu0 0.0
    %7980 = vmatprep.subr.mxu0 0.0
    %7981 = vmatpush1.msra.mxu0 0.0
    %7982 = vmatprep.subr.mxu0 0.0
    %7983 = vmatpush1.msra.mxu0 0.0
    %7984 = vmatprep.subr.mxu0 0.0
    %7985 = vmatpush1.msra.mxu0 0.0
    %7986 = vmatprep.subr.mxu0 0.0
    %7987 = vmatpush1.msra.mxu0 0.0
    %7988 = vmatprep.subr.mxu0 0.0
    %7989 = vmatpush1.msra.mxu0 0.0
    %7990 = vmatprep.mubr.f32.mxu0 0.0
    %7991 = vmatmul.mubr.f32.gmra.mrb[0].mxu0 %v7924
    %v7992 = vpop.f32.mrb[0].mxu0
    %v7993 = vadd.f32 0.0, %v7992
    %v7994 = vpop.f32.mrb[0].mxu0
    %v7995 = vadd.f32 0.0, %v7994
    %7996 = vdwg.mxu0
    %7997 = vmatprep.subr.mxu0 %v6755
    %7998 = vmatpush1.msra.mxu0 %v6754
    %7999 = vmatprep.subr.mxu0 %v6759
    %8000 = vmatpush1.msra.mxu0 %v6758
    %8001 = vmatprep.subr.mxu0 %v6763
    %8002 = vmatpush1.msra.mxu0 %v6762
    %8003 = vmatprep.subr.mxu0 %v6767
    %8004 = vmatpush1.msra.mxu0 %v6766
    %8005 = vmatprep.subr.mxu0 %v6771
    %8006 = vmatpush1.msra.mxu0 %v6770
    %8007 = vmatprep.subr.mxu0 %v6775
    %8008 = vmatpush1.msra.mxu0 %v6774
    %8009 = vmatprep.subr.mxu0 %v6779
    %8010 = vmatpush1.msra.mxu0 %v6778
    %8011 = vmatprep.subr.mxu0 %v6783
    %8012 = vmatpush1.msra.mxu0 %v6782
    %8013 = vmatprep.subr.mxu0 %v6787
    %8014 = vmatpush1.msra.mxu0 %v6786
    %8015 = vmatprep.subr.mxu0 %v6791
    %8016 = vmatpush1.msra.mxu0 %v6790
    %8017 = vmatprep.subr.mxu0 %v6795
    %8018 = vmatpush1.msra.mxu0 %v6794
    %8019 = vmatprep.subr.mxu0 %v6799
    %8020 = vmatpush1.msra.mxu0 %v6798
    %8021 = vmatprep.subr.mxu0 %v6803
    %8022 = vmatpush1.msra.mxu0 %v6802
    %8023 = vmatprep.subr.mxu0 %v6807
    %8024 = vmatpush1.msra.mxu0 %v6806
    %8025 = vmatprep.subr.mxu0 %v6811
    %8026 = vmatpush1.msra.mxu0 %v6810
    %8027 = vmatprep.subr.mxu0 %v6815
    %8028 = vmatpush1.msra.mxu0 %v6814
    %8029 = vmatprep.subr.mxu0 0.0
    %8030 = vmatpush1.msra.mxu0 0.0
    %8031 = vmatprep.subr.mxu0 0.0
    %8032 = vmatpush1.msra.mxu0 0.0
    %8033 = vmatprep.subr.mxu0 0.0
    %8034 = vmatpush1.msra.mxu0 0.0
    %8035 = vmatprep.subr.mxu0 0.0
    %8036 = vmatpush1.msra.mxu0 0.0
    %8037 = vmatprep.subr.mxu0 0.0
    %8038 = vmatpush1.msra.mxu0 0.0
    %8039 = vmatprep.subr.mxu0 0.0
    %8040 = vmatpush1.msra.mxu0 0.0
    %8041 = vmatprep.subr.mxu0 0.0
    %8042 = vmatpush1.msra.mxu0 0.0
    %8043 = vmatprep.subr.mxu0 0.0
    %8044 = vmatpush1.msra.mxu0 0.0
    %8045 = vmatprep.subr.mxu0 0.0
    %8046 = vmatpush1.msra.mxu0 0.0
    %8047 = vmatprep.subr.mxu0 0.0
    %8048 = vmatpush1.msra.mxu0 0.0
    %8049 = vmatprep.subr.mxu0 0.0
    %8050 = vmatpush1.msra.mxu0 0.0
    %8051 = vmatprep.subr.mxu0 0.0
    %8052 = vmatpush1.msra.mxu0 0.0
    %8053 = vmatprep.subr.mxu0 0.0
    %8054 = vmatpush1.msra.mxu0 0.0
    %8055 = vmatprep.subr.mxu0 0.0
    %8056 = vmatpush1.msra.mxu0 0.0
    %8057 = vmatprep.subr.mxu0 0.0
    %8058 = vmatpush1.msra.mxu0 0.0
    %8059 = vmatprep.subr.mxu0 0.0
    %8060 = vmatpush1.msra.mxu0 0.0
    %8061 = vmatprep.mubr.f32.mxu0 0.0
    %8062 = vmatmul.mubr.f32.gmra.mrb[0].mxu0 %v7924
    %v8063 = vpop.f32.mrb[0].mxu0
    %v8064 = vadd.f32 0.0, %v8063
    %v8065 = vpop.f32.mrb[0].mxu0
    %v8066 = vadd.f32 0.0, %v8065
    %8067 = vdwg.mxu0
    %v8072 = vrot.slane %v7993, 2
    %v8073 = vrot.slane %v7995, 2
    %v8074 = vrot.slane %v8064, 2
    %v8075 = vrot.slane %v8066, 2
    %v8080 = vadd.f32 %v6676, %v8072
    %v8081 = vadd.f32 %v6678, %v8073
    %v8082 = vadd.f32 %v6747, %v8074
    %v8083 = vadd.f32 %v6749, %v8075
    %v8084 = vxor.u32 %v8080, 2147483648
    %v8085 = vmul.f32 %v8084, 1.442695
    %v8086 = vpow.pop %v8085
    %v8087 = vadd.f32 %v8086, 1.0
    %v8088 = vrcp.pop %v8087
    %v8089 = vmul.f32 1.0, %v8088
    %v8090 = vxor.u32 %v8081, 2147483648
    %v8091 = vmul.f32 %v8090, 1.442695
    %v8092 = vpow.pop %v8091
    %v8093 = vadd.f32 %v8092, 1.0
    %v8094 = vrcp.pop %v8093
    %v8095 = vmul.f32 1.0, %v8094
    %v8096 = vtanh.pop %v8082
    %v8097 = vxor.u32 %v8083, 2147483648
    %v8098 = vmul.f32 %v8097, 1.442695
    %v8099 = vpow.pop %v8098
    %v8100 = vadd.f32 %v8099, 1.0
    %v8101 = vrcp.pop %v8100
    %v8102 = vmul.f32 1.0, %v8101
    %v8104 = vrot.slane %v7920, 7
    %v8106 = vmul.f32 %v8095, %v8104
    %v8107 = vmul.f32 %v8089, %v8096
    %v8108 = vadd.f32 %v8106, %v8107
    %v8109 = vtanh.pop %v8108
    %v8110 = vmul.f32 %v8102, %v8109
    %v8112 = vrot.slane %v8110, 6
    %8114 = vmatprep.subr.mxu0 %v6753
    %8115 = vmatpush1.msra.mxu0 %v6752
    %8116 = vmatprep.subr.mxu0 %v6757
    %8117 = vmatpush1.msra.mxu0 %v6756
    %8118 = vmatprep.subr.mxu0 %v6761
    %8119 = vmatpush1.msra.mxu0 %v6760
    %8120 = vmatprep.subr.mxu0 %v6765
    %8121 = vmatpush1.msra.mxu0 %v6764
    %8122 = vmatprep.subr.mxu0 %v6769
    %8123 = vmatpush1.msra.mxu0 %v6768
    %8124 = vmatprep.subr.mxu0 %v6773
    %8125 = vmatpush1.msra.mxu0 %v6772
    %8126 = vmatprep.subr.mxu0 %v6777
    %8127 = vmatpush1.msra.mxu0 %v6776
    %8128 = vmatprep.subr.mxu0 %v6781
    %8129 = vmatpush1.msra.mxu0 %v6780
    %8130 = vmatprep.subr.mxu0 %v6785
    %8131 = vmatpush1.msra.mxu0 %v6784
    %8132 = vmatprep.subr.mxu0 %v6789
    %8133 = vmatpush1.msra.mxu0 %v6788
    %8134 = vmatprep.subr.mxu0 %v6793
    %8135 = vmatpush1.msra.mxu0 %v6792
    %8136 = vmatprep.subr.mxu0 %v6797
    %8137 = vmatpush1.msra.mxu0 %v6796
    %8138 = vmatprep.subr.mxu0 %v6801
    %8139 = vmatpush1.msra.mxu0 %v6800
    %8140 = vmatprep.subr.mxu0 %v6805
    %8141 = vmatpush1.msra.mxu0 %v6804
    %8142 = vmatprep.subr.mxu0 %v6809
    %8143 = vmatpush1.msra.mxu0 %v6808
    %8144 = vmatprep.subr.mxu0 %v6813
    %8145 = vmatpush1.msra.mxu0 %v6812
    %8146 = vmatprep.subr.mxu0 0.0
    %8147 = vmatpush1.msra.mxu0 0.0
    %8148 = vmatprep.subr.mxu0 0.0
    %8149 = vmatpush1.msra.mxu0 0.0
    %8150 = vmatprep.subr.mxu0 0.0
    %8151 = vmatpush1.msra.mxu0 0.0
    %8152 = vmatprep.subr.mxu0 0.0
    %8153 = vmatpush1.msra.mxu0 0.0
    %8154 = vmatprep.subr.mxu0 0.0
    %8155 = vmatpush1.msra.mxu0 0.0
    %8156 = vmatprep.subr.mxu0 0.0
    %8157 = vmatpush1.msra.mxu0 0.0
    %8158 = vmatprep.subr.mxu0 0.0
    %8159 = vmatpush1.msra.mxu0 0.0
    %8160 = vmatprep.subr.mxu0 0.0
    %8161 = vmatpush1.msra.mxu0 0.0
    %8162 = vmatprep.subr.mxu0 0.0
    %8163 = vmatpush1.msra.mxu0 0.0
    %8164 = vmatprep.subr.mxu0 0.0
    %8165 = vmatpush1.msra.mxu0 0.0
    %8166 = vmatprep.subr.mxu0 0.0
    %8167 = vmatpush1.msra.mxu0 0.0
    %8168 = vmatprep.subr.mxu0 0.0
    %8169 = vmatpush1.msra.mxu0 0.0
    %8170 = vmatprep.subr.mxu0 0.0
    %8171 = vmatpush1.msra.mxu0 0.0
    %8172 = vmatprep.subr.mxu0 0.0
    %8173 = vmatpush1.msra.mxu0 0.0
    %8174 = vmatprep.subr.mxu0 0.0
    %8175 = vmatpush1.msra.mxu0 0.0
    %8176 = vmatprep.subr.mxu0 0.0
    %8177 = vmatpush1.msra.mxu0 0.0
    %8178 = vmatprep.mubr.f32.mxu0 0.0
    %8179 = vmatmul.mubr.f32.gmra.mrb[0].mxu0 %v8112
    %v8180 = vpop.f32.mrb[0].mxu0
    %v8181 = vadd.f32 0.0, %v8180
    %v8182 = vpop.f32.mrb[0].mxu0
    %v8183 = vadd.f32 0.0, %v8182
    %8184 = vdwg.mxu0
    %8185 = vmatprep.subr.mxu0 %v6755
    %8186 = vmatpush1.msra.mxu0 %v6754
    %8187 = vmatprep.subr.mxu0 %v6759
    %8188 = vmatpush1.msra.mxu0 %v6758
    %8189 = vmatprep.subr.mxu0 %v6763
    %8190 = vmatpush1.msra.mxu0 %v6762
    %8191 = vmatprep.subr.mxu0 %v6767
    %8192 = vmatpush1.msra.mxu0 %v6766
    %8193 = vmatprep.subr.mxu0 %v6771
    %8194 = vmatpush1.msra.mxu0 %v6770
    %8195 = vmatprep.subr.mxu0 %v6775
    %8196 = vmatpush1.msra.mxu0 %v6774
    %8197 = vmatprep.subr.mxu0 %v6779
    %8198 = vmatpush1.msra.mxu0 %v6778
    %8199 = vmatprep.subr.mxu0 %v6783
    %8200 = vmatpush1.msra.mxu0 %v6782
    %8201 = vmatprep.subr.mxu0 %v6787
    %8202 = vmatpush1.msra.mxu0 %v6786
    %8203 = vmatprep.subr.mxu0 %v6791
    %8204 = vmatpush1.msra.mxu0 %v6790
    %8205 = vmatprep.subr.mxu0 %v6795
    %8206 = vmatpush1.msra.mxu0 %v6794
    %8207 = vmatprep.subr.mxu0 %v6799
    %8208 = vmatpush1.msra.mxu0 %v6798
    %8209 = vmatprep.subr.mxu0 %v6803
    %8210 = vmatpush1.msra.mxu0 %v6802
    %8211 = vmatprep.subr.mxu0 %v6807
    %8212 = vmatpush1.msra.mxu0 %v6806
    %8213 = vmatprep.subr.mxu0 %v6811
    %8214 = vmatpush1.msra.mxu0 %v6810
    %8215 = vmatprep.subr.mxu0 %v6815
    %8216 = vmatpush1.msra.mxu0 %v6814
    %8217 = vmatprep.subr.mxu0 0.0
    %8218 = vmatpush1.msra.mxu0 0.0
    %8219 = vmatprep.subr.mxu0 0.0
    %8220 = vmatpush1.msra.mxu0 0.0
    %8221 = vmatprep.subr.mxu0 0.0
    %8222 = vmatpush1.msra.mxu0 0.0
    %8223 = vmatprep.subr.mxu0 0.0
    %8224 = vmatpush1.msra.mxu0 0.0
    %8225 = vmatprep.subr.mxu0 0.0
    %8226 = vmatpush1.msra.mxu0 0.0
    %8227 = vmatprep.subr.mxu0 0.0
    %8228 = vmatpush1.msra.mxu0 0.0
    %8229 = vmatprep.subr.mxu0 0.0
    %8230 = vmatpush1.msra.mxu0 0.0
    %8231 = vmatprep.subr.mxu0 0.0
    %8232 = vmatpush1.msra.mxu0 0.0
    %8233 = vmatprep.subr.mxu0 0.0
    %8234 = vmatpush1.msra.mxu0 0.0
    %8235 = vmatprep.subr.mxu0 0.0
    %8236 = vmatpush1.msra.mxu0 0.0
    %8237 = vmatprep.subr.mxu0 0.0
    %8238 = vmatpush1.msra.mxu0 0.0
    %8239 = vmatprep.subr.mxu0 0.0
    %8240 = vmatpush1.msra.mxu0 0.0
    %8241 = vmatprep.subr.mxu0 0.0
    %8242 = vmatpush1.msra.mxu0 0.0
    %8243 = vmatprep.subr.mxu0 0.0
    %8244 = vmatpush1.msra.mxu0 0.0
    %8245 = vmatprep.subr.mxu0 0.0
    %8246 = vmatpush1.msra.mxu0 0.0
    %8247 = vmatprep.subr.mxu0 0.0
    %8248 = vmatpush1.msra.mxu0 0.0
    %8249 = vmatprep.mubr.f32.mxu0 0.0
    %8250 = vmatmul.mubr.f32.gmra.mrb[0].mxu0 %v8112
    %v8251 = vpop.f32.mrb[0].mxu0
    %v8252 = vadd.f32 0.0, %v8251
    %v8253 = vpop.f32.mrb[0].mxu0
    %v8254 = vadd.f32 0.0, %v8253
    %8255 = vdwg.mxu0
    %v8260 = vrot.slane %v8181, 1
    %v8261 = vrot.slane %v8183, 1
    %v8262 = vrot.slane %v8252, 1
    %v8263 = vrot.slane %v8254, 1
    %v8268 = vadd.f32 %v6676, %v8260
    %v8269 = vadd.f32 %v6678, %v8261
    %v8270 = vadd.f32 %v6747, %v8262
    %v8271 = vadd.f32 %v6749, %v8263
    %v8272 = vxor.u32 %v8268, 2147483648
    %v8273 = vmul.f32 %v8272, 1.442695
    %v8274 = vpow.pop %v8273
    %v8275 = vadd.f32 %v8274, 1.0
    %v8276 = vrcp.pop %v8275
    %v8277 = vmul.f32 1.0, %v8276
    %v8278 = vxor.u32 %v8269, 2147483648
    %v8279 = vmul.f32 %v8278, 1.442695
    %v8280 = vpow.pop %v8279
    %v8281 = vadd.f32 %v8280, 1.0
    %v8282 = vrcp.pop %v8281
    %v8283 = vmul.f32 1.0, %v8282
    %v8284 = vtanh.pop %v8270
    %v8285 = vxor.u32 %v8271, 2147483648
    %v8286 = vmul.f32 %v8285, 1.442695
    %v8287 = vpow.pop %v8286
    %v8288 = vadd.f32 %v8287, 1.0
    %v8289 = vrcp.pop %v8288
    %v8290 = vmul.f32 1.0, %v8289
    %v8292 = vrot.slane %v8108, 7
    %v8294 = vmul.f32 %v8283, %v8292
    %v8295 = vmul.f32 %v8277, %v8284
    %v8296 = vadd.f32 %v8294, %v8295
    %v8297 = vtanh.pop %v8296
    %v8298 = vmul.f32 %v8290, %v8297
    %v8299 = vsel %vm2464, %v6985, %v7170
    %v8300 = vsel %vm2466, %v8299, %v7358
    %v8301 = vsel %vm2468, %v8300, %v7546
    %v8302 = vsel %vm2470, %v8301, %v7734
    %v8303 = vsel %vm2472, %v8302, %v7922
    %v8304 = vsel %vm2474, %v8303, %v8110
    %v8305 = vsel %vm2476, %v8304, %v8298
    %v8306 = vld [vmem:[%s12] sm:$0xff]
    %v8307 = vld [vmem:[%s12 + $0x8] sm:$0xff]
    %v8308 = vld [vmem:[%s12 + $0x10] sm:$0xff]
    %v8309 = vld [vmem:[%s12 + $0x18] sm:$0xff]
    %v8310 = vld [vmem:[%s12 + $0x20] sm:$0xff]
    %v8311 = vld [vmem:[%s12 + $0x28] sm:$0xff]
    %v8312 = vld [vmem:[%s12 + $0x30] sm:$0xff]
    %v8313 = vld [vmem:[%s12 + $0x38] sm:$0xff]
    %v8314 = vld [vmem:[%s12 + $0x40] sm:$0xff]
    %v8315 = vld [vmem:[%s12 + $0x48] sm:$0xff]
    %v8316 = vld [vmem:[%s12 + $0x50] sm:$0xff]
    %v8317 = vld [vmem:[%s12 + $0x58] sm:$0xff]
    %v8318 = vld [vmem:[%s12 + $0x60] sm:$0xff]
    %v8319 = vld [vmem:[%s12 + $0x68] sm:$0xff]
    %v8320 = vld [vmem:[%s12 + $0x70] sm:$0xff]
    %v8321 = vld [vmem:[%s12 + $0x78] sm:$0xff]
    %v8322 = vld [vmem:[%s13] sm:$0x1]
    %v8324 = vlaneseq
    %v8325 = vshrl.u32 %v8324, 7
    %v8326 = vsub.s32 0, %v8325
    %v8327 = vrot.slane %v8322, %v8326
    %8329 = vmatprep.subr.mxu0 0.0
    %8330 = vmatpush1.msra.mxu0 %v8306
    %8331 = vmatprep.subr.mxu0 0.0
    %8332 = vmatpush1.msra.mxu0 %v8307
    %8333 = vmatprep.subr.mxu0 0.0
    %8334 = vmatpush1.msra.mxu0 %v8308
    %8335 = vmatprep.subr.mxu0 0.0
    %8336 = vmatpush1.msra.mxu0 %v8309
    %8337 = vmatprep.subr.mxu0 0.0
    %8338 = vmatpush1.msra.mxu0 %v8310
    %8339 = vmatprep.subr.mxu0 0.0
    %8340 = vmatpush1.msra.mxu0 %v8311
    %8341 = vmatprep.subr.mxu0 0.0
    %8342 = vmatpush1.msra.mxu0 %v8312
    %8343 = vmatprep.subr.mxu0 0.0
    %8344 = vmatpush1.msra.mxu0 %v8313
    %8345 = vmatprep.subr.mxu0 0.0
    %8346 = vmatpush1.msra.mxu0 %v8314
    %8347 = vmatprep.subr.mxu0 0.0
    %8348 = vmatpush1.msra.mxu0 %v8315
    %8349 = vmatprep.subr.mxu0 0.0
    %8350 = vmatpush1.msra.mxu0 %v8316
    %8351 = vmatprep.subr.mxu0 0.0
    %8352 = vmatpush1.msra.mxu0 %v8317
    %8353 = vmatprep.subr.mxu0 0.0
    %8354 = vmatpush1.msra.mxu0 %v8318
    %8355 = vmatprep.subr.mxu0 0.0
    %8356 = vmatpush1.msra.mxu0 %v8319
    %8357 = vmatprep.subr.mxu0 0.0
    %8358 = vmatpush1.msra.mxu0 %v8320
    %8359 = vmatprep.subr.mxu0 0.0
    %8360 = vmatpush1.msra.mxu0 %v8321
    %8361 = vmatprep.subr.mxu0 0.0
    %8362 = vmatpush1.msra.mxu0 0.0
    %8363 = vmatprep.subr.mxu0 0.0
    %8364 = vmatpush1.msra.mxu0 0.0
    %8365 = vmatprep.subr.mxu0 0.0
    %8366 = vmatpush1.msra.mxu0 0.0
    %8367 = vmatprep.subr.mxu0 0.0
    %8368 = vmatpush1.msra.mxu0 0.0
    %8369 = vmatprep.subr.mxu0 0.0
    %8370 = vmatpush1.msra.mxu0 0.0
    %8371 = vmatprep.subr.mxu0 0.0
    %8372 = vmatpush1.msra.mxu0 0.0
    %8373 = vmatprep.subr.mxu0 0.0
    %8374 = vmatpush1.msra.mxu0 0.0
    %8375 = vmatprep.subr.mxu0 0.0
    %8376 = vmatpush1.msra.mxu0 0.0
    %8377 = vmatprep.subr.mxu0 0.0
    %8378 = vmatpush1.msra.mxu0 0.0
    %8379 = vmatprep.subr.mxu0 0.0
    %8380 = vmatpush1.msra.mxu0 0.0
    %8381 = vmatprep.subr.mxu0 0.0
    %8382 = vmatpush1.msra.mxu0 0.0
    %8383 = vmatprep.subr.mxu0 0.0
    %8384 = vmatpush1.msra.mxu0 0.0
    %8385 = vmatprep.subr.mxu0 0.0
    %8386 = vmatpush1.msra.mxu0 0.0
    %8387 = vmatprep.subr.mxu0 0.0
    %8388 = vmatpush1.msra.mxu0 0.0
    %8389 = vmatprep.subr.mxu0 0.0
    %8390 = vmatpush1.msra.mxu0 0.0
    %8391 = vmatprep.subr.mxu0 0.0
    %8392 = vmatpush1.msra.mxu0 0.0
    %8393 = vmatprep.mubr.f32.mxu0 0.0
    %8394 = vmatmul.mubr.f32.gmra.mrb[0].mxu0 %v8305
    %v8395 = vpop.f32.mrb[0].mxu0
    %v8396 = vadd.f32 %v8327, %v8395
    %v8397 = vpop.f32.mrb[0].mxu0
    %8398 = vdwg.mxu0
    %vm8399 = vcmask 31744
    %8400 = vst.msk [vmem:[%s14] sm:$0xff] %vm8399, %v8396
    // Predicated region
    $region78: #{graph_network_forward.1} parent=1 // pred_check
      _
    $region79: #{graph_network_forward.1} parent=1 // pred_check_branch
      %8402 = sbr.rel (0) target = $region81
    $region80: #{graph_network_forward.1} parent=1 // pred_region
      _
    $region81: #{graph_network_forward.1} parent=1 // pred_fallthru
      _
    // Predicated region
    $region82: #{graph_network_forward.1} parent=1 // pred_check
      _
    $region83: #{graph_network_forward.1} parent=1 // pred_check_branch
      %8404 = sbr.rel (0) target = $region85
    $region84: #{graph_network_forward.1} parent=1 // pred_region
      _
    $region85: #{graph_network_forward.1} parent=1 // pred_fallthru
      _
    %8405 = vsyncpa [#allocation3], 1
    %8406 = vsyncpa [#allocation5], 1
    %8407 = vsyncpa [#allocation8], 1

</llo_original>
